<compile_context>
chip_gen: v5e
topology: v5e:2x2
jax: 0.10.0
libtpu: 0.0.40
codegen_flags: <defaults>
</compile_context>

<pallas_src>
import jax
import jax.numpy as jnp
from jax.experimental import pallas as pl
from jax.experimental.pallas import tpu as pltpu

NUM_HEADS = 8
_SQRT_HALF = 0.7071067811865476
_LN_EPS = 1e-5
_NEG_INF = -1e30

PARAM_ORDER = [
    "ve_w1", "ve_b1", "ve_g1", "ve_be1", "ve_w2", "ve_b2", "ve_g2", "ve_be2",
    "n1_g", "n1_b",
    "wq", "wk", "wv", "bq", "bk", "bv", "wo", "op_b",
    "n2_g", "n2_b",
    "fr_w1", "fr_b1", "fr_w2", "fr_b2", "fr_g", "fr_be",
    "n3_g", "n3_b",
    "vi_w1", "vi_b1", "vi_w2", "vi_b2",
]


def _gelu(x):
    # exact (erf-based) GELU -- PyTorch nn.GELU() default
    return 0.5 * x * (1.0 + jax.lax.erf(x * _SQRT_HALF))


def _ln(x, g, b):
    m = jnp.mean(x, axis=-1, keepdims=True)
    c = x - m
    v = jnp.mean(c * c, axis=-1, keepdims=True)
    return c * jax.lax.rsqrt(v + _LN_EPS) * g + b


def _const_index_map(ndim):
    zeros = (0,) * ndim
    return lambda i, _z=zeros: _z


def _vmem_capacity():
    try:
        info = pltpu.get_tpu_info()
        cap = getattr(info, "vmem_capacity_bytes", None)
        if cap:
            return int(cap)
    except Exception:
        pass
    return 64 << 20        # assume the smallest (v7x per-core) VMEM if unknown


def _footprint_bytes(TB, V, D, H, hd_p, weight_bytes):
    """Conservative resident-VMEM estimate for one grid step."""
    R = TB * V
    Hp = H * hd_p
    scores = 3 * H * R * R * 4                  # dense per-head score/exp/prob tensors
    qkv = 3 * R * Hp * 6                        # f32 q/k/v + bf16 copies
    acts = 16 * R * D * 4 + R * Hp * 2          # LN/FFN intermediates + ctx concat
    io = 2 * (R * (D + 2) * 4 + TB * D * 4) + R * R * 4 + TB * R * 2
    return weight_bytes + scores + qkv + acts + io


def _pick_batch_tile(B, V, D, H, hd_p, weight_bytes, vmem_cap):
    """Largest legal batch tile that fits the VMEM budget; prefers >=2 grid steps."""
    max_rows = 512 if vmem_cap >= (100 << 20) else 256     # v5e/v6e vs v7x
    budget = (vmem_cap * 7) // 10
    cands = [t for t in range(1, B + 1)
             if B % t == 0 and (t % 8 == 0 or t == B)]      # (8,128) output-block rule
    fits = [t for t in cands
            if t * V <= max_rows
            and _footprint_bytes(t, V, D, H, hd_p, weight_bytes) <= budget]
    if not fits:
        return min(cands, key=lambda t: t * V)
    multi = [t for t in fits if B // t >= 2]                # keep both v7x TCs busy
    return max(multi if multi else fits, key=lambda t: t * V)


def _vmem_limit_bytes(TB, V, D, H, hd_p, weight_bytes, vmem_cap):
    ceiling = (vmem_cap * 3) // 4      # ~48 MiB on v7x, ~96 MiB on v5e/v6e
    need = _footprint_bytes(TB, V, D, H, hd_p, weight_bytes) + (8 << 20)
    return int(min(ceiling, max(need, 32 << 20)))


def _make_kernel(TB, V, D, H, hd_p):
    R = TB * V
    hd = D // H
    scale = 1.0 / float(hd) ** 0.5
    bf16, f32 = jnp.bfloat16, jnp.float32

    def kernel(feats_ref, vp_ref, bias_ref, pool_ref, *rest):
        out_ref = rest[-1]
        prm = dict(zip(PARAM_ORDER, rest[:-1]))
        ld = lambda n: prm[n][...]

        feats = feats_ref[...]                       # (R, D) f32
        vp = vp_ref[...]                             # (R, 2) f32

        # ---- view encoder: Linear -> LN -> GELU -> Linear -> LN (tiny, f32) ----
        h = jnp.dot(vp, ld("ve_w1"), preferred_element_type=f32) + ld("ve_b1")
        h = _gelu(_ln(h, ld("ve_g1"), ld("ve_be1")))
        ve = jnp.dot(h, ld("ve_w2"), preferred_element_type=f32) + ld("ve_b2")
        ve = _ln(ve, ld("ve_g2"), ld("ve_be2"))

        x = _ln(feats + ve, ld("n1_g"), ld("n1_b"))  # norm1(feats + view_emb)

        # ---- multi-head self-attention, heads along 128-padded lane blocks ----
        x_bf = x.astype(bf16)
        q = jnp.dot(x_bf, ld("wq"), preferred_element_type=f32) + ld("bq")   # (R, Hp)
        k = jnp.dot(x_bf, ld("wk"), preferred_element_type=f32) + ld("bk")
        v = jnp.dot(x_bf, ld("wv"), preferred_element_type=f32) + ld("bv")
        q_bf = (q * scale).astype(bf16)
        k_bf = k.astype(bf16)
        v_bf = v.astype(bf16)
        bias = bias_ref[...]                          # (R, R) f32: 0 / -1e30 block mask

        ctx_parts = []
        for hh in range(H):
            lo = hh * hd_p
            q_h = q_bf[:, lo:lo + hd_p]               # 128-aligned lane slices
            k_h = k_bf[:, lo:lo + hd_p]
            v_h = v_bf[:, lo:lo + hd_p]
            s = jnp.einsum("qf,kf->qk", q_h, k_h,
                           preferred_element_type=f32) + bias          # (R, R)
            m = jnp.max(s, axis=-1, keepdims=True)
            e = jnp.exp(s - m)
            p = e * pl.reciprocal(jnp.sum(e, axis=-1, keepdims=True), approx=True)
            ctx_parts.append(
                jnp.dot(p.astype(bf16), v_h, preferred_element_type=f32).astype(bf16))
        ctx = jnp.concatenate(ctx_parts, axis=-1)                        # (R, Hp) bf16
        attn = jnp.dot(ctx, ld("wo"), preferred_element_type=f32) + ld("op_b")

        x = _ln(x + attn, ld("n2_g"), ld("n2_b"))     # norm2

        # ---- feature refinement FFN: Linear -> GELU -> Linear -> LN ----
        x_bf = x.astype(bf16)
        hf = _gelu(jnp.dot(x_bf, ld("fr_w1"),
                           preferred_element_type=f32) + ld("fr_b1"))
        r = jnp.dot(hf.astype(bf16), ld("fr_w2"),
                    preferred_element_type=f32) + ld("fr_b2")
        r = _ln(r, ld("fr_g"), ld("fr_be"))
        x = _ln(x + r, ld("n3_g"), ld("n3_b"))        # norm3

        # ---- view-importance gate; softmax-over-views folded into the pooling ----
        x_bf = x.astype(bf16)
        g = _gelu(jnp.dot(x_bf, ld("vi_w1"),
                          preferred_element_type=f32) + ld("vi_b1"))
        logit = jnp.dot(g, ld("vi_w2"), preferred_element_type=f32) + ld("vi_b2")
        ew = jnp.exp(jax.nn.sigmoid(logit))           # (R, 1) softmax numerators
        pool = pool_ref[...]                          # (TB, R) bf16 0/1 group matrix
        num = jnp.dot(pool, (ew * x).astype(bf16),
                      preferred_element_type=f32)     # (TB, D)
        den = jnp.dot(pool, ew.astype(bf16),
                      preferred_element_type=f32)     # (TB, 1)
        out_ref[...] = (num * (1.0 / den)).astype(out_ref.dtype)

    return kernel


def _prepare_params(params, D, H):
    """Per-head-pad qkv/op weights to 128-lane heads (exact), cast MXU weights bf16."""
    hd = D // H
    hd_p = -(-hd // 128) * 128
    Hp = H * hd_p
    bf = jnp.bfloat16
    f32 = jnp.float32
    qkv_w = params["qkv_w"].astype(f32)
    qkv_b = params["qkv_b"].astype(f32)

    def pad_cols(w):                       # (D, D) -> (D, Hp), zero-pad each head
        w = w.reshape(D, H, hd)
        w = jnp.pad(w, ((0, 0), (0, 0), (0, hd_p - hd)))
        return w.reshape(D, Hp)

    def pad_bias(b):                       # (1, D) -> (1, Hp), zero-pad each head
        b = b.reshape(1, H, hd)
        b = jnp.pad(b, ((0, 0), (0, 0), (0, hd_p - hd)))
        return b.reshape(1, Hp)

    wo = params["op_w"].reshape(H, hd, D)
    wo = jnp.pad(wo, ((0, 0), (0, hd_p - hd), (0, 0))).reshape(Hp, D)

    prep = {
        "ve_w1": params["ve_w1"], "ve_b1": params["ve_b1"],
        "ve_g1": params["ve_g1"], "ve_be1": params["ve_be1"],
        "ve_w2": params["ve_w2"], "ve_b2": params["ve_b2"],
        "ve_g2": params["ve_g2"], "ve_be2": params["ve_be2"],
        "n1_g": params["n1_g"], "n1_b": params["n1_b"],
        "wq": pad_cols(qkv_w[:, :D]).astype(bf),
        "wk": pad_cols(qkv_w[:, D:2 * D]).astype(bf),
        "wv": pad_cols(qkv_w[:, 2 * D:]).astype(bf),
        "bq": pad_bias(qkv_b[:, :D]),
        "bk": pad_bias(qkv_b[:, D:2 * D]),
        "bv": pad_bias(qkv_b[:, 2 * D:]),
        "wo": wo.astype(bf),
        "op_b": params["op_b"],
        "n2_g": params["n2_g"], "n2_b": params["n2_b"],
        "fr_w1": params["fr_w1"].astype(bf), "fr_b1": params["fr_b1"],
        "fr_w2": params["fr_w2"].astype(bf), "fr_b2": params["fr_b2"],
        "fr_g": params["fr_g"], "fr_be": params["fr_be"],
        "n3_g": params["n3_g"], "n3_b": params["n3_b"],
        "vi_w1": params["vi_w1"].astype(bf), "vi_b1": params["vi_b1"],
        "vi_w2": params["vi_w2"], "vi_b2": params["vi_b2"],
    }
    return prep, hd_p


def view_aware_fusion(feats, view_params, params, num_heads=NUM_HEADS, batch_tile=None):
    B, V, D = feats.shape
    H = num_heads
    assert D % H == 0, "dim must be divisible by num_heads"

    prep, hd_p = _prepare_params(params, D, H)
    plist = [prep[n] for n in PARAM_ORDER]
    weight_bytes = sum(int(p.size) * p.dtype.itemsize for p in plist)
    vmem_cap = _vmem_capacity()

    if batch_tile is not None:
        TB = batch_tile
        assert B % TB == 0, "batch_tile must divide B"
        assert TB % 8 == 0 or TB == B, "batch_tile must be a multiple of 8 or equal B"
    else:
        TB = _pick_batch_tile(B, V, D, H, hd_p, weight_bytes, vmem_cap)
    R = TB * V

    feats2 = feats.reshape(B * V, D).astype(jnp.float32)
    vp2 = view_params.reshape(B * V, 2).astype(jnp.float32)

    # Precomputed (grid-invariant) block-diagonal attention mask and pooling matrix.
    gid = jnp.arange(R, dtype=jnp.int32) // V
    attn_bias = jnp.where(gid[:, None] == gid[None, :], 0.0, _NEG_INF
                          ).astype(jnp.float32)                       # (R, R)
    pool = (gid[None, :] == jnp.arange(TB, dtype=jnp.int32)[:, None]
            ).astype(jnp.bfloat16)                                    # (TB, R)

    kernel = _make_kernel(TB, V, D, H, hd_p)
    limit = _vmem_limit_bytes(TB, V, D, H, hd_p, weight_bytes, vmem_cap)

    def _weight_spec(shape, buffered):
        idx = _const_index_map(len(shape))
        if buffered:
            # Grid-invariant operand: single-buffered to halve its VMEM footprint.
            return pl.BlockSpec(shape, idx, pipeline_mode=pl.Buffered(1))
        return pl.BlockSpec(shape, idx)

    def _run(buffered):
        in_specs = (
            [pl.BlockSpec((R, D), lambda i: (i, 0)),
             pl.BlockSpec((R, 2), lambda i: (i, 0)),
             _weight_spec((R, R), buffered),
             _weight_spec((TB, R), buffered)]
            + [_weight_spec(p.shape, buffered) for p in plist]
        )
        out_specs = pl.BlockSpec((TB, D), lambda i: (i, 0))
        return pl.pallas_call(
            kernel,
            out_shape=jax.ShapeDtypeStruct((B, D), jnp.float32),
            grid_spec=pltpu.PrefetchScalarGridSpec(
                num_scalar_prefetch=0,
                grid=(B // TB,),
                in_specs=in_specs,
                out_specs=out_specs,
            ),
            compiler_params=pltpu.CompilerParams(
                dimension_semantics=("parallel",),
                vmem_limit_bytes=limit),
        )(feats2, vp2, attn_bias, pool, *plist)

    use_buffered = hasattr(pl, "Buffered")
    try:
        return _run(use_buffered)
    except Exception:
        if not use_buffered:
            raise
        return _run(False)      # fall back if Buffered(1) is unsupported here


def init_params(key, D):
    D4, D2 = D // 4, D // 2
    ks = jax.random.split(key, 16)

    def w(k, shape, s=0.05):
        return (s * jax.random.normal(k, shape)).astype(jnp.float32)

    ones = lambda n: jnp.ones((1, n), jnp.float32)
    zeros = lambda n: jnp.zeros((1, n), jnp.float32)
    # linear weights stored pre-transposed as (in_features, out_features)
    return {
        "ve_w1": w(ks[0], (2, D4)),   "ve_b1": w(ks[1], (1, D4)),
        "ve_g1": ones(D4),            "ve_be1": zeros(D4),
        "ve_w2": w(ks[2], (D4, D)),   "ve_b2": w(ks[3], (1, D)),
        "ve_g2": ones(D),             "ve_be2": zeros(D),
        "n1_g": ones(D),              "n1_b": zeros(D),
        "qkv_w": w(ks[4], (D, 3 * D)), "qkv_b": w(ks[5], (1, 3 * D)),
        "op_w": w(ks[6], (D, D)),     "op_b": w(ks[7], (1, D)),
        "n2_g": ones(D),              "n2_b": zeros(D),
        "fr_w1": w(ks[8], (D, 2 * D)), "fr_b1": w(ks[9], (1, 2 * D)),
        "fr_w2": w(ks[10], (2 * D, D)), "fr_b2": w(ks[11], (1, D)),
        "fr_g": ones(D),              "fr_be": zeros(D),
        "n3_g": ones(D),              "n3_b": zeros(D),
        "vi_w1": w(ks[12], (D, D2)),  "vi_b1": w(ks[13], (1, D2)),
        "vi_w2": w(ks[14], (D2, 1)),  "vi_b2": w(ks[15], (1, 1)),
    }


def reference(feats, vp, p, H=NUM_HEADS):
    """Pure-JAX f32 reference of the PyTorch forward pass (for verification)."""
    B, V, D = feats.shape
    hd = D // H

    def ln(x, g, b):
        m = x.mean(-1, keepdims=True)
        c = x - m
        var = (c * c).mean(-1, keepdims=True)
        return c * jax.lax.rsqrt(var + _LN_EPS) * g + b

    h = vp @ p["ve_w1"] + p["ve_b1"]
    h = _gelu(ln(h, p["ve_g1"], p["ve_be1"]))
    ve = h @ p["ve_w2"] + p["ve_b2"]
    ve = ln(ve, p["ve_g2"], p["ve_be2"])
    x = ln(feats + ve, p["n1_g"], p["n1_b"])

    qkv = x @ p["qkv_w"] + p["qkv_b"]
    q, k, v = qkv[..., :D], qkv[..., D:2 * D], qkv[..., 2 * D:]
    q = q.reshape(B, V, H, hd)
    k = k.reshape(B, V, H, hd)
    v = v.reshape(B, V, H, hd)
    s = jnp.einsum("bqhd,bkhd->bhqk", q, k) / (hd ** 0.5)
    pa = jax.nn.softmax(s, axis=-1)
    o = jnp.einsum("bhqk,bkhd->bqhd", pa, v).reshape(B, V, D)
    attn = o @ p["op_w"] + p["op_b"]
    x = ln(x + attn, p["n2_g"], p["n2_b"])

    h = _gelu(x @ p["fr_w1"] + p["fr_b1"])
    r = ln(h @ p["fr_w2"] + p["fr_b2"], p["fr_g"], p["fr_be"])
    x = ln(x + r, p["n3_g"], p["n3_b"])

    h = _gelu(x @ p["vi_w1"] + p["vi_b1"])
    w = jax.nn.sigmoid(h @ p["vi_w2"] + p["vi_b2"])
    w = jax.nn.softmax(w, axis=1)
    return (x * w).sum(axis=1)


if __name__ == "__main__":
    key = jax.random.PRNGKey(0)
    B, V, D = 2, 4, 32          # dim=32, num_views=4, 8 heads -> head_dim=4
    k1, k2, k3 = jax.random.split(key, 3)
    feats = jax.random.normal(k1, (B, V, D), jnp.float32)
    view_params = jax.random.normal(k2, (B, V, 2), jnp.float32)
    params = init_params(k3, D)

    fused = view_aware_fusion(feats, view_params, params)
    fused = jax.block_until_ready(fused)
    assert fused.shape == (B, D)

    ref = reference(feats, view_params, params)
    err = float(jnp.max(jnp.abs(fused - ref)))
    # kernel uses bf16 MXU inputs with f32 accumulation -> bf16-level tolerance
    if not bool(jnp.allclose(fused, ref, atol=5e-2, rtol=5e-2)):
        raise AssertionError(f"Pallas/JAX mismatch, max abs err = {err}")
    print("KERNEL_OK")
</pallas_src>

<mosaic_0001>
module attributes {stable_mosaic.version = 11 : i64} {
  func.func @kernel(%arg0: i32, %arg1: memref<8x32xf32, #tpu.memory_space<vmem>>, %arg2: memref<8x2xf32, #tpu.memory_space<vmem>>, %arg3: memref<8x8xf32, #tpu.memory_space<vmem>>, %arg4: memref<2x8xbf16, #tpu.memory_space<vmem>>, %arg5: memref<2x8xf32, #tpu.memory_space<vmem>>, %arg6: memref<1x8xf32, #tpu.memory_space<vmem>>, %arg7: memref<1x8xf32, #tpu.memory_space<vmem>>, %arg8: memref<1x8xf32, #tpu.memory_space<vmem>>, %arg9: memref<8x32xf32, #tpu.memory_space<vmem>>, %arg10: memref<1x32xf32, #tpu.memory_space<vmem>>, %arg11: memref<1x32xf32, #tpu.memory_space<vmem>>, %arg12: memref<1x32xf32, #tpu.memory_space<vmem>>, %arg13: memref<1x32xf32, #tpu.memory_space<vmem>>, %arg14: memref<1x32xf32, #tpu.memory_space<vmem>>, %arg15: memref<32x1024xbf16, #tpu.memory_space<vmem>>, %arg16: memref<32x1024xbf16, #tpu.memory_space<vmem>>, %arg17: memref<32x1024xbf16, #tpu.memory_space<vmem>>, %arg18: memref<1x1024xf32, #tpu.memory_space<vmem>>, %arg19: memref<1x1024xf32, #tpu.memory_space<vmem>>, %arg20: memref<1x1024xf32, #tpu.memory_space<vmem>>, %arg21: memref<1024x32xbf16, #tpu.memory_space<vmem>>, %arg22: memref<1x32xf32, #tpu.memory_space<vmem>>, %arg23: memref<1x32xf32, #tpu.memory_space<vmem>>, %arg24: memref<1x32xf32, #tpu.memory_space<vmem>>, %arg25: memref<32x64xbf16, #tpu.memory_space<vmem>>, %arg26: memref<1x64xf32, #tpu.memory_space<vmem>>, %arg27: memref<64x32xbf16, #tpu.memory_space<vmem>>, %arg28: memref<1x32xf32, #tpu.memory_space<vmem>>, %arg29: memref<1x32xf32, #tpu.memory_space<vmem>>, %arg30: memref<1x32xf32, #tpu.memory_space<vmem>>, %arg31: memref<1x32xf32, #tpu.memory_space<vmem>>, %arg32: memref<1x32xf32, #tpu.memory_space<vmem>>, %arg33: memref<32x16xbf16, #tpu.memory_space<vmem>>, %arg34: memref<1x16xf32, #tpu.memory_space<vmem>>, %arg35: memref<16x1xf32, #tpu.memory_space<vmem>>, %arg36: memref<1x1xf32, #tpu.memory_space<vmem>>, %arg37: memref<2x32xf32, #tpu.memory_space<vmem>>) attributes {dimension_semantics = [#tpu.dimension_semantics<parallel>], iteration_bounds = array<i64: 1>, scalar_prefetch = 0 : i64, scratch_operands = 0 : i64, tpu.core_type = #tpu.core_type<tc>, window_params = [{transform_indices = @transform_0, window_bounds = array<i64: 8, 32>}, {transform_indices = @transform_1, window_bounds = array<i64: 8, 2>}, {pipeline_mode = #tpu.pipeline_mode<synchronous>, transform_indices = @transform_2, window_bounds = array<i64: 8, 8>}, {pipeline_mode = #tpu.pipeline_mode<synchronous>, transform_indices = @transform_3, window_bounds = array<i64: 2, 8>}, {pipeline_mode = #tpu.pipeline_mode<synchronous>, transform_indices = @transform_4, window_bounds = array<i64: 2, 8>}, {pipeline_mode = #tpu.pipeline_mode<synchronous>, transform_indices = @transform_5, window_bounds = array<i64: 1, 8>}, {pipeline_mode = #tpu.pipeline_mode<synchronous>, transform_indices = @transform_6, window_bounds = array<i64: 1, 8>}, {pipeline_mode = #tpu.pipeline_mode<synchronous>, transform_indices = @transform_7, window_bounds = array<i64: 1, 8>}, {pipeline_mode = #tpu.pipeline_mode<synchronous>, transform_indices = @transform_8, window_bounds = array<i64: 8, 32>}, {pipeline_mode = #tpu.pipeline_mode<synchronous>, transform_indices = @transform_9, window_bounds = array<i64: 1, 32>}, {pipeline_mode = #tpu.pipeline_mode<synchronous>, transform_indices = @transform_10, window_bounds = array<i64: 1, 32>}, {pipeline_mode = #tpu.pipeline_mode<synchronous>, transform_indices = @transform_11, window_bounds = array<i64: 1, 32>}, {pipeline_mode = #tpu.pipeline_mode<synchronous>, transform_indices = @transform_12, window_bounds = array<i64: 1, 32>}, {pipeline_mode = #tpu.pipeline_mode<synchronous>, transform_indices = @transform_13, window_bounds = array<i64: 1, 32>}, {pipeline_mode = #tpu.pipeline_mode<synchronous>, transform_indices = @transform_14, window_bounds = array<i64: 32, 1024>}, {pipeline_mode = #tpu.pipeline_mode<synchronous>, transform_indices = @transform_15, window_bounds = array<i64: 32, 1024>}, {pipeline_mode = #tpu.pipeline_mode<synchronous>, transform_indices = @transform_16, window_bounds = array<i64: 32, 1024>}, {pipeline_mode = #tpu.pipeline_mode<synchronous>, transform_indices = @transform_17, window_bounds = array<i64: 1, 1024>}, {pipeline_mode = #tpu.pipeline_mode<synchronous>, transform_indices = @transform_18, window_bounds = array<i64: 1, 1024>}, {pipeline_mode = #tpu.pipeline_mode<synchronous>, transform_indices = @transform_19, window_bounds = array<i64: 1, 1024>}, {pipeline_mode = #tpu.pipeline_mode<synchronous>, transform_indices = @transform_20, window_bounds = array<i64: 1024, 32>}, {pipeline_mode = #tpu.pipeline_mode<synchronous>, transform_indices = @transform_21, window_bounds = array<i64: 1, 32>}, {pipeline_mode = #tpu.pipeline_mode<synchronous>, transform_indices = @transform_22, window_bounds = array<i64: 1, 32>}, {pipeline_mode = #tpu.pipeline_mode<synchronous>, transform_indices = @transform_23, window_bounds = array<i64: 1, 32>}, {pipeline_mode = #tpu.pipeline_mode<synchronous>, transform_indices = @transform_24, window_bounds = array<i64: 32, 64>}, {pipeline_mode = #tpu.pipeline_mode<synchronous>, transform_indices = @transform_25, window_bounds = array<i64: 1, 64>}, {pipeline_mode = #tpu.pipeline_mode<synchronous>, transform_indices = @transform_26, window_bounds = array<i64: 64, 32>}, {pipeline_mode = #tpu.pipeline_mode<synchronous>, transform_indices = @transform_27, window_bounds = array<i64: 1, 32>}, {pipeline_mode = #tpu.pipeline_mode<synchronous>, transform_indices = @transform_28, window_bounds = array<i64: 1, 32>}, {pipeline_mode = #tpu.pipeline_mode<synchronous>, transform_indices = @transform_29, window_bounds = array<i64: 1, 32>}, {pipeline_mode = #tpu.pipeline_mode<synchronous>, transform_indices = @transform_30, window_bounds = array<i64: 1, 32>}, {pipeline_mode = #tpu.pipeline_mode<synchronous>, transform_indices = @transform_31, window_bounds = array<i64: 1, 32>}, {pipeline_mode = #tpu.pipeline_mode<synchronous>, transform_indices = @transform_32, window_bounds = array<i64: 32, 16>}, {pipeline_mode = #tpu.pipeline_mode<synchronous>, transform_indices = @transform_33, window_bounds = array<i64: 1, 16>}, {pipeline_mode = #tpu.pipeline_mode<synchronous>, transform_indices = @transform_34, window_bounds = array<i64: 16, 1>}, {pipeline_mode = #tpu.pipeline_mode<synchronous>, transform_indices = @transform_35, window_bounds = array<i64: 1, 1>}, {transform_indices = @transform_36, window_bounds = array<i64: 2, 32>}]} {
    %c0 = arith.constant 0 : index
    %c0_0 = arith.constant 0 : index
    %0 = vector.load %arg1[%c0, %c0_0] : memref<8x32xf32, #tpu.memory_space<vmem>>, vector<8x32xf32>
    %c0_1 = arith.constant 0 : index
    %c0_2 = arith.constant 0 : index
    %1 = vector.load %arg2[%c0_1, %c0_2] : memref<8x2xf32, #tpu.memory_space<vmem>>, vector<8x2xf32>
    %c0_3 = arith.constant 0 : index
    %c0_4 = arith.constant 0 : index
    %2 = vector.load %arg5[%c0_3, %c0_4] : memref<2x8xf32, #tpu.memory_space<vmem>>, vector<2x8xf32>
    %cst = arith.constant dense<0.000000e+00> : vector<8x8xf32>
    %3 = tpu.matmul %1, %2, %cst {dimension_numbers = #tpu.dot_dimension_numbers<[1], [0], [0], [1], [0, 0, 1, 1], [], []>} : vector<8x2xf32>, vector<2x8xf32>, vector<8x8xf32> -> vector<8x8xf32>
    %c0_5 = arith.constant 0 : index
    %c0_6 = arith.constant 0 : index
    %4 = vector.load %arg6[%c0_5, %c0_6] : memref<1x8xf32, #tpu.memory_space<vmem>>, vector<1x8xf32>
    %5 = vector.broadcast %4 : vector<1x8xf32> to vector<8x8xf32>
    %6 = arith.addf %3, %5 : vector<8x8xf32>
    %c0_7 = arith.constant 0 : index
    %c0_8 = arith.constant 0 : index
    %7 = vector.load %arg7[%c0_7, %c0_8] : memref<1x8xf32, #tpu.memory_space<vmem>>, vector<1x8xf32>
    %c0_9 = arith.constant 0 : index
    %c0_10 = arith.constant 0 : index
    %8 = vector.load %arg8[%c0_9, %c0_10] : memref<1x8xf32, #tpu.memory_space<vmem>>, vector<1x8xf32>
    %cst_11 = arith.constant dense<0.000000e+00> : vector<8xf32>
    %9 = vector.multi_reduction <add>, %6, %cst_11 [1] : vector<8x8xf32> to vector<8xf32>
    %10 = vector.shape_cast %9 : vector<8xf32> to vector<8x1xf32>
    %cst_12 = arith.constant 8.000000e+00 : f32
    %11 = vector.broadcast %cst_12 : f32 to vector<8x1xf32>
    %12 = arith.divf %10, %11 : vector<8x1xf32>
    %13 = vector.broadcast %12 : vector<8x1xf32> to vector<8x8xf32>
    %14 = arith.subf %6, %13 : vector<8x8xf32>
    %15 = arith.mulf %14, %14 : vector<8x8xf32>
    %cst_13 = arith.constant dense<0.000000e+00> : vector<8xf32>
    %16 = vector.multi_reduction <add>, %15, %cst_13 [1] : vector<8x8xf32> to vector<8xf32>
    %17 = vector.shape_cast %16 : vector<8xf32> to vector<8x1xf32>
    %cst_14 = arith.constant 8.000000e+00 : f32
    %18 = vector.broadcast %cst_14 : f32 to vector<8x1xf32>
    %19 = arith.divf %17, %18 : vector<8x1xf32>
    %cst_15 = arith.constant 9.99999974E-6 : f32
    %20 = vector.broadcast %cst_15 : f32 to vector<8x1xf32>
    %21 = arith.addf %19, %20 : vector<8x1xf32>
    %22 = math.rsqrt %21 : vector<8x1xf32>
    %23 = vector.broadcast %22 : vector<8x1xf32> to vector<8x8xf32>
    %24 = arith.mulf %14, %23 : vector<8x8xf32>
    %25 = vector.broadcast %7 : vector<1x8xf32> to vector<8x8xf32>
    %26 = arith.mulf %24, %25 : vector<8x8xf32>
    %27 = vector.broadcast %8 : vector<1x8xf32> to vector<8x8xf32>
    %28 = arith.addf %26, %27 : vector<8x8xf32>
    %cst_16 = arith.constant 5.000000e-01 : f32
    %29 = vector.broadcast %cst_16 : f32 to vector<8x8xf32>
    %30 = arith.mulf %29, %28 : vector<8x8xf32>
    %cst_17 = arith.constant 0.707106769 : f32
    %31 = vector.broadcast %cst_17 : f32 to vector<8x8xf32>
    %32 = arith.mulf %28, %31 : vector<8x8xf32>
    %33 = math.erf %32 : vector<8x8xf32>
    %cst_18 = arith.constant 1.000000e+00 : f32
    %34 = vector.broadcast %cst_18 : f32 to vector<8x8xf32>
    %35 = arith.addf %34, %33 : vector<8x8xf32>
    %36 = arith.mulf %30, %35 : vector<8x8xf32>
    %c0_19 = arith.constant 0 : index
    %c0_20 = arith.constant 0 : index
    %37 = vector.load %arg9[%c0_19, %c0_20] : memref<8x32xf32, #tpu.memory_space<vmem>>, vector<8x32xf32>
    %cst_21 = arith.constant dense<0.000000e+00> : vector<8x32xf32>
    %38 = tpu.matmul %36, %37, %cst_21 {dimension_numbers = #tpu.dot_dimension_numbers<[1], [0], [0], [1], [0, 0, 1, 1], [], []>} : vector<8x8xf32>, vector<8x32xf32>, vector<8x32xf32> -> vector<8x32xf32>
    %c0_22 = arith.constant 0 : index
    %c0_23 = arith.constant 0 : index
    %39 = vector.load %arg10[%c0_22, %c0_23] : memref<1x32xf32, #tpu.memory_space<vmem>>, vector<1x32xf32>
    %40 = vector.broadcast %39 : vector<1x32xf32> to vector<8x32xf32>
    %41 = arith.addf %38, %40 : vector<8x32xf32>
    %c0_24 = arith.constant 0 : index
    %c0_25 = arith.constant 0 : index
    %42 = vector.load %arg11[%c0_24, %c0_25] : memref<1x32xf32, #tpu.memory_space<vmem>>, vector<1x32xf32>
    %c0_26 = arith.constant 0 : index
    %c0_27 = arith.constant 0 : index
    %43 = vector.load %arg12[%c0_26, %c0_27] : memref<1x32xf32, #tpu.memory_space<vmem>>, vector<1x32xf32>
    %cst_28 = arith.constant dense<0.000000e+00> : vector<8xf32>
    %44 = vector.multi_reduction <add>, %41, %cst_28 [1] : vector<8x32xf32> to vector<8xf32>
    %45 = vector.shape_cast %44 : vector<8xf32> to vector<8x1xf32>
    %cst_29 = arith.constant 3.200000e+01 : f32
    %46 = vector.broadcast %cst_29 : f32 to vector<8x1xf32>
    %47 = arith.divf %45, %46 : vector<8x1xf32>
    %48 = vector.broadcast %47 : vector<8x1xf32> to vector<8x32xf32>
    %49 = arith.subf %41, %48 : vector<8x32xf32>
    %50 = arith.mulf %49, %49 : vector<8x32xf32>
    %cst_30 = arith.constant dense<0.000000e+00> : vector<8xf32>
    %51 = vector.multi_reduction <add>, %50, %cst_30 [1] : vector<8x32xf32> to vector<8xf32>
    %52 = vector.shape_cast %51 : vector<8xf32> to vector<8x1xf32>
    %cst_31 = arith.constant 3.200000e+01 : f32
    %53 = vector.broadcast %cst_31 : f32 to vector<8x1xf32>
    %54 = arith.divf %52, %53 : vector<8x1xf32>
    %cst_32 = arith.constant 9.99999974E-6 : f32
    %55 = vector.broadcast %cst_32 : f32 to vector<8x1xf32>
    %56 = arith.addf %54, %55 : vector<8x1xf32>
    %57 = math.rsqrt %56 : vector<8x1xf32>
    %58 = vector.broadcast %57 : vector<8x1xf32> to vector<8x32xf32>
    %59 = arith.mulf %49, %58 : vector<8x32xf32>
    %60 = vector.broadcast %42 : vector<1x32xf32> to vector<8x32xf32>
    %61 = arith.mulf %59, %60 : vector<8x32xf32>
    %62 = vector.broadcast %43 : vector<1x32xf32> to vector<8x32xf32>
    %63 = arith.addf %61, %62 : vector<8x32xf32>
    %64 = arith.addf %0, %63 : vector<8x32xf32>
    %c0_33 = arith.constant 0 : index
    %c0_34 = arith.constant 0 : index
    %65 = vector.load %arg13[%c0_33, %c0_34] : memref<1x32xf32, #tpu.memory_space<vmem>>, vector<1x32xf32>
    %c0_35 = arith.constant 0 : index
    %c0_36 = arith.constant 0 : index
    %66 = vector.load %arg14[%c0_35, %c0_36] : memref<1x32xf32, #tpu.memory_space<vmem>>, vector<1x32xf32>
    %cst_37 = arith.constant dense<0.000000e+00> : vector<8xf32>
    %67 = vector.multi_reduction <add>, %64, %cst_37 [1] : vector<8x32xf32> to vector<8xf32>
    %68 = vector.shape_cast %67 : vector<8xf32> to vector<8x1xf32>
    %cst_38 = arith.constant 3.200000e+01 : f32
    %69 = vector.broadcast %cst_38 : f32 to vector<8x1xf32>
    %70 = arith.divf %68, %69 : vector<8x1xf32>
    %71 = vector.broadcast %70 : vector<8x1xf32> to vector<8x32xf32>
    %72 = arith.subf %64, %71 : vector<8x32xf32>
    %73 = arith.mulf %72, %72 : vector<8x32xf32>
    %cst_39 = arith.constant dense<0.000000e+00> : vector<8xf32>
    %74 = vector.multi_reduction <add>, %73, %cst_39 [1] : vector<8x32xf32> to vector<8xf32>
    %75 = vector.shape_cast %74 : vector<8xf32> to vector<8x1xf32>
    %cst_40 = arith.constant 3.200000e+01 : f32
    %76 = vector.broadcast %cst_40 : f32 to vector<8x1xf32>
    %77 = arith.divf %75, %76 : vector<8x1xf32>
    %cst_41 = arith.constant 9.99999974E-6 : f32
    %78 = vector.broadcast %cst_41 : f32 to vector<8x1xf32>
    %79 = arith.addf %77, %78 : vector<8x1xf32>
    %80 = math.rsqrt %79 : vector<8x1xf32>
    %81 = vector.broadcast %80 : vector<8x1xf32> to vector<8x32xf32>
    %82 = arith.mulf %72, %81 : vector<8x32xf32>
    %83 = vector.broadcast %65 : vector<1x32xf32> to vector<8x32xf32>
    %84 = arith.mulf %82, %83 : vector<8x32xf32>
    %85 = vector.broadcast %66 : vector<1x32xf32> to vector<8x32xf32>
    %86 = arith.addf %84, %85 : vector<8x32xf32>
    %87 = arith.truncf %86 : vector<8x32xf32> to vector<8x32xbf16>
    %c0_42 = arith.constant 0 : index
    %c0_43 = arith.constant 0 : index
    %88 = vector.load %arg15[%c0_42, %c0_43] : memref<32x1024xbf16, #tpu.memory_space<vmem>>, vector<32x1024xbf16>
    %cst_44 = arith.constant dense<0.000000e+00> : vector<8x1024xf32>
    %89 = tpu.matmul %87, %88, %cst_44 {dimension_numbers = #tpu.dot_dimension_numbers<[1], [0], [0], [1], [0, 0, 1, 1], [], []>} : vector<8x32xbf16>, vector<32x1024xbf16>, vector<8x1024xf32> -> vector<8x1024xf32>
    %c0_45 = arith.constant 0 : index
    %c0_46 = arith.constant 0 : index
    %90 = vector.load %arg18[%c0_45, %c0_46] : memref<1x1024xf32, #tpu.memory_space<vmem>>, vector<1x1024xf32>
    %91 = vector.broadcast %90 : vector<1x1024xf32> to vector<8x1024xf32>
    %92 = arith.addf %89, %91 : vector<8x1024xf32>
    %c0_47 = arith.constant 0 : index
    %c0_48 = arith.constant 0 : index
    %93 = vector.load %arg16[%c0_47, %c0_48] : memref<32x1024xbf16, #tpu.memory_space<vmem>>, vector<32x1024xbf16>
    %cst_49 = arith.constant dense<0.000000e+00> : vector<8x1024xf32>
    %94 = tpu.matmul %87, %93, %cst_49 {dimension_numbers = #tpu.dot_dimension_numbers<[1], [0], [0], [1], [0, 0, 1, 1], [], []>} : vector<8x32xbf16>, vector<32x1024xbf16>, vector<8x1024xf32> -> vector<8x1024xf32>
    %c0_50 = arith.constant 0 : index
    %c0_51 = arith.constant 0 : index
    %95 = vector.load %arg19[%c0_50, %c0_51] : memref<1x1024xf32, #tpu.memory_space<vmem>>, vector<1x1024xf32>
    %96 = vector.broadcast %95 : vector<1x1024xf32> to vector<8x1024xf32>
    %97 = arith.addf %94, %96 : vector<8x1024xf32>
    %c0_52 = arith.constant 0 : index
    %c0_53 = arith.constant 0 : index
    %98 = vector.load %arg17[%c0_52, %c0_53] : memref<32x1024xbf16, #tpu.memory_space<vmem>>, vector<32x1024xbf16>
    %cst_54 = arith.constant dense<0.000000e+00> : vector<8x1024xf32>
    %99 = tpu.matmul %87, %98, %cst_54 {dimension_numbers = #tpu.dot_dimension_numbers<[1], [0], [0], [1], [0, 0, 1, 1], [], []>} : vector<8x32xbf16>, vector<32x1024xbf16>, vector<8x1024xf32> -> vector<8x1024xf32>
    %c0_55 = arith.constant 0 : index
    %c0_56 = arith.constant 0 : index
    %100 = vector.load %arg20[%c0_55, %c0_56] : memref<1x1024xf32, #tpu.memory_space<vmem>>, vector<1x1024xf32>
    %101 = vector.broadcast %100 : vector<1x1024xf32> to vector<8x1024xf32>
    %102 = arith.addf %99, %101 : vector<8x1024xf32>
    %cst_57 = arith.constant 5.000000e-01 : f32
    %103 = vector.broadcast %cst_57 : f32 to vector<8x1024xf32>
    %104 = arith.mulf %92, %103 : vector<8x1024xf32>
    %105 = arith.truncf %104 : vector<8x1024xf32> to vector<8x1024xbf16>
    %106 = arith.truncf %97 : vector<8x1024xf32> to vector<8x1024xbf16>
    %107 = arith.truncf %102 : vector<8x1024xf32> to vector<8x1024xbf16>
    %c0_58 = arith.constant 0 : index
    %c0_59 = arith.constant 0 : index
    %108 = vector.load %arg3[%c0_58, %c0_59] : memref<8x8xf32, #tpu.memory_space<vmem>>, vector<8x8xf32>
    %109 = vector.extract_strided_slice %105 {offsets = [0, 0], sizes = [8, 128], strides = [1, 1]} : vector<8x1024xbf16> to vector<8x128xbf16>
    %110 = vector.extract_strided_slice %106 {offsets = [0, 0], sizes = [8, 128], strides = [1, 1]} : vector<8x1024xbf16> to vector<8x128xbf16>
    %111 = vector.extract_strided_slice %107 {offsets = [0, 0], sizes = [8, 128], strides = [1, 1]} : vector<8x1024xbf16> to vector<8x128xbf16>
    "tpu.trace_start"() <{level = 10 : i32, message = "qf,kf->qk"}> : () -> ()
    %cst_60 = arith.constant dense<0.000000e+00> : vector<8x8xf32>
    %112 = tpu.matmul %109, %110, %cst_60 {dimension_numbers = #tpu.dot_dimension_numbers<[1], [1], [0], [0], [0, 0, 1, 0], [], []>} : vector<8x128xbf16>, vector<8x128xbf16>, vector<8x8xf32> -> vector<8x8xf32>
    "tpu.trace_stop"() : () -> ()
    %113 = arith.addf %112, %108 : vector<8x8xf32>
    %cst_61 = arith.constant dense<0xFF800000> : vector<8xf32>
    %114 = vector.multi_reduction <maximumf>, %113, %cst_61 [1] : vector<8x8xf32> to vector<8xf32>
    %115 = vector.shape_cast %114 : vector<8xf32> to vector<8x1xf32>
    %116 = vector.broadcast %115 : vector<8x1xf32> to vector<8x8xf32>
    %117 = arith.subf %113, %116 : vector<8x8xf32>
    %118 = math.exp %117 : vector<8x8xf32>
    %cst_62 = arith.constant dense<0.000000e+00> : vector<8xf32>
    %119 = vector.multi_reduction <add>, %118, %cst_62 [1] : vector<8x8xf32> to vector<8xf32>
    %120 = vector.shape_cast %119 : vector<8xf32> to vector<8x1xf32>
    %121 = tpu.reciprocal %120 {approx = true} : vector<8x1xf32> -> vector<8x1xf32>
    %122 = vector.broadcast %121 : vector<8x1xf32> to vector<8x8xf32>
    %123 = arith.mulf %118, %122 : vector<8x8xf32>
    %124 = arith.truncf %123 : vector<8x8xf32> to vector<8x8xbf16>
    %cst_63 = arith.constant dense<0.000000e+00> : vector<8x128xf32>
    %125 = tpu.matmul %124, %111, %cst_63 {dimension_numbers = #tpu.dot_dimension_numbers<[1], [0], [0], [1], [0, 0, 1, 1], [], []>} : vector<8x8xbf16>, vector<8x128xbf16>, vector<8x128xf32> -> vector<8x128xf32>
    %126 = arith.truncf %125 : vector<8x128xf32> to vector<8x128xbf16>
    %127 = vector.extract_strided_slice %105 {offsets = [0, 128], sizes = [8, 128], strides = [1, 1]} : vector<8x1024xbf16> to vector<8x128xbf16>
    %128 = vector.extract_strided_slice %106 {offsets = [0, 128], sizes = [8, 128], strides = [1, 1]} : vector<8x1024xbf16> to vector<8x128xbf16>
    %129 = vector.extract_strided_slice %107 {offsets = [0, 128], sizes = [8, 128], strides = [1, 1]} : vector<8x1024xbf16> to vector<8x128xbf16>
    "tpu.trace_start"() <{level = 10 : i32, message = "qf,kf->qk"}> : () -> ()
    %cst_64 = arith.constant dense<0.000000e+00> : vector<8x8xf32>
    %130 = tpu.matmul %127, %128, %cst_64 {dimension_numbers = #tpu.dot_dimension_numbers<[1], [1], [0], [0], [0, 0, 1, 0], [], []>} : vector<8x128xbf16>, vector<8x128xbf16>, vector<8x8xf32> -> vector<8x8xf32>
    "tpu.trace_stop"() : () -> ()
    %131 = arith.addf %130, %108 : vector<8x8xf32>
    %cst_65 = arith.constant dense<0xFF800000> : vector<8xf32>
    %132 = vector.multi_reduction <maximumf>, %131, %cst_65 [1] : vector<8x8xf32> to vector<8xf32>
    %133 = vector.shape_cast %132 : vector<8xf32> to vector<8x1xf32>
    %134 = vector.broadcast %133 : vector<8x1xf32> to vector<8x8xf32>
    %135 = arith.subf %131, %134 : vector<8x8xf32>
    %136 = math.exp %135 : vector<8x8xf32>
    %cst_66 = arith.constant dense<0.000000e+00> : vector<8xf32>
    %137 = vector.multi_reduction <add>, %136, %cst_66 [1] : vector<8x8xf32> to vector<8xf32>
    %138 = vector.shape_cast %137 : vector<8xf32> to vector<8x1xf32>
    %139 = tpu.reciprocal %138 {approx = true} : vector<8x1xf32> -> vector<8x1xf32>
    %140 = vector.broadcast %139 : vector<8x1xf32> to vector<8x8xf32>
    %141 = arith.mulf %136, %140 : vector<8x8xf32>
    %142 = arith.truncf %141 : vector<8x8xf32> to vector<8x8xbf16>
    %cst_67 = arith.constant dense<0.000000e+00> : vector<8x128xf32>
    %143 = tpu.matmul %142, %129, %cst_67 {dimension_numbers = #tpu.dot_dimension_numbers<[1], [0], [0], [1], [0, 0, 1, 1], [], []>} : vector<8x8xbf16>, vector<8x128xbf16>, vector<8x128xf32> -> vector<8x128xf32>
    %144 = arith.truncf %143 : vector<8x128xf32> to vector<8x128xbf16>
    %145 = vector.extract_strided_slice %105 {offsets = [0, 256], sizes = [8, 128], strides = [1, 1]} : vector<8x1024xbf16> to vector<8x128xbf16>
    %146 = vector.extract_strided_slice %106 {offsets = [0, 256], sizes = [8, 128], strides = [1, 1]} : vector<8x1024xbf16> to vector<8x128xbf16>
    %147 = vector.extract_strided_slice %107 {offsets = [0, 256], sizes = [8, 128], strides = [1, 1]} : vector<8x1024xbf16> to vector<8x128xbf16>
    "tpu.trace_start"() <{level = 10 : i32, message = "qf,kf->qk"}> : () -> ()
    %cst_68 = arith.constant dense<0.000000e+00> : vector<8x8xf32>
    %148 = tpu.matmul %145, %146, %cst_68 {dimension_numbers = #tpu.dot_dimension_numbers<[1], [1], [0], [0], [0, 0, 1, 0], [], []>} : vector<8x128xbf16>, vector<8x128xbf16>, vector<8x8xf32> -> vector<8x8xf32>
    "tpu.trace_stop"() : () -> ()
    %149 = arith.addf %148, %108 : vector<8x8xf32>
    %cst_69 = arith.constant dense<0xFF800000> : vector<8xf32>
    %150 = vector.multi_reduction <maximumf>, %149, %cst_69 [1] : vector<8x8xf32> to vector<8xf32>
    %151 = vector.shape_cast %150 : vector<8xf32> to vector<8x1xf32>
    %152 = vector.broadcast %151 : vector<8x1xf32> to vector<8x8xf32>
    %153 = arith.subf %149, %152 : vector<8x8xf32>
    %154 = math.exp %153 : vector<8x8xf32>
    %cst_70 = arith.constant dense<0.000000e+00> : vector<8xf32>
    %155 = vector.multi_reduction <add>, %154, %cst_70 [1] : vector<8x8xf32> to vector<8xf32>
    %156 = vector.shape_cast %155 : vector<8xf32> to vector<8x1xf32>
    %157 = tpu.reciprocal %156 {approx = true} : vector<8x1xf32> -> vector<8x1xf32>
    %158 = vector.broadcast %157 : vector<8x1xf32> to vector<8x8xf32>
    %159 = arith.mulf %154, %158 : vector<8x8xf32>
    %160 = arith.truncf %159 : vector<8x8xf32> to vector<8x8xbf16>
    %cst_71 = arith.constant dense<0.000000e+00> : vector<8x128xf32>
    %161 = tpu.matmul %160, %147, %cst_71 {dimension_numbers = #tpu.dot_dimension_numbers<[1], [0], [0], [1], [0, 0, 1, 1], [], []>} : vector<8x8xbf16>, vector<8x128xbf16>, vector<8x128xf32> -> vector<8x128xf32>
    %162 = arith.truncf %161 : vector<8x128xf32> to vector<8x128xbf16>
    %163 = vector.extract_strided_slice %105 {offsets = [0, 384], sizes = [8, 128], strides = [1, 1]} : vector<8x1024xbf16> to vector<8x128xbf16>
    %164 = vector.extract_strided_slice %106 {offsets = [0, 384], sizes = [8, 128], strides = [1, 1]} : vector<8x1024xbf16> to vector<8x128xbf16>
    %165 = vector.extract_strided_slice %107 {offsets = [0, 384], sizes = [8, 128], strides = [1, 1]} : vector<8x1024xbf16> to vector<8x128xbf16>
    "tpu.trace_start"() <{level = 10 : i32, message = "qf,kf->qk"}> : () -> ()
    %cst_72 = arith.constant dense<0.000000e+00> : vector<8x8xf32>
    %166 = tpu.matmul %163, %164, %cst_72 {dimension_numbers = #tpu.dot_dimension_numbers<[1], [1], [0], [0], [0, 0, 1, 0], [], []>} : vector<8x128xbf16>, vector<8x128xbf16>, vector<8x8xf32> -> vector<8x8xf32>
    "tpu.trace_stop"() : () -> ()
    %167 = arith.addf %166, %108 : vector<8x8xf32>
    %cst_73 = arith.constant dense<0xFF800000> : vector<8xf32>
    %168 = vector.multi_reduction <maximumf>, %167, %cst_73 [1] : vector<8x8xf32> to vector<8xf32>
    %169 = vector.shape_cast %168 : vector<8xf32> to vector<8x1xf32>
    %170 = vector.broadcast %169 : vector<8x1xf32> to vector<8x8xf32>
    %171 = arith.subf %167, %170 : vector<8x8xf32>
    %172 = math.exp %171 : vector<8x8xf32>
    %cst_74 = arith.constant dense<0.000000e+00> : vector<8xf32>
    %173 = vector.multi_reduction <add>, %172, %cst_74 [1] : vector<8x8xf32> to vector<8xf32>
    %174 = vector.shape_cast %173 : vector<8xf32> to vector<8x1xf32>
    %175 = tpu.reciprocal %174 {approx = true} : vector<8x1xf32> -> vector<8x1xf32>
    %176 = vector.broadcast %175 : vector<8x1xf32> to vector<8x8xf32>
    %177 = arith.mulf %172, %176 : vector<8x8xf32>
    %178 = arith.truncf %177 : vector<8x8xf32> to vector<8x8xbf16>
    %cst_75 = arith.constant dense<0.000000e+00> : vector<8x128xf32>
    %179 = tpu.matmul %178, %165, %cst_75 {dimension_numbers = #tpu.dot_dimension_numbers<[1], [0], [0], [1], [0, 0, 1, 1], [], []>} : vector<8x8xbf16>, vector<8x128xbf16>, vector<8x128xf32> -> vector<8x128xf32>
    %180 = arith.truncf %179 : vector<8x128xf32> to vector<8x128xbf16>
    %181 = vector.extract_strided_slice %105 {offsets = [0, 512], sizes = [8, 128], strides = [1, 1]} : vector<8x1024xbf16> to vector<8x128xbf16>
    %182 = vector.extract_strided_slice %106 {offsets = [0, 512], sizes = [8, 128], strides = [1, 1]} : vector<8x1024xbf16> to vector<8x128xbf16>
    %183 = vector.extract_strided_slice %107 {offsets = [0, 512], sizes = [8, 128], strides = [1, 1]} : vector<8x1024xbf16> to vector<8x128xbf16>
    "tpu.trace_start"() <{level = 10 : i32, message = "qf,kf->qk"}> : () -> ()
    %cst_76 = arith.constant dense<0.000000e+00> : vector<8x8xf32>
    %184 = tpu.matmul %181, %182, %cst_76 {dimension_numbers = #tpu.dot_dimension_numbers<[1], [1], [0], [0], [0, 0, 1, 0], [], []>} : vector<8x128xbf16>, vector<8x128xbf16>, vector<8x8xf32> -> vector<8x8xf32>
    "tpu.trace_stop"() : () -> ()
    %185 = arith.addf %184, %108 : vector<8x8xf32>
    %cst_77 = arith.constant dense<0xFF800000> : vector<8xf32>
    %186 = vector.multi_reduction <maximumf>, %185, %cst_77 [1] : vector<8x8xf32> to vector<8xf32>
    %187 = vector.shape_cast %186 : vector<8xf32> to vector<8x1xf32>
    %188 = vector.broadcast %187 : vector<8x1xf32> to vector<8x8xf32>
    %189 = arith.subf %185, %188 : vector<8x8xf32>
    %190 = math.exp %189 : vector<8x8xf32>
    %cst_78 = arith.constant dense<0.000000e+00> : vector<8xf32>
    %191 = vector.multi_reduction <add>, %190, %cst_78 [1] : vector<8x8xf32> to vector<8xf32>
    %192 = vector.shape_cast %191 : vector<8xf32> to vector<8x1xf32>
    %193 = tpu.reciprocal %192 {approx = true} : vector<8x1xf32> -> vector<8x1xf32>
    %194 = vector.broadcast %193 : vector<8x1xf32> to vector<8x8xf32>
    %195 = arith.mulf %190, %194 : vector<8x8xf32>
    %196 = arith.truncf %195 : vector<8x8xf32> to vector<8x8xbf16>
    %cst_79 = arith.constant dense<0.000000e+00> : vector<8x128xf32>
    %197 = tpu.matmul %196, %183, %cst_79 {dimension_numbers = #tpu.dot_dimension_numbers<[1], [0], [0], [1], [0, 0, 1, 1], [], []>} : vector<8x8xbf16>, vector<8x128xbf16>, vector<8x128xf32> -> vector<8x128xf32>
    %198 = arith.truncf %197 : vector<8x128xf32> to vector<8x128xbf16>
    %199 = vector.extract_strided_slice %105 {offsets = [0, 640], sizes = [8, 128], strides = [1, 1]} : vector<8x1024xbf16> to vector<8x128xbf16>
    %200 = vector.extract_strided_slice %106 {offsets = [0, 640], sizes = [8, 128], strides = [1, 1]} : vector<8x1024xbf16> to vector<8x128xbf16>
    %201 = vector.extract_strided_slice %107 {offsets = [0, 640], sizes = [8, 128], strides = [1, 1]} : vector<8x1024xbf16> to vector<8x128xbf16>
    "tpu.trace_start"() <{level = 10 : i32, message = "qf,kf->qk"}> : () -> ()
    %cst_80 = arith.constant dense<0.000000e+00> : vector<8x8xf32>
    %202 = tpu.matmul %199, %200, %cst_80 {dimension_numbers = #tpu.dot_dimension_numbers<[1], [1], [0], [0], [0, 0, 1, 0], [], []>} : vector<8x128xbf16>, vector<8x128xbf16>, vector<8x8xf32> -> vector<8x8xf32>
    "tpu.trace_stop"() : () -> ()
    %203 = arith.addf %202, %108 : vector<8x8xf32>
    %cst_81 = arith.constant dense<0xFF800000> : vector<8xf32>
    %204 = vector.multi_reduction <maximumf>, %203, %cst_81 [1] : vector<8x8xf32> to vector<8xf32>
    %205 = vector.shape_cast %204 : vector<8xf32> to vector<8x1xf32>
    %206 = vector.broadcast %205 : vector<8x1xf32> to vector<8x8xf32>
    %207 = arith.subf %203, %206 : vector<8x8xf32>
    %208 = math.exp %207 : vector<8x8xf32>
    %cst_82 = arith.constant dense<0.000000e+00> : vector<8xf32>
    %209 = vector.multi_reduction <add>, %208, %cst_82 [1] : vector<8x8xf32> to vector<8xf32>
    %210 = vector.shape_cast %209 : vector<8xf32> to vector<8x1xf32>
    %211 = tpu.reciprocal %210 {approx = true} : vector<8x1xf32> -> vector<8x1xf32>
    %212 = vector.broadcast %211 : vector<8x1xf32> to vector<8x8xf32>
    %213 = arith.mulf %208, %212 : vector<8x8xf32>
    %214 = arith.truncf %213 : vector<8x8xf32> to vector<8x8xbf16>
    %cst_83 = arith.constant dense<0.000000e+00> : vector<8x128xf32>
    %215 = tpu.matmul %214, %201, %cst_83 {dimension_numbers = #tpu.dot_dimension_numbers<[1], [0], [0], [1], [0, 0, 1, 1], [], []>} : vector<8x8xbf16>, vector<8x128xbf16>, vector<8x128xf32> -> vector<8x128xf32>
    %216 = arith.truncf %215 : vector<8x128xf32> to vector<8x128xbf16>
    %217 = vector.extract_strided_slice %105 {offsets = [0, 768], sizes = [8, 128], strides = [1, 1]} : vector<8x1024xbf16> to vector<8x128xbf16>
    %218 = vector.extract_strided_slice %106 {offsets = [0, 768], sizes = [8, 128], strides = [1, 1]} : vector<8x1024xbf16> to vector<8x128xbf16>
    %219 = vector.extract_strided_slice %107 {offsets = [0, 768], sizes = [8, 128], strides = [1, 1]} : vector<8x1024xbf16> to vector<8x128xbf16>
    "tpu.trace_start"() <{level = 10 : i32, message = "qf,kf->qk"}> : () -> ()
    %cst_84 = arith.constant dense<0.000000e+00> : vector<8x8xf32>
    %220 = tpu.matmul %217, %218, %cst_84 {dimension_numbers = #tpu.dot_dimension_numbers<[1], [1], [0], [0], [0, 0, 1, 0], [], []>} : vector<8x128xbf16>, vector<8x128xbf16>, vector<8x8xf32> -> vector<8x8xf32>
    "tpu.trace_stop"() : () -> ()
    %221 = arith.addf %220, %108 : vector<8x8xf32>
    %cst_85 = arith.constant dense<0xFF800000> : vector<8xf32>
    %222 = vector.multi_reduction <maximumf>, %221, %cst_85 [1] : vector<8x8xf32> to vector<8xf32>
    %223 = vector.shape_cast %222 : vector<8xf32> to vector<8x1xf32>
    %224 = vector.broadcast %223 : vector<8x1xf32> to vector<8x8xf32>
    %225 = arith.subf %221, %224 : vector<8x8xf32>
    %226 = math.exp %225 : vector<8x8xf32>
    %cst_86 = arith.constant dense<0.000000e+00> : vector<8xf32>
    %227 = vector.multi_reduction <add>, %226, %cst_86 [1] : vector<8x8xf32> to vector<8xf32>
    %228 = vector.shape_cast %227 : vector<8xf32> to vector<8x1xf32>
    %229 = tpu.reciprocal %228 {approx = true} : vector<8x1xf32> -> vector<8x1xf32>
    %230 = vector.broadcast %229 : vector<8x1xf32> to vector<8x8xf32>
    %231 = arith.mulf %226, %230 : vector<8x8xf32>
    %232 = arith.truncf %231 : vector<8x8xf32> to vector<8x8xbf16>
    %cst_87 = arith.constant dense<0.000000e+00> : vector<8x128xf32>
    %233 = tpu.matmul %232, %219, %cst_87 {dimension_numbers = #tpu.dot_dimension_numbers<[1], [0], [0], [1], [0, 0, 1, 1], [], []>} : vector<8x8xbf16>, vector<8x128xbf16>, vector<8x128xf32> -> vector<8x128xf32>
    %234 = arith.truncf %233 : vector<8x128xf32> to vector<8x128xbf16>
    %235 = vector.extract_strided_slice %105 {offsets = [0, 896], sizes = [8, 128], strides = [1, 1]} : vector<8x1024xbf16> to vector<8x128xbf16>
    %236 = vector.extract_strided_slice %106 {offsets = [0, 896], sizes = [8, 128], strides = [1, 1]} : vector<8x1024xbf16> to vector<8x128xbf16>
    %237 = vector.extract_strided_slice %107 {offsets = [0, 896], sizes = [8, 128], strides = [1, 1]} : vector<8x1024xbf16> to vector<8x128xbf16>
    "tpu.trace_start"() <{level = 10 : i32, message = "qf,kf->qk"}> : () -> ()
    %cst_88 = arith.constant dense<0.000000e+00> : vector<8x8xf32>
    %238 = tpu.matmul %235, %236, %cst_88 {dimension_numbers = #tpu.dot_dimension_numbers<[1], [1], [0], [0], [0, 0, 1, 0], [], []>} : vector<8x128xbf16>, vector<8x128xbf16>, vector<8x8xf32> -> vector<8x8xf32>
    "tpu.trace_stop"() : () -> ()
    %239 = arith.addf %238, %108 : vector<8x8xf32>
    %cst_89 = arith.constant dense<0xFF800000> : vector<8xf32>
    %240 = vector.multi_reduction <maximumf>, %239, %cst_89 [1] : vector<8x8xf32> to vector<8xf32>
    %241 = vector.shape_cast %240 : vector<8xf32> to vector<8x1xf32>
    %242 = vector.broadcast %241 : vector<8x1xf32> to vector<8x8xf32>
    %243 = arith.subf %239, %242 : vector<8x8xf32>
    %244 = math.exp %243 : vector<8x8xf32>
    %cst_90 = arith.constant dense<0.000000e+00> : vector<8xf32>
    %245 = vector.multi_reduction <add>, %244, %cst_90 [1] : vector<8x8xf32> to vector<8xf32>
    %246 = vector.shape_cast %245 : vector<8xf32> to vector<8x1xf32>
    %247 = tpu.reciprocal %246 {approx = true} : vector<8x1xf32> -> vector<8x1xf32>
    %248 = vector.broadcast %247 : vector<8x1xf32> to vector<8x8xf32>
    %249 = arith.mulf %244, %248 : vector<8x8xf32>
    %250 = arith.truncf %249 : vector<8x8xf32> to vector<8x8xbf16>
    %cst_91 = arith.constant dense<0.000000e+00> : vector<8x128xf32>
    %251 = tpu.matmul %250, %237, %cst_91 {dimension_numbers = #tpu.dot_dimension_numbers<[1], [0], [0], [1], [0, 0, 1, 1], [], []>} : vector<8x8xbf16>, vector<8x128xbf16>, vector<8x128xf32> -> vector<8x128xf32>
    %252 = arith.truncf %251 : vector<8x128xf32> to vector<8x128xbf16>
    %253 = tpu.concatenate %126, %144, %162, %180, %198, %216, %234, %252 in 1 : vector<8x128xbf16>, vector<8x128xbf16>, vector<8x128xbf16>, vector<8x128xbf16>, vector<8x128xbf16>, vector<8x128xbf16>, vector<8x128xbf16>, vector<8x128xbf16> -> vector<8x1024xbf16>
    %c0_92 = arith.constant 0 : index
    %c0_93 = arith.constant 0 : index
    %254 = vector.load %arg21[%c0_92, %c0_93] : memref<1024x32xbf16, #tpu.memory_space<vmem>>, vector<1024x32xbf16>
    %cst_94 = arith.constant dense<0.000000e+00> : vector<8x32xf32>
    %255 = tpu.matmul %253, %254, %cst_94 {dimension_numbers = #tpu.dot_dimension_numbers<[1], [0], [0], [1], [0, 0, 1, 1], [], []>} : vector<8x1024xbf16>, vector<1024x32xbf16>, vector<8x32xf32> -> vector<8x32xf32>
    %c0_95 = arith.constant 0 : index
    %c0_96 = arith.constant 0 : index
    %256 = vector.load %arg22[%c0_95, %c0_96] : memref<1x32xf32, #tpu.memory_space<vmem>>, vector<1x32xf32>
    %257 = vector.broadcast %256 : vector<1x32xf32> to vector<8x32xf32>
    %258 = arith.addf %255, %257 : vector<8x32xf32>
    %259 = arith.addf %86, %258 : vector<8x32xf32>
    %c0_97 = arith.constant 0 : index
    %c0_98 = arith.constant 0 : index
    %260 = vector.load %arg23[%c0_97, %c0_98] : memref<1x32xf32, #tpu.memory_space<vmem>>, vector<1x32xf32>
    %c0_99 = arith.constant 0 : index
    %c0_100 = arith.constant 0 : index
    %261 = vector.load %arg24[%c0_99, %c0_100] : memref<1x32xf32, #tpu.memory_space<vmem>>, vector<1x32xf32>
    %cst_101 = arith.constant dense<0.000000e+00> : vector<8xf32>
    %262 = vector.multi_reduction <add>, %259, %cst_101 [1] : vector<8x32xf32> to vector<8xf32>
    %263 = vector.shape_cast %262 : vector<8xf32> to vector<8x1xf32>
    %cst_102 = arith.constant 3.200000e+01 : f32
    %264 = vector.broadcast %cst_102 : f32 to vector<8x1xf32>
    %265 = arith.divf %263, %264 : vector<8x1xf32>
    %266 = vector.broadcast %265 : vector<8x1xf32> to vector<8x32xf32>
    %267 = arith.subf %259, %266 : vector<8x32xf32>
    %268 = arith.mulf %267, %267 : vector<8x32xf32>
    %cst_103 = arith.constant dense<0.000000e+00> : vector<8xf32>
    %269 = vector.multi_reduction <add>, %268, %cst_103 [1] : vector<8x32xf32> to vector<8xf32>
    %270 = vector.shape_cast %269 : vector<8xf32> to vector<8x1xf32>
    %cst_104 = arith.constant 3.200000e+01 : f32
    %271 = vector.broadcast %cst_104 : f32 to vector<8x1xf32>
    %272 = arith.divf %270, %271 : vector<8x1xf32>
    %cst_105 = arith.constant 9.99999974E-6 : f32
    %273 = vector.broadcast %cst_105 : f32 to vector<8x1xf32>
    %274 = arith.addf %272, %273 : vector<8x1xf32>
    %275 = math.rsqrt %274 : vector<8x1xf32>
    %276 = vector.broadcast %275 : vector<8x1xf32> to vector<8x32xf32>
    %277 = arith.mulf %267, %276 : vector<8x32xf32>
    %278 = vector.broadcast %260 : vector<1x32xf32> to vector<8x32xf32>
    %279 = arith.mulf %277, %278 : vector<8x32xf32>
    %280 = vector.broadcast %261 : vector<1x32xf32> to vector<8x32xf32>
    %281 = arith.addf %279, %280 : vector<8x32xf32>
    %282 = arith.truncf %281 : vector<8x32xf32> to vector<8x32xbf16>
    %c0_106 = arith.constant 0 : index
    %c0_107 = arith.constant 0 : index
    %283 = vector.load %arg25[%c0_106, %c0_107] : memref<32x64xbf16, #tpu.memory_space<vmem>>, vector<32x64xbf16>
    %cst_108 = arith.constant dense<0.000000e+00> : vector<8x64xf32>
    %284 = tpu.matmul %282, %283, %cst_108 {dimension_numbers = #tpu.dot_dimension_numbers<[1], [0], [0], [1], [0, 0, 1, 1], [], []>} : vector<8x32xbf16>, vector<32x64xbf16>, vector<8x64xf32> -> vector<8x64xf32>
    %c0_109 = arith.constant 0 : index
    %c0_110 = arith.constant 0 : index
    %285 = vector.load %arg26[%c0_109, %c0_110] : memref<1x64xf32, #tpu.memory_space<vmem>>, vector<1x64xf32>
    %286 = vector.broadcast %285 : vector<1x64xf32> to vector<8x64xf32>
    %287 = arith.addf %284, %286 : vector<8x64xf32>
    %cst_111 = arith.constant 5.000000e-01 : f32
    %288 = vector.broadcast %cst_111 : f32 to vector<8x64xf32>
    %289 = arith.mulf %288, %287 : vector<8x64xf32>
    %cst_112 = arith.constant 0.707106769 : f32
    %290 = vector.broadcast %cst_112 : f32 to vector<8x64xf32>
    %291 = arith.mulf %287, %290 : vector<8x64xf32>
    %292 = math.erf %291 : vector<8x64xf32>
    %cst_113 = arith.constant 1.000000e+00 : f32
    %293 = vector.broadcast %cst_113 : f32 to vector<8x64xf32>
    %294 = arith.addf %293, %292 : vector<8x64xf32>
    %295 = arith.mulf %289, %294 : vector<8x64xf32>
    %296 = arith.truncf %295 : vector<8x64xf32> to vector<8x64xbf16>
    %c0_114 = arith.constant 0 : index
    %c0_115 = arith.constant 0 : index
    %297 = vector.load %arg27[%c0_114, %c0_115] : memref<64x32xbf16, #tpu.memory_space<vmem>>, vector<64x32xbf16>
    %cst_116 = arith.constant dense<0.000000e+00> : vector<8x32xf32>
    %298 = tpu.matmul %296, %297, %cst_116 {dimension_numbers = #tpu.dot_dimension_numbers<[1], [0], [0], [1], [0, 0, 1, 1], [], []>} : vector<8x64xbf16>, vector<64x32xbf16>, vector<8x32xf32> -> vector<8x32xf32>
    %c0_117 = arith.constant 0 : index
    %c0_118 = arith.constant 0 : index
    %299 = vector.load %arg28[%c0_117, %c0_118] : memref<1x32xf32, #tpu.memory_space<vmem>>, vector<1x32xf32>
    %300 = vector.broadcast %299 : vector<1x32xf32> to vector<8x32xf32>
    %301 = arith.addf %298, %300 : vector<8x32xf32>
    %c0_119 = arith.constant 0 : index
    %c0_120 = arith.constant 0 : index
    %302 = vector.load %arg29[%c0_119, %c0_120] : memref<1x32xf32, #tpu.memory_space<vmem>>, vector<1x32xf32>
    %c0_121 = arith.constant 0 : index
    %c0_122 = arith.constant 0 : index
    %303 = vector.load %arg30[%c0_121, %c0_122] : memref<1x32xf32, #tpu.memory_space<vmem>>, vector<1x32xf32>
    %cst_123 = arith.constant dense<0.000000e+00> : vector<8xf32>
    %304 = vector.multi_reduction <add>, %301, %cst_123 [1] : vector<8x32xf32> to vector<8xf32>
    %305 = vector.shape_cast %304 : vector<8xf32> to vector<8x1xf32>
    %cst_124 = arith.constant 3.200000e+01 : f32
    %306 = vector.broadcast %cst_124 : f32 to vector<8x1xf32>
    %307 = arith.divf %305, %306 : vector<8x1xf32>
    %308 = vector.broadcast %307 : vector<8x1xf32> to vector<8x32xf32>
    %309 = arith.subf %301, %308 : vector<8x32xf32>
    %310 = arith.mulf %309, %309 : vector<8x32xf32>
    %cst_125 = arith.constant dense<0.000000e+00> : vector<8xf32>
    %311 = vector.multi_reduction <add>, %310, %cst_125 [1] : vector<8x32xf32> to vector<8xf32>
    %312 = vector.shape_cast %311 : vector<8xf32> to vector<8x1xf32>
    %cst_126 = arith.constant 3.200000e+01 : f32
    %313 = vector.broadcast %cst_126 : f32 to vector<8x1xf32>
    %314 = arith.divf %312, %313 : vector<8x1xf32>
    %cst_127 = arith.constant 9.99999974E-6 : f32
    %315 = vector.broadcast %cst_127 : f32 to vector<8x1xf32>
    %316 = arith.addf %314, %315 : vector<8x1xf32>
    %317 = math.rsqrt %316 : vector<8x1xf32>
    %318 = vector.broadcast %317 : vector<8x1xf32> to vector<8x32xf32>
    %319 = arith.mulf %309, %318 : vector<8x32xf32>
    %320 = vector.broadcast %302 : vector<1x32xf32> to vector<8x32xf32>
    %321 = arith.mulf %319, %320 : vector<8x32xf32>
    %322 = vector.broadcast %303 : vector<1x32xf32> to vector<8x32xf32>
    %323 = arith.addf %321, %322 : vector<8x32xf32>
    %324 = arith.addf %281, %323 : vector<8x32xf32>
    %c0_128 = arith.constant 0 : index
    %c0_129 = arith.constant 0 : index
    %325 = vector.load %arg31[%c0_128, %c0_129] : memref<1x32xf32, #tpu.memory_space<vmem>>, vector<1x32xf32>
    %c0_130 = arith.constant 0 : index
    %c0_131 = arith.constant 0 : index
    %326 = vector.load %arg32[%c0_130, %c0_131] : memref<1x32xf32, #tpu.memory_space<vmem>>, vector<1x32xf32>
    %cst_132 = arith.constant dense<0.000000e+00> : vector<8xf32>
    %327 = vector.multi_reduction <add>, %324, %cst_132 [1] : vector<8x32xf32> to vector<8xf32>
    %328 = vector.shape_cast %327 : vector<8xf32> to vector<8x1xf32>
    %cst_133 = arith.constant 3.200000e+01 : f32
    %329 = vector.broadcast %cst_133 : f32 to vector<8x1xf32>
    %330 = arith.divf %328, %329 : vector<8x1xf32>
    %331 = vector.broadcast %330 : vector<8x1xf32> to vector<8x32xf32>
    %332 = arith.subf %324, %331 : vector<8x32xf32>
    %333 = arith.mulf %332, %332 : vector<8x32xf32>
    %cst_134 = arith.constant dense<0.000000e+00> : vector<8xf32>
    %334 = vector.multi_reduction <add>, %333, %cst_134 [1] : vector<8x32xf32> to vector<8xf32>
    %335 = vector.shape_cast %334 : vector<8xf32> to vector<8x1xf32>
    %cst_135 = arith.constant 3.200000e+01 : f32
    %336 = vector.broadcast %cst_135 : f32 to vector<8x1xf32>
    %337 = arith.divf %335, %336 : vector<8x1xf32>
    %cst_136 = arith.constant 9.99999974E-6 : f32
    %338 = vector.broadcast %cst_136 : f32 to vector<8x1xf32>
    %339 = arith.addf %337, %338 : vector<8x1xf32>
    %340 = math.rsqrt %339 : vector<8x1xf32>
    %341 = vector.broadcast %340 : vector<8x1xf32> to vector<8x32xf32>
    %342 = arith.mulf %332, %341 : vector<8x32xf32>
    %343 = vector.broadcast %325 : vector<1x32xf32> to vector<8x32xf32>
    %344 = arith.mulf %342, %343 : vector<8x32xf32>
    %345 = vector.broadcast %326 : vector<1x32xf32> to vector<8x32xf32>
    %346 = arith.addf %344, %345 : vector<8x32xf32>
    %347 = arith.truncf %346 : vector<8x32xf32> to vector<8x32xbf16>
    %c0_137 = arith.constant 0 : index
    %c0_138 = arith.constant 0 : index
    %348 = vector.load %arg33[%c0_137, %c0_138] : memref<32x16xbf16, #tpu.memory_space<vmem>>, vector<32x16xbf16>
    %cst_139 = arith.constant dense<0.000000e+00> : vector<8x16xf32>
    %349 = tpu.matmul %347, %348, %cst_139 {dimension_numbers = #tpu.dot_dimension_numbers<[1], [0], [0], [1], [0, 0, 1, 1], [], []>} : vector<8x32xbf16>, vector<32x16xbf16>, vector<8x16xf32> -> vector<8x16xf32>
    %c0_140 = arith.constant 0 : index
    %c0_141 = arith.constant 0 : index
    %350 = vector.load %arg34[%c0_140, %c0_141] : memref<1x16xf32, #tpu.memory_space<vmem>>, vector<1x16xf32>
    %351 = vector.broadcast %350 : vector<1x16xf32> to vector<8x16xf32>
    %352 = arith.addf %349, %351 : vector<8x16xf32>
    %cst_142 = arith.constant 5.000000e-01 : f32
    %353 = vector.broadcast %cst_142 : f32 to vector<8x16xf32>
    %354 = arith.mulf %353, %352 : vector<8x16xf32>
    %cst_143 = arith.constant 0.707106769 : f32
    %355 = vector.broadcast %cst_143 : f32 to vector<8x16xf32>
    %356 = arith.mulf %352, %355 : vector<8x16xf32>
    %357 = math.erf %356 : vector<8x16xf32>
    %cst_144 = arith.constant 1.000000e+00 : f32
    %358 = vector.broadcast %cst_144 : f32 to vector<8x16xf32>
    %359 = arith.addf %358, %357 : vector<8x16xf32>
    %360 = arith.mulf %354, %359 : vector<8x16xf32>
    %c0_145 = arith.constant 0 : index
    %c0_146 = arith.constant 0 : index
    %361 = vector.load %arg35[%c0_145, %c0_146] : memref<16x1xf32, #tpu.memory_space<vmem>>, vector<16x1xf32>
    %cst_147 = arith.constant dense<0.000000e+00> : vector<8x1xf32>
    %362 = tpu.matmul %360, %361, %cst_147 {dimension_numbers = #tpu.dot_dimension_numbers<[1], [0], [0], [1], [0, 0, 1, 1], [], []>} : vector<8x16xf32>, vector<16x1xf32>, vector<8x1xf32> -> vector<8x1xf32>
    %c0_148 = arith.constant 0 : index
    %c0_149 = arith.constant 0 : index
    %363 = vector.load %arg36[%c0_148, %c0_149] : memref<1x1xf32, #tpu.memory_space<vmem>>, vector<1x1xf32>
    %364 = vector.broadcast %363 : vector<1x1xf32> to vector<8x1xf32>
    %365 = arith.addf %362, %364 : vector<8x1xf32>
    %366 = arith.negf %365 : vector<8x1xf32>
    %367 = math.exp %366 : vector<8x1xf32>
    %cst_150 = arith.constant 1.000000e+00 : f32
    %368 = vector.broadcast %cst_150 : f32 to vector<8x1xf32>
    %369 = arith.addf %368, %367 : vector<8x1xf32>
    %370 = arith.divf %368, %369 : vector<8x1xf32>
    %371 = math.exp %370 : vector<8x1xf32>
    %c0_151 = arith.constant 0 : index
    %c0_152 = arith.constant 0 : index
    %372 = vector.load %arg4[%c0_151, %c0_152] : memref<2x8xbf16, #tpu.memory_space<vmem>>, vector<2x8xbf16>
    %373 = vector.broadcast %371 : vector<8x1xf32> to vector<8x32xf32>
    %374 = arith.mulf %373, %346 : vector<8x32xf32>
    %375 = arith.truncf %374 : vector<8x32xf32> to vector<8x32xbf16>
    %cst_153 = arith.constant dense<0.000000e+00> : vector<2x32xf32>
    %376 = tpu.matmul %372, %375, %cst_153 {dimension_numbers = #tpu.dot_dimension_numbers<[1], [0], [0], [1], [0, 0, 1, 1], [], []>} : vector<2x8xbf16>, vector<8x32xbf16>, vector<2x32xf32> -> vector<2x32xf32>
    %377 = arith.truncf %371 : vector<8x1xf32> to vector<8x1xbf16>
    %cst_154 = arith.constant dense<0.000000e+00> : vector<2x1xf32>
    %378 = tpu.matmul %372, %377, %cst_154 {dimension_numbers = #tpu.dot_dimension_numbers<[1], [0], [0], [1], [0, 0, 1, 1], [], []>} : vector<2x8xbf16>, vector<8x1xbf16>, vector<2x1xf32> -> vector<2x1xf32>
    %cst_155 = arith.constant 1.000000e+00 : f32
    %379 = vector.broadcast %cst_155 : f32 to vector<2x1xf32>
    %380 = arith.divf %379, %378 : vector<2x1xf32>
    %381 = vector.broadcast %380 : vector<2x1xf32> to vector<2x32xf32>
    %382 = arith.mulf %376, %381 : vector<2x32xf32>
    %c0_156 = arith.constant 0 : index
    %c0_157 = arith.constant 0 : index
    %383 = vector.load %arg37[%c0_156, %c0_157] : memref<2x32xf32, #tpu.memory_space<vmem>>, vector<2x32xf32>
    tpu.vector_store %arg37[%c0_156, %c0_157], %382 {strides = array<i32>} : memref<2x32xf32, #tpu.memory_space<vmem>>, vector<2x32xf32>,
    return
  }
  func.func @transform_0(%arg0: i32) -> (i32, i32) {
    %c0_i32 = arith.constant 0 : i32
    %c0_i32_0 = arith.constant 0 : i32
    return %arg0, %c0_i32 : i32, i32
  }
  func.func @transform_1(%arg0: i32) -> (i32, i32) {
    %c0_i32 = arith.constant 0 : i32
    %c0_i32_0 = arith.constant 0 : i32
    return %arg0, %c0_i32 : i32, i32
  }
  func.func @transform_2(%arg0: i32) -> (i32, i32) {
    %c0_i32 = arith.constant 0 : i32
    %c0_i32_0 = arith.constant 0 : i32
    %c0_i32_1 = arith.constant 0 : i32
    return %c0_i32, %c0_i32_0 : i32, i32
  }
  func.func @transform_3(%arg0: i32) -> (i32, i32) {
    %c0_i32 = arith.constant 0 : i32
    %c0_i32_0 = arith.constant 0 : i32
    %c0_i32_1 = arith.constant 0 : i32
    return %c0_i32, %c0_i32_0 : i32, i32
  }
  func.func @transform_4(%arg0: i32) -> (i32, i32) {
    %c0_i32 = arith.constant 0 : i32
    %c0_i32_0 = arith.constant 0 : i32
    %c0_i32_1 = arith.constant 0 : i32
    return %c0_i32, %c0_i32_0 : i32, i32
  }
  func.func @transform_5(%arg0: i32) -> (i32, i32) {
    %c0_i32 = arith.constant 0 : i32
    %c0_i32_0 = arith.constant 0 : i32
    %c0_i32_1 = arith.constant 0 : i32
    return %c0_i32, %c0_i32_0 : i32, i32
  }
  func.func @transform_6(%arg0: i32) -> (i32, i32) {
    %c0_i32 = arith.constant 0 : i32
    %c0_i32_0 = arith.constant 0 : i32
    %c0_i32_1 = arith.constant 0 : i32
    return %c0_i32, %c0_i32_0 : i32, i32
  }
  func.func @transform_7(%arg0: i32) -> (i32, i32) {
    %c0_i32 = arith.constant 0 : i32
    %c0_i32_0 = arith.constant 0 : i32
    %c0_i32_1 = arith.constant 0 : i32
    return %c0_i32, %c0_i32_0 : i32, i32
  }
  func.func @transform_8(%arg0: i32) -> (i32, i32) {
    %c0_i32 = arith.constant 0 : i32
    %c0_i32_0 = arith.constant 0 : i32
    %c0_i32_1 = arith.constant 0 : i32
    return %c0_i32, %c0_i32_0 : i32, i32
  }
  func.func @transform_9(%arg0: i32) -> (i32, i32) {
    %c0_i32 = arith.constant 0 : i32
    %c0_i32_0 = arith.constant 0 : i32
    %c0_i32_1 = arith.constant 0 : i32
    return %c0_i32, %c0_i32_0 : i32, i32
  }
  func.func @transform_10(%arg0: i32) -> (i32, i32) {
    %c0_i32 = arith.constant 0 : i32
    %c0_i32_0 = arith.constant 0 : i32
    %c0_i32_1 = arith.constant 0 : i32
    return %c0_i32, %c0_i32_0 : i32, i32
  }
  func.func @transform_11(%arg0: i32) -> (i32, i32) {
    %c0_i32 = arith.constant 0 : i32
    %c0_i32_0 = arith.constant 0 : i32
    %c0_i32_1 = arith.constant 0 : i32
    return %c0_i32, %c0_i32_0 : i32, i32
  }
  func.func @transform_12(%arg0: i32) -> (i32, i32) {
    %c0_i32 = arith.constant 0 : i32
    %c0_i32_0 = arith.constant 0 : i32
    %c0_i32_1 = arith.constant 0 : i32
    return %c0_i32, %c0_i32_0 : i32, i32
  }
  func.func @transform_13(%arg0: i32) -> (i32, i32) {
    %c0_i32 = arith.constant 0 : i32
    %c0_i32_0 = arith.constant 0 : i32
    %c0_i32_1 = arith.constant 0 : i32
    return %c0_i32, %c0_i32_0 : i32, i32
  }
  func.func @transform_14(%arg0: i32) -> (i32, i32) {
    %c0_i32 = arith.constant 0 : i32
    %c0_i32_0 = arith.constant 0 : i32
    %c0_i32_1 = arith.constant 0 : i32
    return %c0_i32, %c0_i32_0 : i32, i32
  }
  func.func @transform_15(%arg0: i32) -> (i32, i32) {
    %c0_i32 = arith.constant 0 : i32
    %c0_i32_0 = arith.constant 0 : i32
    %c0_i32_1 = arith.constant 0 : i32
    return %c0_i32, %c0_i32_0 : i32, i32
  }
  func.func @transform_16(%arg0: i32) -> (i32, i32) {
    %c0_i32 = arith.constant 0 : i32
    %c0_i32_0 = arith.constant 0 : i32
    %c0_i32_1 = arith.constant 0 : i32
    return %c0_i32, %c0_i32_0 : i32, i32
  }
  func.func @transform_17(%arg0: i32) -> (i32, i32) {
    %c0_i32 = arith.constant 0 : i32
    %c0_i32_0 = arith.constant 0 : i32
    %c0_i32_1 = arith.constant 0 : i32
    return %c0_i32, %c0_i32_0 : i32, i32
  }
  func.func @transform_18(%arg0: i32) -> (i32, i32) {
    %c0_i32 = arith.constant 0 : i32
    %c0_i32_0 = arith.constant 0 : i32
    %c0_i32_1 = arith.constant 0 : i32
    return %c0_i32, %c0_i32_0 : i32, i32
  }
  func.func @transform_19(%arg0: i32) -> (i32, i32) {
    %c0_i32 = arith.constant 0 : i32
    %c0_i32_0 = arith.constant 0 : i32
    %c0_i32_1 = arith.constant 0 : i32
    return %c0_i32, %c0_i32_0 : i32, i32
  }
  func.func @transform_20(%arg0: i32) -> (i32, i32) {
    %c0_i32 = arith.constant 0 : i32
    %c0_i32_0 = arith.constant 0 : i32
    %c0_i32_1 = arith.constant 0 : i32
    return %c0_i32, %c0_i32_0 : i32, i32
  }
  func.func @transform_21(%arg0: i32) -> (i32, i32) {
    %c0_i32 = arith.constant 0 : i32
    %c0_i32_0 = arith.constant 0 : i32
    %c0_i32_1 = arith.constant 0 : i32
    return %c0_i32, %c0_i32_0 : i32, i32
  }
  func.func @transform_22(%arg0: i32) -> (i32, i32) {
    %c0_i32 = arith.constant 0 : i32
    %c0_i32_0 = arith.constant 0 : i32
    %c0_i32_1 = arith.constant 0 : i32
    return %c0_i32, %c0_i32_0 : i32, i32
  }
  func.func @transform_23(%arg0: i32) -> (i32, i32) {
    %c0_i32 = arith.constant 0 : i32
    %c0_i32_0 = arith.constant 0 : i32
    %c0_i32_1 = arith.constant 0 : i32
    return %c0_i32, %c0_i32_0 : i32, i32
  }
  func.func @transform_24(%arg0: i32) -> (i32, i32) {
    %c0_i32 = arith.constant 0 : i32
    %c0_i32_0 = arith.constant 0 : i32
    %c0_i32_1 = arith.constant 0 : i32
    return %c0_i32, %c0_i32_0 : i32, i32
  }
  func.func @transform_25(%arg0: i32) -> (i32, i32) {
    %c0_i32 = arith.constant 0 : i32
    %c0_i32_0 = arith.constant 0 : i32
    %c0_i32_1 = arith.constant 0 : i32
    return %c0_i32, %c0_i32_0 : i32, i32
  }
  func.func @transform_26(%arg0: i32) -> (i32, i32) {
    %c0_i32 = arith.constant 0 : i32
    %c0_i32_0 = arith.constant 0 : i32
    %c0_i32_1 = arith.constant 0 : i32
    return %c0_i32, %c0_i32_0 : i32, i32
  }
  func.func @transform_27(%arg0: i32) -> (i32, i32) {
    %c0_i32 = arith.constant 0 : i32
    %c0_i32_0 = arith.constant 0 : i32
    %c0_i32_1 = arith.constant 0 : i32
    return %c0_i32, %c0_i32_0 : i32, i32
  }
  func.func @transform_28(%arg0: i32) -> (i32, i32) {
    %c0_i32 = arith.constant 0 : i32
    %c0_i32_0 = arith.constant 0 : i32
    %c0_i32_1 = arith.constant 0 : i32
    return %c0_i32, %c0_i32_0 : i32, i32
  }
  func.func @transform_29(%arg0: i32) -> (i32, i32) {
    %c0_i32 = arith.constant 0 : i32
    %c0_i32_0 = arith.constant 0 : i32
    %c0_i32_1 = arith.constant 0 : i32
    return %c0_i32, %c0_i32_0 : i32, i32
  }
  func.func @transform_30(%arg0: i32) -> (i32, i32) {
    %c0_i32 = arith.constant 0 : i32
    %c0_i32_0 = arith.constant 0 : i32
    %c0_i32_1 = arith.constant 0 : i32
    return %c0_i32, %c0_i32_0 : i32, i32
  }
  func.func @transform_31(%arg0: i32) -> (i32, i32) {
    %c0_i32 = arith.constant 0 : i32
    %c0_i32_0 = arith.constant 0 : i32
    %c0_i32_1 = arith.constant 0 : i32
    return %c0_i32, %c0_i32_0 : i32, i32
  }
  func.func @transform_32(%arg0: i32) -> (i32, i32) {
    %c0_i32 = arith.constant 0 : i32
    %c0_i32_0 = arith.constant 0 : i32
    %c0_i32_1 = arith.constant 0 : i32
    return %c0_i32, %c0_i32_0 : i32, i32
  }
  func.func @transform_33(%arg0: i32) -> (i32, i32) {
    %c0_i32 = arith.constant 0 : i32
    %c0_i32_0 = arith.constant 0 : i32
    %c0_i32_1 = arith.constant 0 : i32
    return %c0_i32, %c0_i32_0 : i32, i32
  }
  func.func @transform_34(%arg0: i32) -> (i32, i32) {
    %c0_i32 = arith.constant 0 : i32
    %c0_i32_0 = arith.constant 0 : i32
    %c0_i32_1 = arith.constant 0 : i32
    return %c0_i32, %c0_i32_0 : i32, i32
  }
  func.func @transform_35(%arg0: i32) -> (i32, i32) {
    %c0_i32 = arith.constant 0 : i32
    %c0_i32_0 = arith.constant 0 : i32
    %c0_i32_1 = arith.constant 0 : i32
    return %c0_i32, %c0_i32_0 : i32, i32
  }
  func.func @transform_36(%arg0: i32) -> (i32, i32) {
    %c0_i32 = arith.constant 0 : i32
    %c0_i32_0 = arith.constant 0 : i32
    return %arg0, %c0_i32 : i32, i32
  }
}

module attributes {stable_mosaic.version = 11 : i64} {
  func.func @kernel(%arg0: i32, %arg1: memref<8x32xf32, #tpu.memory_space<vmem>>, %arg2: memref<8x2xf32, #tpu.memory_space<vmem>>, %arg3: memref<8x8xf32, #tpu.memory_space<vmem>>, %arg4: memref<2x8xbf16, #tpu.memory_space<vmem>>, %arg5: memref<2x8xf32, #tpu.memory_space<vmem>>, %arg6: memref<1x8xf32, #tpu.memory_space<vmem>>, %arg7: memref<1x8xf32, #tpu.memory_space<vmem>>, %arg8: memref<1x8xf32, #tpu.memory_space<vmem>>, %arg9: memref<8x32xf32, #tpu.memory_space<vmem>>, %arg10: memref<1x32xf32, #tpu.memory_space<vmem>>, %arg11: memref<1x32xf32, #tpu.memory_space<vmem>>, %arg12: memref<1x32xf32, #tpu.memory_space<vmem>>, %arg13: memref<1x32xf32, #tpu.memory_space<vmem>>, %arg14: memref<1x32xf32, #tpu.memory_space<vmem>>, %arg15: memref<32x1024xbf16, #tpu.memory_space<vmem>>, %arg16: memref<32x1024xbf16, #tpu.memory_space<vmem>>, %arg17: memref<32x1024xbf16, #tpu.memory_space<vmem>>, %arg18: memref<1x1024xf32, #tpu.memory_space<vmem>>, %arg19: memref<1x1024xf32, #tpu.memory_space<vmem>>, %arg20: memref<1x1024xf32, #tpu.memory_space<vmem>>, %arg21: memref<1024x32xbf16, #tpu.memory_space<vmem>>, %arg22: memref<1x32xf32, #tpu.memory_space<vmem>>, %arg23: memref<1x32xf32, #tpu.memory_space<vmem>>, %arg24: memref<1x32xf32, #tpu.memory_space<vmem>>, %arg25: memref<32x64xbf16, #tpu.memory_space<vmem>>, %arg26: memref<1x64xf32, #tpu.memory_space<vmem>>, %arg27: memref<64x32xbf16, #tpu.memory_space<vmem>>, %arg28: memref<1x32xf32, #tpu.memory_space<vmem>>, %arg29: memref<1x32xf32, #tpu.memory_space<vmem>>, %arg30: memref<1x32xf32, #tpu.memory_space<vmem>>, %arg31: memref<1x32xf32, #tpu.memory_space<vmem>>, %arg32: memref<1x32xf32, #tpu.memory_space<vmem>>, %arg33: memref<32x16xbf16, #tpu.memory_space<vmem>>, %arg34: memref<1x16xf32, #tpu.memory_space<vmem>>, %arg35: memref<16x1xf32, #tpu.memory_space<vmem>>, %arg36: memref<1x1xf32, #tpu.memory_space<vmem>>, %arg37: memref<2x32xf32, #tpu.memory_space<vmem>>) attributes {dimension_semantics = [#tpu.dimension_semantics<parallel>], iteration_bounds = array<i64: 1>, scalar_prefetch = 0 : i64, scratch_operands = 0 : i64, tpu.core_type = #tpu.core_type<tc>, window_params = [{transform_indices = @transform_0, window_bounds = array<i64: 8, 32>}, {transform_indices = @transform_1, window_bounds = array<i64: 8, 2>}, {pipeline_mode = #tpu.pipeline_mode<synchronous>, transform_indices = @transform_2, window_bounds = array<i64: 8, 8>}, {pipeline_mode = #tpu.pipeline_mode<synchronous>, transform_indices = @transform_3, window_bounds = array<i64: 2, 8>}, {pipeline_mode = #tpu.pipeline_mode<synchronous>, transform_indices = @transform_4, window_bounds = array<i64: 2, 8>}, {pipeline_mode = #tpu.pipeline_mode<synchronous>, transform_indices = @transform_5, window_bounds = array<i64: 1, 8>}, {pipeline_mode = #tpu.pipeline_mode<synchronous>, transform_indices = @transform_6, window_bounds = array<i64: 1, 8>}, {pipeline_mode = #tpu.pipeline_mode<synchronous>, transform_indices = @transform_7, window_bounds = array<i64: 1, 8>}, {pipeline_mode = #tpu.pipeline_mode<synchronous>, transform_indices = @transform_8, window_bounds = array<i64: 8, 32>}, {pipeline_mode = #tpu.pipeline_mode<synchronous>, transform_indices = @transform_9, window_bounds = array<i64: 1, 32>}, {pipeline_mode = #tpu.pipeline_mode<synchronous>, transform_indices = @transform_10, window_bounds = array<i64: 1, 32>}, {pipeline_mode = #tpu.pipeline_mode<synchronous>, transform_indices = @transform_11, window_bounds = array<i64: 1, 32>}, {pipeline_mode = #tpu.pipeline_mode<synchronous>, transform_indices = @transform_12, window_bounds = array<i64: 1, 32>}, {pipeline_mode = #tpu.pipeline_mode<synchronous>, transform_indices = @transform_13, window_bounds = array<i64: 1, 32>}, {pipeline_mode = #tpu.pipeline_mode<synchronous>, transform_indices = @transform_14, window_bounds = array<i64: 32, 1024>}, {pipeline_mode = #tpu.pipeline_mode<synchronous>, transform_indices = @transform_15, window_bounds = array<i64: 32, 1024>}, {pipeline_mode = #tpu.pipeline_mode<synchronous>, transform_indices = @transform_16, window_bounds = array<i64: 32, 1024>}, {pipeline_mode = #tpu.pipeline_mode<synchronous>, transform_indices = @transform_17, window_bounds = array<i64: 1, 1024>}, {pipeline_mode = #tpu.pipeline_mode<synchronous>, transform_indices = @transform_18, window_bounds = array<i64: 1, 1024>}, {pipeline_mode = #tpu.pipeline_mode<synchronous>, transform_indices = @transform_19, window_bounds = array<i64: 1, 1024>}, {pipeline_mode = #tpu.pipeline_mode<synchronous>, transform_indices = @transform_20, window_bounds = array<i64: 1024, 32>}, {pipeline_mode = #tpu.pipeline_mode<synchronous>, transform_indices = @transform_21, window_bounds = array<i64: 1, 32>}, {pipeline_mode = #tpu.pipeline_mode<synchronous>, transform_indices = @transform_22, window_bounds = array<i64: 1, 32>}, {pipeline_mode = #tpu.pipeline_mode<synchronous>, transform_indices = @transform_23, window_bounds = array<i64: 1, 32>}, {pipeline_mode = #tpu.pipeline_mode<synchronous>, transform_indices = @transform_24, window_bounds = array<i64: 32, 64>}, {pipeline_mode = #tpu.pipeline_mode<synchronous>, transform_indices = @transform_25, window_bounds = array<i64: 1, 64>}, {pipeline_mode = #tpu.pipeline_mode<synchronous>, transform_indices = @transform_26, window_bounds = array<i64: 64, 32>}, {pipeline_mode = #tpu.pipeline_mode<synchronous>, transform_indices = @transform_27, window_bounds = array<i64: 1, 32>}, {pipeline_mode = #tpu.pipeline_mode<synchronous>, transform_indices = @transform_28, window_bounds = array<i64: 1, 32>}, {pipeline_mode = #tpu.pipeline_mode<synchronous>, transform_indices = @transform_29, window_bounds = array<i64: 1, 32>}, {pipeline_mode = #tpu.pipeline_mode<synchronous>, transform_indices = @transform_30, window_bounds = array<i64: 1, 32>}, {pipeline_mode = #tpu.pipeline_mode<synchronous>, transform_indices = @transform_31, window_bounds = array<i64: 1, 32>}, {pipeline_mode = #tpu.pipeline_mode<synchronous>, transform_indices = @transform_32, window_bounds = array<i64: 32, 16>}, {pipeline_mode = #tpu.pipeline_mode<synchronous>, transform_indices = @transform_33, window_bounds = array<i64: 1, 16>}, {pipeline_mode = #tpu.pipeline_mode<synchronous>, transform_indices = @transform_34, window_bounds = array<i64: 16, 1>}, {pipeline_mode = #tpu.pipeline_mode<synchronous>, transform_indices = @transform_35, window_bounds = array<i64: 1, 1>}, {transform_indices = @transform_36, window_bounds = array<i64: 2, 32>}]} {
    %c0 = arith.constant 0 : index
    %c0_0 = arith.constant 0 : index
    %0 = vector.load %arg1[%c0, %c0_0] : memref<8x32xf32, #tpu.memory_space<vmem>>, vector<8x32xf32>
    %c0_1 = arith.constant 0 : index
    %c0_2 = arith.constant 0 : index
    %1 = vector.load %arg2[%c0_1, %c0_2] : memref<8x2xf32, #tpu.memory_space<vmem>>, vector<8x2xf32>
    %c0_3 = arith.constant 0 : index
    %c0_4 = arith.constant 0 : index
    %2 = vector.load %arg5[%c0_3, %c0_4] : memref<2x8xf32, #tpu.memory_space<vmem>>, vector<2x8xf32>
    %cst = arith.constant dense<0.000000e+00> : vector<8x8xf32>
    %3 = tpu.matmul %1, %2, %cst {dimension_numbers = #tpu.dot_dimension_numbers<[1], [0], [0], [1], [0, 0, 1, 1], [], []>} : vector<8x2xf32>, vector<2x8xf32>, vector<8x8xf32> -> vector<8x8xf32>
    %c0_5 = arith.constant 0 : index
    %c0_6 = arith.constant 0 : index
    %4 = vector.load %arg6[%c0_5, %c0_6] : memref<1x8xf32, #tpu.memory_space<vmem>>, vector<1x8xf32>
    %5 = vector.broadcast %4 : vector<1x8xf32> to vector<8x8xf32>
    %6 = arith.addf %3, %5 : vector<8x8xf32>
    %c0_7 = arith.constant 0 : index
    %c0_8 = arith.constant 0 : index
    %7 = vector.load %arg7[%c0_7, %c0_8] : memref<1x8xf32, #tpu.memory_space<vmem>>, vector<1x8xf32>
    %c0_9 = arith.constant 0 : index
    %c0_10 = arith.constant 0 : index
    %8 = vector.load %arg8[%c0_9, %c0_10] : memref<1x8xf32, #tpu.memory_space<vmem>>, vector<1x8xf32>
    %cst_11 = arith.constant dense<0.000000e+00> : vector<8xf32>
    %9 = vector.multi_reduction <add>, %6, %cst_11 [1] : vector<8x8xf32> to vector<8xf32>
    %10 = vector.shape_cast %9 : vector<8xf32> to vector<8x1xf32>
    %cst_12 = arith.constant 8.000000e+00 : f32
    %11 = vector.broadcast %cst_12 : f32 to vector<8x1xf32>
    %12 = arith.divf %10, %11 : vector<8x1xf32>
    %13 = vector.broadcast %12 : vector<8x1xf32> to vector<8x8xf32>
    %14 = arith.subf %6, %13 : vector<8x8xf32>
    %15 = arith.mulf %14, %14 : vector<8x8xf32>
    %cst_13 = arith.constant dense<0.000000e+00> : vector<8xf32>
    %16 = vector.multi_reduction <add>, %15, %cst_13 [1] : vector<8x8xf32> to vector<8xf32>
    %17 = vector.shape_cast %16 : vector<8xf32> to vector<8x1xf32>
    %cst_14 = arith.constant 8.000000e+00 : f32
    %18 = vector.broadcast %cst_14 : f32 to vector<8x1xf32>
    %19 = arith.divf %17, %18 : vector<8x1xf32>
    %cst_15 = arith.constant 9.99999974E-6 : f32
    %20 = vector.broadcast %cst_15 : f32 to vector<8x1xf32>
    %21 = arith.addf %19, %20 : vector<8x1xf32>
    %22 = math.rsqrt %21 : vector<8x1xf32>
    %23 = vector.broadcast %22 : vector<8x1xf32> to vector<8x8xf32>
    %24 = arith.mulf %14, %23 : vector<8x8xf32>
    %25 = vector.broadcast %7 : vector<1x8xf32> to vector<8x8xf32>
    %26 = arith.mulf %24, %25 : vector<8x8xf32>
    %27 = vector.broadcast %8 : vector<1x8xf32> to vector<8x8xf32>
    %28 = arith.addf %26, %27 : vector<8x8xf32>
    %cst_16 = arith.constant 5.000000e-01 : f32
    %29 = vector.broadcast %cst_16 : f32 to vector<8x8xf32>
    %30 = arith.mulf %29, %28 : vector<8x8xf32>
    %cst_17 = arith.constant 0.707106769 : f32
    %31 = vector.broadcast %cst_17 : f32 to vector<8x8xf32>
    %32 = arith.mulf %28, %31 : vector<8x8xf32>
    %33 = math.erf %32 : vector<8x8xf32>
    %cst_18 = arith.constant 1.000000e+00 : f32
    %34 = vector.broadcast %cst_18 : f32 to vector<8x8xf32>
    %35 = arith.addf %34, %33 : vector<8x8xf32>
    %36 = arith.mulf %30, %35 : vector<8x8xf32>
    %c0_19 = arith.constant 0 : index
    %c0_20 = arith.constant 0 : index
    %37 = vector.load %arg9[%c0_19, %c0_20] : memref<8x32xf32, #tpu.memory_space<vmem>>, vector<8x32xf32>
    %cst_21 = arith.constant dense<0.000000e+00> : vector<8x32xf32>
    %38 = tpu.matmul %36, %37, %cst_21 {dimension_numbers = #tpu.dot_dimension_numbers<[1], [0], [0], [1], [0, 0, 1, 1], [], []>} : vector<8x8xf32>, vector<8x32xf32>, vector<8x32xf32> -> vector<8x32xf32>
    %c0_22 = arith.constant 0 : index
    %c0_23 = arith.constant 0 : index
    %39 = vector.load %arg10[%c0_22, %c0_23] : memref<1x32xf32, #tpu.memory_space<vmem>>, vector<1x32xf32>
    %40 = vector.broadcast %39 : vector<1x32xf32> to vector<8x32xf32>
    %41 = arith.addf %38, %40 : vector<8x32xf32>
    %c0_24 = arith.constant 0 : index
    %c0_25 = arith.constant 0 : index
    %42 = vector.load %arg11[%c0_24, %c0_25] : memref<1x32xf32, #tpu.memory_space<vmem>>, vector<1x32xf32>
    %c0_26 = arith.constant 0 : index
    %c0_27 = arith.constant 0 : index
    %43 = vector.load %arg12[%c0_26, %c0_27] : memref<1x32xf32, #tpu.memory_space<vmem>>, vector<1x32xf32>
    %cst_28 = arith.constant dense<0.000000e+00> : vector<8xf32>
    %44 = vector.multi_reduction <add>, %41, %cst_28 [1] : vector<8x32xf32> to vector<8xf32>
    %45 = vector.shape_cast %44 : vector<8xf32> to vector<8x1xf32>
    %cst_29 = arith.constant 3.200000e+01 : f32
    %46 = vector.broadcast %cst_29 : f32 to vector<8x1xf32>
    %47 = arith.divf %45, %46 : vector<8x1xf32>
    %48 = vector.broadcast %47 : vector<8x1xf32> to vector<8x32xf32>
    %49 = arith.subf %41, %48 : vector<8x32xf32>
    %50 = arith.mulf %49, %49 : vector<8x32xf32>
    %cst_30 = arith.constant dense<0.000000e+00> : vector<8xf32>
    %51 = vector.multi_reduction <add>, %50, %cst_30 [1] : vector<8x32xf32> to vector<8xf32>
    %52 = vector.shape_cast %51 : vector<8xf32> to vector<8x1xf32>
    %cst_31 = arith.constant 3.200000e+01 : f32
    %53 = vector.broadcast %cst_31 : f32 to vector<8x1xf32>
    %54 = arith.divf %52, %53 : vector<8x1xf32>
    %cst_32 = arith.constant 9.99999974E-6 : f32
    %55 = vector.broadcast %cst_32 : f32 to vector<8x1xf32>
    %56 = arith.addf %54, %55 : vector<8x1xf32>
    %57 = math.rsqrt %56 : vector<8x1xf32>
    %58 = vector.broadcast %57 : vector<8x1xf32> to vector<8x32xf32>
    %59 = arith.mulf %49, %58 : vector<8x32xf32>
    %60 = vector.broadcast %42 : vector<1x32xf32> to vector<8x32xf32>
    %61 = arith.mulf %59, %60 : vector<8x32xf32>
    %62 = vector.broadcast %43 : vector<1x32xf32> to vector<8x32xf32>
    %63 = arith.addf %61, %62 : vector<8x32xf32>
    %64 = arith.addf %0, %63 : vector<8x32xf32>
    %c0_33 = arith.constant 0 : index
    %c0_34 = arith.constant 0 : index
    %65 = vector.load %arg13[%c0_33, %c0_34] : memref<1x32xf32, #tpu.memory_space<vmem>>, vector<1x32xf32>
    %c0_35 = arith.constant 0 : index
    %c0_36 = arith.constant 0 : index
    %66 = vector.load %arg14[%c0_35, %c0_36] : memref<1x32xf32, #tpu.memory_space<vmem>>, vector<1x32xf32>
    %cst_37 = arith.constant dense<0.000000e+00> : vector<8xf32>
    %67 = vector.multi_reduction <add>, %64, %cst_37 [1] : vector<8x32xf32> to vector<8xf32>
    %68 = vector.shape_cast %67 : vector<8xf32> to vector<8x1xf32>
    %cst_38 = arith.constant 3.200000e+01 : f32
    %69 = vector.broadcast %cst_38 : f32 to vector<8x1xf32>
    %70 = arith.divf %68, %69 : vector<8x1xf32>
    %71 = vector.broadcast %70 : vector<8x1xf32> to vector<8x32xf32>
    %72 = arith.subf %64, %71 : vector<8x32xf32>
    %73 = arith.mulf %72, %72 : vector<8x32xf32>
    %cst_39 = arith.constant dense<0.000000e+00> : vector<8xf32>
    %74 = vector.multi_reduction <add>, %73, %cst_39 [1] : vector<8x32xf32> to vector<8xf32>
    %75 = vector.shape_cast %74 : vector<8xf32> to vector<8x1xf32>
    %cst_40 = arith.constant 3.200000e+01 : f32
    %76 = vector.broadcast %cst_40 : f32 to vector<8x1xf32>
    %77 = arith.divf %75, %76 : vector<8x1xf32>
    %cst_41 = arith.constant 9.99999974E-6 : f32
    %78 = vector.broadcast %cst_41 : f32 to vector<8x1xf32>
    %79 = arith.addf %77, %78 : vector<8x1xf32>
    %80 = math.rsqrt %79 : vector<8x1xf32>
    %81 = vector.broadcast %80 : vector<8x1xf32> to vector<8x32xf32>
    %82 = arith.mulf %72, %81 : vector<8x32xf32>
    %83 = vector.broadcast %65 : vector<1x32xf32> to vector<8x32xf32>
    %84 = arith.mulf %82, %83 : vector<8x32xf32>
    %85 = vector.broadcast %66 : vector<1x32xf32> to vector<8x32xf32>
    %86 = arith.addf %84, %85 : vector<8x32xf32>
    %87 = arith.truncf %86 : vector<8x32xf32> to vector<8x32xbf16>
    %c0_42 = arith.constant 0 : index
    %c0_43 = arith.constant 0 : index
    %88 = vector.load %arg15[%c0_42, %c0_43] : memref<32x1024xbf16, #tpu.memory_space<vmem>>, vector<32x1024xbf16>
    %cst_44 = arith.constant dense<0.000000e+00> : vector<8x1024xf32>
    %89 = tpu.matmul %87, %88, %cst_44 {dimension_numbers = #tpu.dot_dimension_numbers<[1], [0], [0], [1], [0, 0, 1, 1], [], []>} : vector<8x32xbf16>, vector<32x1024xbf16>, vector<8x1024xf32> -> vector<8x1024xf32>
    %c0_45 = arith.constant 0 : index
    %c0_46 = arith.constant 0 : index
    %90 = vector.load %arg18[%c0_45, %c0_46] : memref<1x1024xf32, #tpu.memory_space<vmem>>, vector<1x1024xf32>
    %91 = vector.broadcast %90 : vector<1x1024xf32> to vector<8x1024xf32>
    %92 = arith.addf %89, %91 : vector<8x1024xf32>
    %c0_47 = arith.constant 0 : index
    %c0_48 = arith.constant 0 : index
    %93 = vector.load %arg16[%c0_47, %c0_48] : memref<32x1024xbf16, #tpu.memory_space<vmem>>, vector<32x1024xbf16>
    %cst_49 = arith.constant dense<0.000000e+00> : vector<8x1024xf32>
    %94 = tpu.matmul %87, %93, %cst_49 {dimension_numbers = #tpu.dot_dimension_numbers<[1], [0], [0], [1], [0, 0, 1, 1], [], []>} : vector<8x32xbf16>, vector<32x1024xbf16>, vector<8x1024xf32> -> vector<8x1024xf32>
    %c0_50 = arith.constant 0 : index
    %c0_51 = arith.constant 0 : index
    %95 = vector.load %arg19[%c0_50, %c0_51] : memref<1x1024xf32, #tpu.memory_space<vmem>>, vector<1x1024xf32>
    %96 = vector.broadcast %95 : vector<1x1024xf32> to vector<8x1024xf32>
    %97 = arith.addf %94, %96 : vector<8x1024xf32>
    %c0_52 = arith.constant 0 : index
    %c0_53 = arith.constant 0 : index
    %98 = vector.load %arg17[%c0_52, %c0_53] : memref<32x1024xbf16, #tpu.memory_space<vmem>>, vector<32x1024xbf16>
    %cst_54 = arith.constant dense<0.000000e+00> : vector<8x1024xf32>
    %99 = tpu.matmul %87, %98, %cst_54 {dimension_numbers = #tpu.dot_dimension_numbers<[1], [0], [0], [1], [0, 0, 1, 1], [], []>} : vector<8x32xbf16>, vector<32x1024xbf16>, vector<8x1024xf32> -> vector<8x1024xf32>
    %c0_55 = arith.constant 0 : index
    %c0_56 = arith.constant 0 : index
    %100 = vector.load %arg20[%c0_55, %c0_56] : memref<1x1024xf32, #tpu.memory_space<vmem>>, vector<1x1024xf32>
    %101 = vector.broadcast %100 : vector<1x1024xf32> to vector<8x1024xf32>
    %102 = arith.addf %99, %101 : vector<8x1024xf32>
    %cst_57 = arith.constant 5.000000e-01 : f32
    %103 = vector.broadcast %cst_57 : f32 to vector<8x1024xf32>
    %104 = arith.mulf %92, %103 : vector<8x1024xf32>
    %105 = arith.truncf %104 : vector<8x1024xf32> to vector<8x1024xbf16>
    %106 = arith.truncf %97 : vector<8x1024xf32> to vector<8x1024xbf16>
    %107 = arith.truncf %102 : vector<8x1024xf32> to vector<8x1024xbf16>
    %c0_58 = arith.constant 0 : index
    %c0_59 = arith.constant 0 : index
    %108 = vector.load %arg3[%c0_58, %c0_59] : memref<8x8xf32, #tpu.memory_space<vmem>>, vector<8x8xf32>
    %109 = vector.extract_strided_slice %105 {offsets = [0, 0], sizes = [8, 128], strides = [1, 1]} : vector<8x1024xbf16> to vector<8x128xbf16>
    %110 = vector.extract_strided_slice %106 {offsets = [0, 0], sizes = [8, 128], strides = [1, 1]} : vector<8x1024xbf16> to vector<8x128xbf16>
    %111 = vector.extract_strided_slice %107 {offsets = [0, 0], sizes = [8, 128], strides = [1, 1]} : vector<8x1024xbf16> to vector<8x128xbf16>
    "tpu.trace_start"() <{level = 10 : i32, message = "qf,kf->qk"}> : () -> ()
    %cst_60 = arith.constant dense<0.000000e+00> : vector<8x8xf32>
    %112 = tpu.matmul %109, %110, %cst_60 {dimension_numbers = #tpu.dot_dimension_numbers<[1], [1], [0], [0], [0, 0, 1, 0], [], []>} : vector<8x128xbf16>, vector<8x128xbf16>, vector<8x8xf32> -> vector<8x8xf32>
    "tpu.trace_stop"() : () -> ()
    %113 = arith.addf %112, %108 : vector<8x8xf32>
    %cst_61 = arith.constant dense<0xFF800000> : vector<8xf32>
    %114 = vector.multi_reduction <maximumf>, %113, %cst_61 [1] : vector<8x8xf32> to vector<8xf32>
    %115 = vector.shape_cast %114 : vector<8xf32> to vector<8x1xf32>
    %116 = vector.broadcast %115 : vector<8x1xf32> to vector<8x8xf32>
    %117 = arith.subf %113, %116 : vector<8x8xf32>
    %118 = math.exp %117 : vector<8x8xf32>
    %cst_62 = arith.constant dense<0.000000e+00> : vector<8xf32>
    %119 = vector.multi_reduction <add>, %118, %cst_62 [1] : vector<8x8xf32> to vector<8xf32>
    %120 = vector.shape_cast %119 : vector<8xf32> to vector<8x1xf32>
    %121 = tpu.reciprocal %120 {approx = true} : vector<8x1xf32> -> vector<8x1xf32>
    %122 = vector.broadcast %121 : vector<8x1xf32> to vector<8x8xf32>
    %123 = arith.mulf %118, %122 : vector<8x8xf32>
    %124 = arith.truncf %123 : vector<8x8xf32> to vector<8x8xbf16>
    %cst_63 = arith.constant dense<0.000000e+00> : vector<8x128xf32>
    %125 = tpu.matmul %124, %111, %cst_63 {dimension_numbers = #tpu.dot_dimension_numbers<[1], [0], [0], [1], [0, 0, 1, 1], [], []>} : vector<8x8xbf16>, vector<8x128xbf16>, vector<8x128xf32> -> vector<8x128xf32>
    %126 = arith.truncf %125 : vector<8x128xf32> to vector<8x128xbf16>
    %127 = vector.extract_strided_slice %105 {offsets = [0, 128], sizes = [8, 128], strides = [1, 1]} : vector<8x1024xbf16> to vector<8x128xbf16>
    %128 = vector.extract_strided_slice %106 {offsets = [0, 128], sizes = [8, 128], strides = [1, 1]} : vector<8x1024xbf16> to vector<8x128xbf16>
    %129 = vector.extract_strided_slice %107 {offsets = [0, 128], sizes = [8, 128], strides = [1, 1]} : vector<8x1024xbf16> to vector<8x128xbf16>
    "tpu.trace_start"() <{level = 10 : i32, message = "qf,kf->qk"}> : () -> ()
    %cst_64 = arith.constant dense<0.000000e+00> : vector<8x8xf32>
    %130 = tpu.matmul %127, %128, %cst_64 {dimension_numbers = #tpu.dot_dimension_numbers<[1], [1], [0], [0], [0, 0, 1, 0], [], []>} : vector<8x128xbf16>, vector<8x128xbf16>, vector<8x8xf32> -> vector<8x8xf32>
    "tpu.trace_stop"() : () -> ()
    %131 = arith.addf %130, %108 : vector<8x8xf32>
    %cst_65 = arith.constant dense<0xFF800000> : vector<8xf32>
    %132 = vector.multi_reduction <maximumf>, %131, %cst_65 [1] : vector<8x8xf32> to vector<8xf32>
    %133 = vector.shape_cast %132 : vector<8xf32> to vector<8x1xf32>
    %134 = vector.broadcast %133 : vector<8x1xf32> to vector<8x8xf32>
    %135 = arith.subf %131, %134 : vector<8x8xf32>
    %136 = math.exp %135 : vector<8x8xf32>
    %cst_66 = arith.constant dense<0.000000e+00> : vector<8xf32>
    %137 = vector.multi_reduction <add>, %136, %cst_66 [1] : vector<8x8xf32> to vector<8xf32>
    %138 = vector.shape_cast %137 : vector<8xf32> to vector<8x1xf32>
    %139 = tpu.reciprocal %138 {approx = true} : vector<8x1xf32> -> vector<8x1xf32>
    %140 = vector.broadcast %139 : vector<8x1xf32> to vector<8x8xf32>
    %141 = arith.mulf %136, %140 : vector<8x8xf32>
    %142 = arith.truncf %141 : vector<8x8xf32> to vector<8x8xbf16>
    %cst_67 = arith.constant dense<0.000000e+00> : vector<8x128xf32>
    %143 = tpu.matmul %142, %129, %cst_67 {dimension_numbers = #tpu.dot_dimension_numbers<[1], [0], [0], [1], [0, 0, 1, 1], [], []>} : vector<8x8xbf16>, vector<8x128xbf16>, vector<8x128xf32> -> vector<8x128xf32>
    %144 = arith.truncf %143 : vector<8x128xf32> to vector<8x128xbf16>
    %145 = vector.extract_strided_slice %105 {offsets = [0, 256], sizes = [8, 128], strides = [1, 1]} : vector<8x1024xbf16> to vector<8x128xbf16>
    %146 = vector.extract_strided_slice %106 {offsets = [0, 256], sizes = [8, 128], strides = [1, 1]} : vector<8x1024xbf16> to vector<8x128xbf16>
    %147 = vector.extract_strided_slice %107 {offsets = [0, 256], sizes = [8, 128], strides = [1, 1]} : vector<8x1024xbf16> to vector<8x128xbf16>
    "tpu.trace_start"() <{level = 10 : i32, message = "qf,kf->qk"}> : () -> ()
    %cst_68 = arith.constant dense<0.000000e+00> : vector<8x8xf32>
    %148 = tpu.matmul %145, %146, %cst_68 {dimension_numbers = #tpu.dot_dimension_numbers<[1], [1], [0], [0], [0, 0, 1, 0], [], []>} : vector<8x128xbf16>, vector<8x128xbf16>, vector<8x8xf32> -> vector<8x8xf32>
    "tpu.trace_stop"() : () -> ()
    %149 = arith.addf %148, %108 : vector<8x8xf32>
    %cst_69 = arith.constant dense<0xFF800000> : vector<8xf32>
    %150 = vector.multi_reduction <maximumf>, %149, %cst_69 [1] : vector<8x8xf32> to vector<8xf32>
    %151 = vector.shape_cast %150 : vector<8xf32> to vector<8x1xf32>
    %152 = vector.broadcast %151 : vector<8x1xf32> to vector<8x8xf32>
    %153 = arith.subf %149, %152 : vector<8x8xf32>
    %154 = math.exp %153 : vector<8x8xf32>
    %cst_70 = arith.constant dense<0.000000e+00> : vector<8xf32>
    %155 = vector.multi_reduction <add>, %154, %cst_70 [1] : vector<8x8xf32> to vector<8xf32>
    %156 = vector.shape_cast %155 : vector<8xf32> to vector<8x1xf32>
    %157 = tpu.reciprocal %156 {approx = true} : vector<8x1xf32> -> vector<8x1xf32>
    %158 = vector.broadcast %157 : vector<8x1xf32> to vector<8x8xf32>
    %159 = arith.mulf %154, %158 : vector<8x8xf32>
    %160 = arith.truncf %159 : vector<8x8xf32> to vector<8x8xbf16>
    %cst_71 = arith.constant dense<0.000000e+00> : vector<8x128xf32>
    %161 = tpu.matmul %160, %147, %cst_71 {dimension_numbers = #tpu.dot_dimension_numbers<[1], [0], [0], [1], [0, 0, 1, 1], [], []>} : vector<8x8xbf16>, vector<8x128xbf16>, vector<8x128xf32> -> vector<8x128xf32>
    %162 = arith.truncf %161 : vector<8x128xf32> to vector<8x128xbf16>
    %163 = vector.extract_strided_slice %105 {offsets = [0, 384], sizes = [8, 128], strides = [1, 1]} : vector<8x1024xbf16> to vector<8x128xbf16>
    %164 = vector.extract_strided_slice %106 {offsets = [0, 384], sizes = [8, 128], strides = [1, 1]} : vector<8x1024xbf16> to vector<8x128xbf16>
    %165 = vector.extract_strided_slice %107 {offsets = [0, 384], sizes = [8, 128], strides = [1, 1]} : vector<8x1024xbf16> to vector<8x128xbf16>
    "tpu.trace_start"() <{level = 10 : i32, message = "qf,kf->qk"}> : () -> ()
    %cst_72 = arith.constant dense<0.000000e+00> : vector<8x8xf32>
    %166 = tpu.matmul %163, %164, %cst_72 {dimension_numbers = #tpu.dot_dimension_numbers<[1], [1], [0], [0], [0, 0, 1, 0], [], []>} : vector<8x128xbf16>, vector<8x128xbf16>, vector<8x8xf32> -> vector<8x8xf32>
    "tpu.trace_stop"() : () -> ()
    %167 = arith.addf %166, %108 : vector<8x8xf32>
    %cst_73 = arith.constant dense<0xFF800000> : vector<8xf32>
    %168 = vector.multi_reduction <maximumf>, %167, %cst_73 [1] : vector<8x8xf32> to vector<8xf32>
    %169 = vector.shape_cast %168 : vector<8xf32> to vector<8x1xf32>
    %170 = vector.broadcast %169 : vector<8x1xf32> to vector<8x8xf32>
    %171 = arith.subf %167, %170 : vector<8x8xf32>
    %172 = math.exp %171 : vector<8x8xf32>
    %cst_74 = arith.constant dense<0.000000e+00> : vector<8xf32>
    %173 = vector.multi_reduction <add>, %172, %cst_74 [1] : vector<8x8xf32> to vector<8xf32>
    %174 = vector.shape_cast %173 : vector<8xf32> to vector<8x1xf32>
    %175 = tpu.reciprocal %174 {approx = true} : vector<8x1xf32> -> vector<8x1xf32>
    %176 = vector.broadcast %175 : vector<8x1xf32> to vector<8x8xf32>
    %177 = arith.mulf %172, %176 : vector<8x8xf32>
    %178 = arith.truncf %177 : vector<8x8xf32> to vector<8x8xbf16>
    %cst_75 = arith.constant dense<0.000000e+00> : vector<8x128xf32>
    %179 = tpu.matmul %178, %165, %cst_75 {dimension_numbers = #tpu.dot_dimension_numbers<[1], [0], [0], [1], [0, 0, 1, 1], [], []>} : vector<8x8xbf16>, vector<8x128xbf16>, vector<8x128xf32> -> vector<8x128xf32>
    %180 = arith.truncf %179 : vector<8x128xf32> to vector<8x128xbf16>
    %181 = vector.extract_strided_slice %105 {offsets = [0, 512], sizes = [8, 128], strides = [1, 1]} : vector<8x1024xbf16> to vector<8x128xbf16>
    %182 = vector.extract_strided_slice %106 {offsets = [0, 512], sizes = [8, 128], strides = [1, 1]} : vector<8x1024xbf16> to vector<8x128xbf16>
    %183 = vector.extract_strided_slice %107 {offsets = [0, 512], sizes = [8, 128], strides = [1, 1]} : vector<8x1024xbf16> to vector<8x128xbf16>
    "tpu.trace_start"() <{level = 10 : i32, message = "qf,kf->qk"}> : () -> ()
    %cst_76 = arith.constant dense<0.000000e+00> : vector<8x8xf32>
    %184 = tpu.matmul %181, %182, %cst_76 {dimension_numbers = #tpu.dot_dimension_numbers<[1], [1], [0], [0], [0, 0, 1, 0], [], []>} : vector<8x128xbf16>, vector<8x128xbf16>, vector<8x8xf32> -> vector<8x8xf32>
    "tpu.trace_stop"() : () -> ()
    %185 = arith.addf %184, %108 : vector<8x8xf32>
    %cst_77 = arith.constant dense<0xFF800000> : vector<8xf32>
    %186 = vector.multi_reduction <maximumf>, %185, %cst_77 [1] : vector<8x8xf32> to vector<8xf32>
    %187 = vector.shape_cast %186 : vector<8xf32> to vector<8x1xf32>
    %188 = vector.broadcast %187 : vector<8x1xf32> to vector<8x8xf32>
    %189 = arith.subf %185, %188 : vector<8x8xf32>
    %190 = math.exp %189 : vector<8x8xf32>
    %cst_78 = arith.constant dense<0.000000e+00> : vector<8xf32>
    %191 = vector.multi_reduction <add>, %190, %cst_78 [1] : vector<8x8xf32> to vector<8xf32>
    %192 = vector.shape_cast %191 : vector<8xf32> to vector<8x1xf32>
    %193 = tpu.reciprocal %192 {approx = true} : vector<8x1xf32> -> vector<8x1xf32>
    %194 = vector.broadcast %193 : vector<8x1xf32> to vector<8x8xf32>
    %195 = arith.mulf %190, %194 : vector<8x8xf32>
    %196 = arith.truncf %195 : vector<8x8xf32> to vector<8x8xbf16>
    %cst_79 = arith.constant dense<0.000000e+00> : vector<8x128xf32>
    %197 = tpu.matmul %196, %183, %cst_79 {dimension_numbers = #tpu.dot_dimension_numbers<[1], [0], [0], [1], [0, 0, 1, 1], [], []>} : vector<8x8xbf16>, vector<8x128xbf16>, vector<8x128xf32> -> vector<8x128xf32>
    %198 = arith.truncf %197 : vector<8x128xf32> to vector<8x128xbf16>
    %199 = vector.extract_strided_slice %105 {offsets = [0, 640], sizes = [8, 128], strides = [1, 1]} : vector<8x1024xbf16> to vector<8x128xbf16>
    %200 = vector.extract_strided_slice %106 {offsets = [0, 640], sizes = [8, 128], strides = [1, 1]} : vector<8x1024xbf16> to vector<8x128xbf16>
    %201 = vector.extract_strided_slice %107 {offsets = [0, 640], sizes = [8, 128], strides = [1, 1]} : vector<8x1024xbf16> to vector<8x128xbf16>
    "tpu.trace_start"() <{level = 10 : i32, message = "qf,kf->qk"}> : () -> ()
    %cst_80 = arith.constant dense<0.000000e+00> : vector<8x8xf32>
    %202 = tpu.matmul %199, %200, %cst_80 {dimension_numbers = #tpu.dot_dimension_numbers<[1], [1], [0], [0], [0, 0, 1, 0], [], []>} : vector<8x128xbf16>, vector<8x128xbf16>, vector<8x8xf32> -> vector<8x8xf32>
    "tpu.trace_stop"() : () -> ()
    %203 = arith.addf %202, %108 : vector<8x8xf32>
    %cst_81 = arith.constant dense<0xFF800000> : vector<8xf32>
    %204 = vector.multi_reduction <maximumf>, %203, %cst_81 [1] : vector<8x8xf32> to vector<8xf32>
    %205 = vector.shape_cast %204 : vector<8xf32> to vector<8x1xf32>
    %206 = vector.broadcast %205 : vector<8x1xf32> to vector<8x8xf32>
    %207 = arith.subf %203, %206 : vector<8x8xf32>
    %208 = math.exp %207 : vector<8x8xf32>
    %cst_82 = arith.constant dense<0.000000e+00> : vector<8xf32>
    %209 = vector.multi_reduction <add>, %208, %cst_82 [1] : vector<8x8xf32> to vector<8xf32>
    %210 = vector.shape_cast %209 : vector<8xf32> to vector<8x1xf32>
    %211 = tpu.reciprocal %210 {approx = true} : vector<8x1xf32> -> vector<8x1xf32>
    %212 = vector.broadcast %211 : vector<8x1xf32> to vector<8x8xf32>
    %213 = arith.mulf %208, %212 : vector<8x8xf32>
    %214 = arith.truncf %213 : vector<8x8xf32> to vector<8x8xbf16>
    %cst_83 = arith.constant dense<0.000000e+00> : vector<8x128xf32>
    %215 = tpu.matmul %214, %201, %cst_83 {dimension_numbers = #tpu.dot_dimension_numbers<[1], [0], [0], [1], [0, 0, 1, 1], [], []>} : vector<8x8xbf16>, vector<8x128xbf16>, vector<8x128xf32> -> vector<8x128xf32>
    %216 = arith.truncf %215 : vector<8x128xf32> to vector<8x128xbf16>
    %217 = vector.extract_strided_slice %105 {offsets = [0, 768], sizes = [8, 128], strides = [1, 1]} : vector<8x1024xbf16> to vector<8x128xbf16>
    %218 = vector.extract_strided_slice %106 {offsets = [0, 768], sizes = [8, 128], strides = [1, 1]} : vector<8x1024xbf16> to vector<8x128xbf16>
    %219 = vector.extract_strided_slice %107 {offsets = [0, 768], sizes = [8, 128], strides = [1, 1]} : vector<8x1024xbf16> to vector<8x128xbf16>
    "tpu.trace_start"() <{level = 10 : i32, message = "qf,kf->qk"}> : () -> ()
    %cst_84 = arith.constant dense<0.000000e+00> : vector<8x8xf32>
    %220 = tpu.matmul %217, %218, %cst_84 {dimension_numbers = #tpu.dot_dimension_numbers<[1], [1], [0], [0], [0, 0, 1, 0], [], []>} : vector<8x128xbf16>, vector<8x128xbf16>, vector<8x8xf32> -> vector<8x8xf32>
    "tpu.trace_stop"() : () -> ()
    %221 = arith.addf %220, %108 : vector<8x8xf32>
    %cst_85 = arith.constant dense<0xFF800000> : vector<8xf32>
    %222 = vector.multi_reduction <maximumf>, %221, %cst_85 [1] : vector<8x8xf32> to vector<8xf32>
    %223 = vector.shape_cast %222 : vector<8xf32> to vector<8x1xf32>
    %224 = vector.broadcast %223 : vector<8x1xf32> to vector<8x8xf32>
    %225 = arith.subf %221, %224 : vector<8x8xf32>
    %226 = math.exp %225 : vector<8x8xf32>
    %cst_86 = arith.constant dense<0.000000e+00> : vector<8xf32>
    %227 = vector.multi_reduction <add>, %226, %cst_86 [1] : vector<8x8xf32> to vector<8xf32>
    %228 = vector.shape_cast %227 : vector<8xf32> to vector<8x1xf32>
    %229 = tpu.reciprocal %228 {approx = true} : vector<8x1xf32> -> vector<8x1xf32>
    %230 = vector.broadcast %229 : vector<8x1xf32> to vector<8x8xf32>
    %231 = arith.mulf %226, %230 : vector<8x8xf32>
    %232 = arith.truncf %231 : vector<8x8xf32> to vector<8x8xbf16>
    %cst_87 = arith.constant dense<0.000000e+00> : vector<8x128xf32>
    %233 = tpu.matmul %232, %219, %cst_87 {dimension_numbers = #tpu.dot_dimension_numbers<[1], [0], [0], [1], [0, 0, 1, 1], [], []>} : vector<8x8xbf16>, vector<8x128xbf16>, vector<8x128xf32> -> vector<8x128xf32>
    %234 = arith.truncf %233 : vector<8x128xf32> to vector<8x128xbf16>
    %235 = vector.extract_strided_slice %105 {offsets = [0, 896], sizes = [8, 128], strides = [1, 1]} : vector<8x1024xbf16> to vector<8x128xbf16>
    %236 = vector.extract_strided_slice %106 {offsets = [0, 896], sizes = [8, 128], strides = [1, 1]} : vector<8x1024xbf16> to vector<8x128xbf16>
    %237 = vector.extract_strided_slice %107 {offsets = [0, 896], sizes = [8, 128], strides = [1, 1]} : vector<8x1024xbf16> to vector<8x128xbf16>
    "tpu.trace_start"() <{level = 10 : i32, message = "qf,kf->qk"}> : () -> ()
    %cst_88 = arith.constant dense<0.000000e+00> : vector<8x8xf32>
    %238 = tpu.matmul %235, %236, %cst_88 {dimension_numbers = #tpu.dot_dimension_numbers<[1], [1], [0], [0], [0, 0, 1, 0], [], []>} : vector<8x128xbf16>, vector<8x128xbf16>, vector<8x8xf32> -> vector<8x8xf32>
    "tpu.trace_stop"() : () -> ()
    %239 = arith.addf %238, %108 : vector<8x8xf32>
    %cst_89 = arith.constant dense<0xFF800000> : vector<8xf32>
    %240 = vector.multi_reduction <maximumf>, %239, %cst_89 [1] : vector<8x8xf32> to vector<8xf32>
    %241 = vector.shape_cast %240 : vector<8xf32> to vector<8x1xf32>
    %242 = vector.broadcast %241 : vector<8x1xf32> to vector<8x8xf32>
    %243 = arith.subf %239, %242 : vector<8x8xf32>
    %244 = math.exp %243 : vector<8x8xf32>
    %cst_90 = arith.constant dense<0.000000e+00> : vector<8xf32>
    %245 = vector.multi_reduction <add>, %244, %cst_90 [1] : vector<8x8xf32> to vector<8xf32>
    %246 = vector.shape_cast %245 : vector<8xf32> to vector<8x1xf32>
    %247 = tpu.reciprocal %246 {approx = true} : vector<8x1xf32> -> vector<8x1xf32>
    %248 = vector.broadcast %247 : vector<8x1xf32> to vector<8x8xf32>
    %249 = arith.mulf %244, %248 : vector<8x8xf32>
    %250 = arith.truncf %249 : vector<8x8xf32> to vector<8x8xbf16>
    %cst_91 = arith.constant dense<0.000000e+00> : vector<8x128xf32>
    %251 = tpu.matmul %250, %237, %cst_91 {dimension_numbers = #tpu.dot_dimension_numbers<[1], [0], [0], [1], [0, 0, 1, 1], [], []>} : vector<8x8xbf16>, vector<8x128xbf16>, vector<8x128xf32> -> vector<8x128xf32>
    %252 = arith.truncf %251 : vector<8x128xf32> to vector<8x128xbf16>
    %253 = tpu.concatenate %126, %144, %162, %180, %198, %216, %234, %252 in 1 : vector<8x128xbf16>, vector<8x128xbf16>, vector<8x128xbf16>, vector<8x128xbf16>, vector<8x128xbf16>, vector<8x128xbf16>, vector<8x128xbf16>, vector<8x128xbf16> -> vector<8x1024xbf16>
    %c0_92 = arith.constant 0 : index
    %c0_93 = arith.constant 0 : index
    %254 = vector.load %arg21[%c0_92, %c0_93] : memref<1024x32xbf16, #tpu.memory_space<vmem>>, vector<1024x32xbf16>
    %cst_94 = arith.constant dense<0.000000e+00> : vector<8x32xf32>
    %255 = tpu.matmul %253, %254, %cst_94 {dimension_numbers = #tpu.dot_dimension_numbers<[1], [0], [0], [1], [0, 0, 1, 1], [], []>} : vector<8x1024xbf16>, vector<1024x32xbf16>, vector<8x32xf32> -> vector<8x32xf32>
    %c0_95 = arith.constant 0 : index
    %c0_96 = arith.constant 0 : index
    %256 = vector.load %arg22[%c0_95, %c0_96] : memref<1x32xf32, #tpu.memory_space<vmem>>, vector<1x32xf32>
    %257 = vector.broadcast %256 : vector<1x32xf32> to vector<8x32xf32>
    %258 = arith.addf %255, %257 : vector<8x32xf32>
    %259 = arith.addf %86, %258 : vector<8x32xf32>
    %c0_97 = arith.constant 0 : index
    %c0_98 = arith.constant 0 : index
    %260 = vector.load %arg23[%c0_97, %c0_98] : memref<1x32xf32, #tpu.memory_space<vmem>>, vector<1x32xf32>
    %c0_99 = arith.constant 0 : index
    %c0_100 = arith.constant 0 : index
    %261 = vector.load %arg24[%c0_99, %c0_100] : memref<1x32xf32, #tpu.memory_space<vmem>>, vector<1x32xf32>
    %cst_101 = arith.constant dense<0.000000e+00> : vector<8xf32>
    %262 = vector.multi_reduction <add>, %259, %cst_101 [1] : vector<8x32xf32> to vector<8xf32>
    %263 = vector.shape_cast %262 : vector<8xf32> to vector<8x1xf32>
    %cst_102 = arith.constant 3.200000e+01 : f32
    %264 = vector.broadcast %cst_102 : f32 to vector<8x1xf32>
    %265 = arith.divf %263, %264 : vector<8x1xf32>
    %266 = vector.broadcast %265 : vector<8x1xf32> to vector<8x32xf32>
    %267 = arith.subf %259, %266 : vector<8x32xf32>
    %268 = arith.mulf %267, %267 : vector<8x32xf32>
    %cst_103 = arith.constant dense<0.000000e+00> : vector<8xf32>
    %269 = vector.multi_reduction <add>, %268, %cst_103 [1] : vector<8x32xf32> to vector<8xf32>
    %270 = vector.shape_cast %269 : vector<8xf32> to vector<8x1xf32>
    %cst_104 = arith.constant 3.200000e+01 : f32
    %271 = vector.broadcast %cst_104 : f32 to vector<8x1xf32>
    %272 = arith.divf %270, %271 : vector<8x1xf32>
    %cst_105 = arith.constant 9.99999974E-6 : f32
    %273 = vector.broadcast %cst_105 : f32 to vector<8x1xf32>
    %274 = arith.addf %272, %273 : vector<8x1xf32>
    %275 = math.rsqrt %274 : vector<8x1xf32>
    %276 = vector.broadcast %275 : vector<8x1xf32> to vector<8x32xf32>
    %277 = arith.mulf %267, %276 : vector<8x32xf32>
    %278 = vector.broadcast %260 : vector<1x32xf32> to vector<8x32xf32>
    %279 = arith.mulf %277, %278 : vector<8x32xf32>
    %280 = vector.broadcast %261 : vector<1x32xf32> to vector<8x32xf32>
    %281 = arith.addf %279, %280 : vector<8x32xf32>
    %282 = arith.truncf %281 : vector<8x32xf32> to vector<8x32xbf16>
    %c0_106 = arith.constant 0 : index
    %c0_107 = arith.constant 0 : index
    %283 = vector.load %arg25[%c0_106, %c0_107] : memref<32x64xbf16, #tpu.memory_space<vmem>>, vector<32x64xbf16>
    %cst_108 = arith.constant dense<0.000000e+00> : vector<8x64xf32>
    %284 = tpu.matmul %282, %283, %cst_108 {dimension_numbers = #tpu.dot_dimension_numbers<[1], [0], [0], [1], [0, 0, 1, 1], [], []>} : vector<8x32xbf16>, vector<32x64xbf16>, vector<8x64xf32> -> vector<8x64xf32>
    %c0_109 = arith.constant 0 : index
    %c0_110 = arith.constant 0 : index
    %285 = vector.load %arg26[%c0_109, %c0_110] : memref<1x64xf32, #tpu.memory_space<vmem>>, vector<1x64xf32>
    %286 = vector.broadcast %285 : vector<1x64xf32> to vector<8x64xf32>
    %287 = arith.addf %284, %286 : vector<8x64xf32>
    %cst_111 = arith.constant 5.000000e-01 : f32
    %288 = vector.broadcast %cst_111 : f32 to vector<8x64xf32>
    %289 = arith.mulf %288, %287 : vector<8x64xf32>
    %cst_112 = arith.constant 0.707106769 : f32
    %290 = vector.broadcast %cst_112 : f32 to vector<8x64xf32>
    %291 = arith.mulf %287, %290 : vector<8x64xf32>
    %292 = math.erf %291 : vector<8x64xf32>
    %cst_113 = arith.constant 1.000000e+00 : f32
    %293 = vector.broadcast %cst_113 : f32 to vector<8x64xf32>
    %294 = arith.addf %293, %292 : vector<8x64xf32>
    %295 = arith.mulf %289, %294 : vector<8x64xf32>
    %296 = arith.truncf %295 : vector<8x64xf32> to vector<8x64xbf16>
    %c0_114 = arith.constant 0 : index
    %c0_115 = arith.constant 0 : index
    %297 = vector.load %arg27[%c0_114, %c0_115] : memref<64x32xbf16, #tpu.memory_space<vmem>>, vector<64x32xbf16>
    %cst_116 = arith.constant dense<0.000000e+00> : vector<8x32xf32>
    %298 = tpu.matmul %296, %297, %cst_116 {dimension_numbers = #tpu.dot_dimension_numbers<[1], [0], [0], [1], [0, 0, 1, 1], [], []>} : vector<8x64xbf16>, vector<64x32xbf16>, vector<8x32xf32> -> vector<8x32xf32>
    %c0_117 = arith.constant 0 : index
    %c0_118 = arith.constant 0 : index
    %299 = vector.load %arg28[%c0_117, %c0_118] : memref<1x32xf32, #tpu.memory_space<vmem>>, vector<1x32xf32>
    %300 = vector.broadcast %299 : vector<1x32xf32> to vector<8x32xf32>
    %301 = arith.addf %298, %300 : vector<8x32xf32>
    %c0_119 = arith.constant 0 : index
    %c0_120 = arith.constant 0 : index
    %302 = vector.load %arg29[%c0_119, %c0_120] : memref<1x32xf32, #tpu.memory_space<vmem>>, vector<1x32xf32>
    %c0_121 = arith.constant 0 : index
    %c0_122 = arith.constant 0 : index
    %303 = vector.load %arg30[%c0_121, %c0_122] : memref<1x32xf32, #tpu.memory_space<vmem>>, vector<1x32xf32>
    %cst_123 = arith.constant dense<0.000000e+00> : vector<8xf32>
    %304 = vector.multi_reduction <add>, %301, %cst_123 [1] : vector<8x32xf32> to vector<8xf32>
    %305 = vector.shape_cast %304 : vector<8xf32> to vector<8x1xf32>
    %cst_124 = arith.constant 3.200000e+01 : f32
    %306 = vector.broadcast %cst_124 : f32 to vector<8x1xf32>
    %307 = arith.divf %305, %306 : vector<8x1xf32>
    %308 = vector.broadcast %307 : vector<8x1xf32> to vector<8x32xf32>
    %309 = arith.subf %301, %308 : vector<8x32xf32>
    %310 = arith.mulf %309, %309 : vector<8x32xf32>
    %cst_125 = arith.constant dense<0.000000e+00> : vector<8xf32>
    %311 = vector.multi_reduction <add>, %310, %cst_125 [1] : vector<8x32xf32> to vector<8xf32>
    %312 = vector.shape_cast %311 : vector<8xf32> to vector<8x1xf32>
    %cst_126 = arith.constant 3.200000e+01 : f32
    %313 = vector.broadcast %cst_126 : f32 to vector<8x1xf32>
    %314 = arith.divf %312, %313 : vector<8x1xf32>
    %cst_127 = arith.constant 9.99999974E-6 : f32
    %315 = vector.broadcast %cst_127 : f32 to vector<8x1xf32>
    %316 = arith.addf %314, %315 : vector<8x1xf32>
    %317 = math.rsqrt %316 : vector<8x1xf32>
    %318 = vector.broadcast %317 : vector<8x1xf32> to vector<8x32xf32>
    %319 = arith.mulf %309, %318 : vector<8x32xf32>
    %320 = vector.broadcast %302 : vector<1x32xf32> to vector<8x32xf32>
    %321 = arith.mulf %319, %320 : vector<8x32xf32>
    %322 = vector.broadcast %303 : vector<1x32xf32> to vector<8x32xf32>
    %323 = arith.addf %321, %322 : vector<8x32xf32>
    %324 = arith.addf %281, %323 : vector<8x32xf32>
    %c0_128 = arith.constant 0 : index
    %c0_129 = arith.constant 0 : index
    %325 = vector.load %arg31[%c0_128, %c0_129] : memref<1x32xf32, #tpu.memory_space<vmem>>, vector<1x32xf32>
    %c0_130 = arith.constant 0 : index
    %c0_131 = arith.constant 0 : index
    %326 = vector.load %arg32[%c0_130, %c0_131] : memref<1x32xf32, #tpu.memory_space<vmem>>, vector<1x32xf32>
    %cst_132 = arith.constant dense<0.000000e+00> : vector<8xf32>
    %327 = vector.multi_reduction <add>, %324, %cst_132 [1] : vector<8x32xf32> to vector<8xf32>
    %328 = vector.shape_cast %327 : vector<8xf32> to vector<8x1xf32>
    %cst_133 = arith.constant 3.200000e+01 : f32
    %329 = vector.broadcast %cst_133 : f32 to vector<8x1xf32>
    %330 = arith.divf %328, %329 : vector<8x1xf32>
    %331 = vector.broadcast %330 : vector<8x1xf32> to vector<8x32xf32>
    %332 = arith.subf %324, %331 : vector<8x32xf32>
    %333 = arith.mulf %332, %332 : vector<8x32xf32>
    %cst_134 = arith.constant dense<0.000000e+00> : vector<8xf32>
    %334 = vector.multi_reduction <add>, %333, %cst_134 [1] : vector<8x32xf32> to vector<8xf32>
    %335 = vector.shape_cast %334 : vector<8xf32> to vector<8x1xf32>
    %cst_135 = arith.constant 3.200000e+01 : f32
    %336 = vector.broadcast %cst_135 : f32 to vector<8x1xf32>
    %337 = arith.divf %335, %336 : vector<8x1xf32>
    %cst_136 = arith.constant 9.99999974E-6 : f32
    %338 = vector.broadcast %cst_136 : f32 to vector<8x1xf32>
    %339 = arith.addf %337, %338 : vector<8x1xf32>
    %340 = math.rsqrt %339 : vector<8x1xf32>
    %341 = vector.broadcast %340 : vector<8x1xf32> to vector<8x32xf32>
    %342 = arith.mulf %332, %341 : vector<8x32xf32>
    %343 = vector.broadcast %325 : vector<1x32xf32> to vector<8x32xf32>
    %344 = arith.mulf %342, %343 : vector<8x32xf32>
    %345 = vector.broadcast %326 : vector<1x32xf32> to vector<8x32xf32>
    %346 = arith.addf %344, %345 : vector<8x32xf32>
    %347 = arith.truncf %346 : vector<8x32xf32> to vector<8x32xbf16>
    %c0_137 = arith.constant 0 : index
    %c0_138 = arith.constant 0 : index
    %348 = vector.load %arg33[%c0_137, %c0_138] : memref<32x16xbf16, #tpu.memory_space<vmem>>, vector<32x16xbf16>
    %cst_139 = arith.constant dense<0.000000e+00> : vector<8x16xf32>
    %349 = tpu.matmul %347, %348, %cst_139 {dimension_numbers = #tpu.dot_dimension_numbers<[1], [0], [0], [1], [0, 0, 1, 1], [], []>} : vector<8x32xbf16>, vector<32x16xbf16>, vector<8x16xf32> -> vector<8x16xf32>
    %c0_140 = arith.constant 0 : index
    %c0_141 = arith.constant 0 : index
    %350 = vector.load %arg34[%c0_140, %c0_141] : memref<1x16xf32, #tpu.memory_space<vmem>>, vector<1x16xf32>
    %351 = vector.broadcast %350 : vector<1x16xf32> to vector<8x16xf32>
    %352 = arith.addf %349, %351 : vector<8x16xf32>
    %cst_142 = arith.constant 5.000000e-01 : f32
    %353 = vector.broadcast %cst_142 : f32 to vector<8x16xf32>
    %354 = arith.mulf %353, %352 : vector<8x16xf32>
    %cst_143 = arith.constant 0.707106769 : f32
    %355 = vector.broadcast %cst_143 : f32 to vector<8x16xf32>
    %356 = arith.mulf %352, %355 : vector<8x16xf32>
    %357 = math.erf %356 : vector<8x16xf32>
    %cst_144 = arith.constant 1.000000e+00 : f32
    %358 = vector.broadcast %cst_144 : f32 to vector<8x16xf32>
    %359 = arith.addf %358, %357 : vector<8x16xf32>
    %360 = arith.mulf %354, %359 : vector<8x16xf32>
    %c0_145 = arith.constant 0 : index
    %c0_146 = arith.constant 0 : index
    %361 = vector.load %arg35[%c0_145, %c0_146] : memref<16x1xf32, #tpu.memory_space<vmem>>, vector<16x1xf32>
    %cst_147 = arith.constant dense<0.000000e+00> : vector<8x1xf32>
    %362 = tpu.matmul %360, %361, %cst_147 {dimension_numbers = #tpu.dot_dimension_numbers<[1], [0], [0], [1], [0, 0, 1, 1], [], []>} : vector<8x16xf32>, vector<16x1xf32>, vector<8x1xf32> -> vector<8x1xf32>
    %c0_148 = arith.constant 0 : index
    %c0_149 = arith.constant 0 : index
    %363 = vector.load %arg36[%c0_148, %c0_149] : memref<1x1xf32, #tpu.memory_space<vmem>>, vector<1x1xf32>
    %364 = vector.broadcast %363 : vector<1x1xf32> to vector<8x1xf32>
    %365 = arith.addf %362, %364 : vector<8x1xf32>
    %366 = arith.negf %365 : vector<8x1xf32>
    %367 = math.exp %366 : vector<8x1xf32>
    %cst_150 = arith.constant 1.000000e+00 : f32
    %368 = vector.broadcast %cst_150 : f32 to vector<8x1xf32>
    %369 = arith.addf %368, %367 : vector<8x1xf32>
    %370 = arith.divf %368, %369 : vector<8x1xf32>
    %371 = math.exp %370 : vector<8x1xf32>
    %c0_151 = arith.constant 0 : index
    %c0_152 = arith.constant 0 : index
    %372 = vector.load %arg4[%c0_151, %c0_152] : memref<2x8xbf16, #tpu.memory_space<vmem>>, vector<2x8xbf16>
    %373 = vector.broadcast %371 : vector<8x1xf32> to vector<8x32xf32>
    %374 = arith.mulf %373, %346 : vector<8x32xf32>
    %375 = arith.truncf %374 : vector<8x32xf32> to vector<8x32xbf16>
    %cst_153 = arith.constant dense<0.000000e+00> : vector<2x32xf32>
    %376 = tpu.matmul %372, %375, %cst_153 {dimension_numbers = #tpu.dot_dimension_numbers<[1], [0], [0], [1], [0, 0, 1, 1], [], []>} : vector<2x8xbf16>, vector<8x32xbf16>, vector<2x32xf32> -> vector<2x32xf32>
    %377 = arith.truncf %371 : vector<8x1xf32> to vector<8x1xbf16>
    %cst_154 = arith.constant dense<0.000000e+00> : vector<2x1xf32>
    %378 = tpu.matmul %372, %377, %cst_154 {dimension_numbers = #tpu.dot_dimension_numbers<[1], [0], [0], [1], [0, 0, 1, 1], [], []>} : vector<2x8xbf16>, vector<8x1xbf16>, vector<2x1xf32> -> vector<2x1xf32>
    %cst_155 = arith.constant 1.000000e+00 : f32
    %379 = vector.broadcast %cst_155 : f32 to vector<2x1xf32>
    %380 = arith.divf %379, %378 : vector<2x1xf32>
    %381 = vector.broadcast %380 : vector<2x1xf32> to vector<2x32xf32>
    %382 = arith.mulf %376, %381 : vector<2x32xf32>
    %c0_156 = arith.constant 0 : index
    %c0_157 = arith.constant 0 : index
    %383 = vector.load %arg37[%c0_156, %c0_157] : memref<2x32xf32, #tpu.memory_space<vmem>>, vector<2x32xf32>
    tpu.vector_store %arg37[%c0_156, %c0_157], %382 {strides = array<i32>} : memref<2x32xf32, #tpu.memory_space<vmem>>, vector<2x32xf32>,
    return
  }
  func.func @transform_0(%arg0: i32) -> (i32, i32) {
    %c0_i32 = arith.constant 0 : i32
    %c0_i32_0 = arith.constant 0 : i32
    return %arg0, %c0_i32 : i32, i32
  }
  func.func @transform_1(%arg0: i32) -> (i32, i32) {
    %c0_i32 = arith.constant 0 : i32
    %c0_i32_0 = arith.constant 0 : i32
    return %arg0, %c0_i32 : i32, i32
  }
  func.func @transform_2(%arg0: i32) -> (i32, i32) {
    %c0_i32 = arith.constant 0 : i32
    %c0_i32_0 = arith.constant 0 : i32
    %c0_i32_1 = arith.constant 0 : i32
    return %c0_i32, %c0_i32_0 : i32, i32
  }
  func.func @transform_3(%arg0: i32) -> (i32, i32) {
    %c0_i32 = arith.constant 0 : i32
    %c0_i32_0 = arith.constant 0 : i32
    %c0_i32_1 = arith.constant 0 : i32
    return %c0_i32, %c0_i32_0 : i32, i32
  }
  func.func @transform_4(%arg0: i32) -> (i32, i32) {
    %c0_i32 = arith.constant 0 : i32
    %c0_i32_0 = arith.constant 0 : i32
    %c0_i32_1 = arith.constant 0 : i32
    return %c0_i32, %c0_i32_0 : i32, i32
  }
  func.func @transform_5(%arg0: i32) -> (i32, i32) {
    %c0_i32 = arith.constant 0 : i32
    %c0_i32_0 = arith.constant 0 : i32
    %c0_i32_1 = arith.constant 0 : i32
    return %c0_i32, %c0_i32_0 : i32, i32
  }
  func.func @transform_6(%arg0: i32) -> (i32, i32) {
    %c0_i32 = arith.constant 0 : i32
    %c0_i32_0 = arith.constant 0 : i32
    %c0_i32_1 = arith.constant 0 : i32
    return %c0_i32, %c0_i32_0 : i32, i32
  }
  func.func @transform_7(%arg0: i32) -> (i32, i32) {
    %c0_i32 = arith.constant 0 : i32
    %c0_i32_0 = arith.constant 0 : i32
    %c0_i32_1 = arith.constant 0 : i32
    return %c0_i32, %c0_i32_0 : i32, i32
  }
  func.func @transform_8(%arg0: i32) -> (i32, i32) {
    %c0_i32 = arith.constant 0 : i32
    %c0_i32_0 = arith.constant 0 : i32
    %c0_i32_1 = arith.constant 0 : i32
    return %c0_i32, %c0_i32_0 : i32, i32
  }
  func.func @transform_9(%arg0: i32) -> (i32, i32) {
    %c0_i32 = arith.constant 0 : i32
    %c0_i32_0 = arith.constant 0 : i32
    %c0_i32_1 = arith.constant 0 : i32
    return %c0_i32, %c0_i32_0 : i32, i32
  }
  func.func @transform_10(%arg0: i32) -> (i32, i32) {
    %c0_i32 = arith.constant 0 : i32
    %c0_i32_0 = arith.constant 0 : i32
    %c0_i32_1 = arith.constant 0 : i32
    return %c0_i32, %c0_i32_0 : i32, i32
  }
  func.func @transform_11(%arg0: i32) -> (i32, i32) {
    %c0_i32 = arith.constant 0 : i32
    %c0_i32_0 = arith.constant 0 : i32
    %c0_i32_1 = arith.constant 0 : i32
    return %c0_i32, %c0_i32_0 : i32, i32
  }
  func.func @transform_12(%arg0: i32) -> (i32, i32) {
    %c0_i32 = arith.constant 0 : i32
    %c0_i32_0 = arith.constant 0 : i32
    %c0_i32_1 = arith.constant 0 : i32
    return %c0_i32, %c0_i32_0 : i32, i32
  }
  func.func @transform_13(%arg0: i32) -> (i32, i32) {
    %c0_i32 = arith.constant 0 : i32
    %c0_i32_0 = arith.constant 0 : i32
    %c0_i32_1 = arith.constant 0 : i32
    return %c0_i32, %c0_i32_0 : i32, i32
  }
  func.func @transform_14(%arg0: i32) -> (i32, i32) {
    %c0_i32 = arith.constant 0 : i32
    %c0_i32_0 = arith.constant 0 : i32
    %c0_i32_1 = arith.constant 0 : i32
    return %c0_i32, %c0_i32_0 : i32, i32
  }
  func.func @transform_15(%arg0: i32) -> (i32, i32) {
    %c0_i32 = arith.constant 0 : i32
    %c0_i32_0 = arith.constant 0 : i32
    %c0_i32_1 = arith.constant 0 : i32
    return %c0_i32, %c0_i32_0 : i32, i32
  }
  func.func @transform_16(%arg0: i32) -> (i32, i32) {
    %c0_i32 = arith.constant 0 : i32
    %c0_i32_0 = arith.constant 0 : i32
    %c0_i32_1 = arith.constant 0 : i32
    return %c0_i32, %c0_i32_0 : i32, i32
  }
  func.func @transform_17(%arg0: i32) -> (i32, i32) {
    %c0_i32 = arith.constant 0 : i32
    %c0_i32_0 = arith.constant 0 : i32
    %c0_i32_1 = arith.constant 0 : i32
    return %c0_i32, %c0_i32_0 : i32, i32
  }
  func.func @transform_18(%arg0: i32) -> (i32, i32) {
    %c0_i32 = arith.constant 0 : i32
    %c0_i32_0 = arith.constant 0 : i32
    %c0_i32_1 = arith.constant 0 : i32
    return %c0_i32, %c0_i32_0 : i32, i32
  }
  func.func @transform_19(%arg0: i32) -> (i32, i32) {
    %c0_i32 = arith.constant 0 : i32
    %c0_i32_0 = arith.constant 0 : i32
    %c0_i32_1 = arith.constant 0 : i32
    return %c0_i32, %c0_i32_0 : i32, i32
  }
  func.func @transform_20(%arg0: i32) -> (i32, i32) {
    %c0_i32 = arith.constant 0 : i32
    %c0_i32_0 = arith.constant 0 : i32
    %c0_i32_1 = arith.constant 0 : i32
    return %c0_i32, %c0_i32_0 : i32, i32
  }
  func.func @transform_21(%arg0: i32) -> (i32, i32) {
    %c0_i32 = arith.constant 0 : i32
    %c0_i32_0 = arith.constant 0 : i32
    %c0_i32_1 = arith.constant 0 : i32
    return %c0_i32, %c0_i32_0 : i32, i32
  }
  func.func @transform_22(%arg0: i32) -> (i32, i32) {
    %c0_i32 = arith.constant 0 : i32
    %c0_i32_0 = arith.constant 0 : i32
    %c0_i32_1 = arith.constant 0 : i32
    return %c0_i32, %c0_i32_0 : i32, i32
  }
  func.func @transform_23(%arg0: i32) -> (i32, i32) {
    %c0_i32 = arith.constant 0 : i32
    %c0_i32_0 = arith.constant 0 : i32
    %c0_i32_1 = arith.constant 0 : i32
    return %c0_i32, %c0_i32_0 : i32, i32
  }
  func.func @transform_24(%arg0: i32) -> (i32, i32) {
    %c0_i32 = arith.constant 0 : i32
    %c0_i32_0 = arith.constant 0 : i32
    %c0_i32_1 = arith.constant 0 : i32
    return %c0_i32, %c0_i32_0 : i32, i32
  }
  func.func @transform_25(%arg0: i32) -> (i32, i32) {
    %c0_i32 = arith.constant 0 : i32
    %c0_i32_0 = arith.constant 0 : i32
    %c0_i32_1 = arith.constant 0 : i32
    return %c0_i32, %c0_i32_0 : i32, i32
  }
  func.func @transform_26(%arg0: i32) -> (i32, i32) {
    %c0_i32 = arith.constant 0 : i32
    %c0_i32_0 = arith.constant 0 : i32
    %c0_i32_1 = arith.constant 0 : i32
    return %c0_i32, %c0_i32_0 : i32, i32
  }
  func.func @transform_27(%arg0: i32) -> (i32, i32) {
    %c0_i32 = arith.constant 0 : i32
    %c0_i32_0 = arith.constant 0 : i32
    %c0_i32_1 = arith.constant 0 : i32
    return %c0_i32, %c0_i32_0 : i32, i32
  }
  func.func @transform_28(%arg0: i32) -> (i32, i32) {
    %c0_i32 = arith.constant 0 : i32
    %c0_i32_0 = arith.constant 0 : i32
    %c0_i32_1 = arith.constant 0 : i32
    return %c0_i32, %c0_i32_0 : i32, i32
  }
  func.func @transform_29(%arg0: i32) -> (i32, i32) {
    %c0_i32 = arith.constant 0 : i32
    %c0_i32_0 = arith.constant 0 : i32
    %c0_i32_1 = arith.constant 0 : i32
    return %c0_i32, %c0_i32_0 : i32, i32
  }
  func.func @transform_30(%arg0: i32) -> (i32, i32) {
    %c0_i32 = arith.constant 0 : i32
    %c0_i32_0 = arith.constant 0 : i32
    %c0_i32_1 = arith.constant 0 : i32
    return %c0_i32, %c0_i32_0 : i32, i32
  }
  func.func @transform_31(%arg0: i32) -> (i32, i32) {
    %c0_i32 = arith.constant 0 : i32
    %c0_i32_0 = arith.constant 0 : i32
    %c0_i32_1 = arith.constant 0 : i32
    return %c0_i32, %c0_i32_0 : i32, i32
  }
  func.func @transform_32(%arg0: i32) -> (i32, i32) {
    %c0_i32 = arith.constant 0 : i32
    %c0_i32_0 = arith.constant 0 : i32
    %c0_i32_1 = arith.constant 0 : i32
    return %c0_i32, %c0_i32_0 : i32, i32
  }
  func.func @transform_33(%arg0: i32) -> (i32, i32) {
    %c0_i32 = arith.constant 0 : i32
    %c0_i32_0 = arith.constant 0 : i32
    %c0_i32_1 = arith.constant 0 : i32
    return %c0_i32, %c0_i32_0 : i32, i32
  }
  func.func @transform_34(%arg0: i32) -> (i32, i32) {
    %c0_i32 = arith.constant 0 : i32
    %c0_i32_0 = arith.constant 0 : i32
    %c0_i32_1 = arith.constant 0 : i32
    return %c0_i32, %c0_i32_0 : i32, i32
  }
  func.func @transform_35(%arg0: i32) -> (i32, i32) {
    %c0_i32 = arith.constant 0 : i32
    %c0_i32_0 = arith.constant 0 : i32
    %c0_i32_1 = arith.constant 0 : i32
    return %c0_i32, %c0_i32_0 : i32, i32
  }
  func.func @transform_36(%arg0: i32) -> (i32, i32) {
    %c0_i32 = arith.constant 0 : i32
    %c0_i32_0 = arith.constant 0 : i32
    return %arg0, %c0_i32 : i32, i32
  }
}

</mosaic_0001>

<llo_original>
// kernel: tpu_custom_call.1
$region0: #{tpu_custom_call.1}
  #allocation0 [shape = 'u32[]', space=smem, size = 0x4, offset = 0x4, fixed_abs, tag = 'smem constant byte address 0x4 - core index']
  #allocation1 [shape = 'u32[72,128]{1,0:T(1,128)}', space=vmem, size = 0x9000, scoped, tag = 'internal scratch']
  #allocation2 [shape = 'f32[1,1]{1,0:T(1,128)S(1)}', space=vmem, size = 0x200, scoped, tag = 'scoped memory for tpu_custom_call.1']
  %s0 = inlined_call_operand.smem [shape: u32[37], index: -1, kind: input, shape index: {}]
  %s1 = sld [smem:[%s0]]
  %s2 = scalar_lea.smem %s0, 1
  %s3 = sld [smem:[%s2]]
  %s4 = scalar_lea.smem %s0, 2
  %s5 = sld [smem:[%s4]]
  %s6 = scalar_lea.smem %s0, 3
  %s7 = sld [smem:[%s6]]
  %s8 = scalar_lea.smem %s0, 4
  %s9 = sld [smem:[%s8]]
  %s10 = scalar_lea.smem %s0, 5
  %s11 = sld [smem:[%s10]]
  %s12 = scalar_lea.smem %s0, 6
  %s13 = sld [smem:[%s12]]
  %s14 = scalar_lea.smem %s0, 7
  %s15 = sld [smem:[%s14]]
  %s16 = scalar_lea.smem %s0, 8
  %s17 = sld [smem:[%s16]]
  %s18 = scalar_lea.smem %s0, 9
  %s19 = sld [smem:[%s18]]
  %s20 = scalar_lea.smem %s0, 10
  %s21 = sld [smem:[%s20]]
  %s22 = scalar_lea.smem %s0, 11
  %s23 = sld [smem:[%s22]]
  %s24 = scalar_lea.smem %s0, 12
  %s25 = sld [smem:[%s24]]
  %s26 = scalar_lea.smem %s0, 13
  %s27 = sld [smem:[%s26]]
  %s28 = scalar_lea.smem %s0, 14
  %s29 = sld [smem:[%s28]]
  %s30 = scalar_lea.smem %s0, 15
  %s31 = sld [smem:[%s30]]
  %s32 = scalar_lea.smem %s0, 16
  %s33 = sld [smem:[%s32]]
  %s34 = scalar_lea.smem %s0, 17
  %s35 = sld [smem:[%s34]]
  %s36 = scalar_lea.smem %s0, 18
  %s37 = sld [smem:[%s36]]
  %s38 = scalar_lea.smem %s0, 19
  %s39 = sld [smem:[%s38]]
  %s40 = scalar_lea.smem %s0, 20
  %s41 = sld [smem:[%s40]]
  %s42 = scalar_lea.smem %s0, 21
  %s43 = sld [smem:[%s42]]
  %s44 = scalar_lea.smem %s0, 22
  %s45 = sld [smem:[%s44]]
  %s46 = scalar_lea.smem %s0, 23
  %s47 = sld [smem:[%s46]]
  %s48 = scalar_lea.smem %s0, 24
  %s49 = sld [smem:[%s48]]
  %s50 = scalar_lea.smem %s0, 25
  %s51 = sld [smem:[%s50]]
  %s52 = scalar_lea.smem %s0, 26
  %s53 = sld [smem:[%s52]]
  %s54 = scalar_lea.smem %s0, 27
  %s55 = sld [smem:[%s54]]
  %s56 = scalar_lea.smem %s0, 28
  %s57 = sld [smem:[%s56]]
  %s58 = scalar_lea.smem %s0, 29
  %s59 = sld [smem:[%s58]]
  %s60 = scalar_lea.smem %s0, 30
  %s61 = sld [smem:[%s60]]
  %s62 = scalar_lea.smem %s0, 31
  %s63 = sld [smem:[%s62]]
  %s64 = scalar_lea.smem %s0, 32
  %s65 = sld [smem:[%s64]]
  %s66 = scalar_lea.smem %s0, 33
  %s67 = sld [smem:[%s66]]
  %s68 = scalar_lea.smem %s0, 34
  %s69 = sld [smem:[%s68]]
  %s70 = scalar_lea.smem %s0, 35
  %s71 = sld [smem:[%s70]]
  %s72 = scalar_lea.smem %s0, 36
  %s73 = sld [smem:[%s72]]
  %s74 = sld [smem:[#allocation0]]
  $region154: #{tpu_custom_call.1} parent=0
    _
  %s76 = ssub.s32 1, %s74
  %s77 = scalar_select 0, %s76, %s74
  %v78 = vstv %s71
  %79 = vst [vmem:[#allocation2] sm:$0x1] %v78
  $region1: #{tpu_custom_call.1} parent=0
    #allocation3 [shape = 'u8[1024]{0}', space=vmem, size = 0x400, scoped, tag = 'output window, operand 0, single buffered']
    #allocation4 [shape = 's32[1]{0}', space=sflag, size = 0x4, scoped, tag = 'scoped memory for tpu_custom_call.1']
    %80 = vsyncpa [#allocation4], 0
    // Predicated region
    $region2: #{tpu_custom_call.1} parent=1 // pred_check
      _
    $region3: #{tpu_custom_call.1} parent=1 // pred_check_branch
      %82 = sbr.rel (0) target = $region5
    $region4: #{tpu_custom_call.1} parent=1 // pred_region
      _
    $region5: #{tpu_custom_call.1} parent=1 // pred_fallthru
      _
    // Predicated region
    $region6: #{tpu_custom_call.1} parent=1 // pred_check
      _
    $region7: #{tpu_custom_call.1} parent=1 // pred_check_branch
      %84 = sbr.rel (0) target = $region9
    $region8: #{tpu_custom_call.1} parent=1 // pred_region
      _
    $region9: #{tpu_custom_call.1} parent=1 // pred_fallthru
      _
    // Predicated region
    $region10: #{tpu_custom_call.1} parent=1 // pred_check
      _
    $region11: #{tpu_custom_call.1} parent=1 // pred_check_branch
      %86 = sbr.rel (0) target = $region13
    $region12: #{tpu_custom_call.1} parent=1 // pred_region
      _
    $region13: #{tpu_custom_call.1} parent=1 // pred_fallthru
      _
    // Predicated region
    $region14: #{tpu_custom_call.1} parent=1 // pred_check
      _
    $region15: #{tpu_custom_call.1} parent=1 // pred_check_branch
      %88 = sbr.rel (0) target = $region17
    $region16: #{tpu_custom_call.1} parent=1 // pred_region
      _
    $region17: #{tpu_custom_call.1} parent=1 // pred_fallthru
      _
    // Predicated region
    $region18: #{tpu_custom_call.1} parent=1 // pred_check
      _
    $region19: #{tpu_custom_call.1} parent=1 // pred_check_branch
      %90 = sbr.rel (0) target = $region21
    $region20: #{tpu_custom_call.1} parent=1 // pred_region
      _
    $region21: #{tpu_custom_call.1} parent=1 // pred_fallthru
      _
    // Predicated region
    $region22: #{tpu_custom_call.1} parent=1 // pred_check
      _
    $region23: #{tpu_custom_call.1} parent=1 // pred_check_branch
      %92 = sbr.rel (0) target = $region25
    $region24: #{tpu_custom_call.1} parent=1 // pred_region
      _
    $region25: #{tpu_custom_call.1} parent=1 // pred_fallthru
      _
    // Predicated region
    $region26: #{tpu_custom_call.1} parent=1 // pred_check
      _
    $region27: #{tpu_custom_call.1} parent=1 // pred_check_branch
      %94 = sbr.rel (0) target = $region29
    $region28: #{tpu_custom_call.1} parent=1 // pred_region
      _
    $region29: #{tpu_custom_call.1} parent=1 // pred_fallthru
      _
    // Predicated region
    $region30: #{tpu_custom_call.1} parent=1 // pred_check
      _
    $region31: #{tpu_custom_call.1} parent=1 // pred_check_branch
      %96 = sbr.rel (0) target = $region33
    $region32: #{tpu_custom_call.1} parent=1 // pred_region
      _
    $region33: #{tpu_custom_call.1} parent=1 // pred_fallthru
      _
    // Predicated region
    $region34: #{tpu_custom_call.1} parent=1 // pred_check
      _
    $region35: #{tpu_custom_call.1} parent=1 // pred_check_branch
      %98 = sbr.rel (0) target = $region37
    $region36: #{tpu_custom_call.1} parent=1 // pred_region
      _
    $region37: #{tpu_custom_call.1} parent=1 // pred_fallthru
      _
    // Predicated region
    $region38: #{tpu_custom_call.1} parent=1 // pred_check
      _
    $region39: #{tpu_custom_call.1} parent=1 // pred_check_branch
      %100 = sbr.rel (0) target = $region41
    $region40: #{tpu_custom_call.1} parent=1 // pred_region
      _
    $region41: #{tpu_custom_call.1} parent=1 // pred_fallthru
      _
    // Predicated region
    $region42: #{tpu_custom_call.1} parent=1 // pred_check
      _
    $region43: #{tpu_custom_call.1} parent=1 // pred_check_branch
      %102 = sbr.rel (0) target = $region45
    $region44: #{tpu_custom_call.1} parent=1 // pred_region
      _
    $region45: #{tpu_custom_call.1} parent=1 // pred_fallthru
      _
    // Predicated region
    $region46: #{tpu_custom_call.1} parent=1 // pred_check
      _
    $region47: #{tpu_custom_call.1} parent=1 // pred_check_branch
      %104 = sbr.rel (0) target = $region49
    $region48: #{tpu_custom_call.1} parent=1 // pred_region
      _
    $region49: #{tpu_custom_call.1} parent=1 // pred_fallthru
      _
    // Predicated region
    $region50: #{tpu_custom_call.1} parent=1 // pred_check
      _
    $region51: #{tpu_custom_call.1} parent=1 // pred_check_branch
      %106 = sbr.rel (0) target = $region53
    $region52: #{tpu_custom_call.1} parent=1 // pred_region
      _
    $region53: #{tpu_custom_call.1} parent=1 // pred_fallthru
      _
    // Predicated region
    $region54: #{tpu_custom_call.1} parent=1 // pred_check
      _
    $region55: #{tpu_custom_call.1} parent=1 // pred_check_branch
      %108 = sbr.rel (0) target = $region57
    $region56: #{tpu_custom_call.1} parent=1 // pred_region
      _
    $region57: #{tpu_custom_call.1} parent=1 // pred_fallthru
      _
    // Predicated region
    $region58: #{tpu_custom_call.1} parent=1 // pred_check
      _
    $region59: #{tpu_custom_call.1} parent=1 // pred_check_branch
      %110 = sbr.rel (0) target = $region61
    $region60: #{tpu_custom_call.1} parent=1 // pred_region
      _
    $region61: #{tpu_custom_call.1} parent=1 // pred_fallthru
      _
    // Predicated region
    $region62: #{tpu_custom_call.1} parent=1 // pred_check
      _
    $region63: #{tpu_custom_call.1} parent=1 // pred_check_branch
      %112 = sbr.rel (0) target = $region65
    $region64: #{tpu_custom_call.1} parent=1 // pred_region
      _
    $region65: #{tpu_custom_call.1} parent=1 // pred_fallthru
      _
    // Predicated region
    $region66: #{tpu_custom_call.1} parent=1 // pred_check
      _
    $region67: #{tpu_custom_call.1} parent=1 // pred_check_branch
      %114 = sbr.rel (0) target = $region69
    $region68: #{tpu_custom_call.1} parent=1 // pred_region
      _
    $region69: #{tpu_custom_call.1} parent=1 // pred_fallthru
      _
    // Predicated region
    $region70: #{tpu_custom_call.1} parent=1 // pred_check
      _
    $region71: #{tpu_custom_call.1} parent=1 // pred_check_branch
      %116 = sbr.rel (0) target = $region73
    $region72: #{tpu_custom_call.1} parent=1 // pred_region
      _
    $region73: #{tpu_custom_call.1} parent=1 // pred_fallthru
      _
    // Predicated region
    $region74: #{tpu_custom_call.1} parent=1 // pred_check
      _
    $region75: #{tpu_custom_call.1} parent=1 // pred_check_branch
      %118 = sbr.rel (0) target = $region77
    $region76: #{tpu_custom_call.1} parent=1 // pred_region
      _
    $region77: #{tpu_custom_call.1} parent=1 // pred_fallthru
      _
    // Predicated region
    $region78: #{tpu_custom_call.1} parent=1 // pred_check
      _
    $region79: #{tpu_custom_call.1} parent=1 // pred_check_branch
      %120 = sbr.rel (0) target = $region81
    $region80: #{tpu_custom_call.1} parent=1 // pred_region
      _
    $region81: #{tpu_custom_call.1} parent=1 // pred_fallthru
      _
    // Predicated region
    $region82: #{tpu_custom_call.1} parent=1 // pred_check
      _
    $region83: #{tpu_custom_call.1} parent=1 // pred_check_branch
      %122 = sbr.rel (0) target = $region85
    $region84: #{tpu_custom_call.1} parent=1 // pred_region
      _
    $region85: #{tpu_custom_call.1} parent=1 // pred_fallthru
      _
    // Predicated region
    $region86: #{tpu_custom_call.1} parent=1 // pred_check
      _
    $region87: #{tpu_custom_call.1} parent=1 // pred_check_branch
      %124 = sbr.rel (0) target = $region89
    $region88: #{tpu_custom_call.1} parent=1 // pred_region
      _
    $region89: #{tpu_custom_call.1} parent=1 // pred_fallthru
      _
    // Predicated region
    $region90: #{tpu_custom_call.1} parent=1 // pred_check
      _
    $region91: #{tpu_custom_call.1} parent=1 // pred_check_branch
      %126 = sbr.rel (0) target = $region93
    $region92: #{tpu_custom_call.1} parent=1 // pred_region
      _
    $region93: #{tpu_custom_call.1} parent=1 // pred_fallthru
      _
    // Predicated region
    $region94: #{tpu_custom_call.1} parent=1 // pred_check
      _
    $region95: #{tpu_custom_call.1} parent=1 // pred_check_branch
      %128 = sbr.rel (0) target = $region97
    $region96: #{tpu_custom_call.1} parent=1 // pred_region
      _
    $region97: #{tpu_custom_call.1} parent=1 // pred_fallthru
      _
    // Predicated region
    $region98: #{tpu_custom_call.1} parent=1 // pred_check
      _
    $region99: #{tpu_custom_call.1} parent=1 // pred_check_branch
      %130 = sbr.rel (0) target = $region101
    $region100: #{tpu_custom_call.1} parent=1 // pred_region
      _
    $region101: #{tpu_custom_call.1} parent=1 // pred_fallthru
      _
    // Predicated region
    $region102: #{tpu_custom_call.1} parent=1 // pred_check
      _
    $region103: #{tpu_custom_call.1} parent=1 // pred_check_branch
      %132 = sbr.rel (0) target = $region105
    $region104: #{tpu_custom_call.1} parent=1 // pred_region
      _
    $region105: #{tpu_custom_call.1} parent=1 // pred_fallthru
      _
    // Predicated region
    $region106: #{tpu_custom_call.1} parent=1 // pred_check
      _
    $region107: #{tpu_custom_call.1} parent=1 // pred_check_branch
      %134 = sbr.rel (0) target = $region109
    $region108: #{tpu_custom_call.1} parent=1 // pred_region
      _
    $region109: #{tpu_custom_call.1} parent=1 // pred_fallthru
      _
    // Predicated region
    $region110: #{tpu_custom_call.1} parent=1 // pred_check
      _
    $region111: #{tpu_custom_call.1} parent=1 // pred_check_branch
      %136 = sbr.rel (0) target = $region113
    $region112: #{tpu_custom_call.1} parent=1 // pred_region
      _
    $region113: #{tpu_custom_call.1} parent=1 // pred_fallthru
      _
    // Predicated region
    $region114: #{tpu_custom_call.1} parent=1 // pred_check
      _
    $region115: #{tpu_custom_call.1} parent=1 // pred_check_branch
      %138 = sbr.rel (0) target = $region117
    $region116: #{tpu_custom_call.1} parent=1 // pred_region
      _
    $region117: #{tpu_custom_call.1} parent=1 // pred_fallthru
      _
    // Predicated region
    $region118: #{tpu_custom_call.1} parent=1 // pred_check
      _
    $region119: #{tpu_custom_call.1} parent=1 // pred_check_branch
      %140 = sbr.rel (0) target = $region121
    $region120: #{tpu_custom_call.1} parent=1 // pred_region
      _
    $region121: #{tpu_custom_call.1} parent=1 // pred_fallthru
      _
    // Predicated region
    $region122: #{tpu_custom_call.1} parent=1 // pred_check
      _
    $region123: #{tpu_custom_call.1} parent=1 // pred_check_branch
      %142 = sbr.rel (0) target = $region125
    $region124: #{tpu_custom_call.1} parent=1 // pred_region
      _
    $region125: #{tpu_custom_call.1} parent=1 // pred_fallthru
      _
    // Predicated region
    $region126: #{tpu_custom_call.1} parent=1 // pred_check
      _
    $region127: #{tpu_custom_call.1} parent=1 // pred_check_branch
      %144 = sbr.rel (0) target = $region129
    $region128: #{tpu_custom_call.1} parent=1 // pred_region
      _
    $region129: #{tpu_custom_call.1} parent=1 // pred_fallthru
      _
    // Predicated region
    $region130: #{tpu_custom_call.1} parent=1 // pred_check
      _
    $region131: #{tpu_custom_call.1} parent=1 // pred_check_branch
      %146 = sbr.rel (0) target = $region133
    $region132: #{tpu_custom_call.1} parent=1 // pred_region
      _
    $region133: #{tpu_custom_call.1} parent=1 // pred_fallthru
      _
    // Predicated region
    $region134: #{tpu_custom_call.1} parent=1 // pred_check
      _
    $region135: #{tpu_custom_call.1} parent=1 // pred_check_branch
      %148 = sbr.rel (0) target = $region137
    $region136: #{tpu_custom_call.1} parent=1 // pred_region
      _
    $region137: #{tpu_custom_call.1} parent=1 // pred_fallthru
      _
    // Predicated region
    $region138: #{tpu_custom_call.1} parent=1 // pred_check
      _
    $region139: #{tpu_custom_call.1} parent=1 // pred_check_branch
      %150 = sbr.rel (0) target = $region141
    $region140: #{tpu_custom_call.1} parent=1 // pred_region
      _
    $region141: #{tpu_custom_call.1} parent=1 // pred_fallthru
      _
    // Predicated region
    $region142: #{tpu_custom_call.1} parent=1 // pred_check
      _
    $region143: #{tpu_custom_call.1} parent=1 // pred_check_branch
      %152 = sbr.rel (0) target = $region145
    $region144: #{tpu_custom_call.1} parent=1 // pred_region
      _
    $region145: #{tpu_custom_call.1} parent=1 // pred_fallthru
      _
    %v154 = vld [vmem:[%s1] sm:$0xff]
    %v155 = vld [vmem:[%s3] sm:$0xff]
    %v156 = vld [vmem:[%s9] sm:$0x3]
    %v157 = vld [vmem:[%s11] sm:$0x1]
    %v159 = vperm.slane %v157, 0
    %vm161 = vcmask 15360
    %v163 = vsel %vm161, %v155, 0
    %vm165 = vcmask 1041408
    %v167 = vsel %vm165, %v156, 0
    %169 = vmatpush.msra.mxu0 0.0
    %170 = vmatpush.msra.mxu0 0.0
    %171 = vmatpush.msra.mxu0 0.0
    %172 = vmatpush.msra.mxu0 0.0
    %173 = vmatpush.msra.mxu0 0.0
    %174 = vmatpush.msra.mxu0 0.0
    %175 = vmatpush.msra.mxu0 0.0
    %176 = vmatpush.msra.mxu0 0.0
    %177 = vmatpush.msra.mxu0 0.0
    %178 = vmatpush.msra.mxu0 0.0
    %179 = vmatpush.msra.mxu0 0.0
    %180 = vmatpush.msra.mxu0 0.0
    %181 = vmatpush.msra.mxu0 0.0
    %182 = vmatpush.msra.mxu0 0.0
    %183 = vmatpush.msra.mxu0 0.0
    %184 = vmatpush.msra.mxu0 %v167
    %185 = vmatmul.f32.gmra.mxu0 %v163
    %v186 = vpop.f32.mrf.mxu0
    %v187 = vadd.f32 %v159, %v186
    %188 = vdwg.mxu0
    %v189 = vld [vmem:[%s13] sm:$0x1]
    %v190 = vld [vmem:[%s15] sm:$0x1]
    %vm191 = vcmask 64512
    %v192 = vsel %vm191, %v187, 0.0
    %193 = vadd.xlane.f32.xlu0 %v192
    %v194 = vpop.xlane.xlu0 %193
    %v195 = vrcp.pop 8.0
    %v196 = vmul.f32 8.0, %v195
    %v197 = vsub.f32 1.0, %v196
    %v198 = vmul.f32 %v195, %v197
    %v199 = vadd.f32 %v195, %v198
    %vm200 = vweird.f32 %v195
    %v201 = vsel %vm200, %v195, %v199
    %v202 = vmul.f32 %v194, %v201
    %v203 = vsub.f32 %v187, %v202
    %v204 = vmul.f32 %v203, %v203
    %v205 = vsel %vm191, %v204, 0.0
    %206 = vadd.xlane.f32.xlu0 %v205
    %v207 = vpop.xlane.xlu0 %206
    %v208 = vmul.f32 %v207, %v201
    %v209 = vadd.f32 %v208, 1e-05
    %v210 = vrsqrt.pop %v209
    %v211 = vmul.f32 %v210, %v209
    %v212 = vmul.f32 %v211, %v210
    %v213 = vmul.f32 0.5, %v212
    %v214 = vsub.f32 1.5, %v213
    %v215 = vmul.f32 %v210, %v214
    %vm216 = vweird.f32 %v209
    %vm217 = vweird.f32 %v210
    %vm218 = vmor %vm216, %vm217
    %v219 = vsel %vm218, %v210, %v215
    %v220 = vmul.f32 %v203, %v219
    %v222 = vperm.slane %v189, 0
    %v224 = vmul.f32 %v220, %v222
    %v226 = vperm.slane %v190, 0
    %v228 = vadd.f32 %v224, %v226
    %v229 = vmul.f32 %v228, 0.5
    %v230 = vmul.f32 %v228, 0.70710677
    %v231 = vmul.f32 %v230, %v230
    %v232 = vmin.f32 16.0, %v231
    %v233 = vmul.f32 %v232, 2.1237322e-06
    %v234 = vadd.f32 %v233, 0.00028619796
    %v235 = vmul.f32 %v232, %v234
    %v236 = vadd.f32 %v235, 0.0036580483
    %v237 = vmul.f32 %v232, %v236
    %v238 = vadd.f32 %v237, 0.05243302
    %v239 = vmul.f32 %v232, %v238
    %v240 = vadd.f32 %v239, 0.18741608
    %v241 = vmul.f32 %v232, %v240
    %v242 = vadd.f32 %v241, 1.1283791
    %v243 = vmul.f32 %v230, %v242
    %v244 = vmul.f32 %v232, 3.8918573e-05
    %v245 = vadd.f32 %v244, 0.001143296
    %v246 = vmul.f32 %v232, %v245
    %v247 = vadd.f32 %v246, 0.014752088
    %v248 = vmul.f32 %v232, %v247
    %v249 = vadd.f32 %v248, 0.112945676
    %v250 = vmul.f32 %v232, %v249
    %v251 = vadd.f32 %v250, 0.4994258
    %v252 = vmul.f32 %v232, %v251
    %v253 = vadd.f32 %v252, 1.0
    %v254 = vrcp.pop %v253
    %v255 = vmul.f32 %v253, %v254
    %v256 = vsub.f32 1.0, %v255
    %v257 = vmul.f32 %v254, %v256
    %v258 = vadd.f32 %v254, %v257
    %vm259 = vweird.f32 %v253
    %vm260 = vweird.f32 %v254
    %vm261 = vmor %vm259, %vm260
    %v262 = vsel %vm261, %v254, %v258
    %v263 = vand.u32 2147483647, %v253
    %vm264 = vcmp.eq.f32.partialorder %v263, 8.507059e+37
    %v265 = vand.u32 %v253, 2147483648
    %v266 = vor.u32 1.1754944e-38, %v265
    %v267 = vsel %vm264, %v266, %v262
    %v268 = vmul.f32 %v243, %v267
    %v269 = vmin.f32 %v268, 1.0
    %v270 = vmax.f32 %v269, -1.0
    %v271 = vadd.f32 %v270, 1.0
    %v272 = vmul.f32 %v229, %v271
    %v273 = vld [vmem:[%s17] sm:$0xff]
    %v274 = vld [vmem:[%s19] sm:$0x1]
    %v276 = vperm.slane %v274, 0
    %v279 = vsel %vm191, %v272, 0
    %281 = vmatpush.msra.mxu0 0.0
    %282 = vmatpush.msra.mxu0 0.0
    %283 = vmatpush.msra.mxu0 0.0
    %284 = vmatpush.msra.mxu0 0.0
    %285 = vmatpush.msra.mxu0 0.0
    %286 = vmatpush.msra.mxu0 0.0
    %287 = vmatpush.msra.mxu0 0.0
    %288 = vmatpush.msra.mxu0 0.0
    %289 = vmatpush.msra.mxu0 0.0
    %290 = vmatpush.msra.mxu0 0.0
    %291 = vmatpush.msra.mxu0 0.0
    %292 = vmatpush.msra.mxu0 0.0
    %293 = vmatpush.msra.mxu0 0.0
    %294 = vmatpush.msra.mxu0 0.0
    %295 = vmatpush.msra.mxu0 0.0
    %296 = vmatpush.msra.mxu0 %v273
    %297 = vmatmul.f32.gmra.mxu0 %v279
    %v298 = vpop.f32.mrf.mxu0
    %v299 = vadd.f32 %v276, %v298
    %300 = vdwg.mxu0
    %v301 = vld [vmem:[%s21] sm:$0x1]
    %v302 = vld [vmem:[%s23] sm:$0x1]
    %vm303 = vcmask 261120
    %v304 = vsel %vm303, %v299, 0.0
    %305 = vadd.xlane.f32.xlu0 %v304
    %v306 = vpop.xlane.xlu0 %305
    %v307 = vrcp.pop 32.0
    %v308 = vmul.f32 32.0, %v307
    %v309 = vsub.f32 1.0, %v308
    %v310 = vmul.f32 %v307, %v309
    %v311 = vadd.f32 %v307, %v310
    %vm312 = vweird.f32 %v307
    %v313 = vsel %vm312, %v307, %v311
    %v314 = vmul.f32 %v306, %v313
    %v315 = vsub.f32 %v299, %v314
    %v316 = vmul.f32 %v315, %v315
    %v317 = vsel %vm303, %v316, 0.0
    %318 = vadd.xlane.f32.xlu0 %v317
    %v319 = vpop.xlane.xlu0 %318
    %v320 = vmul.f32 %v319, %v313
    %v321 = vadd.f32 %v320, 1e-05
    %v322 = vrsqrt.pop %v321
    %v323 = vmul.f32 %v322, %v321
    %v324 = vmul.f32 %v323, %v322
    %v325 = vmul.f32 0.5, %v324
    %v326 = vsub.f32 1.5, %v325
    %v327 = vmul.f32 %v322, %v326
    %vm328 = vweird.f32 %v321
    %vm329 = vweird.f32 %v322
    %vm330 = vmor %vm328, %vm329
    %v331 = vsel %vm330, %v322, %v327
    %v332 = vmul.f32 %v315, %v331
    %v334 = vperm.slane %v301, 0
    %v336 = vmul.f32 %v332, %v334
    %v338 = vperm.slane %v302, 0
    %v340 = vadd.f32 %v336, %v338
    %v341 = vadd.f32 %v154, %v340
    %v342 = vld [vmem:[%s25] sm:$0x1]
    %v343 = vld [vmem:[%s27] sm:$0x1]
    %v344 = vsel %vm303, %v341, 0.0
    %345 = vadd.xlane.f32.xlu0 %v344
    %v346 = vpop.xlane.xlu0 %345
    %v347 = vmul.f32 %v346, %v313
    %v348 = vsub.f32 %v341, %v347
    %v349 = vmul.f32 %v348, %v348
    %v350 = vsel %vm303, %v349, 0.0
    %351 = vadd.xlane.f32.xlu0 %v350
    %v352 = vpop.xlane.xlu0 %351
    %v353 = vmul.f32 %v352, %v313
    %v354 = vadd.f32 %v353, 1e-05
    %v355 = vrsqrt.pop %v354
    %v356 = vmul.f32 %v355, %v354
    %v357 = vmul.f32 %v356, %v355
    %v358 = vmul.f32 0.5, %v357
    %v359 = vsub.f32 1.5, %v358
    %v360 = vmul.f32 %v355, %v359
    %vm361 = vweird.f32 %v354
    %vm362 = vweird.f32 %v355
    %vm363 = vmor %vm361, %vm362
    %v364 = vsel %vm363, %v355, %v360
    %v365 = vmul.f32 %v348, %v364
    %v367 = vperm.slane %v342, 0
    %v369 = vmul.f32 %v365, %v367
    %v371 = vperm.slane %v343, 0
    %v373 = vadd.f32 %v369, %v371
    %v374 = vpack.c.bf16 %v373, %v373
    %v375 = vld [vmem:[%s29] sm:$0xff]
    %v376 = vld [vmem:[%s29 + $0x8] sm:$0xff]
    %v377 = vld [vmem:[%s29 + $0x10] sm:$0xff]
    %v378 = vld [vmem:[%s29 + $0x18] sm:$0xff]
    %v379 = vld [vmem:[%s29 + $0x20] sm:$0xff]
    %v380 = vld [vmem:[%s29 + $0x28] sm:$0xff]
    %v381 = vld [vmem:[%s29 + $0x30] sm:$0xff]
    %v382 = vld [vmem:[%s29 + $0x38] sm:$0xff]
    %v383 = vld [vmem:[%s29 + $0x40] sm:$0xff]
    %v384 = vld [vmem:[%s29 + $0x48] sm:$0xff]
    %v385 = vld [vmem:[%s29 + $0x50] sm:$0xff]
    %v386 = vld [vmem:[%s29 + $0x58] sm:$0xff]
    %v387 = vld [vmem:[%s29 + $0x60] sm:$0xff]
    %v388 = vld [vmem:[%s29 + $0x68] sm:$0xff]
    %v389 = vld [vmem:[%s29 + $0x70] sm:$0xff]
    %v390 = vld [vmem:[%s29 + $0x78] sm:$0xff]
    %v391 = vld [vmem:[%s35] sm:$0xff]
    %v393 = vperm.slane %v391, 0
    %v394 = vperm.slane %v391, 1
    %v395 = vperm.slane %v391, 2
    %v396 = vperm.slane %v391, 3
    %v397 = vperm.slane %v391, 4
    %v398 = vperm.slane %v391, 5
    %v399 = vperm.slane %v391, 6
    %v400 = vperm.slane %v391, 7
    %v425 = vunpack.c.l.b16 %v375
    %v426 = vunpack.c.h.b16 %v375
    %v427 = vunpack.c.l.b16 %v376
    %v428 = vunpack.c.h.b16 %v376
    %v429 = vunpack.c.l.b16 %v377
    %v430 = vunpack.c.h.b16 %v377
    %v431 = vunpack.c.l.b16 %v378
    %v432 = vunpack.c.h.b16 %v378
    %v433 = vunpack.c.l.b16 %v379
    %v434 = vunpack.c.h.b16 %v379
    %v435 = vunpack.c.l.b16 %v380
    %v436 = vunpack.c.h.b16 %v380
    %v437 = vunpack.c.l.b16 %v381
    %v438 = vunpack.c.h.b16 %v381
    %v439 = vunpack.c.l.b16 %v382
    %v440 = vunpack.c.h.b16 %v382
    %v441 = vunpack.c.l.b16 %v383
    %v442 = vunpack.c.h.b16 %v383
    %v443 = vunpack.c.l.b16 %v384
    %v444 = vunpack.c.h.b16 %v384
    %v445 = vunpack.c.l.b16 %v385
    %v446 = vunpack.c.h.b16 %v385
    %v447 = vunpack.c.l.b16 %v386
    %v448 = vunpack.c.h.b16 %v386
    %v449 = vunpack.c.l.b16 %v387
    %v450 = vunpack.c.h.b16 %v387
    %v451 = vunpack.c.l.b16 %v388
    %v452 = vunpack.c.h.b16 %v388
    %v453 = vunpack.c.l.b16 %v389
    %v454 = vunpack.c.h.b16 %v389
    %v455 = vunpack.c.l.b16 %v390
    %v456 = vunpack.c.h.b16 %v390
    %v457 = vpack.c.b16 %v433, %v425
    %v458 = vpack.c.b16 %v434, %v426
    %v459 = vpack.c.b16 %v435, %v427
    %v460 = vpack.c.b16 %v436, %v428
    %v461 = vpack.c.b16 %v437, %v429
    %v462 = vpack.c.b16 %v438, %v430
    %v463 = vpack.c.b16 %v439, %v431
    %v464 = vpack.c.b16 %v440, %v432
    %v465 = vpack.c.b16 %v449, %v441
    %v466 = vpack.c.b16 %v450, %v442
    %v467 = vpack.c.b16 %v451, %v443
    %v468 = vpack.c.b16 %v452, %v444
    %v469 = vpack.c.b16 %v453, %v445
    %v470 = vpack.c.b16 %v454, %v446
    %v471 = vpack.c.b16 %v455, %v447
    %v472 = vpack.c.b16 %v456, %v448
    %v490 = vsel %vm303, %v374, 0
    %492 = vmatpush.bf16.msra.mxu0 0
    %493 = vmatpush.bf16.msra.mxu0 0
    %494 = vmatpush.bf16.msra.mxu0 0
    %495 = vmatpush.bf16.msra.mxu0 0
    %496 = vmatpush.bf16.msra.mxu0 0
    %497 = vmatpush.bf16.msra.mxu0 0
    %498 = vmatpush.bf16.msra.mxu0 %v465
    %499 = vmatpush.bf16.msra.mxu0 %v457
    %500 = vmatmul.bf16.gmra.mxu0 %v490
    %v501 = vpop.f32.mrf.mxu0
    %v502 = vadd.f32 %v393, %v501
    %v503 = vpop.f32.mrf.mxu0
    %504 = vdwg.mxu0
    %505 = vmatpush.bf16.msra.mxu0 0
    %506 = vmatpush.bf16.msra.mxu0 0
    %507 = vmatpush.bf16.msra.mxu0 0
    %508 = vmatpush.bf16.msra.mxu0 0
    %509 = vmatpush.bf16.msra.mxu0 0
    %510 = vmatpush.bf16.msra.mxu0 0
    %511 = vmatpush.bf16.msra.mxu0 %v466
    %512 = vmatpush.bf16.msra.mxu0 %v458
    %513 = vmatmul.bf16.gmra.mxu0 %v490
    %v514 = vpop.f32.mrf.mxu0
    %v515 = vadd.f32 %v394, %v514
    %v516 = vpop.f32.mrf.mxu0
    %517 = vdwg.mxu0
    %518 = vmatpush.bf16.msra.mxu0 0
    %519 = vmatpush.bf16.msra.mxu0 0
    %520 = vmatpush.bf16.msra.mxu0 0
    %521 = vmatpush.bf16.msra.mxu0 0
    %522 = vmatpush.bf16.msra.mxu0 0
    %523 = vmatpush.bf16.msra.mxu0 0
    %524 = vmatpush.bf16.msra.mxu0 %v467
    %525 = vmatpush.bf16.msra.mxu0 %v459
    %526 = vmatmul.bf16.gmra.mxu0 %v490
    %v527 = vpop.f32.mrf.mxu0
    %v528 = vadd.f32 %v395, %v527
    %v529 = vpop.f32.mrf.mxu0
    %530 = vdwg.mxu0
    %531 = vmatpush.bf16.msra.mxu0 0
    %532 = vmatpush.bf16.msra.mxu0 0
    %533 = vmatpush.bf16.msra.mxu0 0
    %534 = vmatpush.bf16.msra.mxu0 0
    %535 = vmatpush.bf16.msra.mxu0 0
    %536 = vmatpush.bf16.msra.mxu0 0
    %537 = vmatpush.bf16.msra.mxu0 %v468
    %538 = vmatpush.bf16.msra.mxu0 %v460
    %539 = vmatmul.bf16.gmra.mxu0 %v490
    %v540 = vpop.f32.mrf.mxu0
    %v541 = vadd.f32 %v396, %v540
    %v542 = vpop.f32.mrf.mxu0
    %543 = vdwg.mxu0
    %544 = vmatpush.bf16.msra.mxu0 0
    %545 = vmatpush.bf16.msra.mxu0 0
    %546 = vmatpush.bf16.msra.mxu0 0
    %547 = vmatpush.bf16.msra.mxu0 0
    %548 = vmatpush.bf16.msra.mxu0 0
    %549 = vmatpush.bf16.msra.mxu0 0
    %550 = vmatpush.bf16.msra.mxu0 %v469
    %551 = vmatpush.bf16.msra.mxu0 %v461
    %552 = vmatmul.bf16.gmra.mxu0 %v490
    %v553 = vpop.f32.mrf.mxu0
    %v554 = vadd.f32 %v397, %v553
    %v555 = vpop.f32.mrf.mxu0
    %556 = vdwg.mxu0
    %557 = vmatpush.bf16.msra.mxu0 0
    %558 = vmatpush.bf16.msra.mxu0 0
    %559 = vmatpush.bf16.msra.mxu0 0
    %560 = vmatpush.bf16.msra.mxu0 0
    %561 = vmatpush.bf16.msra.mxu0 0
    %562 = vmatpush.bf16.msra.mxu0 0
    %563 = vmatpush.bf16.msra.mxu0 %v470
    %564 = vmatpush.bf16.msra.mxu0 %v462
    %565 = vmatmul.bf16.gmra.mxu0 %v490
    %v566 = vpop.f32.mrf.mxu0
    %v567 = vadd.f32 %v398, %v566
    %v568 = vpop.f32.mrf.mxu0
    %569 = vdwg.mxu0
    %570 = vmatpush.bf16.msra.mxu0 0
    %571 = vmatpush.bf16.msra.mxu0 0
    %572 = vmatpush.bf16.msra.mxu0 0
    %573 = vmatpush.bf16.msra.mxu0 0
    %574 = vmatpush.bf16.msra.mxu0 0
    %575 = vmatpush.bf16.msra.mxu0 0
    %576 = vmatpush.bf16.msra.mxu0 %v471
    %577 = vmatpush.bf16.msra.mxu0 %v463
    %578 = vmatmul.bf16.gmra.mxu0 %v490
    %v579 = vpop.f32.mrf.mxu0
    %v580 = vadd.f32 %v399, %v579
    %v581 = vpop.f32.mrf.mxu0
    %582 = vdwg.mxu0
    %583 = vmatpush.bf16.msra.mxu0 0
    %584 = vmatpush.bf16.msra.mxu0 0
    %585 = vmatpush.bf16.msra.mxu0 0
    %586 = vmatpush.bf16.msra.mxu0 0
    %587 = vmatpush.bf16.msra.mxu0 0
    %588 = vmatpush.bf16.msra.mxu0 0
    %589 = vmatpush.bf16.msra.mxu0 %v472
    %590 = vmatpush.bf16.msra.mxu0 %v464
    %591 = vmatmul.bf16.gmra.mxu0 %v490
    %v592 = vpop.f32.mrf.mxu0
    %v593 = vadd.f32 %v400, %v592
    %v594 = vpop.f32.mrf.mxu0
    %595 = vdwg.mxu0
    %v596 = vld [vmem:[%s31] sm:$0xff]
    %v597 = vld [vmem:[%s31 + $0x8] sm:$0xff]
    %v598 = vld [vmem:[%s31 + $0x10] sm:$0xff]
    %v599 = vld [vmem:[%s31 + $0x18] sm:$0xff]
    %v600 = vld [vmem:[%s31 + $0x20] sm:$0xff]
    %v601 = vld [vmem:[%s31 + $0x28] sm:$0xff]
    %v602 = vld [vmem:[%s31 + $0x30] sm:$0xff]
    %v603 = vld [vmem:[%s31 + $0x38] sm:$0xff]
    %v604 = vld [vmem:[%s31 + $0x40] sm:$0xff]
    %v605 = vld [vmem:[%s31 + $0x48] sm:$0xff]
    %v606 = vld [vmem:[%s31 + $0x50] sm:$0xff]
    %v607 = vld [vmem:[%s31 + $0x58] sm:$0xff]
    %v608 = vld [vmem:[%s31 + $0x60] sm:$0xff]
    %v609 = vld [vmem:[%s31 + $0x68] sm:$0xff]
    %v610 = vld [vmem:[%s31 + $0x70] sm:$0xff]
    %v611 = vld [vmem:[%s31 + $0x78] sm:$0xff]
    %v612 = vld [vmem:[%s37] sm:$0xff]
    %v614 = vperm.slane %v612, 0
    %v615 = vperm.slane %v612, 1
    %v616 = vperm.slane %v612, 2
    %v617 = vperm.slane %v612, 3
    %v618 = vperm.slane %v612, 4
    %v619 = vperm.slane %v612, 5
    %v620 = vperm.slane %v612, 6
    %v621 = vperm.slane %v612, 7
    %v646 = vunpack.c.l.b16 %v596
    %v647 = vunpack.c.h.b16 %v596
    %v648 = vunpack.c.l.b16 %v597
    %v649 = vunpack.c.h.b16 %v597
    %v650 = vunpack.c.l.b16 %v598
    %v651 = vunpack.c.h.b16 %v598
    %v652 = vunpack.c.l.b16 %v599
    %v653 = vunpack.c.h.b16 %v599
    %v654 = vunpack.c.l.b16 %v600
    %v655 = vunpack.c.h.b16 %v600
    %v656 = vunpack.c.l.b16 %v601
    %v657 = vunpack.c.h.b16 %v601
    %v658 = vunpack.c.l.b16 %v602
    %v659 = vunpack.c.h.b16 %v602
    %v660 = vunpack.c.l.b16 %v603
    %v661 = vunpack.c.h.b16 %v603
    %v662 = vunpack.c.l.b16 %v604
    %v663 = vunpack.c.h.b16 %v604
    %v664 = vunpack.c.l.b16 %v605
    %v665 = vunpack.c.h.b16 %v605
    %v666 = vunpack.c.l.b16 %v606
    %v667 = vunpack.c.h.b16 %v606
    %v668 = vunpack.c.l.b16 %v607
    %v669 = vunpack.c.h.b16 %v607
    %v670 = vunpack.c.l.b16 %v608
    %v671 = vunpack.c.h.b16 %v608
    %v672 = vunpack.c.l.b16 %v609
    %v673 = vunpack.c.h.b16 %v609
    %v674 = vunpack.c.l.b16 %v610
    %v675 = vunpack.c.h.b16 %v610
    %v676 = vunpack.c.l.b16 %v611
    %v677 = vunpack.c.h.b16 %v611
    %v678 = vpack.c.b16 %v654, %v646
    %v679 = vpack.c.b16 %v655, %v647
    %v680 = vpack.c.b16 %v656, %v648
    %v681 = vpack.c.b16 %v657, %v649
    %v682 = vpack.c.b16 %v658, %v650
    %v683 = vpack.c.b16 %v659, %v651
    %v684 = vpack.c.b16 %v660, %v652
    %v685 = vpack.c.b16 %v661, %v653
    %v686 = vpack.c.b16 %v670, %v662
    %v687 = vpack.c.b16 %v671, %v663
    %v688 = vpack.c.b16 %v672, %v664
    %v689 = vpack.c.b16 %v673, %v665
    %v690 = vpack.c.b16 %v674, %v666
    %v691 = vpack.c.b16 %v675, %v667
    %v692 = vpack.c.b16 %v676, %v668
    %v693 = vpack.c.b16 %v677, %v669
    %710 = vmatpush.bf16.msra.mxu0 0
    %711 = vmatpush.bf16.msra.mxu0 0
    %712 = vmatpush.bf16.msra.mxu0 0
    %713 = vmatpush.bf16.msra.mxu0 0
    %714 = vmatpush.bf16.msra.mxu0 0
    %715 = vmatpush.bf16.msra.mxu0 0
    %716 = vmatpush.bf16.msra.mxu0 %v686
    %717 = vmatpush.bf16.msra.mxu0 %v678
    %718 = vmatmul.bf16.gmra.mxu0 %v490
    %v719 = vpop.f32.mrf.mxu0
    %v720 = vadd.f32 %v614, %v719
    %v721 = vpop.f32.mrf.mxu0
    %722 = vdwg.mxu0
    %723 = vmatpush.bf16.msra.mxu0 0
    %724 = vmatpush.bf16.msra.mxu0 0
    %725 = vmatpush.bf16.msra.mxu0 0
    %726 = vmatpush.bf16.msra.mxu0 0
    %727 = vmatpush.bf16.msra.mxu0 0
    %728 = vmatpush.bf16.msra.mxu0 0
    %729 = vmatpush.bf16.msra.mxu0 %v687
    %730 = vmatpush.bf16.msra.mxu0 %v679
    %731 = vmatmul.bf16.gmra.mxu0 %v490
    %v732 = vpop.f32.mrf.mxu0
    %v733 = vadd.f32 %v615, %v732
    %v734 = vpop.f32.mrf.mxu0
    %735 = vdwg.mxu0
    %736 = vmatpush.bf16.msra.mxu0 0
    %737 = vmatpush.bf16.msra.mxu0 0
    %738 = vmatpush.bf16.msra.mxu0 0
    %739 = vmatpush.bf16.msra.mxu0 0
    %740 = vmatpush.bf16.msra.mxu0 0
    %741 = vmatpush.bf16.msra.mxu0 0
    %742 = vmatpush.bf16.msra.mxu0 %v688
    %743 = vmatpush.bf16.msra.mxu0 %v680
    %744 = vmatmul.bf16.gmra.mxu0 %v490
    %v745 = vpop.f32.mrf.mxu0
    %v746 = vadd.f32 %v616, %v745
    %v747 = vpop.f32.mrf.mxu0
    %748 = vdwg.mxu0
    %749 = vmatpush.bf16.msra.mxu0 0
    %750 = vmatpush.bf16.msra.mxu0 0
    %751 = vmatpush.bf16.msra.mxu0 0
    %752 = vmatpush.bf16.msra.mxu0 0
    %753 = vmatpush.bf16.msra.mxu0 0
    %754 = vmatpush.bf16.msra.mxu0 0
    %755 = vmatpush.bf16.msra.mxu0 %v689
    %756 = vmatpush.bf16.msra.mxu0 %v681
    %757 = vmatmul.bf16.gmra.mxu0 %v490
    %v758 = vpop.f32.mrf.mxu0
    %v759 = vadd.f32 %v617, %v758
    %v760 = vpop.f32.mrf.mxu0
    %761 = vdwg.mxu0
    %762 = vmatpush.bf16.msra.mxu0 0
    %763 = vmatpush.bf16.msra.mxu0 0
    %764 = vmatpush.bf16.msra.mxu0 0
    %765 = vmatpush.bf16.msra.mxu0 0
    %766 = vmatpush.bf16.msra.mxu0 0
    %767 = vmatpush.bf16.msra.mxu0 0
    %768 = vmatpush.bf16.msra.mxu0 %v690
    %769 = vmatpush.bf16.msra.mxu0 %v682
    %770 = vmatmul.bf16.gmra.mxu0 %v490
    %v771 = vpop.f32.mrf.mxu0
    %v772 = vadd.f32 %v618, %v771
    %v773 = vpop.f32.mrf.mxu0
    %774 = vdwg.mxu0
    %775 = vmatpush.bf16.msra.mxu0 0
    %776 = vmatpush.bf16.msra.mxu0 0
    %777 = vmatpush.bf16.msra.mxu0 0
    %778 = vmatpush.bf16.msra.mxu0 0
    %779 = vmatpush.bf16.msra.mxu0 0
    %780 = vmatpush.bf16.msra.mxu0 0
    %781 = vmatpush.bf16.msra.mxu0 %v691
    %782 = vmatpush.bf16.msra.mxu0 %v683
    %783 = vmatmul.bf16.gmra.mxu0 %v490
    %v784 = vpop.f32.mrf.mxu0
    %v785 = vadd.f32 %v619, %v784
    %v786 = vpop.f32.mrf.mxu0
    %787 = vdwg.mxu0
    %788 = vmatpush.bf16.msra.mxu0 0
    %789 = vmatpush.bf16.msra.mxu0 0
    %790 = vmatpush.bf16.msra.mxu0 0
    %791 = vmatpush.bf16.msra.mxu0 0
    %792 = vmatpush.bf16.msra.mxu0 0
    %793 = vmatpush.bf16.msra.mxu0 0
    %794 = vmatpush.bf16.msra.mxu0 %v692
    %795 = vmatpush.bf16.msra.mxu0 %v684
    %796 = vmatmul.bf16.gmra.mxu0 %v490
    %v797 = vpop.f32.mrf.mxu0
    %v798 = vadd.f32 %v620, %v797
    %v799 = vpop.f32.mrf.mxu0
    %800 = vdwg.mxu0
    %801 = vmatpush.bf16.msra.mxu0 0
    %802 = vmatpush.bf16.msra.mxu0 0
    %803 = vmatpush.bf16.msra.mxu0 0
    %804 = vmatpush.bf16.msra.mxu0 0
    %805 = vmatpush.bf16.msra.mxu0 0
    %806 = vmatpush.bf16.msra.mxu0 0
    %807 = vmatpush.bf16.msra.mxu0 %v693
    %808 = vmatpush.bf16.msra.mxu0 %v685
    %809 = vmatmul.bf16.gmra.mxu0 %v490
    %v810 = vpop.f32.mrf.mxu0
    %v811 = vadd.f32 %v621, %v810
    %v812 = vpop.f32.mrf.mxu0
    %813 = vdwg.mxu0
    %v814 = vld [vmem:[%s33] sm:$0xff]
    %v815 = vld [vmem:[%s33 + $0x8] sm:$0xff]
    %v816 = vld [vmem:[%s33 + $0x10] sm:$0xff]
    %v817 = vld [vmem:[%s33 + $0x18] sm:$0xff]
    %v818 = vld [vmem:[%s33 + $0x20] sm:$0xff]
    %v819 = vld [vmem:[%s33 + $0x28] sm:$0xff]
    %v820 = vld [vmem:[%s33 + $0x30] sm:$0xff]
    %v821 = vld [vmem:[%s33 + $0x38] sm:$0xff]
    %v822 = vld [vmem:[%s33 + $0x40] sm:$0xff]
    %v823 = vld [vmem:[%s33 + $0x48] sm:$0xff]
    %v824 = vld [vmem:[%s33 + $0x50] sm:$0xff]
    %v825 = vld [vmem:[%s33 + $0x58] sm:$0xff]
    %v826 = vld [vmem:[%s33 + $0x60] sm:$0xff]
    %v827 = vld [vmem:[%s33 + $0x68] sm:$0xff]
    %v828 = vld [vmem:[%s33 + $0x70] sm:$0xff]
    %v829 = vld [vmem:[%s33 + $0x78] sm:$0xff]
    %v830 = vld [vmem:[%s39] sm:$0xff]
    %v832 = vperm.slane %v830, 0
    %v833 = vperm.slane %v830, 1
    %v834 = vperm.slane %v830, 2
    %v835 = vperm.slane %v830, 3
    %v836 = vperm.slane %v830, 4
    %v837 = vperm.slane %v830, 5
    %v838 = vperm.slane %v830, 6
    %v839 = vperm.slane %v830, 7
    %v864 = vunpack.c.l.b16 %v814
    %v865 = vunpack.c.h.b16 %v814
    %v866 = vunpack.c.l.b16 %v815
    %v867 = vunpack.c.h.b16 %v815
    %v868 = vunpack.c.l.b16 %v816
    %v869 = vunpack.c.h.b16 %v816
    %v870 = vunpack.c.l.b16 %v817
    %v871 = vunpack.c.h.b16 %v817
    %v872 = vunpack.c.l.b16 %v818
    %v873 = vunpack.c.h.b16 %v818
    %v874 = vunpack.c.l.b16 %v819
    %v875 = vunpack.c.h.b16 %v819
    %v876 = vunpack.c.l.b16 %v820
    %v877 = vunpack.c.h.b16 %v820
    %v878 = vunpack.c.l.b16 %v821
    %v879 = vunpack.c.h.b16 %v821
    %v880 = vunpack.c.l.b16 %v822
    %v881 = vunpack.c.h.b16 %v822
    %v882 = vunpack.c.l.b16 %v823
    %v883 = vunpack.c.h.b16 %v823
    %v884 = vunpack.c.l.b16 %v824
    %v885 = vunpack.c.h.b16 %v824
    %v886 = vunpack.c.l.b16 %v825
    %v887 = vunpack.c.h.b16 %v825
    %v888 = vunpack.c.l.b16 %v826
    %v889 = vunpack.c.h.b16 %v826
    %v890 = vunpack.c.l.b16 %v827
    %v891 = vunpack.c.h.b16 %v827
    %v892 = vunpack.c.l.b16 %v828
    %v893 = vunpack.c.h.b16 %v828
    %v894 = vunpack.c.l.b16 %v829
    %v895 = vunpack.c.h.b16 %v829
    %v896 = vpack.c.b16 %v872, %v864
    %v897 = vpack.c.b16 %v873, %v865
    %v898 = vpack.c.b16 %v874, %v866
    %v899 = vpack.c.b16 %v875, %v867
    %v900 = vpack.c.b16 %v876, %v868
    %v901 = vpack.c.b16 %v877, %v869
    %v902 = vpack.c.b16 %v878, %v870
    %v903 = vpack.c.b16 %v879, %v871
    %v904 = vpack.c.b16 %v888, %v880
    %v905 = vpack.c.b16 %v889, %v881
    %v906 = vpack.c.b16 %v890, %v882
    %v907 = vpack.c.b16 %v891, %v883
    %v908 = vpack.c.b16 %v892, %v884
    %v909 = vpack.c.b16 %v893, %v885
    %v910 = vpack.c.b16 %v894, %v886
    %v911 = vpack.c.b16 %v895, %v887
    %928 = vmatpush.bf16.msra.mxu0 0
    %929 = vmatpush.bf16.msra.mxu0 0
    %930 = vmatpush.bf16.msra.mxu0 0
    %931 = vmatpush.bf16.msra.mxu0 0
    %932 = vmatpush.bf16.msra.mxu0 0
    %933 = vmatpush.bf16.msra.mxu0 0
    %934 = vmatpush.bf16.msra.mxu0 %v904
    %935 = vmatpush.bf16.msra.mxu0 %v896
    %936 = vmatmul.bf16.gmra.mxu0 %v490
    %v937 = vpop.f32.mrf.mxu0
    %v938 = vadd.f32 %v832, %v937
    %v939 = vpop.f32.mrf.mxu0
    %940 = vdwg.mxu0
    %941 = vmatpush.bf16.msra.mxu0 0
    %942 = vmatpush.bf16.msra.mxu0 0
    %943 = vmatpush.bf16.msra.mxu0 0
    %944 = vmatpush.bf16.msra.mxu0 0
    %945 = vmatpush.bf16.msra.mxu0 0
    %946 = vmatpush.bf16.msra.mxu0 0
    %947 = vmatpush.bf16.msra.mxu0 %v905
    %948 = vmatpush.bf16.msra.mxu0 %v897
    %949 = vmatmul.bf16.gmra.mxu0 %v490
    %v950 = vpop.f32.mrf.mxu0
    %v951 = vadd.f32 %v833, %v950
    %v952 = vpop.f32.mrf.mxu0
    %953 = vdwg.mxu0
    %954 = vmatpush.bf16.msra.mxu0 0
    %955 = vmatpush.bf16.msra.mxu0 0
    %956 = vmatpush.bf16.msra.mxu0 0
    %957 = vmatpush.bf16.msra.mxu0 0
    %958 = vmatpush.bf16.msra.mxu0 0
    %959 = vmatpush.bf16.msra.mxu0 0
    %960 = vmatpush.bf16.msra.mxu0 %v906
    %961 = vmatpush.bf16.msra.mxu0 %v898
    %962 = vmatmul.bf16.gmra.mxu0 %v490
    %v963 = vpop.f32.mrf.mxu0
    %v964 = vadd.f32 %v834, %v963
    %v965 = vpop.f32.mrf.mxu0
    %966 = vdwg.mxu0
    %967 = vmatpush.bf16.msra.mxu0 0
    %968 = vmatpush.bf16.msra.mxu0 0
    %969 = vmatpush.bf16.msra.mxu0 0
    %970 = vmatpush.bf16.msra.mxu0 0
    %971 = vmatpush.bf16.msra.mxu0 0
    %972 = vmatpush.bf16.msra.mxu0 0
    %973 = vmatpush.bf16.msra.mxu0 %v907
    %974 = vmatpush.bf16.msra.mxu0 %v899
    %975 = vmatmul.bf16.gmra.mxu0 %v490
    %v976 = vpop.f32.mrf.mxu0
    %v977 = vadd.f32 %v835, %v976
    %v978 = vpop.f32.mrf.mxu0
    %979 = vdwg.mxu0
    %980 = vmatpush.bf16.msra.mxu0 0
    %981 = vmatpush.bf16.msra.mxu0 0
    %982 = vmatpush.bf16.msra.mxu0 0
    %983 = vmatpush.bf16.msra.mxu0 0
    %984 = vmatpush.bf16.msra.mxu0 0
    %985 = vmatpush.bf16.msra.mxu0 0
    %986 = vmatpush.bf16.msra.mxu0 %v908
    %987 = vmatpush.bf16.msra.mxu0 %v900
    %988 = vmatmul.bf16.gmra.mxu0 %v490
    %v989 = vpop.f32.mrf.mxu0
    %v990 = vadd.f32 %v836, %v989
    %v991 = vpop.f32.mrf.mxu0
    %992 = vdwg.mxu0
    %993 = vmatpush.bf16.msra.mxu0 0
    %994 = vmatpush.bf16.msra.mxu0 0
    %995 = vmatpush.bf16.msra.mxu0 0
    %996 = vmatpush.bf16.msra.mxu0 0
    %997 = vmatpush.bf16.msra.mxu0 0
    %998 = vmatpush.bf16.msra.mxu0 0
    %999 = vmatpush.bf16.msra.mxu0 %v909
    %1000 = vmatpush.bf16.msra.mxu0 %v901
    %1001 = vmatmul.bf16.gmra.mxu0 %v490
    %v1002 = vpop.f32.mrf.mxu0
    %v1003 = vadd.f32 %v837, %v1002
    %v1004 = vpop.f32.mrf.mxu0
    %1005 = vdwg.mxu0
    %1006 = vmatpush.bf16.msra.mxu0 0
    %1007 = vmatpush.bf16.msra.mxu0 0
    %1008 = vmatpush.bf16.msra.mxu0 0
    %1009 = vmatpush.bf16.msra.mxu0 0
    %1010 = vmatpush.bf16.msra.mxu0 0
    %1011 = vmatpush.bf16.msra.mxu0 0
    %1012 = vmatpush.bf16.msra.mxu0 %v910
    %1013 = vmatpush.bf16.msra.mxu0 %v902
    %1014 = vmatmul.bf16.gmra.mxu0 %v490
    %v1015 = vpop.f32.mrf.mxu0
    %v1016 = vadd.f32 %v838, %v1015
    %v1017 = vpop.f32.mrf.mxu0
    %1018 = vdwg.mxu0
    %1019 = vmatpush.bf16.msra.mxu0 0
    %1020 = vmatpush.bf16.msra.mxu0 0
    %1021 = vmatpush.bf16.msra.mxu0 0
    %1022 = vmatpush.bf16.msra.mxu0 0
    %1023 = vmatpush.bf16.msra.mxu0 0
    %1024 = vmatpush.bf16.msra.mxu0 0
    %1025 = vmatpush.bf16.msra.mxu0 %v911
    %1026 = vmatpush.bf16.msra.mxu0 %v903
    %1027 = vmatmul.bf16.gmra.mxu0 %v490
    %v1028 = vpop.f32.mrf.mxu0
    %v1029 = vadd.f32 %v839, %v1028
    %v1030 = vpop.f32.mrf.mxu0
    %1031 = vdwg.mxu0
    %v1032 = vmul.f32 %v502, 0.5
    %v1033 = vmul.f32 %v515, 0.5
    %v1034 = vmul.f32 %v528, 0.5
    %v1035 = vmul.f32 %v541, 0.5
    %v1036 = vmul.f32 %v554, 0.5
    %v1037 = vmul.f32 %v567, 0.5
    %v1038 = vmul.f32 %v580, 0.5
    %v1039 = vmul.f32 %v593, 0.5
    %v1040 = vpack.c.bf16 %v1033, %v1032
    %v1041 = vpack.c.bf16 %v1035, %v1034
    %v1042 = vpack.c.bf16 %v1037, %v1036
    %v1043 = vpack.c.bf16 %v1039, %v1038
    %v1044 = vpack.c.bf16 %v733, %v720
    %v1045 = vpack.c.bf16 %v759, %v746
    %v1046 = vpack.c.bf16 %v785, %v772
    %v1047 = vpack.c.bf16 %v811, %v798
    %v1048 = vpack.c.bf16 %v951, %v938
    %v1049 = vpack.c.bf16 %v977, %v964
    %v1050 = vpack.c.bf16 %v1003, %v990
    %v1051 = vpack.c.bf16 %v1029, %v1016
    %v1052 = vld [vmem:[%s5] sm:$0xff]
    %1053 = vmatpush.bf16.xpose.msra.mxu0 0
    %1054 = vmatpush.bf16.xpose.msra.mxu0 0
    %1055 = vmatpush.bf16.xpose.msra.mxu0 0
    %1056 = vmatpush.bf16.xpose.msra.mxu0 0
    %1057 = vmatpush.bf16.xpose.msra.mxu0 0
    %1058 = vmatpush.bf16.xpose.msra.mxu0 0
    %1059 = vmatpush.bf16.xpose.msra.mxu0 0
    %1060 = vmatpush.bf16.xpose.msra.mxu0 %v1044
    %1061 = vmatmul.bf16.gmra.mxu0 %v1040
    %v1062 = vpop.f32.mrf.mxu0
    %v1063 = vadd.f32 %v1052, %v1062
    %v1064 = vpop.f32.mrf.mxu0
    %1065 = vdwg.mxu0
    %v1066 = vsel %vm191, %v1063, -inf
    %1067 = vmax.xlane.f32.xlu0 %v1066
    %v1068 = vpop.xlane.xlu0 %1067
    %v1069 = vsub.f32 %v1063, %v1068
    %v1070 = vmul.f32 %v1069, 1.442695
    %v1071 = vpow.pop %v1070
    %v1072 = vsel %vm191, %v1071, 0.0
    %1073 = vadd.xlane.f32.xlu0 %v1072
    %v1074 = vpop.xlane.xlu0 %1073
    %v1075 = vrcp.pop %v1074
    %v1076 = vmul.f32 %v1071, %v1075
    %v1077 = vpack.c.bf16 %v1076, %v1076
    %v1079 = vsel %vm191, %v1077, 0
    %vm1081 = vcmask 1043456
    %v1083 = vsel %vm1081, %v1048, 0
    %1085 = vmatpush.bf16.msra.mxu0 0
    %1086 = vmatpush.bf16.msra.mxu0 0
    %1087 = vmatpush.bf16.msra.mxu0 0
    %1088 = vmatpush.bf16.msra.mxu0 0
    %1089 = vmatpush.bf16.msra.mxu0 0
    %1090 = vmatpush.bf16.msra.mxu0 0
    %1091 = vmatpush.bf16.msra.mxu0 0
    %1092 = vmatpush.bf16.msra.mxu0 %v1083
    %1093 = vmatmul.bf16.gmra.mxu0 %v1079
    %v1094 = vpop.f32.mrf.mxu0
    %v1095 = vadd.f32 0.0, %v1094
    %v1096 = vpop.f32.mrf.mxu0
    %1097 = vdwg.mxu0
    %v1098 = vpack.c.bf16 %v1095, %v1095
    %v1100 = vunpack.c.h.b16 %v1040
    %v1101 = vpack.c.b16 %v1100, %v1100
    %v1104 = vunpack.c.h.b16 %v1044
    %v1105 = vpack.c.b16 %v1104, %v1104
    %1107 = vmatpush.bf16.xpose.msra.mxu0 0
    %1108 = vmatpush.bf16.xpose.msra.mxu0 0
    %1109 = vmatpush.bf16.xpose.msra.mxu0 0
    %1110 = vmatpush.bf16.xpose.msra.mxu0 0
    %1111 = vmatpush.bf16.xpose.msra.mxu0 0
    %1112 = vmatpush.bf16.xpose.msra.mxu0 0
    %1113 = vmatpush.bf16.xpose.msra.mxu0 0
    %1114 = vmatpush.bf16.xpose.msra.mxu0 %v1105
    %1115 = vmatmul.bf16.gmra.mxu0 %v1101
    %v1116 = vpop.f32.mrf.mxu0
    %v1117 = vadd.f32 %v1052, %v1116
    %v1118 = vpop.f32.mrf.mxu0
    %1119 = vdwg.mxu0
    %v1120 = vsel %vm191, %v1117, -inf
    %1121 = vmax.xlane.f32.xlu0 %v1120
    %v1122 = vpop.xlane.xlu0 %1121
    %v1123 = vsub.f32 %v1117, %v1122
    %v1124 = vmul.f32 %v1123, 1.442695
    %v1125 = vpow.pop %v1124
    %v1126 = vsel %vm191, %v1125, 0.0
    %1127 = vadd.xlane.f32.xlu0 %v1126
    %v1128 = vpop.xlane.xlu0 %1127
    %v1129 = vrcp.pop %v1128
    %v1130 = vmul.f32 %v1125, %v1129
    %v1131 = vpack.c.bf16 %v1130, %v1130
    %v1133 = vunpack.c.h.b16 %v1048
    %v1134 = vpack.c.b16 %v1133, %v1133
    %v1136 = vsel %vm191, %v1131, 0
    %v1139 = vsel %vm1081, %v1134, 0
    %1141 = vmatpush.bf16.msra.mxu0 0
    %1142 = vmatpush.bf16.msra.mxu0 0
    %1143 = vmatpush.bf16.msra.mxu0 0
    %1144 = vmatpush.bf16.msra.mxu0 0
    %1145 = vmatpush.bf16.msra.mxu0 0
    %1146 = vmatpush.bf16.msra.mxu0 0
    %1147 = vmatpush.bf16.msra.mxu0 0
    %1148 = vmatpush.bf16.msra.mxu0 %v1139
    %1149 = vmatmul.bf16.gmra.mxu0 %v1136
    %v1150 = vpop.f32.mrf.mxu0
    %v1151 = vadd.f32 0.0, %v1150
    %v1152 = vpop.f32.mrf.mxu0
    %1153 = vdwg.mxu0
    %v1154 = vpack.c.bf16 %v1151, %v1151
    %1155 = vmatpush.bf16.xpose.msra.mxu0 0
    %1156 = vmatpush.bf16.xpose.msra.mxu0 0
    %1157 = vmatpush.bf16.xpose.msra.mxu0 0
    %1158 = vmatpush.bf16.xpose.msra.mxu0 0
    %1159 = vmatpush.bf16.xpose.msra.mxu0 0
    %1160 = vmatpush.bf16.xpose.msra.mxu0 0
    %1161 = vmatpush.bf16.xpose.msra.mxu0 0
    %1162 = vmatpush.bf16.xpose.msra.mxu0 %v1045
    %1163 = vmatmul.bf16.gmra.mxu0 %v1041
    %v1164 = vpop.f32.mrf.mxu0
    %v1165 = vadd.f32 %v1052, %v1164
    %v1166 = vpop.f32.mrf.mxu0
    %1167 = vdwg.mxu0
    %v1168 = vsel %vm191, %v1165, -inf
    %1169 = vmax.xlane.f32.xlu0 %v1168
    %v1170 = vpop.xlane.xlu0 %1169
    %v1171 = vsub.f32 %v1165, %v1170
    %v1172 = vmul.f32 %v1171, 1.442695
    %v1173 = vpow.pop %v1172
    %v1174 = vsel %vm191, %v1173, 0.0
    %1175 = vadd.xlane.f32.xlu0 %v1174
    %v1176 = vpop.xlane.xlu0 %1175
    %v1177 = vrcp.pop %v1176
    %v1178 = vmul.f32 %v1173, %v1177
    %v1179 = vpack.c.bf16 %v1178, %v1178
    %v1181 = vsel %vm191, %v1179, 0
    %v1184 = vsel %vm1081, %v1049, 0
    %1186 = vmatpush.bf16.msra.mxu0 0
    %1187 = vmatpush.bf16.msra.mxu0 0
    %1188 = vmatpush.bf16.msra.mxu0 0
    %1189 = vmatpush.bf16.msra.mxu0 0
    %1190 = vmatpush.bf16.msra.mxu0 0
    %1191 = vmatpush.bf16.msra.mxu0 0
    %1192 = vmatpush.bf16.msra.mxu0 0
    %1193 = vmatpush.bf16.msra.mxu0 %v1184
    %1194 = vmatmul.bf16.gmra.mxu0 %v1181
    %v1195 = vpop.f32.mrf.mxu0
    %v1196 = vadd.f32 0.0, %v1195
    %v1197 = vpop.f32.mrf.mxu0
    %1198 = vdwg.mxu0
    %v1199 = vpack.c.bf16 %v1196, %v1196
    %v1201 = vunpack.c.h.b16 %v1041
    %v1202 = vpack.c.b16 %v1201, %v1201
    %v1205 = vunpack.c.h.b16 %v1045
    %v1206 = vpack.c.b16 %v1205, %v1205
    %1208 = vmatpush.bf16.xpose.msra.mxu0 0
    %1209 = vmatpush.bf16.xpose.msra.mxu0 0
    %1210 = vmatpush.bf16.xpose.msra.mxu0 0
    %1211 = vmatpush.bf16.xpose.msra.mxu0 0
    %1212 = vmatpush.bf16.xpose.msra.mxu0 0
    %1213 = vmatpush.bf16.xpose.msra.mxu0 0
    %1214 = vmatpush.bf16.xpose.msra.mxu0 0
    %1215 = vmatpush.bf16.xpose.msra.mxu0 %v1206
    %1216 = vmatmul.bf16.gmra.mxu0 %v1202
    %v1217 = vpop.f32.mrf.mxu0
    %v1218 = vadd.f32 %v1052, %v1217
    %v1219 = vpop.f32.mrf.mxu0
    %1220 = vdwg.mxu0
    %v1221 = vsel %vm191, %v1218, -inf
    %1222 = vmax.xlane.f32.xlu0 %v1221
    %v1223 = vpop.xlane.xlu0 %1222
    %v1224 = vsub.f32 %v1218, %v1223
    %v1225 = vmul.f32 %v1224, 1.442695
    %v1226 = vpow.pop %v1225
    %v1227 = vsel %vm191, %v1226, 0.0
    %1228 = vadd.xlane.f32.xlu0 %v1227
    %v1229 = vpop.xlane.xlu0 %1228
    %v1230 = vrcp.pop %v1229
    %v1231 = vmul.f32 %v1226, %v1230
    %v1232 = vpack.c.bf16 %v1231, %v1231
    %v1234 = vunpack.c.h.b16 %v1049
    %v1235 = vpack.c.b16 %v1234, %v1234
    %v1237 = vsel %vm191, %v1232, 0
    %v1240 = vsel %vm1081, %v1235, 0
    %1242 = vmatpush.bf16.msra.mxu0 0
    %1243 = vmatpush.bf16.msra.mxu0 0
    %1244 = vmatpush.bf16.msra.mxu0 0
    %1245 = vmatpush.bf16.msra.mxu0 0
    %1246 = vmatpush.bf16.msra.mxu0 0
    %1247 = vmatpush.bf16.msra.mxu0 0
    %1248 = vmatpush.bf16.msra.mxu0 0
    %1249 = vmatpush.bf16.msra.mxu0 %v1240
    %1250 = vmatmul.bf16.gmra.mxu0 %v1237
    %v1251 = vpop.f32.mrf.mxu0
    %v1252 = vadd.f32 0.0, %v1251
    %v1253 = vpop.f32.mrf.mxu0
    %1254 = vdwg.mxu0
    %v1255 = vpack.c.bf16 %v1252, %v1252
    %1256 = vmatpush.bf16.xpose.msra.mxu0 0
    %1257 = vmatpush.bf16.xpose.msra.mxu0 0
    %1258 = vmatpush.bf16.xpose.msra.mxu0 0
    %1259 = vmatpush.bf16.xpose.msra.mxu0 0
    %1260 = vmatpush.bf16.xpose.msra.mxu0 0
    %1261 = vmatpush.bf16.xpose.msra.mxu0 0
    %1262 = vmatpush.bf16.xpose.msra.mxu0 0
    %1263 = vmatpush.bf16.xpose.msra.mxu0 %v1046
    %1264 = vmatmul.bf16.gmra.mxu0 %v1042
    %v1265 = vpop.f32.mrf.mxu0
    %v1266 = vadd.f32 %v1052, %v1265
    %v1267 = vpop.f32.mrf.mxu0
    %1268 = vdwg.mxu0
    %v1269 = vsel %vm191, %v1266, -inf
    %1270 = vmax.xlane.f32.xlu0 %v1269
    %v1271 = vpop.xlane.xlu0 %1270
    %v1272 = vsub.f32 %v1266, %v1271
    %v1273 = vmul.f32 %v1272, 1.442695
    %v1274 = vpow.pop %v1273
    %v1275 = vsel %vm191, %v1274, 0.0
    %1276 = vadd.xlane.f32.xlu0 %v1275
    %v1277 = vpop.xlane.xlu0 %1276
    %v1278 = vrcp.pop %v1277
    %v1279 = vmul.f32 %v1274, %v1278
    %v1280 = vpack.c.bf16 %v1279, %v1279
    %v1282 = vsel %vm191, %v1280, 0
    %v1285 = vsel %vm1081, %v1050, 0
    %1287 = vmatpush.bf16.msra.mxu0 0
    %1288 = vmatpush.bf16.msra.mxu0 0
    %1289 = vmatpush.bf16.msra.mxu0 0
    %1290 = vmatpush.bf16.msra.mxu0 0
    %1291 = vmatpush.bf16.msra.mxu0 0
    %1292 = vmatpush.bf16.msra.mxu0 0
    %1293 = vmatpush.bf16.msra.mxu0 0
    %1294 = vmatpush.bf16.msra.mxu0 %v1285
    %1295 = vmatmul.bf16.gmra.mxu0 %v1282
    %v1296 = vpop.f32.mrf.mxu0
    %v1297 = vadd.f32 0.0, %v1296
    %v1298 = vpop.f32.mrf.mxu0
    %1299 = vdwg.mxu0
    %v1300 = vpack.c.bf16 %v1297, %v1297
    %v1302 = vunpack.c.h.b16 %v1042
    %v1303 = vpack.c.b16 %v1302, %v1302
    %v1306 = vunpack.c.h.b16 %v1046
    %v1307 = vpack.c.b16 %v1306, %v1306
    %1309 = vmatpush.bf16.xpose.msra.mxu0 0
    %1310 = vmatpush.bf16.xpose.msra.mxu0 0
    %1311 = vmatpush.bf16.xpose.msra.mxu0 0
    %1312 = vmatpush.bf16.xpose.msra.mxu0 0
    %1313 = vmatpush.bf16.xpose.msra.mxu0 0
    %1314 = vmatpush.bf16.xpose.msra.mxu0 0
    %1315 = vmatpush.bf16.xpose.msra.mxu0 0
    %1316 = vmatpush.bf16.xpose.msra.mxu0 %v1307
    %1317 = vmatmul.bf16.gmra.mxu0 %v1303
    %v1318 = vpop.f32.mrf.mxu0
    %v1319 = vadd.f32 %v1052, %v1318
    %v1320 = vpop.f32.mrf.mxu0
    %1321 = vdwg.mxu0
    %v1322 = vsel %vm191, %v1319, -inf
    %1323 = vmax.xlane.f32.xlu0 %v1322
    %v1324 = vpop.xlane.xlu0 %1323
    %v1325 = vsub.f32 %v1319, %v1324
    %v1326 = vmul.f32 %v1325, 1.442695
    %v1327 = vpow.pop %v1326
    %v1328 = vsel %vm191, %v1327, 0.0
    %1329 = vadd.xlane.f32.xlu0 %v1328
    %v1330 = vpop.xlane.xlu0 %1329
    %v1331 = vrcp.pop %v1330
    %v1332 = vmul.f32 %v1327, %v1331
    %v1333 = vpack.c.bf16 %v1332, %v1332
    %v1335 = vunpack.c.h.b16 %v1050
    %v1336 = vpack.c.b16 %v1335, %v1335
    %v1338 = vsel %vm191, %v1333, 0
    %v1341 = vsel %vm1081, %v1336, 0
    %1343 = vmatpush.bf16.msra.mxu0 0
    %1344 = vmatpush.bf16.msra.mxu0 0
    %1345 = vmatpush.bf16.msra.mxu0 0
    %1346 = vmatpush.bf16.msra.mxu0 0
    %1347 = vmatpush.bf16.msra.mxu0 0
    %1348 = vmatpush.bf16.msra.mxu0 0
    %1349 = vmatpush.bf16.msra.mxu0 0
    %1350 = vmatpush.bf16.msra.mxu0 %v1341
    %1351 = vmatmul.bf16.gmra.mxu0 %v1338
    %v1352 = vpop.f32.mrf.mxu0
    %v1353 = vadd.f32 0.0, %v1352
    %v1354 = vpop.f32.mrf.mxu0
    %1355 = vdwg.mxu0
    %v1356 = vpack.c.bf16 %v1353, %v1353
    %1357 = vmatpush.bf16.xpose.msra.mxu0 0
    %1358 = vmatpush.bf16.xpose.msra.mxu0 0
    %1359 = vmatpush.bf16.xpose.msra.mxu0 0
    %1360 = vmatpush.bf16.xpose.msra.mxu0 0
    %1361 = vmatpush.bf16.xpose.msra.mxu0 0
    %1362 = vmatpush.bf16.xpose.msra.mxu0 0
    %1363 = vmatpush.bf16.xpose.msra.mxu0 0
    %1364 = vmatpush.bf16.xpose.msra.mxu0 %v1047
    %1365 = vmatmul.bf16.gmra.mxu0 %v1043
    %v1366 = vpop.f32.mrf.mxu0
    %v1367 = vadd.f32 %v1052, %v1366
    %v1368 = vpop.f32.mrf.mxu0
    %1369 = vdwg.mxu0
    %v1370 = vsel %vm191, %v1367, -inf
    %1371 = vmax.xlane.f32.xlu0 %v1370
    %v1372 = vpop.xlane.xlu0 %1371
    %v1373 = vsub.f32 %v1367, %v1372
    %v1374 = vmul.f32 %v1373, 1.442695
    %v1375 = vpow.pop %v1374
    %v1376 = vsel %vm191, %v1375, 0.0
    %1377 = vadd.xlane.f32.xlu0 %v1376
    %v1378 = vpop.xlane.xlu0 %1377
    %v1379 = vrcp.pop %v1378
    %v1380 = vmul.f32 %v1375, %v1379
    %v1381 = vpack.c.bf16 %v1380, %v1380
    %v1383 = vsel %vm191, %v1381, 0
    %v1386 = vsel %vm1081, %v1051, 0
    %1388 = vmatpush.bf16.msra.mxu0 0
    %1389 = vmatpush.bf16.msra.mxu0 0
    %1390 = vmatpush.bf16.msra.mxu0 0
    %1391 = vmatpush.bf16.msra.mxu0 0
    %1392 = vmatpush.bf16.msra.mxu0 0
    %1393 = vmatpush.bf16.msra.mxu0 0
    %1394 = vmatpush.bf16.msra.mxu0 0
    %1395 = vmatpush.bf16.msra.mxu0 %v1386
    %1396 = vmatmul.bf16.gmra.mxu0 %v1383
    %v1397 = vpop.f32.mrf.mxu0
    %v1398 = vadd.f32 0.0, %v1397
    %v1399 = vpop.f32.mrf.mxu0
    %1400 = vdwg.mxu0
    %v1401 = vpack.c.bf16 %v1398, %v1398
    %v1403 = vunpack.c.h.b16 %v1043
    %v1404 = vpack.c.b16 %v1403, %v1403
    %v1407 = vunpack.c.h.b16 %v1047
    %v1408 = vpack.c.b16 %v1407, %v1407
    %1410 = vmatpush.bf16.xpose.msra.mxu0 0
    %1411 = vmatpush.bf16.xpose.msra.mxu0 0
    %1412 = vmatpush.bf16.xpose.msra.mxu0 0
    %1413 = vmatpush.bf16.xpose.msra.mxu0 0
    %1414 = vmatpush.bf16.xpose.msra.mxu0 0
    %1415 = vmatpush.bf16.xpose.msra.mxu0 0
    %1416 = vmatpush.bf16.xpose.msra.mxu0 0
    %1417 = vmatpush.bf16.xpose.msra.mxu0 %v1408
    %1418 = vmatmul.bf16.gmra.mxu0 %v1404
    %v1419 = vpop.f32.mrf.mxu0
    %v1420 = vadd.f32 %v1052, %v1419
    %v1421 = vpop.f32.mrf.mxu0
    %1422 = vdwg.mxu0
    %v1423 = vsel %vm191, %v1420, -inf
    %1424 = vmax.xlane.f32.xlu0 %v1423
    %v1425 = vpop.xlane.xlu0 %1424
    %v1426 = vsub.f32 %v1420, %v1425
    %v1427 = vmul.f32 %v1426, 1.442695
    %v1428 = vpow.pop %v1427
    %v1429 = vsel %vm191, %v1428, 0.0
    %1430 = vadd.xlane.f32.xlu0 %v1429
    %v1431 = vpop.xlane.xlu0 %1430
    %v1432 = vrcp.pop %v1431
    %v1433 = vmul.f32 %v1428, %v1432
    %v1434 = vpack.c.bf16 %v1433, %v1433
    %v1436 = vunpack.c.h.b16 %v1051
    %v1437 = vpack.c.b16 %v1436, %v1436
    %v1439 = vsel %vm191, %v1434, 0
    %v1442 = vsel %vm1081, %v1437, 0
    %1444 = vmatpush.bf16.msra.mxu0 0
    %1445 = vmatpush.bf16.msra.mxu0 0
    %1446 = vmatpush.bf16.msra.mxu0 0
    %1447 = vmatpush.bf16.msra.mxu0 0
    %1448 = vmatpush.bf16.msra.mxu0 0
    %1449 = vmatpush.bf16.msra.mxu0 0
    %1450 = vmatpush.bf16.msra.mxu0 0
    %1451 = vmatpush.bf16.msra.mxu0 %v1442
    %1452 = vmatmul.bf16.gmra.mxu0 %v1439
    %v1453 = vpop.f32.mrf.mxu0
    %v1454 = vadd.f32 0.0, %v1453
    %v1455 = vpop.f32.mrf.mxu0
    %1456 = vdwg.mxu0
    %v1457 = vpack.c.bf16 %v1454, %v1454
    %v1458 = vld [vmem:[%s41] sm:$0xf]
    %v1459 = vld [vmem:[%s41 + $0x4] sm:$0xf]
    %v1460 = vld [vmem:[%s41 + $0x8] sm:$0xf]
    %v1461 = vld [vmem:[%s41 + $0xc] sm:$0xf]
    %v1462 = vld [vmem:[%s41 + $0x10] sm:$0xf]
    %v1463 = vld [vmem:[%s41 + $0x14] sm:$0xf]
    %v1464 = vld [vmem:[%s41 + $0x18] sm:$0xf]
    %v1465 = vld [vmem:[%s41 + $0x1c] sm:$0xf]
    %v1466 = vld [vmem:[%s41 + $0x20] sm:$0xf]
    %v1467 = vld [vmem:[%s41 + $0x24] sm:$0xf]
    %v1468 = vld [vmem:[%s41 + $0x28] sm:$0xf]
    %v1469 = vld [vmem:[%s41 + $0x2c] sm:$0xf]
    %v1470 = vld [vmem:[%s41 + $0x30] sm:$0xf]
    %v1471 = vld [vmem:[%s41 + $0x34] sm:$0xf]
    %v1472 = vld [vmem:[%s41 + $0x38] sm:$0xf]
    %v1473 = vld [vmem:[%s41 + $0x3c] sm:$0xf]
    %v1474 = vld [vmem:[%s41 + $0x40] sm:$0xf]
    %v1475 = vld [vmem:[%s41 + $0x44] sm:$0xf]
    %v1476 = vld [vmem:[%s41 + $0x48] sm:$0xf]
    %v1477 = vld [vmem:[%s41 + $0x4c] sm:$0xf]
    %v1478 = vld [vmem:[%s41 + $0x50] sm:$0xf]
    %v1479 = vld [vmem:[%s41 + $0x54] sm:$0xf]
    %v1480 = vld [vmem:[%s41 + $0x58] sm:$0xf]
    %v1481 = vld [vmem:[%s41 + $0x5c] sm:$0xf]
    %v1482 = vld [vmem:[%s41 + $0x60] sm:$0xf]
    %v1483 = vld [vmem:[%s41 + $0x64] sm:$0xf]
    %v1484 = vld [vmem:[%s41 + $0x68] sm:$0xf]
    %v1485 = vld [vmem:[%s41 + $0x6c] sm:$0xf]
    %v1486 = vld [vmem:[%s41 + $0x70] sm:$0xf]
    %v1487 = vld [vmem:[%s41 + $0x74] sm:$0xf]
    %v1488 = vld [vmem:[%s41 + $0x78] sm:$0xf]
    %v1489 = vld [vmem:[%s41 + $0x7c] sm:$0xf]
    %v1490 = vld [vmem:[%s41 + $0x80] sm:$0xf]
    %v1491 = vld [vmem:[%s41 + $0x84] sm:$0xf]
    %v1492 = vld [vmem:[%s41 + $0x88] sm:$0xf]
    %v1493 = vld [vmem:[%s41 + $0x8c] sm:$0xf]
    %v1494 = vld [vmem:[%s41 + $0x90] sm:$0xf]
    %v1495 = vld [vmem:[%s41 + $0x94] sm:$0xf]
    %v1496 = vld [vmem:[%s41 + $0x98] sm:$0xf]
    %v1497 = vld [vmem:[%s41 + $0x9c] sm:$0xf]
    %v1498 = vld [vmem:[%s41 + $0xa0] sm:$0xf]
    %v1499 = vld [vmem:[%s41 + $0xa4] sm:$0xf]
    %v1500 = vld [vmem:[%s41 + $0xa8] sm:$0xf]
    %v1501 = vld [vmem:[%s41 + $0xac] sm:$0xf]
    %v1502 = vld [vmem:[%s41 + $0xb0] sm:$0xf]
    %v1503 = vld [vmem:[%s41 + $0xb4] sm:$0xf]
    %v1504 = vld [vmem:[%s41 + $0xb8] sm:$0xf]
    %v1505 = vld [vmem:[%s41 + $0xbc] sm:$0xf]
    %v1506 = vld [vmem:[%s41 + $0xc0] sm:$0xf]
    %v1507 = vld [vmem:[%s41 + $0xc4] sm:$0xf]
    %v1508 = vld [vmem:[%s41 + $0xc8] sm:$0xf]
    %v1509 = vld [vmem:[%s41 + $0xcc] sm:$0xf]
    %v1510 = vld [vmem:[%s41 + $0xd0] sm:$0xf]
    %v1511 = vld [vmem:[%s41 + $0xd4] sm:$0xf]
    %v1512 = vld [vmem:[%s41 + $0xd8] sm:$0xf]
    %v1513 = vld [vmem:[%s41 + $0xdc] sm:$0xf]
    %v1514 = vld [vmem:[%s41 + $0xe0] sm:$0xf]
    %v1515 = vld [vmem:[%s41 + $0xe4] sm:$0xf]
    %v1516 = vld [vmem:[%s41 + $0xe8] sm:$0xf]
    %v1517 = vld [vmem:[%s41 + $0xec] sm:$0xf]
    %v1518 = vld [vmem:[%s41 + $0xf0] sm:$0xf]
    %v1519 = vld [vmem:[%s41 + $0xf4] sm:$0xf]
    %v1520 = vld [vmem:[%s41 + $0xf8] sm:$0xf]
    %v1521 = vld [vmem:[%s41 + $0xfc] sm:$0xf]
    %v1522 = vld [vmem:[%s41 + $0x100] sm:$0xf]
    %v1523 = vld [vmem:[%s41 + $0x104] sm:$0xf]
    %v1524 = vld [vmem:[%s41 + $0x108] sm:$0xf]
    %v1525 = vld [vmem:[%s41 + $0x10c] sm:$0xf]
    %v1526 = vld [vmem:[%s41 + $0x110] sm:$0xf]
    %v1527 = vld [vmem:[%s41 + $0x114] sm:$0xf]
    %v1528 = vld [vmem:[%s41 + $0x118] sm:$0xf]
    %v1529 = vld [vmem:[%s41 + $0x11c] sm:$0xf]
    %v1530 = vld [vmem:[%s41 + $0x120] sm:$0xf]
    %v1531 = vld [vmem:[%s41 + $0x124] sm:$0xf]
    %v1532 = vld [vmem:[%s41 + $0x128] sm:$0xf]
    %v1533 = vld [vmem:[%s41 + $0x12c] sm:$0xf]
    %v1534 = vld [vmem:[%s41 + $0x130] sm:$0xf]
    %v1535 = vld [vmem:[%s41 + $0x134] sm:$0xf]
    %v1536 = vld [vmem:[%s41 + $0x138] sm:$0xf]
    %v1537 = vld [vmem:[%s41 + $0x13c] sm:$0xf]
    %v1538 = vld [vmem:[%s41 + $0x140] sm:$0xf]
    %v1539 = vld [vmem:[%s41 + $0x144] sm:$0xf]
    %v1540 = vld [vmem:[%s41 + $0x148] sm:$0xf]
    %v1541 = vld [vmem:[%s41 + $0x14c] sm:$0xf]
    %v1542 = vld [vmem:[%s41 + $0x150] sm:$0xf]
    %v1543 = vld [vmem:[%s41 + $0x154] sm:$0xf]
    %v1544 = vld [vmem:[%s41 + $0x158] sm:$0xf]
    %v1545 = vld [vmem:[%s41 + $0x15c] sm:$0xf]
    %v1546 = vld [vmem:[%s41 + $0x160] sm:$0xf]
    %v1547 = vld [vmem:[%s41 + $0x164] sm:$0xf]
    %v1548 = vld [vmem:[%s41 + $0x168] sm:$0xf]
    %v1549 = vld [vmem:[%s41 + $0x16c] sm:$0xf]
    %v1550 = vld [vmem:[%s41 + $0x170] sm:$0xf]
    %v1551 = vld [vmem:[%s41 + $0x174] sm:$0xf]
    %v1552 = vld [vmem:[%s41 + $0x178] sm:$0xf]
    %v1553 = vld [vmem:[%s41 + $0x17c] sm:$0xf]
    %v1554 = vld [vmem:[%s41 + $0x180] sm:$0xf]
    %v1555 = vld [vmem:[%s41 + $0x184] sm:$0xf]
    %v1556 = vld [vmem:[%s41 + $0x188] sm:$0xf]
    %v1557 = vld [vmem:[%s41 + $0x18c] sm:$0xf]
    %v1558 = vld [vmem:[%s41 + $0x190] sm:$0xf]
    %v1559 = vld [vmem:[%s41 + $0x194] sm:$0xf]
    %v1560 = vld [vmem:[%s41 + $0x198] sm:$0xf]
    %v1561 = vld [vmem:[%s41 + $0x19c] sm:$0xf]
    %v1562 = vld [vmem:[%s41 + $0x1a0] sm:$0xf]
    %v1563 = vld [vmem:[%s41 + $0x1a4] sm:$0xf]
    %v1564 = vld [vmem:[%s41 + $0x1a8] sm:$0xf]
    %v1565 = vld [vmem:[%s41 + $0x1ac] sm:$0xf]
    %v1566 = vld [vmem:[%s41 + $0x1b0] sm:$0xf]
    %v1567 = vld [vmem:[%s41 + $0x1b4] sm:$0xf]
    %v1568 = vld [vmem:[%s41 + $0x1b8] sm:$0xf]
    %v1569 = vld [vmem:[%s41 + $0x1bc] sm:$0xf]
    %v1570 = vld [vmem:[%s41 + $0x1c0] sm:$0xf]
    %v1571 = vld [vmem:[%s41 + $0x1c4] sm:$0xf]
    %v1572 = vld [vmem:[%s41 + $0x1c8] sm:$0xf]
    %v1573 = vld [vmem:[%s41 + $0x1cc] sm:$0xf]
    %v1574 = vld [vmem:[%s41 + $0x1d0] sm:$0xf]
    %v1575 = vld [vmem:[%s41 + $0x1d4] sm:$0xf]
    %v1576 = vld [vmem:[%s41 + $0x1d8] sm:$0xf]
    %v1577 = vld [vmem:[%s41 + $0x1dc] sm:$0xf]
    %v1578 = vld [vmem:[%s41 + $0x1e0] sm:$0xf]
    %v1579 = vld [vmem:[%s41 + $0x1e4] sm:$0xf]
    %v1580 = vld [vmem:[%s41 + $0x1e8] sm:$0xf]
    %v1581 = vld [vmem:[%s41 + $0x1ec] sm:$0xf]
    %v1582 = vld [vmem:[%s41 + $0x1f0] sm:$0xf]
    %v1583 = vld [vmem:[%s41 + $0x1f4] sm:$0xf]
    %v1584 = vld [vmem:[%s41 + $0x1f8] sm:$0xf]
    %v1585 = vld [vmem:[%s41 + $0x1fc] sm:$0xf]
    %v1586 = vld [vmem:[%s43] sm:$0x1]
    %v1588 = vperm.slane %v1586, 0
    %v1718 = vunpack.c.l.b16 %v1458
    %v1719 = vunpack.c.l.b16 %v1459
    %v1720 = vunpack.c.l.b16 %v1460
    %v1721 = vunpack.c.l.b16 %v1461
    %v1722 = vunpack.c.l.b16 %v1462
    %v1723 = vunpack.c.l.b16 %v1463
    %v1724 = vunpack.c.l.b16 %v1464
    %v1725 = vunpack.c.l.b16 %v1465
    %v1726 = vunpack.c.l.b16 %v1466
    %v1727 = vunpack.c.l.b16 %v1467
    %v1728 = vunpack.c.l.b16 %v1468
    %v1729 = vunpack.c.l.b16 %v1469
    %v1730 = vunpack.c.l.b16 %v1470
    %v1731 = vunpack.c.l.b16 %v1471
    %v1732 = vunpack.c.l.b16 %v1472
    %v1733 = vunpack.c.l.b16 %v1473
    %v1734 = vunpack.c.l.b16 %v1474
    %v1735 = vunpack.c.l.b16 %v1475
    %v1736 = vunpack.c.l.b16 %v1476
    %v1737 = vunpack.c.l.b16 %v1477
    %v1738 = vunpack.c.l.b16 %v1478
    %v1739 = vunpack.c.l.b16 %v1479
    %v1740 = vunpack.c.l.b16 %v1480
    %v1741 = vunpack.c.l.b16 %v1481
    %v1742 = vunpack.c.l.b16 %v1482
    %v1743 = vunpack.c.l.b16 %v1483
    %v1744 = vunpack.c.l.b16 %v1484
    %v1745 = vunpack.c.l.b16 %v1485
    %v1746 = vunpack.c.l.b16 %v1486
    %v1747 = vunpack.c.l.b16 %v1487
    %v1748 = vunpack.c.l.b16 %v1488
    %v1749 = vunpack.c.l.b16 %v1489
    %v1750 = vunpack.c.l.b16 %v1490
    %v1751 = vunpack.c.l.b16 %v1491
    %v1752 = vunpack.c.l.b16 %v1492
    %v1753 = vunpack.c.l.b16 %v1493
    %v1754 = vunpack.c.l.b16 %v1494
    %v1755 = vunpack.c.l.b16 %v1495
    %v1756 = vunpack.c.l.b16 %v1496
    %v1757 = vunpack.c.l.b16 %v1497
    %v1758 = vunpack.c.l.b16 %v1498
    %v1759 = vunpack.c.l.b16 %v1499
    %v1760 = vunpack.c.l.b16 %v1500
    %v1761 = vunpack.c.l.b16 %v1501
    %v1762 = vunpack.c.l.b16 %v1502
    %v1763 = vunpack.c.l.b16 %v1503
    %v1764 = vunpack.c.l.b16 %v1504
    %v1765 = vunpack.c.l.b16 %v1505
    %v1766 = vunpack.c.l.b16 %v1506
    %v1767 = vunpack.c.l.b16 %v1507
    %v1768 = vunpack.c.l.b16 %v1508
    %v1769 = vunpack.c.l.b16 %v1509
    %v1770 = vunpack.c.l.b16 %v1510
    %v1771 = vunpack.c.l.b16 %v1511
    %v1772 = vunpack.c.l.b16 %v1512
    %v1773 = vunpack.c.l.b16 %v1513
    %v1774 = vunpack.c.l.b16 %v1514
    %v1775 = vunpack.c.l.b16 %v1515
    %v1776 = vunpack.c.l.b16 %v1516
    %v1777 = vunpack.c.l.b16 %v1517
    %v1778 = vunpack.c.l.b16 %v1518
    %v1779 = vunpack.c.l.b16 %v1519
    %v1780 = vunpack.c.l.b16 %v1520
    %v1781 = vunpack.c.l.b16 %v1521
    %v1782 = vunpack.c.l.b16 %v1522
    %v1783 = vunpack.c.l.b16 %v1523
    %v1784 = vunpack.c.l.b16 %v1524
    %v1785 = vunpack.c.l.b16 %v1525
    %v1786 = vunpack.c.l.b16 %v1526
    %v1787 = vunpack.c.l.b16 %v1527
    %v1788 = vunpack.c.l.b16 %v1528
    %v1789 = vunpack.c.l.b16 %v1529
    %v1790 = vunpack.c.l.b16 %v1530
    %v1791 = vunpack.c.l.b16 %v1531
    %v1792 = vunpack.c.l.b16 %v1532
    %v1793 = vunpack.c.l.b16 %v1533
    %v1794 = vunpack.c.l.b16 %v1534
    %v1795 = vunpack.c.l.b16 %v1535
    %v1796 = vunpack.c.l.b16 %v1536
    %v1797 = vunpack.c.l.b16 %v1537
    %v1798 = vunpack.c.l.b16 %v1538
    %v1799 = vunpack.c.l.b16 %v1539
    %v1800 = vunpack.c.l.b16 %v1540
    %v1801 = vunpack.c.l.b16 %v1541
    %v1802 = vunpack.c.l.b16 %v1542
    %v1803 = vunpack.c.l.b16 %v1543
    %v1804 = vunpack.c.l.b16 %v1544
    %v1805 = vunpack.c.l.b16 %v1545
    %v1806 = vunpack.c.l.b16 %v1546
    %v1807 = vunpack.c.l.b16 %v1547
    %v1808 = vunpack.c.l.b16 %v1548
    %v1809 = vunpack.c.l.b16 %v1549
    %v1810 = vunpack.c.l.b16 %v1550
    %v1811 = vunpack.c.l.b16 %v1551
    %v1812 = vunpack.c.l.b16 %v1552
    %v1813 = vunpack.c.l.b16 %v1553
    %v1814 = vunpack.c.l.b16 %v1554
    %v1815 = vunpack.c.l.b16 %v1555
    %v1816 = vunpack.c.l.b16 %v1556
    %v1817 = vunpack.c.l.b16 %v1557
    %v1818 = vunpack.c.l.b16 %v1558
    %v1819 = vunpack.c.l.b16 %v1559
    %v1820 = vunpack.c.l.b16 %v1560
    %v1821 = vunpack.c.l.b16 %v1561
    %v1822 = vunpack.c.l.b16 %v1562
    %v1823 = vunpack.c.l.b16 %v1563
    %v1824 = vunpack.c.l.b16 %v1564
    %v1825 = vunpack.c.l.b16 %v1565
    %v1826 = vunpack.c.l.b16 %v1566
    %v1827 = vunpack.c.l.b16 %v1567
    %v1828 = vunpack.c.l.b16 %v1568
    %v1829 = vunpack.c.l.b16 %v1569
    %v1830 = vunpack.c.l.b16 %v1570
    %v1831 = vunpack.c.l.b16 %v1571
    %v1832 = vunpack.c.l.b16 %v1572
    %v1833 = vunpack.c.l.b16 %v1573
    %v1834 = vunpack.c.l.b16 %v1574
    %v1835 = vunpack.c.l.b16 %v1575
    %v1836 = vunpack.c.l.b16 %v1576
    %v1837 = vunpack.c.l.b16 %v1577
    %v1838 = vunpack.c.l.b16 %v1578
    %v1839 = vunpack.c.l.b16 %v1579
    %v1840 = vunpack.c.l.b16 %v1580
    %v1841 = vunpack.c.l.b16 %v1581
    %v1842 = vunpack.c.l.b16 %v1582
    %v1843 = vunpack.c.l.b16 %v1583
    %v1844 = vunpack.c.l.b16 %v1584
    %v1845 = vunpack.c.l.b16 %v1585
    %v1846 = vpack.c.b16 %v1719, %v1718
    %v1847 = vpack.c.b16 %v1721, %v1720
    %v1848 = vpack.c.b16 %v1723, %v1722
    %v1849 = vpack.c.b16 %v1725, %v1724
    %v1850 = vpack.c.b16 %v1727, %v1726
    %v1851 = vpack.c.b16 %v1729, %v1728
    %v1852 = vpack.c.b16 %v1731, %v1730
    %v1853 = vpack.c.b16 %v1733, %v1732
    %v1854 = vpack.c.b16 %v1735, %v1734
    %v1855 = vpack.c.b16 %v1737, %v1736
    %v1856 = vpack.c.b16 %v1739, %v1738
    %v1857 = vpack.c.b16 %v1741, %v1740
    %v1858 = vpack.c.b16 %v1743, %v1742
    %v1859 = vpack.c.b16 %v1745, %v1744
    %v1860 = vpack.c.b16 %v1747, %v1746
    %v1861 = vpack.c.b16 %v1749, %v1748
    %v1862 = vpack.c.b16 %v1751, %v1750
    %v1863 = vpack.c.b16 %v1753, %v1752
    %v1864 = vpack.c.b16 %v1755, %v1754
    %v1865 = vpack.c.b16 %v1757, %v1756
    %v1866 = vpack.c.b16 %v1759, %v1758
    %v1867 = vpack.c.b16 %v1761, %v1760
    %v1868 = vpack.c.b16 %v1763, %v1762
    %v1869 = vpack.c.b16 %v1765, %v1764
    %v1870 = vpack.c.b16 %v1767, %v1766
    %v1871 = vpack.c.b16 %v1769, %v1768
    %v1872 = vpack.c.b16 %v1771, %v1770
    %v1873 = vpack.c.b16 %v1773, %v1772
    %v1874 = vpack.c.b16 %v1775, %v1774
    %v1875 = vpack.c.b16 %v1777, %v1776
    %v1876 = vpack.c.b16 %v1779, %v1778
    %v1877 = vpack.c.b16 %v1781, %v1780
    %v1878 = vpack.c.b16 %v1783, %v1782
    %v1879 = vpack.c.b16 %v1785, %v1784
    %v1880 = vpack.c.b16 %v1787, %v1786
    %v1881 = vpack.c.b16 %v1789, %v1788
    %v1882 = vpack.c.b16 %v1791, %v1790
    %v1883 = vpack.c.b16 %v1793, %v1792
    %v1884 = vpack.c.b16 %v1795, %v1794
    %v1885 = vpack.c.b16 %v1797, %v1796
    %v1886 = vpack.c.b16 %v1799, %v1798
    %v1887 = vpack.c.b16 %v1801, %v1800
    %v1888 = vpack.c.b16 %v1803, %v1802
    %v1889 = vpack.c.b16 %v1805, %v1804
    %v1890 = vpack.c.b16 %v1807, %v1806
    %v1891 = vpack.c.b16 %v1809, %v1808
    %v1892 = vpack.c.b16 %v1811, %v1810
    %v1893 = vpack.c.b16 %v1813, %v1812
    %v1894 = vpack.c.b16 %v1815, %v1814
    %v1895 = vpack.c.b16 %v1817, %v1816
    %v1896 = vpack.c.b16 %v1819, %v1818
    %v1897 = vpack.c.b16 %v1821, %v1820
    %v1898 = vpack.c.b16 %v1823, %v1822
    %v1899 = vpack.c.b16 %v1825, %v1824
    %v1900 = vpack.c.b16 %v1827, %v1826
    %v1901 = vpack.c.b16 %v1829, %v1828
    %v1902 = vpack.c.b16 %v1831, %v1830
    %v1903 = vpack.c.b16 %v1833, %v1832
    %v1904 = vpack.c.b16 %v1835, %v1834
    %v1905 = vpack.c.b16 %v1837, %v1836
    %v1906 = vpack.c.b16 %v1839, %v1838
    %v1907 = vpack.c.b16 %v1841, %v1840
    %v1908 = vpack.c.b16 %v1843, %v1842
    %v1909 = vpack.c.b16 %v1845, %v1844
    %1974 = vmatpush.bf16.msra.mxu0 %v1853
    %1975 = vmatpush.bf16.msra.mxu0 %v1852
    %1976 = vmatpush.bf16.msra.mxu0 %v1851
    %1977 = vmatpush.bf16.msra.mxu0 %v1850
    %1978 = vmatpush.bf16.msra.mxu0 %v1849
    %1979 = vmatpush.bf16.msra.mxu0 %v1848
    %1980 = vmatpush.bf16.msra.mxu0 %v1847
    %1981 = vmatpush.bf16.msra.mxu0 %v1846
    %1982 = vmatmul.bf16.gmra.mxu0 %v1098
    %v1983 = vpop.f32.mrf.mxu0
    %v1984 = vadd.f32 %v1588, %v1983
    %v1985 = vpop.f32.mrf.mxu0
    %1986 = vdwg.mxu0
    %1987 = vmatpush.bf16.msra.mxu0 %v1861
    %1988 = vmatpush.bf16.msra.mxu0 %v1860
    %1989 = vmatpush.bf16.msra.mxu0 %v1859
    %1990 = vmatpush.bf16.msra.mxu0 %v1858
    %1991 = vmatpush.bf16.msra.mxu0 %v1857
    %1992 = vmatpush.bf16.msra.mxu0 %v1856
    %1993 = vmatpush.bf16.msra.mxu0 %v1855
    %1994 = vmatpush.bf16.msra.mxu0 %v1854
    %1995 = vmatmul.bf16.gmra.mxu0 %v1154
    %v1996 = vpop.f32.mrf.mxu0
    %v1997 = vadd.f32 %v1984, %v1996
    %v1998 = vpop.f32.mrf.mxu0
    %1999 = vdwg.mxu0
    %2000 = vmatpush.bf16.msra.mxu0 %v1869
    %2001 = vmatpush.bf16.msra.mxu0 %v1868
    %2002 = vmatpush.bf16.msra.mxu0 %v1867
    %2003 = vmatpush.bf16.msra.mxu0 %v1866
    %2004 = vmatpush.bf16.msra.mxu0 %v1865
    %2005 = vmatpush.bf16.msra.mxu0 %v1864
    %2006 = vmatpush.bf16.msra.mxu0 %v1863
    %2007 = vmatpush.bf16.msra.mxu0 %v1862
    %2008 = vmatmul.bf16.gmra.mxu0 %v1199
    %v2009 = vpop.f32.mrf.mxu0
    %v2010 = vadd.f32 %v1997, %v2009
    %v2011 = vpop.f32.mrf.mxu0
    %2012 = vdwg.mxu0
    %2013 = vmatpush.bf16.msra.mxu0 %v1877
    %2014 = vmatpush.bf16.msra.mxu0 %v1876
    %2015 = vmatpush.bf16.msra.mxu0 %v1875
    %2016 = vmatpush.bf16.msra.mxu0 %v1874
    %2017 = vmatpush.bf16.msra.mxu0 %v1873
    %2018 = vmatpush.bf16.msra.mxu0 %v1872
    %2019 = vmatpush.bf16.msra.mxu0 %v1871
    %2020 = vmatpush.bf16.msra.mxu0 %v1870
    %2021 = vmatmul.bf16.gmra.mxu0 %v1255
    %v2022 = vpop.f32.mrf.mxu0
    %v2023 = vadd.f32 %v2010, %v2022
    %v2024 = vpop.f32.mrf.mxu0
    %2025 = vdwg.mxu0
    %2026 = vmatpush.bf16.msra.mxu0 %v1885
    %2027 = vmatpush.bf16.msra.mxu0 %v1884
    %2028 = vmatpush.bf16.msra.mxu0 %v1883
    %2029 = vmatpush.bf16.msra.mxu0 %v1882
    %2030 = vmatpush.bf16.msra.mxu0 %v1881
    %2031 = vmatpush.bf16.msra.mxu0 %v1880
    %2032 = vmatpush.bf16.msra.mxu0 %v1879
    %2033 = vmatpush.bf16.msra.mxu0 %v1878
    %2034 = vmatmul.bf16.gmra.mxu0 %v1300
    %v2035 = vpop.f32.mrf.mxu0
    %v2036 = vadd.f32 %v2023, %v2035
    %v2037 = vpop.f32.mrf.mxu0
    %2038 = vdwg.mxu0
    %2039 = vmatpush.bf16.msra.mxu0 %v1893
    %2040 = vmatpush.bf16.msra.mxu0 %v1892
    %2041 = vmatpush.bf16.msra.mxu0 %v1891
    %2042 = vmatpush.bf16.msra.mxu0 %v1890
    %2043 = vmatpush.bf16.msra.mxu0 %v1889
    %2044 = vmatpush.bf16.msra.mxu0 %v1888
    %2045 = vmatpush.bf16.msra.mxu0 %v1887
    %2046 = vmatpush.bf16.msra.mxu0 %v1886
    %2047 = vmatmul.bf16.gmra.mxu0 %v1356
    %v2048 = vpop.f32.mrf.mxu0
    %v2049 = vadd.f32 %v2036, %v2048
    %v2050 = vpop.f32.mrf.mxu0
    %2051 = vdwg.mxu0
    %2052 = vmatpush.bf16.msra.mxu0 %v1901
    %2053 = vmatpush.bf16.msra.mxu0 %v1900
    %2054 = vmatpush.bf16.msra.mxu0 %v1899
    %2055 = vmatpush.bf16.msra.mxu0 %v1898
    %2056 = vmatpush.bf16.msra.mxu0 %v1897
    %2057 = vmatpush.bf16.msra.mxu0 %v1896
    %2058 = vmatpush.bf16.msra.mxu0 %v1895
    %2059 = vmatpush.bf16.msra.mxu0 %v1894
    %2060 = vmatmul.bf16.gmra.mxu0 %v1401
    %v2061 = vpop.f32.mrf.mxu0
    %v2062 = vadd.f32 %v2049, %v2061
    %v2063 = vpop.f32.mrf.mxu0
    %2064 = vdwg.mxu0
    %2065 = vmatpush.bf16.msra.mxu0 %v1909
    %2066 = vmatpush.bf16.msra.mxu0 %v1908
    %2067 = vmatpush.bf16.msra.mxu0 %v1907
    %2068 = vmatpush.bf16.msra.mxu0 %v1906
    %2069 = vmatpush.bf16.msra.mxu0 %v1905
    %2070 = vmatpush.bf16.msra.mxu0 %v1904
    %2071 = vmatpush.bf16.msra.mxu0 %v1903
    %2072 = vmatpush.bf16.msra.mxu0 %v1902
    %2073 = vmatmul.bf16.gmra.mxu0 %v1457
    %v2074 = vpop.f32.mrf.mxu0
    %v2075 = vadd.f32 %v2062, %v2074
    %v2076 = vpop.f32.mrf.mxu0
    %2077 = vdwg.mxu0
    %v2078 = vadd.f32 %v373, %v2075
    %v2079 = vld [vmem:[%s45] sm:$0x1]
    %v2080 = vld [vmem:[%s47] sm:$0x1]
    %v2081 = vsel %vm303, %v2078, 0.0
    %2082 = vadd.xlane.f32.xlu0 %v2081
    %v2083 = vpop.xlane.xlu0 %2082
    %v2084 = vmul.f32 %v2083, %v313
    %v2085 = vsub.f32 %v2078, %v2084
    %v2086 = vmul.f32 %v2085, %v2085
    %v2087 = vsel %vm303, %v2086, 0.0
    %2088 = vadd.xlane.f32.xlu0 %v2087
    %v2089 = vpop.xlane.xlu0 %2088
    %v2090 = vmul.f32 %v2089, %v313
    %v2091 = vadd.f32 %v2090, 1e-05
    %v2092 = vrsqrt.pop %v2091
    %v2093 = vmul.f32 %v2092, %v2091
    %v2094 = vmul.f32 %v2093, %v2092
    %v2095 = vmul.f32 0.5, %v2094
    %v2096 = vsub.f32 1.5, %v2095
    %v2097 = vmul.f32 %v2092, %v2096
    %vm2098 = vweird.f32 %v2091
    %vm2099 = vweird.f32 %v2092
    %vm2100 = vmor %vm2098, %vm2099
    %v2101 = vsel %vm2100, %v2092, %v2097
    %v2102 = vmul.f32 %v2085, %v2101
    %v2104 = vperm.slane %v2079, 0
    %v2106 = vmul.f32 %v2102, %v2104
    %v2108 = vperm.slane %v2080, 0
    %v2110 = vadd.f32 %v2106, %v2108
    %v2111 = vpack.c.bf16 %v2110, %v2110
    %v2112 = vld [vmem:[%s49] sm:$0xf]
    %v2113 = vld [vmem:[%s49 + $0x4] sm:$0xf]
    %v2114 = vld [vmem:[%s49 + $0x8] sm:$0xf]
    %v2115 = vld [vmem:[%s49 + $0xc] sm:$0xf]
    %v2116 = vld [vmem:[%s51] sm:$0x1]
    %v2118 = vperm.slane %v2116, 0
    %v2124 = vunpack.c.l.b16 %v2112
    %v2125 = vunpack.c.l.b16 %v2113
    %v2126 = vunpack.c.l.b16 %v2114
    %v2127 = vunpack.c.l.b16 %v2115
    %v2128 = vpack.c.b16 %v2125, %v2124
    %v2129 = vpack.c.b16 %v2127, %v2126
    %v2133 = vsel %vm303, %v2111, 0
    %2135 = vmatpush.bf16.msra.mxu0 0
    %2136 = vmatpush.bf16.msra.mxu0 0
    %2137 = vmatpush.bf16.msra.mxu0 0
    %2138 = vmatpush.bf16.msra.mxu0 0
    %2139 = vmatpush.bf16.msra.mxu0 0
    %2140 = vmatpush.bf16.msra.mxu0 0
    %2141 = vmatpush.bf16.msra.mxu0 %v2129
    %2142 = vmatpush.bf16.msra.mxu0 %v2128
    %2143 = vmatmul.bf16.gmra.mxu0 %v2133
    %v2144 = vpop.f32.mrf.mxu0
    %v2145 = vadd.f32 %v2118, %v2144
    %v2146 = vpop.f32.mrf.mxu0
    %2147 = vdwg.mxu0
    %v2148 = vmul.f32 %v2145, 0.5
    %v2149 = vmul.f32 %v2145, 0.70710677
    %v2150 = vmul.f32 %v2149, %v2149
    %v2151 = vmin.f32 16.0, %v2150
    %v2152 = vmul.f32 %v2151, 2.1237322e-06
    %v2153 = vadd.f32 %v2152, 0.00028619796
    %v2154 = vmul.f32 %v2151, %v2153
    %v2155 = vadd.f32 %v2154, 0.0036580483
    %v2156 = vmul.f32 %v2151, %v2155
    %v2157 = vadd.f32 %v2156, 0.05243302
    %v2158 = vmul.f32 %v2151, %v2157
    %v2159 = vadd.f32 %v2158, 0.18741608
    %v2160 = vmul.f32 %v2151, %v2159
    %v2161 = vadd.f32 %v2160, 1.1283791
    %v2162 = vmul.f32 %v2149, %v2161
    %v2163 = vmul.f32 %v2151, 3.8918573e-05
    %v2164 = vadd.f32 %v2163, 0.001143296
    %v2165 = vmul.f32 %v2151, %v2164
    %v2166 = vadd.f32 %v2165, 0.014752088
    %v2167 = vmul.f32 %v2151, %v2166
    %v2168 = vadd.f32 %v2167, 0.112945676
    %v2169 = vmul.f32 %v2151, %v2168
    %v2170 = vadd.f32 %v2169, 0.4994258
    %v2171 = vmul.f32 %v2151, %v2170
    %v2172 = vadd.f32 %v2171, 1.0
    %v2173 = vrcp.pop %v2172
    %v2174 = vmul.f32 %v2172, %v2173
    %v2175 = vsub.f32 1.0, %v2174
    %v2176 = vmul.f32 %v2173, %v2175
    %v2177 = vadd.f32 %v2173, %v2176
    %vm2178 = vweird.f32 %v2172
    %vm2179 = vweird.f32 %v2173
    %vm2180 = vmor %vm2178, %vm2179
    %v2181 = vsel %vm2180, %v2173, %v2177
    %v2182 = vand.u32 2147483647, %v2172
    %vm2183 = vcmp.eq.f32.partialorder %v2182, 8.507059e+37
    %v2184 = vand.u32 %v2172, 2147483648
    %v2185 = vor.u32 1.1754944e-38, %v2184
    %v2186 = vsel %vm2183, %v2185, %v2181
    %v2187 = vmul.f32 %v2162, %v2186
    %v2188 = vmin.f32 %v2187, 1.0
    %v2189 = vmax.f32 %v2188, -1.0
    %v2190 = vadd.f32 %v2189, 1.0
    %v2191 = vmul.f32 %v2148, %v2190
    %v2192 = vpack.c.bf16 %v2191, %v2191
    %v2193 = vld [vmem:[%s53] sm:$0xf]
    %v2194 = vld [vmem:[%s53 + $0x4] sm:$0xf]
    %v2195 = vld [vmem:[%s53 + $0x8] sm:$0xf]
    %v2196 = vld [vmem:[%s53 + $0xc] sm:$0xf]
    %v2197 = vld [vmem:[%s53 + $0x10] sm:$0xf]
    %v2198 = vld [vmem:[%s53 + $0x14] sm:$0xf]
    %v2199 = vld [vmem:[%s53 + $0x18] sm:$0xf]
    %v2200 = vld [vmem:[%s53 + $0x1c] sm:$0xf]
    %v2201 = vld [vmem:[%s55] sm:$0x1]
    %v2203 = vperm.slane %v2201, 0
    %v2213 = vunpack.c.l.b16 %v2193
    %v2214 = vunpack.c.l.b16 %v2194
    %v2215 = vunpack.c.l.b16 %v2195
    %v2216 = vunpack.c.l.b16 %v2196
    %v2217 = vunpack.c.l.b16 %v2197
    %v2218 = vunpack.c.l.b16 %v2198
    %v2219 = vunpack.c.l.b16 %v2199
    %v2220 = vunpack.c.l.b16 %v2200
    %v2221 = vpack.c.b16 %v2214, %v2213
    %v2222 = vpack.c.b16 %v2216, %v2215
    %v2223 = vpack.c.b16 %v2218, %v2217
    %v2224 = vpack.c.b16 %v2220, %v2219
    %vm2229 = vcmask 523264
    %v2231 = vsel %vm2229, %v2192, 0
    %2233 = vmatpush.bf16.msra.mxu0 0
    %2234 = vmatpush.bf16.msra.mxu0 0
    %2235 = vmatpush.bf16.msra.mxu0 0
    %2236 = vmatpush.bf16.msra.mxu0 0
    %2237 = vmatpush.bf16.msra.mxu0 %v2224
    %2238 = vmatpush.bf16.msra.mxu0 %v2223
    %2239 = vmatpush.bf16.msra.mxu0 %v2222
    %2240 = vmatpush.bf16.msra.mxu0 %v2221
    %2241 = vmatmul.bf16.gmra.mxu0 %v2231
    %v2242 = vpop.f32.mrf.mxu0
    %v2243 = vadd.f32 %v2203, %v2242
    %v2244 = vpop.f32.mrf.mxu0
    %2245 = vdwg.mxu0
    %v2246 = vld [vmem:[%s57] sm:$0x1]
    %v2247 = vld [vmem:[%s59] sm:$0x1]
    %v2248 = vsel %vm303, %v2243, 0.0
    %2249 = vadd.xlane.f32.xlu0 %v2248
    %v2250 = vpop.xlane.xlu0 %2249
    %v2251 = vmul.f32 %v2250, %v313
    %v2252 = vsub.f32 %v2243, %v2251
    %v2253 = vmul.f32 %v2252, %v2252
    %v2254 = vsel %vm303, %v2253, 0.0
    %2255 = vadd.xlane.f32.xlu0 %v2254
    %v2256 = vpop.xlane.xlu0 %2255
    %v2257 = vmul.f32 %v2256, %v313
    %v2258 = vadd.f32 %v2257, 1e-05
    %v2259 = vrsqrt.pop %v2258
    %v2260 = vmul.f32 %v2259, %v2258
    %v2261 = vmul.f32 %v2260, %v2259
    %v2262 = vmul.f32 0.5, %v2261
    %v2263 = vsub.f32 1.5, %v2262
    %v2264 = vmul.f32 %v2259, %v2263
    %vm2265 = vweird.f32 %v2258
    %vm2266 = vweird.f32 %v2259
    %vm2267 = vmor %vm2265, %vm2266
    %v2268 = vsel %vm2267, %v2259, %v2264
    %v2269 = vmul.f32 %v2252, %v2268
    %v2271 = vperm.slane %v2246, 0
    %v2273 = vmul.f32 %v2269, %v2271
    %v2275 = vperm.slane %v2247, 0
    %v2277 = vadd.f32 %v2273, %v2275
    %v2278 = vadd.f32 %v2110, %v2277
    %v2279 = vld [vmem:[%s61] sm:$0x1]
    %v2280 = vld [vmem:[%s63] sm:$0x1]
    %v2281 = vsel %vm303, %v2278, 0.0
    %2282 = vadd.xlane.f32.xlu0 %v2281
    %v2283 = vpop.xlane.xlu0 %2282
    %v2284 = vmul.f32 %v2283, %v313
    %v2285 = vsub.f32 %v2278, %v2284
    %v2286 = vmul.f32 %v2285, %v2285
    %v2287 = vsel %vm303, %v2286, 0.0
    %2288 = vadd.xlane.f32.xlu0 %v2287
    %v2289 = vpop.xlane.xlu0 %2288
    %v2290 = vmul.f32 %v2289, %v313
    %v2291 = vadd.f32 %v2290, 1e-05
    %v2292 = vrsqrt.pop %v2291
    %v2293 = vmul.f32 %v2292, %v2291
    %v2294 = vmul.f32 %v2293, %v2292
    %v2295 = vmul.f32 0.5, %v2294
    %v2296 = vsub.f32 1.5, %v2295
    %v2297 = vmul.f32 %v2292, %v2296
    %vm2298 = vweird.f32 %v2291
    %vm2299 = vweird.f32 %v2292
    %vm2300 = vmor %vm2298, %vm2299
    %v2301 = vsel %vm2300, %v2292, %v2297
    %v2302 = vmul.f32 %v2285, %v2301
    %v2304 = vperm.slane %v2279, 0
    %v2306 = vmul.f32 %v2302, %v2304
    %v2308 = vperm.slane %v2280, 0
    %v2310 = vadd.f32 %v2306, %v2308
    %v2311 = vpack.c.bf16 %v2310, %v2310
    %v2312 = vld [vmem:[%s65] sm:$0xf]
    %v2313 = vld [vmem:[%s65 + $0x4] sm:$0xf]
    %v2314 = vld [vmem:[%s65 + $0x8] sm:$0xf]
    %v2315 = vld [vmem:[%s65 + $0xc] sm:$0xf]
    %v2316 = vld [vmem:[%s67] sm:$0x1]
    %v2318 = vperm.slane %v2316, 0
    %v2324 = vunpack.c.l.b16 %v2312
    %v2325 = vunpack.c.l.b16 %v2313
    %v2326 = vunpack.c.l.b16 %v2314
    %v2327 = vunpack.c.l.b16 %v2315
    %v2328 = vpack.c.b16 %v2325, %v2324
    %v2329 = vpack.c.b16 %v2327, %v2326
    %v2333 = vsel %vm303, %v2311, 0
    %2335 = vmatpush.bf16.msra.mxu0 0
    %2336 = vmatpush.bf16.msra.mxu0 0
    %2337 = vmatpush.bf16.msra.mxu0 0
    %2338 = vmatpush.bf16.msra.mxu0 0
    %2339 = vmatpush.bf16.msra.mxu0 0
    %2340 = vmatpush.bf16.msra.mxu0 0
    %2341 = vmatpush.bf16.msra.mxu0 %v2329
    %2342 = vmatpush.bf16.msra.mxu0 %v2328
    %2343 = vmatmul.bf16.gmra.mxu0 %v2333
    %v2344 = vpop.f32.mrf.mxu0
    %v2345 = vadd.f32 %v2318, %v2344
    %v2346 = vpop.f32.mrf.mxu0
    %2347 = vdwg.mxu0
    %v2348 = vmul.f32 %v2345, 0.5
    %v2349 = vmul.f32 %v2345, 0.70710677
    %v2350 = vmul.f32 %v2349, %v2349
    %v2351 = vmin.f32 16.0, %v2350
    %v2352 = vmul.f32 %v2351, 2.1237322e-06
    %v2353 = vadd.f32 %v2352, 0.00028619796
    %v2354 = vmul.f32 %v2351, %v2353
    %v2355 = vadd.f32 %v2354, 0.0036580483
    %v2356 = vmul.f32 %v2351, %v2355
    %v2357 = vadd.f32 %v2356, 0.05243302
    %v2358 = vmul.f32 %v2351, %v2357
    %v2359 = vadd.f32 %v2358, 0.18741608
    %v2360 = vmul.f32 %v2351, %v2359
    %v2361 = vadd.f32 %v2360, 1.1283791
    %v2362 = vmul.f32 %v2349, %v2361
    %v2363 = vmul.f32 %v2351, 3.8918573e-05
    %v2364 = vadd.f32 %v2363, 0.001143296
    %v2365 = vmul.f32 %v2351, %v2364
    %v2366 = vadd.f32 %v2365, 0.014752088
    %v2367 = vmul.f32 %v2351, %v2366
    %v2368 = vadd.f32 %v2367, 0.112945676
    %v2369 = vmul.f32 %v2351, %v2368
    %v2370 = vadd.f32 %v2369, 0.4994258
    %v2371 = vmul.f32 %v2351, %v2370
    %v2372 = vadd.f32 %v2371, 1.0
    %v2373 = vrcp.pop %v2372
    %v2374 = vmul.f32 %v2372, %v2373
    %v2375 = vsub.f32 1.0, %v2374
    %v2376 = vmul.f32 %v2373, %v2375
    %v2377 = vadd.f32 %v2373, %v2376
    %vm2378 = vweird.f32 %v2372
    %vm2379 = vweird.f32 %v2373
    %vm2380 = vmor %vm2378, %vm2379
    %v2381 = vsel %vm2380, %v2373, %v2377
    %v2382 = vand.u32 2147483647, %v2372
    %vm2383 = vcmp.eq.f32.partialorder %v2382, 8.507059e+37
    %v2384 = vand.u32 %v2372, 2147483648
    %v2385 = vor.u32 1.1754944e-38, %v2384
    %v2386 = vsel %vm2383, %v2385, %v2381
    %v2387 = vmul.f32 %v2362, %v2386
    %v2388 = vmin.f32 %v2387, 1.0
    %v2389 = vmax.f32 %v2388, -1.0
    %v2390 = vadd.f32 %v2389, 1.0
    %v2391 = vmul.f32 %v2348, %v2390
    %v2392 = vld [vmem:[%s69] sm:$0xff]
    %v2393 = vld [vmem:[%s69 + $0x8] sm:$0xff]
    %v2394 = vld [vmem:[#allocation2] sm:$0x1]
    %v2396 = vperm.slane %v2394, 0
    %vm2398 = vcmask 130048
    %v2400 = vsel %vm2398, %v2391, 0
    %2402 = vmatpush.msra.mxu0 0.0
    %2403 = vmatpush.msra.mxu0 0.0
    %2404 = vmatpush.msra.mxu0 0.0
    %2405 = vmatpush.msra.mxu0 0.0
    %2406 = vmatpush.msra.mxu0 0.0
    %2407 = vmatpush.msra.mxu0 0.0
    %2408 = vmatpush.msra.mxu0 0.0
    %2409 = vmatpush.msra.mxu0 0.0
    %2410 = vmatpush.msra.mxu0 0.0
    %2411 = vmatpush.msra.mxu0 0.0
    %2412 = vmatpush.msra.mxu0 0.0
    %2413 = vmatpush.msra.mxu0 0.0
    %2414 = vmatpush.msra.mxu0 0.0
    %2415 = vmatpush.msra.mxu0 0.0
    %2416 = vmatpush.msra.mxu0 %v2393
    %2417 = vmatpush.msra.mxu0 %v2392
    %2418 = vmatmul.f32.gmra.mxu0 %v2400
    %v2419 = vpop.f32.mrf.mxu0
    %v2420 = vadd.f32 %v2396, %v2419
    %2421 = vdwg.mxu0
    %v2422 = vxor.u32 %v2420, 2147483648
    %v2423 = vmul.f32 %v2422, 1.442695
    %v2424 = vpow.pop %v2423
    %v2425 = vadd.f32 %v2424, 1.0
    %v2426 = vrcp.pop %v2425
    %v2427 = vmul.f32 %v2425, %v2426
    %v2428 = vsub.f32 1.0, %v2427
    %v2429 = vmul.f32 %v2426, %v2428
    %v2430 = vadd.f32 %v2426, %v2429
    %vm2431 = vweird.f32 %v2425
    %vm2432 = vweird.f32 %v2426
    %vm2433 = vmor %vm2431, %vm2432
    %v2434 = vsel %vm2433, %v2426, %v2430
    %v2435 = vand.u32 2147483647, %v2425
    %vm2436 = vcmp.eq.f32.partialorder %v2435, 8.507059e+37
    %v2437 = vand.u32 %v2425, 2147483648
    %v2438 = vor.u32 1.1754944e-38, %v2437
    %v2439 = vsel %vm2436, %v2438, %v2434
    %v2440 = vmul.f32 1.0, %v2439
    %v2441 = vmul.f32 %v2440, 1.442695
    %v2442 = vpow.pop %v2441
    %v2443 = vld [vmem:[%s7] sm:$0x1]
    %2445 = vset.pattern.permute.xlu0 0
    %2446 = vperm.xlu0 %2445, %v2442
    %v2447 = vpop.permute.xlu0 %2446
    %v2449 = vmul.f32 %v2447, %v2310
    %v2450 = vpack.c.bf16 %v2449, %v2449
    %v2452 = vsel %vm191, %v2443, 0
    %v2455 = vsel %vm1081, %v2450, 0
    %2457 = vmatpush.bf16.msra.mxu0 0
    %2458 = vmatpush.bf16.msra.mxu0 0
    %2459 = vmatpush.bf16.msra.mxu0 0
    %2460 = vmatpush.bf16.msra.mxu0 0
    %2461 = vmatpush.bf16.msra.mxu0 0
    %2462 = vmatpush.bf16.msra.mxu0 0
    %2463 = vmatpush.bf16.msra.mxu0 0
    %2464 = vmatpush.bf16.msra.mxu0 %v2455
    %2465 = vmatmul.bf16.gmra.mxu0 %v2452
    %v2466 = vpop.f32.mrf.mxu0
    %v2467 = vadd.f32 0.0, %v2466
    %v2468 = vpop.f32.mrf.mxu0
    %2469 = vdwg.mxu0
    %v2470 = vpack.c.bf16 %v2442, %v2442
    %v2472 = vsel %vm1081, %v2470, 0
    %2474 = vmatpush.bf16.msra.mxu0 0
    %2475 = vmatpush.bf16.msra.mxu0 0
    %2476 = vmatpush.bf16.msra.mxu0 0
    %2477 = vmatpush.bf16.msra.mxu0 0
    %2478 = vmatpush.bf16.msra.mxu0 0
    %2479 = vmatpush.bf16.msra.mxu0 0
    %2480 = vmatpush.bf16.msra.mxu0 0
    %2481 = vmatpush.bf16.msra.mxu0 %v2472
    %2482 = vmatmul.bf16.gmra.mxu0 %v2452
    %v2483 = vpop.f32.mrf.mxu0
    %v2484 = vadd.f32 0.0, %v2483
    %v2485 = vpop.f32.mrf.mxu0
    %2486 = vdwg.mxu0
    %v2487 = vrcp.pop %v2484
    %v2488 = vmul.f32 %v2484, %v2487
    %v2489 = vsub.f32 1.0, %v2488
    %v2490 = vmul.f32 %v2487, %v2489
    %v2491 = vadd.f32 %v2487, %v2490
    %vm2492 = vweird.f32 %v2484
    %vm2493 = vweird.f32 %v2487
    %vm2494 = vmor %vm2492, %vm2493
    %v2495 = vsel %vm2494, %v2487, %v2491
    %v2496 = vand.u32 2147483647, %v2484
    %vm2497 = vcmp.eq.f32.partialorder %v2496, 8.507059e+37
    %v2498 = vand.u32 %v2484, 2147483648
    %v2499 = vor.u32 1.1754944e-38, %v2498
    %v2500 = vsel %vm2497, %v2499, %v2495
    %v2501 = vmul.f32 1.0, %v2500
    %2503 = vset.pattern.permute.xlu0 0
    %2504 = vperm.xlu0 %2503, %v2501
    %v2505 = vpop.permute.xlu0 %2504
    %v2507 = vmul.f32 %v2467, %v2505
    %vm2508 = vcmask 254976
    %2509 = vst.msk [vmem:[#allocation3] sm:$0x3] %vm2508, %v2507
    // Predicated region
    $region146: #{tpu_custom_call.1} parent=1 // pred_check
      _
    $region147: #{tpu_custom_call.1} parent=1 // pred_check_branch
      %2511 = sbr.rel (0) target = $region149
    $region148: #{tpu_custom_call.1} parent=1 // pred_region
      %2513 = vsyncadd [#allocation4], 0
      %s2515 = sshll.u32 [#allocation3], 4
      %s2516 = int_to_ptr.vmem [resolvable:$true] %s2515
      %s2517 = sshll.u32 %s73, 4
      %s2518 = int_to_ptr.hbm [resolvable:$true] %s2517
      %2520 = dma.vmem_to_hbm [thread:$0]  %s2516, 32, %s2518, [#allocation4]
    $region149: #{tpu_custom_call.1} parent=1 // pred_fallthru
      _
    // Predicated region
    $region150: #{tpu_custom_call.1} parent=1 // pred_check
      _
    $region151: #{tpu_custom_call.1} parent=1 // pred_check_branch
      %2522 = sbr.rel (0) target = $region153
    $region152: #{tpu_custom_call.1} parent=1 // pred_region
      %2524 = dma.done [#allocation4], 32
    $region153: #{tpu_custom_call.1} parent=1 // pred_fallthru
      _
    %2525 = vsyncpa [#allocation4], 1

// kernel: tpu_custom_call.1
$region0: #{tpu_custom_call.1}
  #allocation0 [shape = 'u32[]', space=smem, size = 0x4, offset = 0x4, fixed_abs, tag = 'smem constant byte address 0x4 - core index']
  #allocation1 [shape = 'u32[72,128]{1,0:T(1,128)}', space=vmem, size = 0x9000, scoped, tag = 'internal scratch']
  #allocation2 [shape = 'f32[1,1]{1,0:T(1,128)S(1)}', space=vmem, size = 0x200, scoped, tag = 'scoped memory for tpu_custom_call.1']
  %s0 = inlined_call_operand.smem [shape: u32[37], index: -1, kind: input, shape index: {}]
  %s1 = sld [smem:[%s0]]
  %s2 = scalar_lea.smem %s0, 1
  %s3 = sld [smem:[%s2]]
  %s4 = scalar_lea.smem %s0, 2
  %s5 = sld [smem:[%s4]]
  %s6 = scalar_lea.smem %s0, 3
  %s7 = sld [smem:[%s6]]
  %s8 = scalar_lea.smem %s0, 4
  %s9 = sld [smem:[%s8]]
  %s10 = scalar_lea.smem %s0, 5
  %s11 = sld [smem:[%s10]]
  %s12 = scalar_lea.smem %s0, 6
  %s13 = sld [smem:[%s12]]
  %s14 = scalar_lea.smem %s0, 7
  %s15 = sld [smem:[%s14]]
  %s16 = scalar_lea.smem %s0, 8
  %s17 = sld [smem:[%s16]]
  %s18 = scalar_lea.smem %s0, 9
  %s19 = sld [smem:[%s18]]
  %s20 = scalar_lea.smem %s0, 10
  %s21 = sld [smem:[%s20]]
  %s22 = scalar_lea.smem %s0, 11
  %s23 = sld [smem:[%s22]]
  %s24 = scalar_lea.smem %s0, 12
  %s25 = sld [smem:[%s24]]
  %s26 = scalar_lea.smem %s0, 13
  %s27 = sld [smem:[%s26]]
  %s28 = scalar_lea.smem %s0, 14
  %s29 = sld [smem:[%s28]]
  %s30 = scalar_lea.smem %s0, 15
  %s31 = sld [smem:[%s30]]
  %s32 = scalar_lea.smem %s0, 16
  %s33 = sld [smem:[%s32]]
  %s34 = scalar_lea.smem %s0, 17
  %s35 = sld [smem:[%s34]]
  %s36 = scalar_lea.smem %s0, 18
  %s37 = sld [smem:[%s36]]
  %s38 = scalar_lea.smem %s0, 19
  %s39 = sld [smem:[%s38]]
  %s40 = scalar_lea.smem %s0, 20
  %s41 = sld [smem:[%s40]]
  %s42 = scalar_lea.smem %s0, 21
  %s43 = sld [smem:[%s42]]
  %s44 = scalar_lea.smem %s0, 22
  %s45 = sld [smem:[%s44]]
  %s46 = scalar_lea.smem %s0, 23
  %s47 = sld [smem:[%s46]]
  %s48 = scalar_lea.smem %s0, 24
  %s49 = sld [smem:[%s48]]
  %s50 = scalar_lea.smem %s0, 25
  %s51 = sld [smem:[%s50]]
  %s52 = scalar_lea.smem %s0, 26
  %s53 = sld [smem:[%s52]]
  %s54 = scalar_lea.smem %s0, 27
  %s55 = sld [smem:[%s54]]
  %s56 = scalar_lea.smem %s0, 28
  %s57 = sld [smem:[%s56]]
  %s58 = scalar_lea.smem %s0, 29
  %s59 = sld [smem:[%s58]]
  %s60 = scalar_lea.smem %s0, 30
  %s61 = sld [smem:[%s60]]
  %s62 = scalar_lea.smem %s0, 31
  %s63 = sld [smem:[%s62]]
  %s64 = scalar_lea.smem %s0, 32
  %s65 = sld [smem:[%s64]]
  %s66 = scalar_lea.smem %s0, 33
  %s67 = sld [smem:[%s66]]
  %s68 = scalar_lea.smem %s0, 34
  %s69 = sld [smem:[%s68]]
  %s70 = scalar_lea.smem %s0, 35
  %s71 = sld [smem:[%s70]]
  %s72 = scalar_lea.smem %s0, 36
  %s73 = sld [smem:[%s72]]
  %s74 = sld [smem:[#allocation0]]
  $region154: #{tpu_custom_call.1} parent=0
    _
  %s76 = ssub.s32 1, %s74
  %s77 = scalar_select 0, %s76, %s74
  %v78 = vstv %s71
  %79 = vst [vmem:[#allocation2] sm:$0x1] %v78
  $region1: #{tpu_custom_call.1} parent=0
    #allocation3 [shape = 'u8[1024]{0}', space=vmem, size = 0x400, scoped, tag = 'output window, operand 0, single buffered']
    #allocation4 [shape = 's32[1]{0}', space=sflag, size = 0x4, scoped, tag = 'scoped memory for tpu_custom_call.1']
    %80 = vsyncpa [#allocation4], 0
    // Predicated region
    $region2: #{tpu_custom_call.1} parent=1 // pred_check
      _
    $region3: #{tpu_custom_call.1} parent=1 // pred_check_branch
      %82 = sbr.rel (0) target = $region5
    $region4: #{tpu_custom_call.1} parent=1 // pred_region
      _
    $region5: #{tpu_custom_call.1} parent=1 // pred_fallthru
      _
    // Predicated region
    $region6: #{tpu_custom_call.1} parent=1 // pred_check
      _
    $region7: #{tpu_custom_call.1} parent=1 // pred_check_branch
      %84 = sbr.rel (0) target = $region9
    $region8: #{tpu_custom_call.1} parent=1 // pred_region
      _
    $region9: #{tpu_custom_call.1} parent=1 // pred_fallthru
      _
    // Predicated region
    $region10: #{tpu_custom_call.1} parent=1 // pred_check
      _
    $region11: #{tpu_custom_call.1} parent=1 // pred_check_branch
      %86 = sbr.rel (0) target = $region13
    $region12: #{tpu_custom_call.1} parent=1 // pred_region
      _
    $region13: #{tpu_custom_call.1} parent=1 // pred_fallthru
      _
    // Predicated region
    $region14: #{tpu_custom_call.1} parent=1 // pred_check
      _
    $region15: #{tpu_custom_call.1} parent=1 // pred_check_branch
      %88 = sbr.rel (0) target = $region17
    $region16: #{tpu_custom_call.1} parent=1 // pred_region
      _
    $region17: #{tpu_custom_call.1} parent=1 // pred_fallthru
      _
    // Predicated region
    $region18: #{tpu_custom_call.1} parent=1 // pred_check
      _
    $region19: #{tpu_custom_call.1} parent=1 // pred_check_branch
      %90 = sbr.rel (0) target = $region21
    $region20: #{tpu_custom_call.1} parent=1 // pred_region
      _
    $region21: #{tpu_custom_call.1} parent=1 // pred_fallthru
      _
    // Predicated region
    $region22: #{tpu_custom_call.1} parent=1 // pred_check
      _
    $region23: #{tpu_custom_call.1} parent=1 // pred_check_branch
      %92 = sbr.rel (0) target = $region25
    $region24: #{tpu_custom_call.1} parent=1 // pred_region
      _
    $region25: #{tpu_custom_call.1} parent=1 // pred_fallthru
      _
    // Predicated region
    $region26: #{tpu_custom_call.1} parent=1 // pred_check
      _
    $region27: #{tpu_custom_call.1} parent=1 // pred_check_branch
      %94 = sbr.rel (0) target = $region29
    $region28: #{tpu_custom_call.1} parent=1 // pred_region
      _
    $region29: #{tpu_custom_call.1} parent=1 // pred_fallthru
      _
    // Predicated region
    $region30: #{tpu_custom_call.1} parent=1 // pred_check
      _
    $region31: #{tpu_custom_call.1} parent=1 // pred_check_branch
      %96 = sbr.rel (0) target = $region33
    $region32: #{tpu_custom_call.1} parent=1 // pred_region
      _
    $region33: #{tpu_custom_call.1} parent=1 // pred_fallthru
      _
    // Predicated region
    $region34: #{tpu_custom_call.1} parent=1 // pred_check
      _
    $region35: #{tpu_custom_call.1} parent=1 // pred_check_branch
      %98 = sbr.rel (0) target = $region37
    $region36: #{tpu_custom_call.1} parent=1 // pred_region
      _
    $region37: #{tpu_custom_call.1} parent=1 // pred_fallthru
      _
    // Predicated region
    $region38: #{tpu_custom_call.1} parent=1 // pred_check
      _
    $region39: #{tpu_custom_call.1} parent=1 // pred_check_branch
      %100 = sbr.rel (0) target = $region41
    $region40: #{tpu_custom_call.1} parent=1 // pred_region
      _
    $region41: #{tpu_custom_call.1} parent=1 // pred_fallthru
      _
    // Predicated region
    $region42: #{tpu_custom_call.1} parent=1 // pred_check
      _
    $region43: #{tpu_custom_call.1} parent=1 // pred_check_branch
      %102 = sbr.rel (0) target = $region45
    $region44: #{tpu_custom_call.1} parent=1 // pred_region
      _
    $region45: #{tpu_custom_call.1} parent=1 // pred_fallthru
      _
    // Predicated region
    $region46: #{tpu_custom_call.1} parent=1 // pred_check
      _
    $region47: #{tpu_custom_call.1} parent=1 // pred_check_branch
      %104 = sbr.rel (0) target = $region49
    $region48: #{tpu_custom_call.1} parent=1 // pred_region
      _
    $region49: #{tpu_custom_call.1} parent=1 // pred_fallthru
      _
    // Predicated region
    $region50: #{tpu_custom_call.1} parent=1 // pred_check
      _
    $region51: #{tpu_custom_call.1} parent=1 // pred_check_branch
      %106 = sbr.rel (0) target = $region53
    $region52: #{tpu_custom_call.1} parent=1 // pred_region
      _
    $region53: #{tpu_custom_call.1} parent=1 // pred_fallthru
      _
    // Predicated region
    $region54: #{tpu_custom_call.1} parent=1 // pred_check
      _
    $region55: #{tpu_custom_call.1} parent=1 // pred_check_branch
      %108 = sbr.rel (0) target = $region57
    $region56: #{tpu_custom_call.1} parent=1 // pred_region
      _
    $region57: #{tpu_custom_call.1} parent=1 // pred_fallthru
      _
    // Predicated region
    $region58: #{tpu_custom_call.1} parent=1 // pred_check
      _
    $region59: #{tpu_custom_call.1} parent=1 // pred_check_branch
      %110 = sbr.rel (0) target = $region61
    $region60: #{tpu_custom_call.1} parent=1 // pred_region
      _
    $region61: #{tpu_custom_call.1} parent=1 // pred_fallthru
      _
    // Predicated region
    $region62: #{tpu_custom_call.1} parent=1 // pred_check
      _
    $region63: #{tpu_custom_call.1} parent=1 // pred_check_branch
      %112 = sbr.rel (0) target = $region65
    $region64: #{tpu_custom_call.1} parent=1 // pred_region
      _
    $region65: #{tpu_custom_call.1} parent=1 // pred_fallthru
      _
    // Predicated region
    $region66: #{tpu_custom_call.1} parent=1 // pred_check
      _
    $region67: #{tpu_custom_call.1} parent=1 // pred_check_branch
      %114 = sbr.rel (0) target = $region69
    $region68: #{tpu_custom_call.1} parent=1 // pred_region
      _
    $region69: #{tpu_custom_call.1} parent=1 // pred_fallthru
      _
    // Predicated region
    $region70: #{tpu_custom_call.1} parent=1 // pred_check
      _
    $region71: #{tpu_custom_call.1} parent=1 // pred_check_branch
      %116 = sbr.rel (0) target = $region73
    $region72: #{tpu_custom_call.1} parent=1 // pred_region
      _
    $region73: #{tpu_custom_call.1} parent=1 // pred_fallthru
      _
    // Predicated region
    $region74: #{tpu_custom_call.1} parent=1 // pred_check
      _
    $region75: #{tpu_custom_call.1} parent=1 // pred_check_branch
      %118 = sbr.rel (0) target = $region77
    $region76: #{tpu_custom_call.1} parent=1 // pred_region
      _
    $region77: #{tpu_custom_call.1} parent=1 // pred_fallthru
      _
    // Predicated region
    $region78: #{tpu_custom_call.1} parent=1 // pred_check
      _
    $region79: #{tpu_custom_call.1} parent=1 // pred_check_branch
      %120 = sbr.rel (0) target = $region81
    $region80: #{tpu_custom_call.1} parent=1 // pred_region
      _
    $region81: #{tpu_custom_call.1} parent=1 // pred_fallthru
      _
    // Predicated region
    $region82: #{tpu_custom_call.1} parent=1 // pred_check
      _
    $region83: #{tpu_custom_call.1} parent=1 // pred_check_branch
      %122 = sbr.rel (0) target = $region85
    $region84: #{tpu_custom_call.1} parent=1 // pred_region
      _
    $region85: #{tpu_custom_call.1} parent=1 // pred_fallthru
      _
    // Predicated region
    $region86: #{tpu_custom_call.1} parent=1 // pred_check
      _
    $region87: #{tpu_custom_call.1} parent=1 // pred_check_branch
      %124 = sbr.rel (0) target = $region89
    $region88: #{tpu_custom_call.1} parent=1 // pred_region
      _
    $region89: #{tpu_custom_call.1} parent=1 // pred_fallthru
      _
    // Predicated region
    $region90: #{tpu_custom_call.1} parent=1 // pred_check
      _
    $region91: #{tpu_custom_call.1} parent=1 // pred_check_branch
      %126 = sbr.rel (0) target = $region93
    $region92: #{tpu_custom_call.1} parent=1 // pred_region
      _
    $region93: #{tpu_custom_call.1} parent=1 // pred_fallthru
      _
    // Predicated region
    $region94: #{tpu_custom_call.1} parent=1 // pred_check
      _
    $region95: #{tpu_custom_call.1} parent=1 // pred_check_branch
      %128 = sbr.rel (0) target = $region97
    $region96: #{tpu_custom_call.1} parent=1 // pred_region
      _
    $region97: #{tpu_custom_call.1} parent=1 // pred_fallthru
      _
    // Predicated region
    $region98: #{tpu_custom_call.1} parent=1 // pred_check
      _
    $region99: #{tpu_custom_call.1} parent=1 // pred_check_branch
      %130 = sbr.rel (0) target = $region101
    $region100: #{tpu_custom_call.1} parent=1 // pred_region
      _
    $region101: #{tpu_custom_call.1} parent=1 // pred_fallthru
      _
    // Predicated region
    $region102: #{tpu_custom_call.1} parent=1 // pred_check
      _
    $region103: #{tpu_custom_call.1} parent=1 // pred_check_branch
      %132 = sbr.rel (0) target = $region105
    $region104: #{tpu_custom_call.1} parent=1 // pred_region
      _
    $region105: #{tpu_custom_call.1} parent=1 // pred_fallthru
      _
    // Predicated region
    $region106: #{tpu_custom_call.1} parent=1 // pred_check
      _
    $region107: #{tpu_custom_call.1} parent=1 // pred_check_branch
      %134 = sbr.rel (0) target = $region109
    $region108: #{tpu_custom_call.1} parent=1 // pred_region
      _
    $region109: #{tpu_custom_call.1} parent=1 // pred_fallthru
      _
    // Predicated region
    $region110: #{tpu_custom_call.1} parent=1 // pred_check
      _
    $region111: #{tpu_custom_call.1} parent=1 // pred_check_branch
      %136 = sbr.rel (0) target = $region113
    $region112: #{tpu_custom_call.1} parent=1 // pred_region
      _
    $region113: #{tpu_custom_call.1} parent=1 // pred_fallthru
      _
    // Predicated region
    $region114: #{tpu_custom_call.1} parent=1 // pred_check
      _
    $region115: #{tpu_custom_call.1} parent=1 // pred_check_branch
      %138 = sbr.rel (0) target = $region117
    $region116: #{tpu_custom_call.1} parent=1 // pred_region
      _
    $region117: #{tpu_custom_call.1} parent=1 // pred_fallthru
      _
    // Predicated region
    $region118: #{tpu_custom_call.1} parent=1 // pred_check
      _
    $region119: #{tpu_custom_call.1} parent=1 // pred_check_branch
      %140 = sbr.rel (0) target = $region121
    $region120: #{tpu_custom_call.1} parent=1 // pred_region
      _
    $region121: #{tpu_custom_call.1} parent=1 // pred_fallthru
      _
    // Predicated region
    $region122: #{tpu_custom_call.1} parent=1 // pred_check
      _
    $region123: #{tpu_custom_call.1} parent=1 // pred_check_branch
      %142 = sbr.rel (0) target = $region125
    $region124: #{tpu_custom_call.1} parent=1 // pred_region
      _
    $region125: #{tpu_custom_call.1} parent=1 // pred_fallthru
      _
    // Predicated region
    $region126: #{tpu_custom_call.1} parent=1 // pred_check
      _
    $region127: #{tpu_custom_call.1} parent=1 // pred_check_branch
      %144 = sbr.rel (0) target = $region129
    $region128: #{tpu_custom_call.1} parent=1 // pred_region
      _
    $region129: #{tpu_custom_call.1} parent=1 // pred_fallthru
      _
    // Predicated region
    $region130: #{tpu_custom_call.1} parent=1 // pred_check
      _
    $region131: #{tpu_custom_call.1} parent=1 // pred_check_branch
      %146 = sbr.rel (0) target = $region133
    $region132: #{tpu_custom_call.1} parent=1 // pred_region
      _
    $region133: #{tpu_custom_call.1} parent=1 // pred_fallthru
      _
    // Predicated region
    $region134: #{tpu_custom_call.1} parent=1 // pred_check
      _
    $region135: #{tpu_custom_call.1} parent=1 // pred_check_branch
      %148 = sbr.rel (0) target = $region137
    $region136: #{tpu_custom_call.1} parent=1 // pred_region
      _
    $region137: #{tpu_custom_call.1} parent=1 // pred_fallthru
      _
    // Predicated region
    $region138: #{tpu_custom_call.1} parent=1 // pred_check
      _
    $region139: #{tpu_custom_call.1} parent=1 // pred_check_branch
      %150 = sbr.rel (0) target = $region141
    $region140: #{tpu_custom_call.1} parent=1 // pred_region
      _
    $region141: #{tpu_custom_call.1} parent=1 // pred_fallthru
      _
    // Predicated region
    $region142: #{tpu_custom_call.1} parent=1 // pred_check
      _
    $region143: #{tpu_custom_call.1} parent=1 // pred_check_branch
      %152 = sbr.rel (0) target = $region145
    $region144: #{tpu_custom_call.1} parent=1 // pred_region
      _
    $region145: #{tpu_custom_call.1} parent=1 // pred_fallthru
      _
    %v154 = vld [vmem:[%s1] sm:$0xff]
    %v155 = vld [vmem:[%s3] sm:$0xff]
    %v156 = vld [vmem:[%s9] sm:$0x3]
    %v157 = vld [vmem:[%s11] sm:$0x1]
    %v159 = vperm.slane %v157, 0
    %vm161 = vcmask 15360
    %v163 = vsel %vm161, %v155, 0
    %vm165 = vcmask 1041408
    %v167 = vsel %vm165, %v156, 0
    %169 = vmatpush.msra.mxu0 0.0
    %170 = vmatpush.msra.mxu0 0.0
    %171 = vmatpush.msra.mxu0 0.0
    %172 = vmatpush.msra.mxu0 0.0
    %173 = vmatpush.msra.mxu0 0.0
    %174 = vmatpush.msra.mxu0 0.0
    %175 = vmatpush.msra.mxu0 0.0
    %176 = vmatpush.msra.mxu0 0.0
    %177 = vmatpush.msra.mxu0 0.0
    %178 = vmatpush.msra.mxu0 0.0
    %179 = vmatpush.msra.mxu0 0.0
    %180 = vmatpush.msra.mxu0 0.0
    %181 = vmatpush.msra.mxu0 0.0
    %182 = vmatpush.msra.mxu0 0.0
    %183 = vmatpush.msra.mxu0 0.0
    %184 = vmatpush.msra.mxu0 %v167
    %185 = vmatmul.f32.gmra.mxu0 %v163
    %v186 = vpop.f32.mrf.mxu0
    %v187 = vadd.f32 %v159, %v186
    %188 = vdwg.mxu0
    %v189 = vld [vmem:[%s13] sm:$0x1]
    %v190 = vld [vmem:[%s15] sm:$0x1]
    %vm191 = vcmask 64512
    %v192 = vsel %vm191, %v187, 0.0
    %193 = vadd.xlane.f32.xlu0 %v192
    %v194 = vpop.xlane.xlu0 %193
    %v195 = vrcp.pop 8.0
    %v196 = vmul.f32 8.0, %v195
    %v197 = vsub.f32 1.0, %v196
    %v198 = vmul.f32 %v195, %v197
    %v199 = vadd.f32 %v195, %v198
    %vm200 = vweird.f32 %v195
    %v201 = vsel %vm200, %v195, %v199
    %v202 = vmul.f32 %v194, %v201
    %v203 = vsub.f32 %v187, %v202
    %v204 = vmul.f32 %v203, %v203
    %v205 = vsel %vm191, %v204, 0.0
    %206 = vadd.xlane.f32.xlu0 %v205
    %v207 = vpop.xlane.xlu0 %206
    %v208 = vmul.f32 %v207, %v201
    %v209 = vadd.f32 %v208, 1e-05
    %v210 = vrsqrt.pop %v209
    %v211 = vmul.f32 %v210, %v209
    %v212 = vmul.f32 %v211, %v210
    %v213 = vmul.f32 0.5, %v212
    %v214 = vsub.f32 1.5, %v213
    %v215 = vmul.f32 %v210, %v214
    %vm216 = vweird.f32 %v209
    %vm217 = vweird.f32 %v210
    %vm218 = vmor %vm216, %vm217
    %v219 = vsel %vm218, %v210, %v215
    %v220 = vmul.f32 %v203, %v219
    %v222 = vperm.slane %v189, 0
    %v224 = vmul.f32 %v220, %v222
    %v226 = vperm.slane %v190, 0
    %v228 = vadd.f32 %v224, %v226
    %v229 = vmul.f32 %v228, 0.5
    %v230 = vmul.f32 %v228, 0.70710677
    %v231 = vmul.f32 %v230, %v230
    %v232 = vmin.f32 16.0, %v231
    %v233 = vmul.f32 %v232, 2.1237322e-06
    %v234 = vadd.f32 %v233, 0.00028619796
    %v235 = vmul.f32 %v232, %v234
    %v236 = vadd.f32 %v235, 0.0036580483
    %v237 = vmul.f32 %v232, %v236
    %v238 = vadd.f32 %v237, 0.05243302
    %v239 = vmul.f32 %v232, %v238
    %v240 = vadd.f32 %v239, 0.18741608
    %v241 = vmul.f32 %v232, %v240
    %v242 = vadd.f32 %v241, 1.1283791
    %v243 = vmul.f32 %v230, %v242
    %v244 = vmul.f32 %v232, 3.8918573e-05
    %v245 = vadd.f32 %v244, 0.001143296
    %v246 = vmul.f32 %v232, %v245
    %v247 = vadd.f32 %v246, 0.014752088
    %v248 = vmul.f32 %v232, %v247
    %v249 = vadd.f32 %v248, 0.112945676
    %v250 = vmul.f32 %v232, %v249
    %v251 = vadd.f32 %v250, 0.4994258
    %v252 = vmul.f32 %v232, %v251
    %v253 = vadd.f32 %v252, 1.0
    %v254 = vrcp.pop %v253
    %v255 = vmul.f32 %v253, %v254
    %v256 = vsub.f32 1.0, %v255
    %v257 = vmul.f32 %v254, %v256
    %v258 = vadd.f32 %v254, %v257
    %vm259 = vweird.f32 %v253
    %vm260 = vweird.f32 %v254
    %vm261 = vmor %vm259, %vm260
    %v262 = vsel %vm261, %v254, %v258
    %v263 = vand.u32 2147483647, %v253
    %vm264 = vcmp.eq.f32.partialorder %v263, 8.507059e+37
    %v265 = vand.u32 %v253, 2147483648
    %v266 = vor.u32 1.1754944e-38, %v265
    %v267 = vsel %vm264, %v266, %v262
    %v268 = vmul.f32 %v243, %v267
    %v269 = vmin.f32 %v268, 1.0
    %v270 = vmax.f32 %v269, -1.0
    %v271 = vadd.f32 %v270, 1.0
    %v272 = vmul.f32 %v229, %v271
    %v273 = vld [vmem:[%s17] sm:$0xff]
    %v274 = vld [vmem:[%s19] sm:$0x1]
    %v276 = vperm.slane %v274, 0
    %v279 = vsel %vm191, %v272, 0
    %281 = vmatpush.msra.mxu0 0.0
    %282 = vmatpush.msra.mxu0 0.0
    %283 = vmatpush.msra.mxu0 0.0
    %284 = vmatpush.msra.mxu0 0.0
    %285 = vmatpush.msra.mxu0 0.0
    %286 = vmatpush.msra.mxu0 0.0
    %287 = vmatpush.msra.mxu0 0.0
    %288 = vmatpush.msra.mxu0 0.0
    %289 = vmatpush.msra.mxu0 0.0
    %290 = vmatpush.msra.mxu0 0.0
    %291 = vmatpush.msra.mxu0 0.0
    %292 = vmatpush.msra.mxu0 0.0
    %293 = vmatpush.msra.mxu0 0.0
    %294 = vmatpush.msra.mxu0 0.0
    %295 = vmatpush.msra.mxu0 0.0
    %296 = vmatpush.msra.mxu0 %v273
    %297 = vmatmul.f32.gmra.mxu0 %v279
    %v298 = vpop.f32.mrf.mxu0
    %v299 = vadd.f32 %v276, %v298
    %300 = vdwg.mxu0
    %v301 = vld [vmem:[%s21] sm:$0x1]
    %v302 = vld [vmem:[%s23] sm:$0x1]
    %vm303 = vcmask 261120
    %v304 = vsel %vm303, %v299, 0.0
    %305 = vadd.xlane.f32.xlu0 %v304
    %v306 = vpop.xlane.xlu0 %305
    %v307 = vrcp.pop 32.0
    %v308 = vmul.f32 32.0, %v307
    %v309 = vsub.f32 1.0, %v308
    %v310 = vmul.f32 %v307, %v309
    %v311 = vadd.f32 %v307, %v310
    %vm312 = vweird.f32 %v307
    %v313 = vsel %vm312, %v307, %v311
    %v314 = vmul.f32 %v306, %v313
    %v315 = vsub.f32 %v299, %v314
    %v316 = vmul.f32 %v315, %v315
    %v317 = vsel %vm303, %v316, 0.0
    %318 = vadd.xlane.f32.xlu0 %v317
    %v319 = vpop.xlane.xlu0 %318
    %v320 = vmul.f32 %v319, %v313
    %v321 = vadd.f32 %v320, 1e-05
    %v322 = vrsqrt.pop %v321
    %v323 = vmul.f32 %v322, %v321
    %v324 = vmul.f32 %v323, %v322
    %v325 = vmul.f32 0.5, %v324
    %v326 = vsub.f32 1.5, %v325
    %v327 = vmul.f32 %v322, %v326
    %vm328 = vweird.f32 %v321
    %vm329 = vweird.f32 %v322
    %vm330 = vmor %vm328, %vm329
    %v331 = vsel %vm330, %v322, %v327
    %v332 = vmul.f32 %v315, %v331
    %v334 = vperm.slane %v301, 0
    %v336 = vmul.f32 %v332, %v334
    %v338 = vperm.slane %v302, 0
    %v340 = vadd.f32 %v336, %v338
    %v341 = vadd.f32 %v154, %v340
    %v342 = vld [vmem:[%s25] sm:$0x1]
    %v343 = vld [vmem:[%s27] sm:$0x1]
    %v344 = vsel %vm303, %v341, 0.0
    %345 = vadd.xlane.f32.xlu0 %v344
    %v346 = vpop.xlane.xlu0 %345
    %v347 = vmul.f32 %v346, %v313
    %v348 = vsub.f32 %v341, %v347
    %v349 = vmul.f32 %v348, %v348
    %v350 = vsel %vm303, %v349, 0.0
    %351 = vadd.xlane.f32.xlu0 %v350
    %v352 = vpop.xlane.xlu0 %351
    %v353 = vmul.f32 %v352, %v313
    %v354 = vadd.f32 %v353, 1e-05
    %v355 = vrsqrt.pop %v354
    %v356 = vmul.f32 %v355, %v354
    %v357 = vmul.f32 %v356, %v355
    %v358 = vmul.f32 0.5, %v357
    %v359 = vsub.f32 1.5, %v358
    %v360 = vmul.f32 %v355, %v359
    %vm361 = vweird.f32 %v354
    %vm362 = vweird.f32 %v355
    %vm363 = vmor %vm361, %vm362
    %v364 = vsel %vm363, %v355, %v360
    %v365 = vmul.f32 %v348, %v364
    %v367 = vperm.slane %v342, 0
    %v369 = vmul.f32 %v365, %v367
    %v371 = vperm.slane %v343, 0
    %v373 = vadd.f32 %v369, %v371
    %v374 = vpack.c.bf16 %v373, %v373
    %v375 = vld [vmem:[%s29] sm:$0xff]
    %v376 = vld [vmem:[%s29 + $0x8] sm:$0xff]
    %v377 = vld [vmem:[%s29 + $0x10] sm:$0xff]
    %v378 = vld [vmem:[%s29 + $0x18] sm:$0xff]
    %v379 = vld [vmem:[%s29 + $0x20] sm:$0xff]
    %v380 = vld [vmem:[%s29 + $0x28] sm:$0xff]
    %v381 = vld [vmem:[%s29 + $0x30] sm:$0xff]
    %v382 = vld [vmem:[%s29 + $0x38] sm:$0xff]
    %v383 = vld [vmem:[%s29 + $0x40] sm:$0xff]
    %v384 = vld [vmem:[%s29 + $0x48] sm:$0xff]
    %v385 = vld [vmem:[%s29 + $0x50] sm:$0xff]
    %v386 = vld [vmem:[%s29 + $0x58] sm:$0xff]
    %v387 = vld [vmem:[%s29 + $0x60] sm:$0xff]
    %v388 = vld [vmem:[%s29 + $0x68] sm:$0xff]
    %v389 = vld [vmem:[%s29 + $0x70] sm:$0xff]
    %v390 = vld [vmem:[%s29 + $0x78] sm:$0xff]
    %v391 = vld [vmem:[%s35] sm:$0xff]
    %v393 = vperm.slane %v391, 0
    %v394 = vperm.slane %v391, 1
    %v395 = vperm.slane %v391, 2
    %v396 = vperm.slane %v391, 3
    %v397 = vperm.slane %v391, 4
    %v398 = vperm.slane %v391, 5
    %v399 = vperm.slane %v391, 6
    %v400 = vperm.slane %v391, 7
    %v425 = vunpack.c.l.b16 %v375
    %v426 = vunpack.c.h.b16 %v375
    %v427 = vunpack.c.l.b16 %v376
    %v428 = vunpack.c.h.b16 %v376
    %v429 = vunpack.c.l.b16 %v377
    %v430 = vunpack.c.h.b16 %v377
    %v431 = vunpack.c.l.b16 %v378
    %v432 = vunpack.c.h.b16 %v378
    %v433 = vunpack.c.l.b16 %v379
    %v434 = vunpack.c.h.b16 %v379
    %v435 = vunpack.c.l.b16 %v380
    %v436 = vunpack.c.h.b16 %v380
    %v437 = vunpack.c.l.b16 %v381
    %v438 = vunpack.c.h.b16 %v381
    %v439 = vunpack.c.l.b16 %v382
    %v440 = vunpack.c.h.b16 %v382
    %v441 = vunpack.c.l.b16 %v383
    %v442 = vunpack.c.h.b16 %v383
    %v443 = vunpack.c.l.b16 %v384
    %v444 = vunpack.c.h.b16 %v384
    %v445 = vunpack.c.l.b16 %v385
    %v446 = vunpack.c.h.b16 %v385
    %v447 = vunpack.c.l.b16 %v386
    %v448 = vunpack.c.h.b16 %v386
    %v449 = vunpack.c.l.b16 %v387
    %v450 = vunpack.c.h.b16 %v387
    %v451 = vunpack.c.l.b16 %v388
    %v452 = vunpack.c.h.b16 %v388
    %v453 = vunpack.c.l.b16 %v389
    %v454 = vunpack.c.h.b16 %v389
    %v455 = vunpack.c.l.b16 %v390
    %v456 = vunpack.c.h.b16 %v390
    %v457 = vpack.c.b16 %v433, %v425
    %v458 = vpack.c.b16 %v434, %v426
    %v459 = vpack.c.b16 %v435, %v427
    %v460 = vpack.c.b16 %v436, %v428
    %v461 = vpack.c.b16 %v437, %v429
    %v462 = vpack.c.b16 %v438, %v430
    %v463 = vpack.c.b16 %v439, %v431
    %v464 = vpack.c.b16 %v440, %v432
    %v465 = vpack.c.b16 %v449, %v441
    %v466 = vpack.c.b16 %v450, %v442
    %v467 = vpack.c.b16 %v451, %v443
    %v468 = vpack.c.b16 %v452, %v444
    %v469 = vpack.c.b16 %v453, %v445
    %v470 = vpack.c.b16 %v454, %v446
    %v471 = vpack.c.b16 %v455, %v447
    %v472 = vpack.c.b16 %v456, %v448
    %v490 = vsel %vm303, %v374, 0
    %492 = vmatpush.bf16.msra.mxu0 0
    %493 = vmatpush.bf16.msra.mxu0 0
    %494 = vmatpush.bf16.msra.mxu0 0
    %495 = vmatpush.bf16.msra.mxu0 0
    %496 = vmatpush.bf16.msra.mxu0 0
    %497 = vmatpush.bf16.msra.mxu0 0
    %498 = vmatpush.bf16.msra.mxu0 %v465
    %499 = vmatpush.bf16.msra.mxu0 %v457
    %500 = vmatmul.bf16.gmra.mxu0 %v490
    %v501 = vpop.f32.mrf.mxu0
    %v502 = vadd.f32 %v393, %v501
    %v503 = vpop.f32.mrf.mxu0
    %504 = vdwg.mxu0
    %505 = vmatpush.bf16.msra.mxu0 0
    %506 = vmatpush.bf16.msra.mxu0 0
    %507 = vmatpush.bf16.msra.mxu0 0
    %508 = vmatpush.bf16.msra.mxu0 0
    %509 = vmatpush.bf16.msra.mxu0 0
    %510 = vmatpush.bf16.msra.mxu0 0
    %511 = vmatpush.bf16.msra.mxu0 %v466
    %512 = vmatpush.bf16.msra.mxu0 %v458
    %513 = vmatmul.bf16.gmra.mxu0 %v490
    %v514 = vpop.f32.mrf.mxu0
    %v515 = vadd.f32 %v394, %v514
    %v516 = vpop.f32.mrf.mxu0
    %517 = vdwg.mxu0
    %518 = vmatpush.bf16.msra.mxu0 0
    %519 = vmatpush.bf16.msra.mxu0 0
    %520 = vmatpush.bf16.msra.mxu0 0
    %521 = vmatpush.bf16.msra.mxu0 0
    %522 = vmatpush.bf16.msra.mxu0 0
    %523 = vmatpush.bf16.msra.mxu0 0
    %524 = vmatpush.bf16.msra.mxu0 %v467
    %525 = vmatpush.bf16.msra.mxu0 %v459
    %526 = vmatmul.bf16.gmra.mxu0 %v490
    %v527 = vpop.f32.mrf.mxu0
    %v528 = vadd.f32 %v395, %v527
    %v529 = vpop.f32.mrf.mxu0
    %530 = vdwg.mxu0
    %531 = vmatpush.bf16.msra.mxu0 0
    %532 = vmatpush.bf16.msra.mxu0 0
    %533 = vmatpush.bf16.msra.mxu0 0
    %534 = vmatpush.bf16.msra.mxu0 0
    %535 = vmatpush.bf16.msra.mxu0 0
    %536 = vmatpush.bf16.msra.mxu0 0
    %537 = vmatpush.bf16.msra.mxu0 %v468
    %538 = vmatpush.bf16.msra.mxu0 %v460
    %539 = vmatmul.bf16.gmra.mxu0 %v490
    %v540 = vpop.f32.mrf.mxu0
    %v541 = vadd.f32 %v396, %v540
    %v542 = vpop.f32.mrf.mxu0
    %543 = vdwg.mxu0
    %544 = vmatpush.bf16.msra.mxu0 0
    %545 = vmatpush.bf16.msra.mxu0 0
    %546 = vmatpush.bf16.msra.mxu0 0
    %547 = vmatpush.bf16.msra.mxu0 0
    %548 = vmatpush.bf16.msra.mxu0 0
    %549 = vmatpush.bf16.msra.mxu0 0
    %550 = vmatpush.bf16.msra.mxu0 %v469
    %551 = vmatpush.bf16.msra.mxu0 %v461
    %552 = vmatmul.bf16.gmra.mxu0 %v490
    %v553 = vpop.f32.mrf.mxu0
    %v554 = vadd.f32 %v397, %v553
    %v555 = vpop.f32.mrf.mxu0
    %556 = vdwg.mxu0
    %557 = vmatpush.bf16.msra.mxu0 0
    %558 = vmatpush.bf16.msra.mxu0 0
    %559 = vmatpush.bf16.msra.mxu0 0
    %560 = vmatpush.bf16.msra.mxu0 0
    %561 = vmatpush.bf16.msra.mxu0 0
    %562 = vmatpush.bf16.msra.mxu0 0
    %563 = vmatpush.bf16.msra.mxu0 %v470
    %564 = vmatpush.bf16.msra.mxu0 %v462
    %565 = vmatmul.bf16.gmra.mxu0 %v490
    %v566 = vpop.f32.mrf.mxu0
    %v567 = vadd.f32 %v398, %v566
    %v568 = vpop.f32.mrf.mxu0
    %569 = vdwg.mxu0
    %570 = vmatpush.bf16.msra.mxu0 0
    %571 = vmatpush.bf16.msra.mxu0 0
    %572 = vmatpush.bf16.msra.mxu0 0
    %573 = vmatpush.bf16.msra.mxu0 0
    %574 = vmatpush.bf16.msra.mxu0 0
    %575 = vmatpush.bf16.msra.mxu0 0
    %576 = vmatpush.bf16.msra.mxu0 %v471
    %577 = vmatpush.bf16.msra.mxu0 %v463
    %578 = vmatmul.bf16.gmra.mxu0 %v490
    %v579 = vpop.f32.mrf.mxu0
    %v580 = vadd.f32 %v399, %v579
    %v581 = vpop.f32.mrf.mxu0
    %582 = vdwg.mxu0
    %583 = vmatpush.bf16.msra.mxu0 0
    %584 = vmatpush.bf16.msra.mxu0 0
    %585 = vmatpush.bf16.msra.mxu0 0
    %586 = vmatpush.bf16.msra.mxu0 0
    %587 = vmatpush.bf16.msra.mxu0 0
    %588 = vmatpush.bf16.msra.mxu0 0
    %589 = vmatpush.bf16.msra.mxu0 %v472
    %590 = vmatpush.bf16.msra.mxu0 %v464
    %591 = vmatmul.bf16.gmra.mxu0 %v490
    %v592 = vpop.f32.mrf.mxu0
    %v593 = vadd.f32 %v400, %v592
    %v594 = vpop.f32.mrf.mxu0
    %595 = vdwg.mxu0
    %v596 = vld [vmem:[%s31] sm:$0xff]
    %v597 = vld [vmem:[%s31 + $0x8] sm:$0xff]
    %v598 = vld [vmem:[%s31 + $0x10] sm:$0xff]
    %v599 = vld [vmem:[%s31 + $0x18] sm:$0xff]
    %v600 = vld [vmem:[%s31 + $0x20] sm:$0xff]
    %v601 = vld [vmem:[%s31 + $0x28] sm:$0xff]
    %v602 = vld [vmem:[%s31 + $0x30] sm:$0xff]
    %v603 = vld [vmem:[%s31 + $0x38] sm:$0xff]
    %v604 = vld [vmem:[%s31 + $0x40] sm:$0xff]
    %v605 = vld [vmem:[%s31 + $0x48] sm:$0xff]
    %v606 = vld [vmem:[%s31 + $0x50] sm:$0xff]
    %v607 = vld [vmem:[%s31 + $0x58] sm:$0xff]
    %v608 = vld [vmem:[%s31 + $0x60] sm:$0xff]
    %v609 = vld [vmem:[%s31 + $0x68] sm:$0xff]
    %v610 = vld [vmem:[%s31 + $0x70] sm:$0xff]
    %v611 = vld [vmem:[%s31 + $0x78] sm:$0xff]
    %v612 = vld [vmem:[%s37] sm:$0xff]
    %v614 = vperm.slane %v612, 0
    %v615 = vperm.slane %v612, 1
    %v616 = vperm.slane %v612, 2
    %v617 = vperm.slane %v612, 3
    %v618 = vperm.slane %v612, 4
    %v619 = vperm.slane %v612, 5
    %v620 = vperm.slane %v612, 6
    %v621 = vperm.slane %v612, 7
    %v646 = vunpack.c.l.b16 %v596
    %v647 = vunpack.c.h.b16 %v596
    %v648 = vunpack.c.l.b16 %v597
    %v649 = vunpack.c.h.b16 %v597
    %v650 = vunpack.c.l.b16 %v598
    %v651 = vunpack.c.h.b16 %v598
    %v652 = vunpack.c.l.b16 %v599
    %v653 = vunpack.c.h.b16 %v599
    %v654 = vunpack.c.l.b16 %v600
    %v655 = vunpack.c.h.b16 %v600
    %v656 = vunpack.c.l.b16 %v601
    %v657 = vunpack.c.h.b16 %v601
    %v658 = vunpack.c.l.b16 %v602
    %v659 = vunpack.c.h.b16 %v602
    %v660 = vunpack.c.l.b16 %v603
    %v661 = vunpack.c.h.b16 %v603
    %v662 = vunpack.c.l.b16 %v604
    %v663 = vunpack.c.h.b16 %v604
    %v664 = vunpack.c.l.b16 %v605
    %v665 = vunpack.c.h.b16 %v605
    %v666 = vunpack.c.l.b16 %v606
    %v667 = vunpack.c.h.b16 %v606
    %v668 = vunpack.c.l.b16 %v607
    %v669 = vunpack.c.h.b16 %v607
    %v670 = vunpack.c.l.b16 %v608
    %v671 = vunpack.c.h.b16 %v608
    %v672 = vunpack.c.l.b16 %v609
    %v673 = vunpack.c.h.b16 %v609
    %v674 = vunpack.c.l.b16 %v610
    %v675 = vunpack.c.h.b16 %v610
    %v676 = vunpack.c.l.b16 %v611
    %v677 = vunpack.c.h.b16 %v611
    %v678 = vpack.c.b16 %v654, %v646
    %v679 = vpack.c.b16 %v655, %v647
    %v680 = vpack.c.b16 %v656, %v648
    %v681 = vpack.c.b16 %v657, %v649
    %v682 = vpack.c.b16 %v658, %v650
    %v683 = vpack.c.b16 %v659, %v651
    %v684 = vpack.c.b16 %v660, %v652
    %v685 = vpack.c.b16 %v661, %v653
    %v686 = vpack.c.b16 %v670, %v662
    %v687 = vpack.c.b16 %v671, %v663
    %v688 = vpack.c.b16 %v672, %v664
    %v689 = vpack.c.b16 %v673, %v665
    %v690 = vpack.c.b16 %v674, %v666
    %v691 = vpack.c.b16 %v675, %v667
    %v692 = vpack.c.b16 %v676, %v668
    %v693 = vpack.c.b16 %v677, %v669
    %710 = vmatpush.bf16.msra.mxu0 0
    %711 = vmatpush.bf16.msra.mxu0 0
    %712 = vmatpush.bf16.msra.mxu0 0
    %713 = vmatpush.bf16.msra.mxu0 0
    %714 = vmatpush.bf16.msra.mxu0 0
    %715 = vmatpush.bf16.msra.mxu0 0
    %716 = vmatpush.bf16.msra.mxu0 %v686
    %717 = vmatpush.bf16.msra.mxu0 %v678
    %718 = vmatmul.bf16.gmra.mxu0 %v490
    %v719 = vpop.f32.mrf.mxu0
    %v720 = vadd.f32 %v614, %v719
    %v721 = vpop.f32.mrf.mxu0
    %722 = vdwg.mxu0
    %723 = vmatpush.bf16.msra.mxu0 0
    %724 = vmatpush.bf16.msra.mxu0 0
    %725 = vmatpush.bf16.msra.mxu0 0
    %726 = vmatpush.bf16.msra.mxu0 0
    %727 = vmatpush.bf16.msra.mxu0 0
    %728 = vmatpush.bf16.msra.mxu0 0
    %729 = vmatpush.bf16.msra.mxu0 %v687
    %730 = vmatpush.bf16.msra.mxu0 %v679
    %731 = vmatmul.bf16.gmra.mxu0 %v490
    %v732 = vpop.f32.mrf.mxu0
    %v733 = vadd.f32 %v615, %v732
    %v734 = vpop.f32.mrf.mxu0
    %735 = vdwg.mxu0
    %736 = vmatpush.bf16.msra.mxu0 0
    %737 = vmatpush.bf16.msra.mxu0 0
    %738 = vmatpush.bf16.msra.mxu0 0
    %739 = vmatpush.bf16.msra.mxu0 0
    %740 = vmatpush.bf16.msra.mxu0 0
    %741 = vmatpush.bf16.msra.mxu0 0
    %742 = vmatpush.bf16.msra.mxu0 %v688
    %743 = vmatpush.bf16.msra.mxu0 %v680
    %744 = vmatmul.bf16.gmra.mxu0 %v490
    %v745 = vpop.f32.mrf.mxu0
    %v746 = vadd.f32 %v616, %v745
    %v747 = vpop.f32.mrf.mxu0
    %748 = vdwg.mxu0
    %749 = vmatpush.bf16.msra.mxu0 0
    %750 = vmatpush.bf16.msra.mxu0 0
    %751 = vmatpush.bf16.msra.mxu0 0
    %752 = vmatpush.bf16.msra.mxu0 0
    %753 = vmatpush.bf16.msra.mxu0 0
    %754 = vmatpush.bf16.msra.mxu0 0
    %755 = vmatpush.bf16.msra.mxu0 %v689
    %756 = vmatpush.bf16.msra.mxu0 %v681
    %757 = vmatmul.bf16.gmra.mxu0 %v490
    %v758 = vpop.f32.mrf.mxu0
    %v759 = vadd.f32 %v617, %v758
    %v760 = vpop.f32.mrf.mxu0
    %761 = vdwg.mxu0
    %762 = vmatpush.bf16.msra.mxu0 0
    %763 = vmatpush.bf16.msra.mxu0 0
    %764 = vmatpush.bf16.msra.mxu0 0
    %765 = vmatpush.bf16.msra.mxu0 0
    %766 = vmatpush.bf16.msra.mxu0 0
    %767 = vmatpush.bf16.msra.mxu0 0
    %768 = vmatpush.bf16.msra.mxu0 %v690
    %769 = vmatpush.bf16.msra.mxu0 %v682
    %770 = vmatmul.bf16.gmra.mxu0 %v490
    %v771 = vpop.f32.mrf.mxu0
    %v772 = vadd.f32 %v618, %v771
    %v773 = vpop.f32.mrf.mxu0
    %774 = vdwg.mxu0
    %775 = vmatpush.bf16.msra.mxu0 0
    %776 = vmatpush.bf16.msra.mxu0 0
    %777 = vmatpush.bf16.msra.mxu0 0
    %778 = vmatpush.bf16.msra.mxu0 0
    %779 = vmatpush.bf16.msra.mxu0 0
    %780 = vmatpush.bf16.msra.mxu0 0
    %781 = vmatpush.bf16.msra.mxu0 %v691
    %782 = vmatpush.bf16.msra.mxu0 %v683
    %783 = vmatmul.bf16.gmra.mxu0 %v490
    %v784 = vpop.f32.mrf.mxu0
    %v785 = vadd.f32 %v619, %v784
    %v786 = vpop.f32.mrf.mxu0
    %787 = vdwg.mxu0
    %788 = vmatpush.bf16.msra.mxu0 0
    %789 = vmatpush.bf16.msra.mxu0 0
    %790 = vmatpush.bf16.msra.mxu0 0
    %791 = vmatpush.bf16.msra.mxu0 0
    %792 = vmatpush.bf16.msra.mxu0 0
    %793 = vmatpush.bf16.msra.mxu0 0
    %794 = vmatpush.bf16.msra.mxu0 %v692
    %795 = vmatpush.bf16.msra.mxu0 %v684
    %796 = vmatmul.bf16.gmra.mxu0 %v490
    %v797 = vpop.f32.mrf.mxu0
    %v798 = vadd.f32 %v620, %v797
    %v799 = vpop.f32.mrf.mxu0
    %800 = vdwg.mxu0
    %801 = vmatpush.bf16.msra.mxu0 0
    %802 = vmatpush.bf16.msra.mxu0 0
    %803 = vmatpush.bf16.msra.mxu0 0
    %804 = vmatpush.bf16.msra.mxu0 0
    %805 = vmatpush.bf16.msra.mxu0 0
    %806 = vmatpush.bf16.msra.mxu0 0
    %807 = vmatpush.bf16.msra.mxu0 %v693
    %808 = vmatpush.bf16.msra.mxu0 %v685
    %809 = vmatmul.bf16.gmra.mxu0 %v490
    %v810 = vpop.f32.mrf.mxu0
    %v811 = vadd.f32 %v621, %v810
    %v812 = vpop.f32.mrf.mxu0
    %813 = vdwg.mxu0
    %v814 = vld [vmem:[%s33] sm:$0xff]
    %v815 = vld [vmem:[%s33 + $0x8] sm:$0xff]
    %v816 = vld [vmem:[%s33 + $0x10] sm:$0xff]
    %v817 = vld [vmem:[%s33 + $0x18] sm:$0xff]
    %v818 = vld [vmem:[%s33 + $0x20] sm:$0xff]
    %v819 = vld [vmem:[%s33 + $0x28] sm:$0xff]
    %v820 = vld [vmem:[%s33 + $0x30] sm:$0xff]
    %v821 = vld [vmem:[%s33 + $0x38] sm:$0xff]
    %v822 = vld [vmem:[%s33 + $0x40] sm:$0xff]
    %v823 = vld [vmem:[%s33 + $0x48] sm:$0xff]
    %v824 = vld [vmem:[%s33 + $0x50] sm:$0xff]
    %v825 = vld [vmem:[%s33 + $0x58] sm:$0xff]
    %v826 = vld [vmem:[%s33 + $0x60] sm:$0xff]
    %v827 = vld [vmem:[%s33 + $0x68] sm:$0xff]
    %v828 = vld [vmem:[%s33 + $0x70] sm:$0xff]
    %v829 = vld [vmem:[%s33 + $0x78] sm:$0xff]
    %v830 = vld [vmem:[%s39] sm:$0xff]
    %v832 = vperm.slane %v830, 0
    %v833 = vperm.slane %v830, 1
    %v834 = vperm.slane %v830, 2
    %v835 = vperm.slane %v830, 3
    %v836 = vperm.slane %v830, 4
    %v837 = vperm.slane %v830, 5
    %v838 = vperm.slane %v830, 6
    %v839 = vperm.slane %v830, 7
    %v864 = vunpack.c.l.b16 %v814
    %v865 = vunpack.c.h.b16 %v814
    %v866 = vunpack.c.l.b16 %v815
    %v867 = vunpack.c.h.b16 %v815
    %v868 = vunpack.c.l.b16 %v816
    %v869 = vunpack.c.h.b16 %v816
    %v870 = vunpack.c.l.b16 %v817
    %v871 = vunpack.c.h.b16 %v817
    %v872 = vunpack.c.l.b16 %v818
    %v873 = vunpack.c.h.b16 %v818
    %v874 = vunpack.c.l.b16 %v819
    %v875 = vunpack.c.h.b16 %v819
    %v876 = vunpack.c.l.b16 %v820
    %v877 = vunpack.c.h.b16 %v820
    %v878 = vunpack.c.l.b16 %v821
    %v879 = vunpack.c.h.b16 %v821
    %v880 = vunpack.c.l.b16 %v822
    %v881 = vunpack.c.h.b16 %v822
    %v882 = vunpack.c.l.b16 %v823
    %v883 = vunpack.c.h.b16 %v823
    %v884 = vunpack.c.l.b16 %v824
    %v885 = vunpack.c.h.b16 %v824
    %v886 = vunpack.c.l.b16 %v825
    %v887 = vunpack.c.h.b16 %v825
    %v888 = vunpack.c.l.b16 %v826
    %v889 = vunpack.c.h.b16 %v826
    %v890 = vunpack.c.l.b16 %v827
    %v891 = vunpack.c.h.b16 %v827
    %v892 = vunpack.c.l.b16 %v828
    %v893 = vunpack.c.h.b16 %v828
    %v894 = vunpack.c.l.b16 %v829
    %v895 = vunpack.c.h.b16 %v829
    %v896 = vpack.c.b16 %v872, %v864
    %v897 = vpack.c.b16 %v873, %v865
    %v898 = vpack.c.b16 %v874, %v866
    %v899 = vpack.c.b16 %v875, %v867
    %v900 = vpack.c.b16 %v876, %v868
    %v901 = vpack.c.b16 %v877, %v869
    %v902 = vpack.c.b16 %v878, %v870
    %v903 = vpack.c.b16 %v879, %v871
    %v904 = vpack.c.b16 %v888, %v880
    %v905 = vpack.c.b16 %v889, %v881
    %v906 = vpack.c.b16 %v890, %v882
    %v907 = vpack.c.b16 %v891, %v883
    %v908 = vpack.c.b16 %v892, %v884
    %v909 = vpack.c.b16 %v893, %v885
    %v910 = vpack.c.b16 %v894, %v886
    %v911 = vpack.c.b16 %v895, %v887
    %928 = vmatpush.bf16.msra.mxu0 0
    %929 = vmatpush.bf16.msra.mxu0 0
    %930 = vmatpush.bf16.msra.mxu0 0
    %931 = vmatpush.bf16.msra.mxu0 0
    %932 = vmatpush.bf16.msra.mxu0 0
    %933 = vmatpush.bf16.msra.mxu0 0
    %934 = vmatpush.bf16.msra.mxu0 %v904
    %935 = vmatpush.bf16.msra.mxu0 %v896
    %936 = vmatmul.bf16.gmra.mxu0 %v490
    %v937 = vpop.f32.mrf.mxu0
    %v938 = vadd.f32 %v832, %v937
    %v939 = vpop.f32.mrf.mxu0
    %940 = vdwg.mxu0
    %941 = vmatpush.bf16.msra.mxu0 0
    %942 = vmatpush.bf16.msra.mxu0 0
    %943 = vmatpush.bf16.msra.mxu0 0
    %944 = vmatpush.bf16.msra.mxu0 0
    %945 = vmatpush.bf16.msra.mxu0 0
    %946 = vmatpush.bf16.msra.mxu0 0
    %947 = vmatpush.bf16.msra.mxu0 %v905
    %948 = vmatpush.bf16.msra.mxu0 %v897
    %949 = vmatmul.bf16.gmra.mxu0 %v490
    %v950 = vpop.f32.mrf.mxu0
    %v951 = vadd.f32 %v833, %v950
    %v952 = vpop.f32.mrf.mxu0
    %953 = vdwg.mxu0
    %954 = vmatpush.bf16.msra.mxu0 0
    %955 = vmatpush.bf16.msra.mxu0 0
    %956 = vmatpush.bf16.msra.mxu0 0
    %957 = vmatpush.bf16.msra.mxu0 0
    %958 = vmatpush.bf16.msra.mxu0 0
    %959 = vmatpush.bf16.msra.mxu0 0
    %960 = vmatpush.bf16.msra.mxu0 %v906
    %961 = vmatpush.bf16.msra.mxu0 %v898
    %962 = vmatmul.bf16.gmra.mxu0 %v490
    %v963 = vpop.f32.mrf.mxu0
    %v964 = vadd.f32 %v834, %v963
    %v965 = vpop.f32.mrf.mxu0
    %966 = vdwg.mxu0
    %967 = vmatpush.bf16.msra.mxu0 0
    %968 = vmatpush.bf16.msra.mxu0 0
    %969 = vmatpush.bf16.msra.mxu0 0
    %970 = vmatpush.bf16.msra.mxu0 0
    %971 = vmatpush.bf16.msra.mxu0 0
    %972 = vmatpush.bf16.msra.mxu0 0
    %973 = vmatpush.bf16.msra.mxu0 %v907
    %974 = vmatpush.bf16.msra.mxu0 %v899
    %975 = vmatmul.bf16.gmra.mxu0 %v490
    %v976 = vpop.f32.mrf.mxu0
    %v977 = vadd.f32 %v835, %v976
    %v978 = vpop.f32.mrf.mxu0
    %979 = vdwg.mxu0
    %980 = vmatpush.bf16.msra.mxu0 0
    %981 = vmatpush.bf16.msra.mxu0 0
    %982 = vmatpush.bf16.msra.mxu0 0
    %983 = vmatpush.bf16.msra.mxu0 0
    %984 = vmatpush.bf16.msra.mxu0 0
    %985 = vmatpush.bf16.msra.mxu0 0
    %986 = vmatpush.bf16.msra.mxu0 %v908
    %987 = vmatpush.bf16.msra.mxu0 %v900
    %988 = vmatmul.bf16.gmra.mxu0 %v490
    %v989 = vpop.f32.mrf.mxu0
    %v990 = vadd.f32 %v836, %v989
    %v991 = vpop.f32.mrf.mxu0
    %992 = vdwg.mxu0
    %993 = vmatpush.bf16.msra.mxu0 0
    %994 = vmatpush.bf16.msra.mxu0 0
    %995 = vmatpush.bf16.msra.mxu0 0
    %996 = vmatpush.bf16.msra.mxu0 0
    %997 = vmatpush.bf16.msra.mxu0 0
    %998 = vmatpush.bf16.msra.mxu0 0
    %999 = vmatpush.bf16.msra.mxu0 %v909
    %1000 = vmatpush.bf16.msra.mxu0 %v901
    %1001 = vmatmul.bf16.gmra.mxu0 %v490
    %v1002 = vpop.f32.mrf.mxu0
    %v1003 = vadd.f32 %v837, %v1002
    %v1004 = vpop.f32.mrf.mxu0
    %1005 = vdwg.mxu0
    %1006 = vmatpush.bf16.msra.mxu0 0
    %1007 = vmatpush.bf16.msra.mxu0 0
    %1008 = vmatpush.bf16.msra.mxu0 0
    %1009 = vmatpush.bf16.msra.mxu0 0
    %1010 = vmatpush.bf16.msra.mxu0 0
    %1011 = vmatpush.bf16.msra.mxu0 0
    %1012 = vmatpush.bf16.msra.mxu0 %v910
    %1013 = vmatpush.bf16.msra.mxu0 %v902
    %1014 = vmatmul.bf16.gmra.mxu0 %v490
    %v1015 = vpop.f32.mrf.mxu0
    %v1016 = vadd.f32 %v838, %v1015
    %v1017 = vpop.f32.mrf.mxu0
    %1018 = vdwg.mxu0
    %1019 = vmatpush.bf16.msra.mxu0 0
    %1020 = vmatpush.bf16.msra.mxu0 0
    %1021 = vmatpush.bf16.msra.mxu0 0
    %1022 = vmatpush.bf16.msra.mxu0 0
    %1023 = vmatpush.bf16.msra.mxu0 0
    %1024 = vmatpush.bf16.msra.mxu0 0
    %1025 = vmatpush.bf16.msra.mxu0 %v911
    %1026 = vmatpush.bf16.msra.mxu0 %v903
    %1027 = vmatmul.bf16.gmra.mxu0 %v490
    %v1028 = vpop.f32.mrf.mxu0
    %v1029 = vadd.f32 %v839, %v1028
    %v1030 = vpop.f32.mrf.mxu0
    %1031 = vdwg.mxu0
    %v1032 = vmul.f32 %v502, 0.5
    %v1033 = vmul.f32 %v515, 0.5
    %v1034 = vmul.f32 %v528, 0.5
    %v1035 = vmul.f32 %v541, 0.5
    %v1036 = vmul.f32 %v554, 0.5
    %v1037 = vmul.f32 %v567, 0.5
    %v1038 = vmul.f32 %v580, 0.5
    %v1039 = vmul.f32 %v593, 0.5
    %v1040 = vpack.c.bf16 %v1033, %v1032
    %v1041 = vpack.c.bf16 %v1035, %v1034
    %v1042 = vpack.c.bf16 %v1037, %v1036
    %v1043 = vpack.c.bf16 %v1039, %v1038
    %v1044 = vpack.c.bf16 %v733, %v720
    %v1045 = vpack.c.bf16 %v759, %v746
    %v1046 = vpack.c.bf16 %v785, %v772
    %v1047 = vpack.c.bf16 %v811, %v798
    %v1048 = vpack.c.bf16 %v951, %v938
    %v1049 = vpack.c.bf16 %v977, %v964
    %v1050 = vpack.c.bf16 %v1003, %v990
    %v1051 = vpack.c.bf16 %v1029, %v1016
    %v1052 = vld [vmem:[%s5] sm:$0xff]
    %1053 = vmatpush.bf16.xpose.msra.mxu0 0
    %1054 = vmatpush.bf16.xpose.msra.mxu0 0
    %1055 = vmatpush.bf16.xpose.msra.mxu0 0
    %1056 = vmatpush.bf16.xpose.msra.mxu0 0
    %1057 = vmatpush.bf16.xpose.msra.mxu0 0
    %1058 = vmatpush.bf16.xpose.msra.mxu0 0
    %1059 = vmatpush.bf16.xpose.msra.mxu0 0
    %1060 = vmatpush.bf16.xpose.msra.mxu0 %v1044
    %1061 = vmatmul.bf16.gmra.mxu0 %v1040
    %v1062 = vpop.f32.mrf.mxu0
    %v1063 = vadd.f32 %v1052, %v1062
    %v1064 = vpop.f32.mrf.mxu0
    %1065 = vdwg.mxu0
    %v1066 = vsel %vm191, %v1063, -inf
    %1067 = vmax.xlane.f32.xlu0 %v1066
    %v1068 = vpop.xlane.xlu0 %1067
    %v1069 = vsub.f32 %v1063, %v1068
    %v1070 = vmul.f32 %v1069, 1.442695
    %v1071 = vpow.pop %v1070
    %v1072 = vsel %vm191, %v1071, 0.0
    %1073 = vadd.xlane.f32.xlu0 %v1072
    %v1074 = vpop.xlane.xlu0 %1073
    %v1075 = vrcp.pop %v1074
    %v1076 = vmul.f32 %v1071, %v1075
    %v1077 = vpack.c.bf16 %v1076, %v1076
    %v1079 = vsel %vm191, %v1077, 0
    %vm1081 = vcmask 1043456
    %v1083 = vsel %vm1081, %v1048, 0
    %1085 = vmatpush.bf16.msra.mxu0 0
    %1086 = vmatpush.bf16.msra.mxu0 0
    %1087 = vmatpush.bf16.msra.mxu0 0
    %1088 = vmatpush.bf16.msra.mxu0 0
    %1089 = vmatpush.bf16.msra.mxu0 0
    %1090 = vmatpush.bf16.msra.mxu0 0
    %1091 = vmatpush.bf16.msra.mxu0 0
    %1092 = vmatpush.bf16.msra.mxu0 %v1083
    %1093 = vmatmul.bf16.gmra.mxu0 %v1079
    %v1094 = vpop.f32.mrf.mxu0
    %v1095 = vadd.f32 0.0, %v1094
    %v1096 = vpop.f32.mrf.mxu0
    %1097 = vdwg.mxu0
    %v1098 = vpack.c.bf16 %v1095, %v1095
    %v1100 = vunpack.c.h.b16 %v1040
    %v1101 = vpack.c.b16 %v1100, %v1100
    %v1104 = vunpack.c.h.b16 %v1044
    %v1105 = vpack.c.b16 %v1104, %v1104
    %1107 = vmatpush.bf16.xpose.msra.mxu0 0
    %1108 = vmatpush.bf16.xpose.msra.mxu0 0
    %1109 = vmatpush.bf16.xpose.msra.mxu0 0
    %1110 = vmatpush.bf16.xpose.msra.mxu0 0
    %1111 = vmatpush.bf16.xpose.msra.mxu0 0
    %1112 = vmatpush.bf16.xpose.msra.mxu0 0
    %1113 = vmatpush.bf16.xpose.msra.mxu0 0
    %1114 = vmatpush.bf16.xpose.msra.mxu0 %v1105
    %1115 = vmatmul.bf16.gmra.mxu0 %v1101
    %v1116 = vpop.f32.mrf.mxu0
    %v1117 = vadd.f32 %v1052, %v1116
    %v1118 = vpop.f32.mrf.mxu0
    %1119 = vdwg.mxu0
    %v1120 = vsel %vm191, %v1117, -inf
    %1121 = vmax.xlane.f32.xlu0 %v1120
    %v1122 = vpop.xlane.xlu0 %1121
    %v1123 = vsub.f32 %v1117, %v1122
    %v1124 = vmul.f32 %v1123, 1.442695
    %v1125 = vpow.pop %v1124
    %v1126 = vsel %vm191, %v1125, 0.0
    %1127 = vadd.xlane.f32.xlu0 %v1126
    %v1128 = vpop.xlane.xlu0 %1127
    %v1129 = vrcp.pop %v1128
    %v1130 = vmul.f32 %v1125, %v1129
    %v1131 = vpack.c.bf16 %v1130, %v1130
    %v1133 = vunpack.c.h.b16 %v1048
    %v1134 = vpack.c.b16 %v1133, %v1133
    %v1136 = vsel %vm191, %v1131, 0
    %v1139 = vsel %vm1081, %v1134, 0
    %1141 = vmatpush.bf16.msra.mxu0 0
    %1142 = vmatpush.bf16.msra.mxu0 0
    %1143 = vmatpush.bf16.msra.mxu0 0
    %1144 = vmatpush.bf16.msra.mxu0 0
    %1145 = vmatpush.bf16.msra.mxu0 0
    %1146 = vmatpush.bf16.msra.mxu0 0
    %1147 = vmatpush.bf16.msra.mxu0 0
    %1148 = vmatpush.bf16.msra.mxu0 %v1139
    %1149 = vmatmul.bf16.gmra.mxu0 %v1136
    %v1150 = vpop.f32.mrf.mxu0
    %v1151 = vadd.f32 0.0, %v1150
    %v1152 = vpop.f32.mrf.mxu0
    %1153 = vdwg.mxu0
    %v1154 = vpack.c.bf16 %v1151, %v1151
    %1155 = vmatpush.bf16.xpose.msra.mxu0 0
    %1156 = vmatpush.bf16.xpose.msra.mxu0 0
    %1157 = vmatpush.bf16.xpose.msra.mxu0 0
    %1158 = vmatpush.bf16.xpose.msra.mxu0 0
    %1159 = vmatpush.bf16.xpose.msra.mxu0 0
    %1160 = vmatpush.bf16.xpose.msra.mxu0 0
    %1161 = vmatpush.bf16.xpose.msra.mxu0 0
    %1162 = vmatpush.bf16.xpose.msra.mxu0 %v1045
    %1163 = vmatmul.bf16.gmra.mxu0 %v1041
    %v1164 = vpop.f32.mrf.mxu0
    %v1165 = vadd.f32 %v1052, %v1164
    %v1166 = vpop.f32.mrf.mxu0
    %1167 = vdwg.mxu0
    %v1168 = vsel %vm191, %v1165, -inf
    %1169 = vmax.xlane.f32.xlu0 %v1168
    %v1170 = vpop.xlane.xlu0 %1169
    %v1171 = vsub.f32 %v1165, %v1170
    %v1172 = vmul.f32 %v1171, 1.442695
    %v1173 = vpow.pop %v1172
    %v1174 = vsel %vm191, %v1173, 0.0
    %1175 = vadd.xlane.f32.xlu0 %v1174
    %v1176 = vpop.xlane.xlu0 %1175
    %v1177 = vrcp.pop %v1176
    %v1178 = vmul.f32 %v1173, %v1177
    %v1179 = vpack.c.bf16 %v1178, %v1178
    %v1181 = vsel %vm191, %v1179, 0
    %v1184 = vsel %vm1081, %v1049, 0
    %1186 = vmatpush.bf16.msra.mxu0 0
    %1187 = vmatpush.bf16.msra.mxu0 0
    %1188 = vmatpush.bf16.msra.mxu0 0
    %1189 = vmatpush.bf16.msra.mxu0 0
    %1190 = vmatpush.bf16.msra.mxu0 0
    %1191 = vmatpush.bf16.msra.mxu0 0
    %1192 = vmatpush.bf16.msra.mxu0 0
    %1193 = vmatpush.bf16.msra.mxu0 %v1184
    %1194 = vmatmul.bf16.gmra.mxu0 %v1181
    %v1195 = vpop.f32.mrf.mxu0
    %v1196 = vadd.f32 0.0, %v1195
    %v1197 = vpop.f32.mrf.mxu0
    %1198 = vdwg.mxu0
    %v1199 = vpack.c.bf16 %v1196, %v1196
    %v1201 = vunpack.c.h.b16 %v1041
    %v1202 = vpack.c.b16 %v1201, %v1201
    %v1205 = vunpack.c.h.b16 %v1045
    %v1206 = vpack.c.b16 %v1205, %v1205
    %1208 = vmatpush.bf16.xpose.msra.mxu0 0
    %1209 = vmatpush.bf16.xpose.msra.mxu0 0
    %1210 = vmatpush.bf16.xpose.msra.mxu0 0
    %1211 = vmatpush.bf16.xpose.msra.mxu0 0
    %1212 = vmatpush.bf16.xpose.msra.mxu0 0
    %1213 = vmatpush.bf16.xpose.msra.mxu0 0
    %1214 = vmatpush.bf16.xpose.msra.mxu0 0
    %1215 = vmatpush.bf16.xpose.msra.mxu0 %v1206
    %1216 = vmatmul.bf16.gmra.mxu0 %v1202
    %v1217 = vpop.f32.mrf.mxu0
    %v1218 = vadd.f32 %v1052, %v1217
    %v1219 = vpop.f32.mrf.mxu0
    %1220 = vdwg.mxu0
    %v1221 = vsel %vm191, %v1218, -inf
    %1222 = vmax.xlane.f32.xlu0 %v1221
    %v1223 = vpop.xlane.xlu0 %1222
    %v1224 = vsub.f32 %v1218, %v1223
    %v1225 = vmul.f32 %v1224, 1.442695
    %v1226 = vpow.pop %v1225
    %v1227 = vsel %vm191, %v1226, 0.0
    %1228 = vadd.xlane.f32.xlu0 %v1227
    %v1229 = vpop.xlane.xlu0 %1228
    %v1230 = vrcp.pop %v1229
    %v1231 = vmul.f32 %v1226, %v1230
    %v1232 = vpack.c.bf16 %v1231, %v1231
    %v1234 = vunpack.c.h.b16 %v1049
    %v1235 = vpack.c.b16 %v1234, %v1234
    %v1237 = vsel %vm191, %v1232, 0
    %v1240 = vsel %vm1081, %v1235, 0
    %1242 = vmatpush.bf16.msra.mxu0 0
    %1243 = vmatpush.bf16.msra.mxu0 0
    %1244 = vmatpush.bf16.msra.mxu0 0
    %1245 = vmatpush.bf16.msra.mxu0 0
    %1246 = vmatpush.bf16.msra.mxu0 0
    %1247 = vmatpush.bf16.msra.mxu0 0
    %1248 = vmatpush.bf16.msra.mxu0 0
    %1249 = vmatpush.bf16.msra.mxu0 %v1240
    %1250 = vmatmul.bf16.gmra.mxu0 %v1237
    %v1251 = vpop.f32.mrf.mxu0
    %v1252 = vadd.f32 0.0, %v1251
    %v1253 = vpop.f32.mrf.mxu0
    %1254 = vdwg.mxu0
    %v1255 = vpack.c.bf16 %v1252, %v1252
    %1256 = vmatpush.bf16.xpose.msra.mxu0 0
    %1257 = vmatpush.bf16.xpose.msra.mxu0 0
    %1258 = vmatpush.bf16.xpose.msra.mxu0 0
    %1259 = vmatpush.bf16.xpose.msra.mxu0 0
    %1260 = vmatpush.bf16.xpose.msra.mxu0 0
    %1261 = vmatpush.bf16.xpose.msra.mxu0 0
    %1262 = vmatpush.bf16.xpose.msra.mxu0 0
    %1263 = vmatpush.bf16.xpose.msra.mxu0 %v1046
    %1264 = vmatmul.bf16.gmra.mxu0 %v1042
    %v1265 = vpop.f32.mrf.mxu0
    %v1266 = vadd.f32 %v1052, %v1265
    %v1267 = vpop.f32.mrf.mxu0
    %1268 = vdwg.mxu0
    %v1269 = vsel %vm191, %v1266, -inf
    %1270 = vmax.xlane.f32.xlu0 %v1269
    %v1271 = vpop.xlane.xlu0 %1270
    %v1272 = vsub.f32 %v1266, %v1271
    %v1273 = vmul.f32 %v1272, 1.442695
    %v1274 = vpow.pop %v1273
    %v1275 = vsel %vm191, %v1274, 0.0
    %1276 = vadd.xlane.f32.xlu0 %v1275
    %v1277 = vpop.xlane.xlu0 %1276
    %v1278 = vrcp.pop %v1277
    %v1279 = vmul.f32 %v1274, %v1278
    %v1280 = vpack.c.bf16 %v1279, %v1279
    %v1282 = vsel %vm191, %v1280, 0
    %v1285 = vsel %vm1081, %v1050, 0
    %1287 = vmatpush.bf16.msra.mxu0 0
    %1288 = vmatpush.bf16.msra.mxu0 0
    %1289 = vmatpush.bf16.msra.mxu0 0
    %1290 = vmatpush.bf16.msra.mxu0 0
    %1291 = vmatpush.bf16.msra.mxu0 0
    %1292 = vmatpush.bf16.msra.mxu0 0
    %1293 = vmatpush.bf16.msra.mxu0 0
    %1294 = vmatpush.bf16.msra.mxu0 %v1285
    %1295 = vmatmul.bf16.gmra.mxu0 %v1282
    %v1296 = vpop.f32.mrf.mxu0
    %v1297 = vadd.f32 0.0, %v1296
    %v1298 = vpop.f32.mrf.mxu0
    %1299 = vdwg.mxu0
    %v1300 = vpack.c.bf16 %v1297, %v1297
    %v1302 = vunpack.c.h.b16 %v1042
    %v1303 = vpack.c.b16 %v1302, %v1302
    %v1306 = vunpack.c.h.b16 %v1046
    %v1307 = vpack.c.b16 %v1306, %v1306
    %1309 = vmatpush.bf16.xpose.msra.mxu0 0
    %1310 = vmatpush.bf16.xpose.msra.mxu0 0
    %1311 = vmatpush.bf16.xpose.msra.mxu0 0
    %1312 = vmatpush.bf16.xpose.msra.mxu0 0
    %1313 = vmatpush.bf16.xpose.msra.mxu0 0
    %1314 = vmatpush.bf16.xpose.msra.mxu0 0
    %1315 = vmatpush.bf16.xpose.msra.mxu0 0
    %1316 = vmatpush.bf16.xpose.msra.mxu0 %v1307
    %1317 = vmatmul.bf16.gmra.mxu0 %v1303
    %v1318 = vpop.f32.mrf.mxu0
    %v1319 = vadd.f32 %v1052, %v1318
    %v1320 = vpop.f32.mrf.mxu0
    %1321 = vdwg.mxu0
    %v1322 = vsel %vm191, %v1319, -inf
    %1323 = vmax.xlane.f32.xlu0 %v1322
    %v1324 = vpop.xlane.xlu0 %1323
    %v1325 = vsub.f32 %v1319, %v1324
    %v1326 = vmul.f32 %v1325, 1.442695
    %v1327 = vpow.pop %v1326
    %v1328 = vsel %vm191, %v1327, 0.0
    %1329 = vadd.xlane.f32.xlu0 %v1328
    %v1330 = vpop.xlane.xlu0 %1329
    %v1331 = vrcp.pop %v1330
    %v1332 = vmul.f32 %v1327, %v1331
    %v1333 = vpack.c.bf16 %v1332, %v1332
    %v1335 = vunpack.c.h.b16 %v1050
    %v1336 = vpack.c.b16 %v1335, %v1335
    %v1338 = vsel %vm191, %v1333, 0
    %v1341 = vsel %vm1081, %v1336, 0
    %1343 = vmatpush.bf16.msra.mxu0 0
    %1344 = vmatpush.bf16.msra.mxu0 0
    %1345 = vmatpush.bf16.msra.mxu0 0
    %1346 = vmatpush.bf16.msra.mxu0 0
    %1347 = vmatpush.bf16.msra.mxu0 0
    %1348 = vmatpush.bf16.msra.mxu0 0
    %1349 = vmatpush.bf16.msra.mxu0 0
    %1350 = vmatpush.bf16.msra.mxu0 %v1341
    %1351 = vmatmul.bf16.gmra.mxu0 %v1338
    %v1352 = vpop.f32.mrf.mxu0
    %v1353 = vadd.f32 0.0, %v1352
    %v1354 = vpop.f32.mrf.mxu0
    %1355 = vdwg.mxu0
    %v1356 = vpack.c.bf16 %v1353, %v1353
    %1357 = vmatpush.bf16.xpose.msra.mxu0 0
    %1358 = vmatpush.bf16.xpose.msra.mxu0 0
    %1359 = vmatpush.bf16.xpose.msra.mxu0 0
    %1360 = vmatpush.bf16.xpose.msra.mxu0 0
    %1361 = vmatpush.bf16.xpose.msra.mxu0 0
    %1362 = vmatpush.bf16.xpose.msra.mxu0 0
    %1363 = vmatpush.bf16.xpose.msra.mxu0 0
    %1364 = vmatpush.bf16.xpose.msra.mxu0 %v1047
    %1365 = vmatmul.bf16.gmra.mxu0 %v1043
    %v1366 = vpop.f32.mrf.mxu0
    %v1367 = vadd.f32 %v1052, %v1366
    %v1368 = vpop.f32.mrf.mxu0
    %1369 = vdwg.mxu0
    %v1370 = vsel %vm191, %v1367, -inf
    %1371 = vmax.xlane.f32.xlu0 %v1370
    %v1372 = vpop.xlane.xlu0 %1371
    %v1373 = vsub.f32 %v1367, %v1372
    %v1374 = vmul.f32 %v1373, 1.442695
    %v1375 = vpow.pop %v1374
    %v1376 = vsel %vm191, %v1375, 0.0
    %1377 = vadd.xlane.f32.xlu0 %v1376
    %v1378 = vpop.xlane.xlu0 %1377
    %v1379 = vrcp.pop %v1378
    %v1380 = vmul.f32 %v1375, %v1379
    %v1381 = vpack.c.bf16 %v1380, %v1380
    %v1383 = vsel %vm191, %v1381, 0
    %v1386 = vsel %vm1081, %v1051, 0
    %1388 = vmatpush.bf16.msra.mxu0 0
    %1389 = vmatpush.bf16.msra.mxu0 0
    %1390 = vmatpush.bf16.msra.mxu0 0
    %1391 = vmatpush.bf16.msra.mxu0 0
    %1392 = vmatpush.bf16.msra.mxu0 0
    %1393 = vmatpush.bf16.msra.mxu0 0
    %1394 = vmatpush.bf16.msra.mxu0 0
    %1395 = vmatpush.bf16.msra.mxu0 %v1386
    %1396 = vmatmul.bf16.gmra.mxu0 %v1383
    %v1397 = vpop.f32.mrf.mxu0
    %v1398 = vadd.f32 0.0, %v1397
    %v1399 = vpop.f32.mrf.mxu0
    %1400 = vdwg.mxu0
    %v1401 = vpack.c.bf16 %v1398, %v1398
    %v1403 = vunpack.c.h.b16 %v1043
    %v1404 = vpack.c.b16 %v1403, %v1403
    %v1407 = vunpack.c.h.b16 %v1047
    %v1408 = vpack.c.b16 %v1407, %v1407
    %1410 = vmatpush.bf16.xpose.msra.mxu0 0
    %1411 = vmatpush.bf16.xpose.msra.mxu0 0
    %1412 = vmatpush.bf16.xpose.msra.mxu0 0
    %1413 = vmatpush.bf16.xpose.msra.mxu0 0
    %1414 = vmatpush.bf16.xpose.msra.mxu0 0
    %1415 = vmatpush.bf16.xpose.msra.mxu0 0
    %1416 = vmatpush.bf16.xpose.msra.mxu0 0
    %1417 = vmatpush.bf16.xpose.msra.mxu0 %v1408
    %1418 = vmatmul.bf16.gmra.mxu0 %v1404
    %v1419 = vpop.f32.mrf.mxu0
    %v1420 = vadd.f32 %v1052, %v1419
    %v1421 = vpop.f32.mrf.mxu0
    %1422 = vdwg.mxu0
    %v1423 = vsel %vm191, %v1420, -inf
    %1424 = vmax.xlane.f32.xlu0 %v1423
    %v1425 = vpop.xlane.xlu0 %1424
    %v1426 = vsub.f32 %v1420, %v1425
    %v1427 = vmul.f32 %v1426, 1.442695
    %v1428 = vpow.pop %v1427
    %v1429 = vsel %vm191, %v1428, 0.0
    %1430 = vadd.xlane.f32.xlu0 %v1429
    %v1431 = vpop.xlane.xlu0 %1430
    %v1432 = vrcp.pop %v1431
    %v1433 = vmul.f32 %v1428, %v1432
    %v1434 = vpack.c.bf16 %v1433, %v1433
    %v1436 = vunpack.c.h.b16 %v1051
    %v1437 = vpack.c.b16 %v1436, %v1436
    %v1439 = vsel %vm191, %v1434, 0
    %v1442 = vsel %vm1081, %v1437, 0
    %1444 = vmatpush.bf16.msra.mxu0 0
    %1445 = vmatpush.bf16.msra.mxu0 0
    %1446 = vmatpush.bf16.msra.mxu0 0
    %1447 = vmatpush.bf16.msra.mxu0 0
    %1448 = vmatpush.bf16.msra.mxu0 0
    %1449 = vmatpush.bf16.msra.mxu0 0
    %1450 = vmatpush.bf16.msra.mxu0 0
    %1451 = vmatpush.bf16.msra.mxu0 %v1442
    %1452 = vmatmul.bf16.gmra.mxu0 %v1439
    %v1453 = vpop.f32.mrf.mxu0
    %v1454 = vadd.f32 0.0, %v1453
    %v1455 = vpop.f32.mrf.mxu0
    %1456 = vdwg.mxu0
    %v1457 = vpack.c.bf16 %v1454, %v1454
    %v1458 = vld [vmem:[%s41] sm:$0xf]
    %v1459 = vld [vmem:[%s41 + $0x4] sm:$0xf]
    %v1460 = vld [vmem:[%s41 + $0x8] sm:$0xf]
    %v1461 = vld [vmem:[%s41 + $0xc] sm:$0xf]
    %v1462 = vld [vmem:[%s41 + $0x10] sm:$0xf]
    %v1463 = vld [vmem:[%s41 + $0x14] sm:$0xf]
    %v1464 = vld [vmem:[%s41 + $0x18] sm:$0xf]
    %v1465 = vld [vmem:[%s41 + $0x1c] sm:$0xf]
    %v1466 = vld [vmem:[%s41 + $0x20] sm:$0xf]
    %v1467 = vld [vmem:[%s41 + $0x24] sm:$0xf]
    %v1468 = vld [vmem:[%s41 + $0x28] sm:$0xf]
    %v1469 = vld [vmem:[%s41 + $0x2c] sm:$0xf]
    %v1470 = vld [vmem:[%s41 + $0x30] sm:$0xf]
    %v1471 = vld [vmem:[%s41 + $0x34] sm:$0xf]
    %v1472 = vld [vmem:[%s41 + $0x38] sm:$0xf]
    %v1473 = vld [vmem:[%s41 + $0x3c] sm:$0xf]
    %v1474 = vld [vmem:[%s41 + $0x40] sm:$0xf]
    %v1475 = vld [vmem:[%s41 + $0x44] sm:$0xf]
    %v1476 = vld [vmem:[%s41 + $0x48] sm:$0xf]
    %v1477 = vld [vmem:[%s41 + $0x4c] sm:$0xf]
    %v1478 = vld [vmem:[%s41 + $0x50] sm:$0xf]
    %v1479 = vld [vmem:[%s41 + $0x54] sm:$0xf]
    %v1480 = vld [vmem:[%s41 + $0x58] sm:$0xf]
    %v1481 = vld [vmem:[%s41 + $0x5c] sm:$0xf]
    %v1482 = vld [vmem:[%s41 + $0x60] sm:$0xf]
    %v1483 = vld [vmem:[%s41 + $0x64] sm:$0xf]
    %v1484 = vld [vmem:[%s41 + $0x68] sm:$0xf]
    %v1485 = vld [vmem:[%s41 + $0x6c] sm:$0xf]
    %v1486 = vld [vmem:[%s41 + $0x70] sm:$0xf]
    %v1487 = vld [vmem:[%s41 + $0x74] sm:$0xf]
    %v1488 = vld [vmem:[%s41 + $0x78] sm:$0xf]
    %v1489 = vld [vmem:[%s41 + $0x7c] sm:$0xf]
    %v1490 = vld [vmem:[%s41 + $0x80] sm:$0xf]
    %v1491 = vld [vmem:[%s41 + $0x84] sm:$0xf]
    %v1492 = vld [vmem:[%s41 + $0x88] sm:$0xf]
    %v1493 = vld [vmem:[%s41 + $0x8c] sm:$0xf]
    %v1494 = vld [vmem:[%s41 + $0x90] sm:$0xf]
    %v1495 = vld [vmem:[%s41 + $0x94] sm:$0xf]
    %v1496 = vld [vmem:[%s41 + $0x98] sm:$0xf]
    %v1497 = vld [vmem:[%s41 + $0x9c] sm:$0xf]
    %v1498 = vld [vmem:[%s41 + $0xa0] sm:$0xf]
    %v1499 = vld [vmem:[%s41 + $0xa4] sm:$0xf]
    %v1500 = vld [vmem:[%s41 + $0xa8] sm:$0xf]
    %v1501 = vld [vmem:[%s41 + $0xac] sm:$0xf]
    %v1502 = vld [vmem:[%s41 + $0xb0] sm:$0xf]
    %v1503 = vld [vmem:[%s41 + $0xb4] sm:$0xf]
    %v1504 = vld [vmem:[%s41 + $0xb8] sm:$0xf]
    %v1505 = vld [vmem:[%s41 + $0xbc] sm:$0xf]
    %v1506 = vld [vmem:[%s41 + $0xc0] sm:$0xf]
    %v1507 = vld [vmem:[%s41 + $0xc4] sm:$0xf]
    %v1508 = vld [vmem:[%s41 + $0xc8] sm:$0xf]
    %v1509 = vld [vmem:[%s41 + $0xcc] sm:$0xf]
    %v1510 = vld [vmem:[%s41 + $0xd0] sm:$0xf]
    %v1511 = vld [vmem:[%s41 + $0xd4] sm:$0xf]
    %v1512 = vld [vmem:[%s41 + $0xd8] sm:$0xf]
    %v1513 = vld [vmem:[%s41 + $0xdc] sm:$0xf]
    %v1514 = vld [vmem:[%s41 + $0xe0] sm:$0xf]
    %v1515 = vld [vmem:[%s41 + $0xe4] sm:$0xf]
    %v1516 = vld [vmem:[%s41 + $0xe8] sm:$0xf]
    %v1517 = vld [vmem:[%s41 + $0xec] sm:$0xf]
    %v1518 = vld [vmem:[%s41 + $0xf0] sm:$0xf]
    %v1519 = vld [vmem:[%s41 + $0xf4] sm:$0xf]
    %v1520 = vld [vmem:[%s41 + $0xf8] sm:$0xf]
    %v1521 = vld [vmem:[%s41 + $0xfc] sm:$0xf]
    %v1522 = vld [vmem:[%s41 + $0x100] sm:$0xf]
    %v1523 = vld [vmem:[%s41 + $0x104] sm:$0xf]
    %v1524 = vld [vmem:[%s41 + $0x108] sm:$0xf]
    %v1525 = vld [vmem:[%s41 + $0x10c] sm:$0xf]
    %v1526 = vld [vmem:[%s41 + $0x110] sm:$0xf]
    %v1527 = vld [vmem:[%s41 + $0x114] sm:$0xf]
    %v1528 = vld [vmem:[%s41 + $0x118] sm:$0xf]
    %v1529 = vld [vmem:[%s41 + $0x11c] sm:$0xf]
    %v1530 = vld [vmem:[%s41 + $0x120] sm:$0xf]
    %v1531 = vld [vmem:[%s41 + $0x124] sm:$0xf]
    %v1532 = vld [vmem:[%s41 + $0x128] sm:$0xf]
    %v1533 = vld [vmem:[%s41 + $0x12c] sm:$0xf]
    %v1534 = vld [vmem:[%s41 + $0x130] sm:$0xf]
    %v1535 = vld [vmem:[%s41 + $0x134] sm:$0xf]
    %v1536 = vld [vmem:[%s41 + $0x138] sm:$0xf]
    %v1537 = vld [vmem:[%s41 + $0x13c] sm:$0xf]
    %v1538 = vld [vmem:[%s41 + $0x140] sm:$0xf]
    %v1539 = vld [vmem:[%s41 + $0x144] sm:$0xf]
    %v1540 = vld [vmem:[%s41 + $0x148] sm:$0xf]
    %v1541 = vld [vmem:[%s41 + $0x14c] sm:$0xf]
    %v1542 = vld [vmem:[%s41 + $0x150] sm:$0xf]
    %v1543 = vld [vmem:[%s41 + $0x154] sm:$0xf]
    %v1544 = vld [vmem:[%s41 + $0x158] sm:$0xf]
    %v1545 = vld [vmem:[%s41 + $0x15c] sm:$0xf]
    %v1546 = vld [vmem:[%s41 + $0x160] sm:$0xf]
    %v1547 = vld [vmem:[%s41 + $0x164] sm:$0xf]
    %v1548 = vld [vmem:[%s41 + $0x168] sm:$0xf]
    %v1549 = vld [vmem:[%s41 + $0x16c] sm:$0xf]
    %v1550 = vld [vmem:[%s41 + $0x170] sm:$0xf]
    %v1551 = vld [vmem:[%s41 + $0x174] sm:$0xf]
    %v1552 = vld [vmem:[%s41 + $0x178] sm:$0xf]
    %v1553 = vld [vmem:[%s41 + $0x17c] sm:$0xf]
    %v1554 = vld [vmem:[%s41 + $0x180] sm:$0xf]
    %v1555 = vld [vmem:[%s41 + $0x184] sm:$0xf]
    %v1556 = vld [vmem:[%s41 + $0x188] sm:$0xf]
    %v1557 = vld [vmem:[%s41 + $0x18c] sm:$0xf]
    %v1558 = vld [vmem:[%s41 + $0x190] sm:$0xf]
    %v1559 = vld [vmem:[%s41 + $0x194] sm:$0xf]
    %v1560 = vld [vmem:[%s41 + $0x198] sm:$0xf]
    %v1561 = vld [vmem:[%s41 + $0x19c] sm:$0xf]
    %v1562 = vld [vmem:[%s41 + $0x1a0] sm:$0xf]
    %v1563 = vld [vmem:[%s41 + $0x1a4] sm:$0xf]
    %v1564 = vld [vmem:[%s41 + $0x1a8] sm:$0xf]
    %v1565 = vld [vmem:[%s41 + $0x1ac] sm:$0xf]
    %v1566 = vld [vmem:[%s41 + $0x1b0] sm:$0xf]
    %v1567 = vld [vmem:[%s41 + $0x1b4] sm:$0xf]
    %v1568 = vld [vmem:[%s41 + $0x1b8] sm:$0xf]
    %v1569 = vld [vmem:[%s41 + $0x1bc] sm:$0xf]
    %v1570 = vld [vmem:[%s41 + $0x1c0] sm:$0xf]
    %v1571 = vld [vmem:[%s41 + $0x1c4] sm:$0xf]
    %v1572 = vld [vmem:[%s41 + $0x1c8] sm:$0xf]
    %v1573 = vld [vmem:[%s41 + $0x1cc] sm:$0xf]
    %v1574 = vld [vmem:[%s41 + $0x1d0] sm:$0xf]
    %v1575 = vld [vmem:[%s41 + $0x1d4] sm:$0xf]
    %v1576 = vld [vmem:[%s41 + $0x1d8] sm:$0xf]
    %v1577 = vld [vmem:[%s41 + $0x1dc] sm:$0xf]
    %v1578 = vld [vmem:[%s41 + $0x1e0] sm:$0xf]
    %v1579 = vld [vmem:[%s41 + $0x1e4] sm:$0xf]
    %v1580 = vld [vmem:[%s41 + $0x1e8] sm:$0xf]
    %v1581 = vld [vmem:[%s41 + $0x1ec] sm:$0xf]
    %v1582 = vld [vmem:[%s41 + $0x1f0] sm:$0xf]
    %v1583 = vld [vmem:[%s41 + $0x1f4] sm:$0xf]
    %v1584 = vld [vmem:[%s41 + $0x1f8] sm:$0xf]
    %v1585 = vld [vmem:[%s41 + $0x1fc] sm:$0xf]
    %v1586 = vld [vmem:[%s43] sm:$0x1]
    %v1588 = vperm.slane %v1586, 0
    %v1718 = vunpack.c.l.b16 %v1458
    %v1719 = vunpack.c.l.b16 %v1459
    %v1720 = vunpack.c.l.b16 %v1460
    %v1721 = vunpack.c.l.b16 %v1461
    %v1722 = vunpack.c.l.b16 %v1462
    %v1723 = vunpack.c.l.b16 %v1463
    %v1724 = vunpack.c.l.b16 %v1464
    %v1725 = vunpack.c.l.b16 %v1465
    %v1726 = vunpack.c.l.b16 %v1466
    %v1727 = vunpack.c.l.b16 %v1467
    %v1728 = vunpack.c.l.b16 %v1468
    %v1729 = vunpack.c.l.b16 %v1469
    %v1730 = vunpack.c.l.b16 %v1470
    %v1731 = vunpack.c.l.b16 %v1471
    %v1732 = vunpack.c.l.b16 %v1472
    %v1733 = vunpack.c.l.b16 %v1473
    %v1734 = vunpack.c.l.b16 %v1474
    %v1735 = vunpack.c.l.b16 %v1475
    %v1736 = vunpack.c.l.b16 %v1476
    %v1737 = vunpack.c.l.b16 %v1477
    %v1738 = vunpack.c.l.b16 %v1478
    %v1739 = vunpack.c.l.b16 %v1479
    %v1740 = vunpack.c.l.b16 %v1480
    %v1741 = vunpack.c.l.b16 %v1481
    %v1742 = vunpack.c.l.b16 %v1482
    %v1743 = vunpack.c.l.b16 %v1483
    %v1744 = vunpack.c.l.b16 %v1484
    %v1745 = vunpack.c.l.b16 %v1485
    %v1746 = vunpack.c.l.b16 %v1486
    %v1747 = vunpack.c.l.b16 %v1487
    %v1748 = vunpack.c.l.b16 %v1488
    %v1749 = vunpack.c.l.b16 %v1489
    %v1750 = vunpack.c.l.b16 %v1490
    %v1751 = vunpack.c.l.b16 %v1491
    %v1752 = vunpack.c.l.b16 %v1492
    %v1753 = vunpack.c.l.b16 %v1493
    %v1754 = vunpack.c.l.b16 %v1494
    %v1755 = vunpack.c.l.b16 %v1495
    %v1756 = vunpack.c.l.b16 %v1496
    %v1757 = vunpack.c.l.b16 %v1497
    %v1758 = vunpack.c.l.b16 %v1498
    %v1759 = vunpack.c.l.b16 %v1499
    %v1760 = vunpack.c.l.b16 %v1500
    %v1761 = vunpack.c.l.b16 %v1501
    %v1762 = vunpack.c.l.b16 %v1502
    %v1763 = vunpack.c.l.b16 %v1503
    %v1764 = vunpack.c.l.b16 %v1504
    %v1765 = vunpack.c.l.b16 %v1505
    %v1766 = vunpack.c.l.b16 %v1506
    %v1767 = vunpack.c.l.b16 %v1507
    %v1768 = vunpack.c.l.b16 %v1508
    %v1769 = vunpack.c.l.b16 %v1509
    %v1770 = vunpack.c.l.b16 %v1510
    %v1771 = vunpack.c.l.b16 %v1511
    %v1772 = vunpack.c.l.b16 %v1512
    %v1773 = vunpack.c.l.b16 %v1513
    %v1774 = vunpack.c.l.b16 %v1514
    %v1775 = vunpack.c.l.b16 %v1515
    %v1776 = vunpack.c.l.b16 %v1516
    %v1777 = vunpack.c.l.b16 %v1517
    %v1778 = vunpack.c.l.b16 %v1518
    %v1779 = vunpack.c.l.b16 %v1519
    %v1780 = vunpack.c.l.b16 %v1520
    %v1781 = vunpack.c.l.b16 %v1521
    %v1782 = vunpack.c.l.b16 %v1522
    %v1783 = vunpack.c.l.b16 %v1523
    %v1784 = vunpack.c.l.b16 %v1524
    %v1785 = vunpack.c.l.b16 %v1525
    %v1786 = vunpack.c.l.b16 %v1526
    %v1787 = vunpack.c.l.b16 %v1527
    %v1788 = vunpack.c.l.b16 %v1528
    %v1789 = vunpack.c.l.b16 %v1529
    %v1790 = vunpack.c.l.b16 %v1530
    %v1791 = vunpack.c.l.b16 %v1531
    %v1792 = vunpack.c.l.b16 %v1532
    %v1793 = vunpack.c.l.b16 %v1533
    %v1794 = vunpack.c.l.b16 %v1534
    %v1795 = vunpack.c.l.b16 %v1535
    %v1796 = vunpack.c.l.b16 %v1536
    %v1797 = vunpack.c.l.b16 %v1537
    %v1798 = vunpack.c.l.b16 %v1538
    %v1799 = vunpack.c.l.b16 %v1539
    %v1800 = vunpack.c.l.b16 %v1540
    %v1801 = vunpack.c.l.b16 %v1541
    %v1802 = vunpack.c.l.b16 %v1542
    %v1803 = vunpack.c.l.b16 %v1543
    %v1804 = vunpack.c.l.b16 %v1544
    %v1805 = vunpack.c.l.b16 %v1545
    %v1806 = vunpack.c.l.b16 %v1546
    %v1807 = vunpack.c.l.b16 %v1547
    %v1808 = vunpack.c.l.b16 %v1548
    %v1809 = vunpack.c.l.b16 %v1549
    %v1810 = vunpack.c.l.b16 %v1550
    %v1811 = vunpack.c.l.b16 %v1551
    %v1812 = vunpack.c.l.b16 %v1552
    %v1813 = vunpack.c.l.b16 %v1553
    %v1814 = vunpack.c.l.b16 %v1554
    %v1815 = vunpack.c.l.b16 %v1555
    %v1816 = vunpack.c.l.b16 %v1556
    %v1817 = vunpack.c.l.b16 %v1557
    %v1818 = vunpack.c.l.b16 %v1558
    %v1819 = vunpack.c.l.b16 %v1559
    %v1820 = vunpack.c.l.b16 %v1560
    %v1821 = vunpack.c.l.b16 %v1561
    %v1822 = vunpack.c.l.b16 %v1562
    %v1823 = vunpack.c.l.b16 %v1563
    %v1824 = vunpack.c.l.b16 %v1564
    %v1825 = vunpack.c.l.b16 %v1565
    %v1826 = vunpack.c.l.b16 %v1566
    %v1827 = vunpack.c.l.b16 %v1567
    %v1828 = vunpack.c.l.b16 %v1568
    %v1829 = vunpack.c.l.b16 %v1569
    %v1830 = vunpack.c.l.b16 %v1570
    %v1831 = vunpack.c.l.b16 %v1571
    %v1832 = vunpack.c.l.b16 %v1572
    %v1833 = vunpack.c.l.b16 %v1573
    %v1834 = vunpack.c.l.b16 %v1574
    %v1835 = vunpack.c.l.b16 %v1575
    %v1836 = vunpack.c.l.b16 %v1576
    %v1837 = vunpack.c.l.b16 %v1577
    %v1838 = vunpack.c.l.b16 %v1578
    %v1839 = vunpack.c.l.b16 %v1579
    %v1840 = vunpack.c.l.b16 %v1580
    %v1841 = vunpack.c.l.b16 %v1581
    %v1842 = vunpack.c.l.b16 %v1582
    %v1843 = vunpack.c.l.b16 %v1583
    %v1844 = vunpack.c.l.b16 %v1584
    %v1845 = vunpack.c.l.b16 %v1585
    %v1846 = vpack.c.b16 %v1719, %v1718
    %v1847 = vpack.c.b16 %v1721, %v1720
    %v1848 = vpack.c.b16 %v1723, %v1722
    %v1849 = vpack.c.b16 %v1725, %v1724
    %v1850 = vpack.c.b16 %v1727, %v1726
    %v1851 = vpack.c.b16 %v1729, %v1728
    %v1852 = vpack.c.b16 %v1731, %v1730
    %v1853 = vpack.c.b16 %v1733, %v1732
    %v1854 = vpack.c.b16 %v1735, %v1734
    %v1855 = vpack.c.b16 %v1737, %v1736
    %v1856 = vpack.c.b16 %v1739, %v1738
    %v1857 = vpack.c.b16 %v1741, %v1740
    %v1858 = vpack.c.b16 %v1743, %v1742
    %v1859 = vpack.c.b16 %v1745, %v1744
    %v1860 = vpack.c.b16 %v1747, %v1746
    %v1861 = vpack.c.b16 %v1749, %v1748
    %v1862 = vpack.c.b16 %v1751, %v1750
    %v1863 = vpack.c.b16 %v1753, %v1752
    %v1864 = vpack.c.b16 %v1755, %v1754
    %v1865 = vpack.c.b16 %v1757, %v1756
    %v1866 = vpack.c.b16 %v1759, %v1758
    %v1867 = vpack.c.b16 %v1761, %v1760
    %v1868 = vpack.c.b16 %v1763, %v1762
    %v1869 = vpack.c.b16 %v1765, %v1764
    %v1870 = vpack.c.b16 %v1767, %v1766
    %v1871 = vpack.c.b16 %v1769, %v1768
    %v1872 = vpack.c.b16 %v1771, %v1770
    %v1873 = vpack.c.b16 %v1773, %v1772
    %v1874 = vpack.c.b16 %v1775, %v1774
    %v1875 = vpack.c.b16 %v1777, %v1776
    %v1876 = vpack.c.b16 %v1779, %v1778
    %v1877 = vpack.c.b16 %v1781, %v1780
    %v1878 = vpack.c.b16 %v1783, %v1782
    %v1879 = vpack.c.b16 %v1785, %v1784
    %v1880 = vpack.c.b16 %v1787, %v1786
    %v1881 = vpack.c.b16 %v1789, %v1788
    %v1882 = vpack.c.b16 %v1791, %v1790
    %v1883 = vpack.c.b16 %v1793, %v1792
    %v1884 = vpack.c.b16 %v1795, %v1794
    %v1885 = vpack.c.b16 %v1797, %v1796
    %v1886 = vpack.c.b16 %v1799, %v1798
    %v1887 = vpack.c.b16 %v1801, %v1800
    %v1888 = vpack.c.b16 %v1803, %v1802
    %v1889 = vpack.c.b16 %v1805, %v1804
    %v1890 = vpack.c.b16 %v1807, %v1806
    %v1891 = vpack.c.b16 %v1809, %v1808
    %v1892 = vpack.c.b16 %v1811, %v1810
    %v1893 = vpack.c.b16 %v1813, %v1812
    %v1894 = vpack.c.b16 %v1815, %v1814
    %v1895 = vpack.c.b16 %v1817, %v1816
    %v1896 = vpack.c.b16 %v1819, %v1818
    %v1897 = vpack.c.b16 %v1821, %v1820
    %v1898 = vpack.c.b16 %v1823, %v1822
    %v1899 = vpack.c.b16 %v1825, %v1824
    %v1900 = vpack.c.b16 %v1827, %v1826
    %v1901 = vpack.c.b16 %v1829, %v1828
    %v1902 = vpack.c.b16 %v1831, %v1830
    %v1903 = vpack.c.b16 %v1833, %v1832
    %v1904 = vpack.c.b16 %v1835, %v1834
    %v1905 = vpack.c.b16 %v1837, %v1836
    %v1906 = vpack.c.b16 %v1839, %v1838
    %v1907 = vpack.c.b16 %v1841, %v1840
    %v1908 = vpack.c.b16 %v1843, %v1842
    %v1909 = vpack.c.b16 %v1845, %v1844
    %1974 = vmatpush.bf16.msra.mxu0 %v1853
    %1975 = vmatpush.bf16.msra.mxu0 %v1852
    %1976 = vmatpush.bf16.msra.mxu0 %v1851
    %1977 = vmatpush.bf16.msra.mxu0 %v1850
    %1978 = vmatpush.bf16.msra.mxu0 %v1849
    %1979 = vmatpush.bf16.msra.mxu0 %v1848
    %1980 = vmatpush.bf16.msra.mxu0 %v1847
    %1981 = vmatpush.bf16.msra.mxu0 %v1846
    %1982 = vmatmul.bf16.gmra.mxu0 %v1098
    %v1983 = vpop.f32.mrf.mxu0
    %v1984 = vadd.f32 %v1588, %v1983
    %v1985 = vpop.f32.mrf.mxu0
    %1986 = vdwg.mxu0
    %1987 = vmatpush.bf16.msra.mxu0 %v1861
    %1988 = vmatpush.bf16.msra.mxu0 %v1860
    %1989 = vmatpush.bf16.msra.mxu0 %v1859
    %1990 = vmatpush.bf16.msra.mxu0 %v1858
    %1991 = vmatpush.bf16.msra.mxu0 %v1857
    %1992 = vmatpush.bf16.msra.mxu0 %v1856
    %1993 = vmatpush.bf16.msra.mxu0 %v1855
    %1994 = vmatpush.bf16.msra.mxu0 %v1854
    %1995 = vmatmul.bf16.gmra.mxu0 %v1154
    %v1996 = vpop.f32.mrf.mxu0
    %v1997 = vadd.f32 %v1984, %v1996
    %v1998 = vpop.f32.mrf.mxu0
    %1999 = vdwg.mxu0
    %2000 = vmatpush.bf16.msra.mxu0 %v1869
    %2001 = vmatpush.bf16.msra.mxu0 %v1868
    %2002 = vmatpush.bf16.msra.mxu0 %v1867
    %2003 = vmatpush.bf16.msra.mxu0 %v1866
    %2004 = vmatpush.bf16.msra.mxu0 %v1865
    %2005 = vmatpush.bf16.msra.mxu0 %v1864
    %2006 = vmatpush.bf16.msra.mxu0 %v1863
    %2007 = vmatpush.bf16.msra.mxu0 %v1862
    %2008 = vmatmul.bf16.gmra.mxu0 %v1199
    %v2009 = vpop.f32.mrf.mxu0
    %v2010 = vadd.f32 %v1997, %v2009
    %v2011 = vpop.f32.mrf.mxu0
    %2012 = vdwg.mxu0
    %2013 = vmatpush.bf16.msra.mxu0 %v1877
    %2014 = vmatpush.bf16.msra.mxu0 %v1876
    %2015 = vmatpush.bf16.msra.mxu0 %v1875
    %2016 = vmatpush.bf16.msra.mxu0 %v1874
    %2017 = vmatpush.bf16.msra.mxu0 %v1873
    %2018 = vmatpush.bf16.msra.mxu0 %v1872
    %2019 = vmatpush.bf16.msra.mxu0 %v1871
    %2020 = vmatpush.bf16.msra.mxu0 %v1870
    %2021 = vmatmul.bf16.gmra.mxu0 %v1255
    %v2022 = vpop.f32.mrf.mxu0
    %v2023 = vadd.f32 %v2010, %v2022
    %v2024 = vpop.f32.mrf.mxu0
    %2025 = vdwg.mxu0
    %2026 = vmatpush.bf16.msra.mxu0 %v1885
    %2027 = vmatpush.bf16.msra.mxu0 %v1884
    %2028 = vmatpush.bf16.msra.mxu0 %v1883
    %2029 = vmatpush.bf16.msra.mxu0 %v1882
    %2030 = vmatpush.bf16.msra.mxu0 %v1881
    %2031 = vmatpush.bf16.msra.mxu0 %v1880
    %2032 = vmatpush.bf16.msra.mxu0 %v1879
    %2033 = vmatpush.bf16.msra.mxu0 %v1878
    %2034 = vmatmul.bf16.gmra.mxu0 %v1300
    %v2035 = vpop.f32.mrf.mxu0
    %v2036 = vadd.f32 %v2023, %v2035
    %v2037 = vpop.f32.mrf.mxu0
    %2038 = vdwg.mxu0
    %2039 = vmatpush.bf16.msra.mxu0 %v1893
    %2040 = vmatpush.bf16.msra.mxu0 %v1892
    %2041 = vmatpush.bf16.msra.mxu0 %v1891
    %2042 = vmatpush.bf16.msra.mxu0 %v1890
    %2043 = vmatpush.bf16.msra.mxu0 %v1889
    %2044 = vmatpush.bf16.msra.mxu0 %v1888
    %2045 = vmatpush.bf16.msra.mxu0 %v1887
    %2046 = vmatpush.bf16.msra.mxu0 %v1886
    %2047 = vmatmul.bf16.gmra.mxu0 %v1356
    %v2048 = vpop.f32.mrf.mxu0
    %v2049 = vadd.f32 %v2036, %v2048
    %v2050 = vpop.f32.mrf.mxu0
    %2051 = vdwg.mxu0
    %2052 = vmatpush.bf16.msra.mxu0 %v1901
    %2053 = vmatpush.bf16.msra.mxu0 %v1900
    %2054 = vmatpush.bf16.msra.mxu0 %v1899
    %2055 = vmatpush.bf16.msra.mxu0 %v1898
    %2056 = vmatpush.bf16.msra.mxu0 %v1897
    %2057 = vmatpush.bf16.msra.mxu0 %v1896
    %2058 = vmatpush.bf16.msra.mxu0 %v1895
    %2059 = vmatpush.bf16.msra.mxu0 %v1894
    %2060 = vmatmul.bf16.gmra.mxu0 %v1401
    %v2061 = vpop.f32.mrf.mxu0
    %v2062 = vadd.f32 %v2049, %v2061
    %v2063 = vpop.f32.mrf.mxu0
    %2064 = vdwg.mxu0
    %2065 = vmatpush.bf16.msra.mxu0 %v1909
    %2066 = vmatpush.bf16.msra.mxu0 %v1908
    %2067 = vmatpush.bf16.msra.mxu0 %v1907
    %2068 = vmatpush.bf16.msra.mxu0 %v1906
    %2069 = vmatpush.bf16.msra.mxu0 %v1905
    %2070 = vmatpush.bf16.msra.mxu0 %v1904
    %2071 = vmatpush.bf16.msra.mxu0 %v1903
    %2072 = vmatpush.bf16.msra.mxu0 %v1902
    %2073 = vmatmul.bf16.gmra.mxu0 %v1457
    %v2074 = vpop.f32.mrf.mxu0
    %v2075 = vadd.f32 %v2062, %v2074
    %v2076 = vpop.f32.mrf.mxu0
    %2077 = vdwg.mxu0
    %v2078 = vadd.f32 %v373, %v2075
    %v2079 = vld [vmem:[%s45] sm:$0x1]
    %v2080 = vld [vmem:[%s47] sm:$0x1]
    %v2081 = vsel %vm303, %v2078, 0.0
    %2082 = vadd.xlane.f32.xlu0 %v2081
    %v2083 = vpop.xlane.xlu0 %2082
    %v2084 = vmul.f32 %v2083, %v313
    %v2085 = vsub.f32 %v2078, %v2084
    %v2086 = vmul.f32 %v2085, %v2085
    %v2087 = vsel %vm303, %v2086, 0.0
    %2088 = vadd.xlane.f32.xlu0 %v2087
    %v2089 = vpop.xlane.xlu0 %2088
    %v2090 = vmul.f32 %v2089, %v313
    %v2091 = vadd.f32 %v2090, 1e-05
    %v2092 = vrsqrt.pop %v2091
    %v2093 = vmul.f32 %v2092, %v2091
    %v2094 = vmul.f32 %v2093, %v2092
    %v2095 = vmul.f32 0.5, %v2094
    %v2096 = vsub.f32 1.5, %v2095
    %v2097 = vmul.f32 %v2092, %v2096
    %vm2098 = vweird.f32 %v2091
    %vm2099 = vweird.f32 %v2092
    %vm2100 = vmor %vm2098, %vm2099
    %v2101 = vsel %vm2100, %v2092, %v2097
    %v2102 = vmul.f32 %v2085, %v2101
    %v2104 = vperm.slane %v2079, 0
    %v2106 = vmul.f32 %v2102, %v2104
    %v2108 = vperm.slane %v2080, 0
    %v2110 = vadd.f32 %v2106, %v2108
    %v2111 = vpack.c.bf16 %v2110, %v2110
    %v2112 = vld [vmem:[%s49] sm:$0xf]
    %v2113 = vld [vmem:[%s49 + $0x4] sm:$0xf]
    %v2114 = vld [vmem:[%s49 + $0x8] sm:$0xf]
    %v2115 = vld [vmem:[%s49 + $0xc] sm:$0xf]
    %v2116 = vld [vmem:[%s51] sm:$0x1]
    %v2118 = vperm.slane %v2116, 0
    %v2124 = vunpack.c.l.b16 %v2112
    %v2125 = vunpack.c.l.b16 %v2113
    %v2126 = vunpack.c.l.b16 %v2114
    %v2127 = vunpack.c.l.b16 %v2115
    %v2128 = vpack.c.b16 %v2125, %v2124
    %v2129 = vpack.c.b16 %v2127, %v2126
    %v2133 = vsel %vm303, %v2111, 0
    %2135 = vmatpush.bf16.msra.mxu0 0
    %2136 = vmatpush.bf16.msra.mxu0 0
    %2137 = vmatpush.bf16.msra.mxu0 0
    %2138 = vmatpush.bf16.msra.mxu0 0
    %2139 = vmatpush.bf16.msra.mxu0 0
    %2140 = vmatpush.bf16.msra.mxu0 0
    %2141 = vmatpush.bf16.msra.mxu0 %v2129
    %2142 = vmatpush.bf16.msra.mxu0 %v2128
    %2143 = vmatmul.bf16.gmra.mxu0 %v2133
    %v2144 = vpop.f32.mrf.mxu0
    %v2145 = vadd.f32 %v2118, %v2144
    %v2146 = vpop.f32.mrf.mxu0
    %2147 = vdwg.mxu0
    %v2148 = vmul.f32 %v2145, 0.5
    %v2149 = vmul.f32 %v2145, 0.70710677
    %v2150 = vmul.f32 %v2149, %v2149
    %v2151 = vmin.f32 16.0, %v2150
    %v2152 = vmul.f32 %v2151, 2.1237322e-06
    %v2153 = vadd.f32 %v2152, 0.00028619796
    %v2154 = vmul.f32 %v2151, %v2153
    %v2155 = vadd.f32 %v2154, 0.0036580483
    %v2156 = vmul.f32 %v2151, %v2155
    %v2157 = vadd.f32 %v2156, 0.05243302
    %v2158 = vmul.f32 %v2151, %v2157
    %v2159 = vadd.f32 %v2158, 0.18741608
    %v2160 = vmul.f32 %v2151, %v2159
    %v2161 = vadd.f32 %v2160, 1.1283791
    %v2162 = vmul.f32 %v2149, %v2161
    %v2163 = vmul.f32 %v2151, 3.8918573e-05
    %v2164 = vadd.f32 %v2163, 0.001143296
    %v2165 = vmul.f32 %v2151, %v2164
    %v2166 = vadd.f32 %v2165, 0.014752088
    %v2167 = vmul.f32 %v2151, %v2166
    %v2168 = vadd.f32 %v2167, 0.112945676
    %v2169 = vmul.f32 %v2151, %v2168
    %v2170 = vadd.f32 %v2169, 0.4994258
    %v2171 = vmul.f32 %v2151, %v2170
    %v2172 = vadd.f32 %v2171, 1.0
    %v2173 = vrcp.pop %v2172
    %v2174 = vmul.f32 %v2172, %v2173
    %v2175 = vsub.f32 1.0, %v2174
    %v2176 = vmul.f32 %v2173, %v2175
    %v2177 = vadd.f32 %v2173, %v2176
    %vm2178 = vweird.f32 %v2172
    %vm2179 = vweird.f32 %v2173
    %vm2180 = vmor %vm2178, %vm2179
    %v2181 = vsel %vm2180, %v2173, %v2177
    %v2182 = vand.u32 2147483647, %v2172
    %vm2183 = vcmp.eq.f32.partialorder %v2182, 8.507059e+37
    %v2184 = vand.u32 %v2172, 2147483648
    %v2185 = vor.u32 1.1754944e-38, %v2184
    %v2186 = vsel %vm2183, %v2185, %v2181
    %v2187 = vmul.f32 %v2162, %v2186
    %v2188 = vmin.f32 %v2187, 1.0
    %v2189 = vmax.f32 %v2188, -1.0
    %v2190 = vadd.f32 %v2189, 1.0
    %v2191 = vmul.f32 %v2148, %v2190
    %v2192 = vpack.c.bf16 %v2191, %v2191
    %v2193 = vld [vmem:[%s53] sm:$0xf]
    %v2194 = vld [vmem:[%s53 + $0x4] sm:$0xf]
    %v2195 = vld [vmem:[%s53 + $0x8] sm:$0xf]
    %v2196 = vld [vmem:[%s53 + $0xc] sm:$0xf]
    %v2197 = vld [vmem:[%s53 + $0x10] sm:$0xf]
    %v2198 = vld [vmem:[%s53 + $0x14] sm:$0xf]
    %v2199 = vld [vmem:[%s53 + $0x18] sm:$0xf]
    %v2200 = vld [vmem:[%s53 + $0x1c] sm:$0xf]
    %v2201 = vld [vmem:[%s55] sm:$0x1]
    %v2203 = vperm.slane %v2201, 0
    %v2213 = vunpack.c.l.b16 %v2193
    %v2214 = vunpack.c.l.b16 %v2194
    %v2215 = vunpack.c.l.b16 %v2195
    %v2216 = vunpack.c.l.b16 %v2196
    %v2217 = vunpack.c.l.b16 %v2197
    %v2218 = vunpack.c.l.b16 %v2198
    %v2219 = vunpack.c.l.b16 %v2199
    %v2220 = vunpack.c.l.b16 %v2200
    %v2221 = vpack.c.b16 %v2214, %v2213
    %v2222 = vpack.c.b16 %v2216, %v2215
    %v2223 = vpack.c.b16 %v2218, %v2217
    %v2224 = vpack.c.b16 %v2220, %v2219
    %vm2229 = vcmask 523264
    %v2231 = vsel %vm2229, %v2192, 0
    %2233 = vmatpush.bf16.msra.mxu0 0
    %2234 = vmatpush.bf16.msra.mxu0 0
    %2235 = vmatpush.bf16.msra.mxu0 0
    %2236 = vmatpush.bf16.msra.mxu0 0
    %2237 = vmatpush.bf16.msra.mxu0 %v2224
    %2238 = vmatpush.bf16.msra.mxu0 %v2223
    %2239 = vmatpush.bf16.msra.mxu0 %v2222
    %2240 = vmatpush.bf16.msra.mxu0 %v2221
    %2241 = vmatmul.bf16.gmra.mxu0 %v2231
    %v2242 = vpop.f32.mrf.mxu0
    %v2243 = vadd.f32 %v2203, %v2242
    %v2244 = vpop.f32.mrf.mxu0
    %2245 = vdwg.mxu0
    %v2246 = vld [vmem:[%s57] sm:$0x1]
    %v2247 = vld [vmem:[%s59] sm:$0x1]
    %v2248 = vsel %vm303, %v2243, 0.0
    %2249 = vadd.xlane.f32.xlu0 %v2248
    %v2250 = vpop.xlane.xlu0 %2249
    %v2251 = vmul.f32 %v2250, %v313
    %v2252 = vsub.f32 %v2243, %v2251
    %v2253 = vmul.f32 %v2252, %v2252
    %v2254 = vsel %vm303, %v2253, 0.0
    %2255 = vadd.xlane.f32.xlu0 %v2254
    %v2256 = vpop.xlane.xlu0 %2255
    %v2257 = vmul.f32 %v2256, %v313
    %v2258 = vadd.f32 %v2257, 1e-05
    %v2259 = vrsqrt.pop %v2258
    %v2260 = vmul.f32 %v2259, %v2258
    %v2261 = vmul.f32 %v2260, %v2259
    %v2262 = vmul.f32 0.5, %v2261
    %v2263 = vsub.f32 1.5, %v2262
    %v2264 = vmul.f32 %v2259, %v2263
    %vm2265 = vweird.f32 %v2258
    %vm2266 = vweird.f32 %v2259
    %vm2267 = vmor %vm2265, %vm2266
    %v2268 = vsel %vm2267, %v2259, %v2264
    %v2269 = vmul.f32 %v2252, %v2268
    %v2271 = vperm.slane %v2246, 0
    %v2273 = vmul.f32 %v2269, %v2271
    %v2275 = vperm.slane %v2247, 0
    %v2277 = vadd.f32 %v2273, %v2275
    %v2278 = vadd.f32 %v2110, %v2277
    %v2279 = vld [vmem:[%s61] sm:$0x1]
    %v2280 = vld [vmem:[%s63] sm:$0x1]
    %v2281 = vsel %vm303, %v2278, 0.0
    %2282 = vadd.xlane.f32.xlu0 %v2281
    %v2283 = vpop.xlane.xlu0 %2282
    %v2284 = vmul.f32 %v2283, %v313
    %v2285 = vsub.f32 %v2278, %v2284
    %v2286 = vmul.f32 %v2285, %v2285
    %v2287 = vsel %vm303, %v2286, 0.0
    %2288 = vadd.xlane.f32.xlu0 %v2287
    %v2289 = vpop.xlane.xlu0 %2288
    %v2290 = vmul.f32 %v2289, %v313
    %v2291 = vadd.f32 %v2290, 1e-05
    %v2292 = vrsqrt.pop %v2291
    %v2293 = vmul.f32 %v2292, %v2291
    %v2294 = vmul.f32 %v2293, %v2292
    %v2295 = vmul.f32 0.5, %v2294
    %v2296 = vsub.f32 1.5, %v2295
    %v2297 = vmul.f32 %v2292, %v2296
    %vm2298 = vweird.f32 %v2291
    %vm2299 = vweird.f32 %v2292
    %vm2300 = vmor %vm2298, %vm2299
    %v2301 = vsel %vm2300, %v2292, %v2297
    %v2302 = vmul.f32 %v2285, %v2301
    %v2304 = vperm.slane %v2279, 0
    %v2306 = vmul.f32 %v2302, %v2304
    %v2308 = vperm.slane %v2280, 0
    %v2310 = vadd.f32 %v2306, %v2308
    %v2311 = vpack.c.bf16 %v2310, %v2310
    %v2312 = vld [vmem:[%s65] sm:$0xf]
    %v2313 = vld [vmem:[%s65 + $0x4] sm:$0xf]
    %v2314 = vld [vmem:[%s65 + $0x8] sm:$0xf]
    %v2315 = vld [vmem:[%s65 + $0xc] sm:$0xf]
    %v2316 = vld [vmem:[%s67] sm:$0x1]
    %v2318 = vperm.slane %v2316, 0
    %v2324 = vunpack.c.l.b16 %v2312
    %v2325 = vunpack.c.l.b16 %v2313
    %v2326 = vunpack.c.l.b16 %v2314
    %v2327 = vunpack.c.l.b16 %v2315
    %v2328 = vpack.c.b16 %v2325, %v2324
    %v2329 = vpack.c.b16 %v2327, %v2326
    %v2333 = vsel %vm303, %v2311, 0
    %2335 = vmatpush.bf16.msra.mxu0 0
    %2336 = vmatpush.bf16.msra.mxu0 0
    %2337 = vmatpush.bf16.msra.mxu0 0
    %2338 = vmatpush.bf16.msra.mxu0 0
    %2339 = vmatpush.bf16.msra.mxu0 0
    %2340 = vmatpush.bf16.msra.mxu0 0
    %2341 = vmatpush.bf16.msra.mxu0 %v2329
    %2342 = vmatpush.bf16.msra.mxu0 %v2328
    %2343 = vmatmul.bf16.gmra.mxu0 %v2333
    %v2344 = vpop.f32.mrf.mxu0
    %v2345 = vadd.f32 %v2318, %v2344
    %v2346 = vpop.f32.mrf.mxu0
    %2347 = vdwg.mxu0
    %v2348 = vmul.f32 %v2345, 0.5
    %v2349 = vmul.f32 %v2345, 0.70710677
    %v2350 = vmul.f32 %v2349, %v2349
    %v2351 = vmin.f32 16.0, %v2350
    %v2352 = vmul.f32 %v2351, 2.1237322e-06
    %v2353 = vadd.f32 %v2352, 0.00028619796
    %v2354 = vmul.f32 %v2351, %v2353
    %v2355 = vadd.f32 %v2354, 0.0036580483
    %v2356 = vmul.f32 %v2351, %v2355
    %v2357 = vadd.f32 %v2356, 0.05243302
    %v2358 = vmul.f32 %v2351, %v2357
    %v2359 = vadd.f32 %v2358, 0.18741608
    %v2360 = vmul.f32 %v2351, %v2359
    %v2361 = vadd.f32 %v2360, 1.1283791
    %v2362 = vmul.f32 %v2349, %v2361
    %v2363 = vmul.f32 %v2351, 3.8918573e-05
    %v2364 = vadd.f32 %v2363, 0.001143296
    %v2365 = vmul.f32 %v2351, %v2364
    %v2366 = vadd.f32 %v2365, 0.014752088
    %v2367 = vmul.f32 %v2351, %v2366
    %v2368 = vadd.f32 %v2367, 0.112945676
    %v2369 = vmul.f32 %v2351, %v2368
    %v2370 = vadd.f32 %v2369, 0.4994258
    %v2371 = vmul.f32 %v2351, %v2370
    %v2372 = vadd.f32 %v2371, 1.0
    %v2373 = vrcp.pop %v2372
    %v2374 = vmul.f32 %v2372, %v2373
    %v2375 = vsub.f32 1.0, %v2374
    %v2376 = vmul.f32 %v2373, %v2375
    %v2377 = vadd.f32 %v2373, %v2376
    %vm2378 = vweird.f32 %v2372
    %vm2379 = vweird.f32 %v2373
    %vm2380 = vmor %vm2378, %vm2379
    %v2381 = vsel %vm2380, %v2373, %v2377
    %v2382 = vand.u32 2147483647, %v2372
    %vm2383 = vcmp.eq.f32.partialorder %v2382, 8.507059e+37
    %v2384 = vand.u32 %v2372, 2147483648
    %v2385 = vor.u32 1.1754944e-38, %v2384
    %v2386 = vsel %vm2383, %v2385, %v2381
    %v2387 = vmul.f32 %v2362, %v2386
    %v2388 = vmin.f32 %v2387, 1.0
    %v2389 = vmax.f32 %v2388, -1.0
    %v2390 = vadd.f32 %v2389, 1.0
    %v2391 = vmul.f32 %v2348, %v2390
    %v2392 = vld [vmem:[%s69] sm:$0xff]
    %v2393 = vld [vmem:[%s69 + $0x8] sm:$0xff]
    %v2394 = vld [vmem:[#allocation2] sm:$0x1]
    %v2396 = vperm.slane %v2394, 0
    %vm2398 = vcmask 130048
    %v2400 = vsel %vm2398, %v2391, 0
    %2402 = vmatpush.msra.mxu0 0.0
    %2403 = vmatpush.msra.mxu0 0.0
    %2404 = vmatpush.msra.mxu0 0.0
    %2405 = vmatpush.msra.mxu0 0.0
    %2406 = vmatpush.msra.mxu0 0.0
    %2407 = vmatpush.msra.mxu0 0.0
    %2408 = vmatpush.msra.mxu0 0.0
    %2409 = vmatpush.msra.mxu0 0.0
    %2410 = vmatpush.msra.mxu0 0.0
    %2411 = vmatpush.msra.mxu0 0.0
    %2412 = vmatpush.msra.mxu0 0.0
    %2413 = vmatpush.msra.mxu0 0.0
    %2414 = vmatpush.msra.mxu0 0.0
    %2415 = vmatpush.msra.mxu0 0.0
    %2416 = vmatpush.msra.mxu0 %v2393
    %2417 = vmatpush.msra.mxu0 %v2392
    %2418 = vmatmul.f32.gmra.mxu0 %v2400
    %v2419 = vpop.f32.mrf.mxu0
    %v2420 = vadd.f32 %v2396, %v2419
    %2421 = vdwg.mxu0
    %v2422 = vxor.u32 %v2420, 2147483648
    %v2423 = vmul.f32 %v2422, 1.442695
    %v2424 = vpow.pop %v2423
    %v2425 = vadd.f32 %v2424, 1.0
    %v2426 = vrcp.pop %v2425
    %v2427 = vmul.f32 %v2425, %v2426
    %v2428 = vsub.f32 1.0, %v2427
    %v2429 = vmul.f32 %v2426, %v2428
    %v2430 = vadd.f32 %v2426, %v2429
    %vm2431 = vweird.f32 %v2425
    %vm2432 = vweird.f32 %v2426
    %vm2433 = vmor %vm2431, %vm2432
    %v2434 = vsel %vm2433, %v2426, %v2430
    %v2435 = vand.u32 2147483647, %v2425
    %vm2436 = vcmp.eq.f32.partialorder %v2435, 8.507059e+37
    %v2437 = vand.u32 %v2425, 2147483648
    %v2438 = vor.u32 1.1754944e-38, %v2437
    %v2439 = vsel %vm2436, %v2438, %v2434
    %v2440 = vmul.f32 1.0, %v2439
    %v2441 = vmul.f32 %v2440, 1.442695
    %v2442 = vpow.pop %v2441
    %v2443 = vld [vmem:[%s7] sm:$0x1]
    %2445 = vset.pattern.permute.xlu0 0
    %2446 = vperm.xlu0 %2445, %v2442
    %v2447 = vpop.permute.xlu0 %2446
    %v2449 = vmul.f32 %v2447, %v2310
    %v2450 = vpack.c.bf16 %v2449, %v2449
    %v2452 = vsel %vm191, %v2443, 0
    %v2455 = vsel %vm1081, %v2450, 0
    %2457 = vmatpush.bf16.msra.mxu0 0
    %2458 = vmatpush.bf16.msra.mxu0 0
    %2459 = vmatpush.bf16.msra.mxu0 0
    %2460 = vmatpush.bf16.msra.mxu0 0
    %2461 = vmatpush.bf16.msra.mxu0 0
    %2462 = vmatpush.bf16.msra.mxu0 0
    %2463 = vmatpush.bf16.msra.mxu0 0
    %2464 = vmatpush.bf16.msra.mxu0 %v2455
    %2465 = vmatmul.bf16.gmra.mxu0 %v2452
    %v2466 = vpop.f32.mrf.mxu0
    %v2467 = vadd.f32 0.0, %v2466
    %v2468 = vpop.f32.mrf.mxu0
    %2469 = vdwg.mxu0
    %v2470 = vpack.c.bf16 %v2442, %v2442
    %v2472 = vsel %vm1081, %v2470, 0
    %2474 = vmatpush.bf16.msra.mxu0 0
    %2475 = vmatpush.bf16.msra.mxu0 0
    %2476 = vmatpush.bf16.msra.mxu0 0
    %2477 = vmatpush.bf16.msra.mxu0 0
    %2478 = vmatpush.bf16.msra.mxu0 0
    %2479 = vmatpush.bf16.msra.mxu0 0
    %2480 = vmatpush.bf16.msra.mxu0 0
    %2481 = vmatpush.bf16.msra.mxu0 %v2472
    %2482 = vmatmul.bf16.gmra.mxu0 %v2452
    %v2483 = vpop.f32.mrf.mxu0
    %v2484 = vadd.f32 0.0, %v2483
    %v2485 = vpop.f32.mrf.mxu0
    %2486 = vdwg.mxu0
    %v2487 = vrcp.pop %v2484
    %v2488 = vmul.f32 %v2484, %v2487
    %v2489 = vsub.f32 1.0, %v2488
    %v2490 = vmul.f32 %v2487, %v2489
    %v2491 = vadd.f32 %v2487, %v2490
    %vm2492 = vweird.f32 %v2484
    %vm2493 = vweird.f32 %v2487
    %vm2494 = vmor %vm2492, %vm2493
    %v2495 = vsel %vm2494, %v2487, %v2491
    %v2496 = vand.u32 2147483647, %v2484
    %vm2497 = vcmp.eq.f32.partialorder %v2496, 8.507059e+37
    %v2498 = vand.u32 %v2484, 2147483648
    %v2499 = vor.u32 1.1754944e-38, %v2498
    %v2500 = vsel %vm2497, %v2499, %v2495
    %v2501 = vmul.f32 1.0, %v2500
    %2503 = vset.pattern.permute.xlu0 0
    %2504 = vperm.xlu0 %2503, %v2501
    %v2505 = vpop.permute.xlu0 %2504
    %v2507 = vmul.f32 %v2467, %v2505
    %vm2508 = vcmask 254976
    %2509 = vst.msk [vmem:[#allocation3] sm:$0x3] %vm2508, %v2507
    // Predicated region
    $region146: #{tpu_custom_call.1} parent=1 // pred_check
      _
    $region147: #{tpu_custom_call.1} parent=1 // pred_check_branch
      %2511 = sbr.rel (0) target = $region149
    $region148: #{tpu_custom_call.1} parent=1 // pred_region
      %2513 = vsyncadd [#allocation4], 0
      %s2515 = sshll.u32 [#allocation3], 4
      %s2516 = int_to_ptr.vmem [resolvable:$true] %s2515
      %s2517 = sshll.u32 %s73, 4
      %s2518 = int_to_ptr.hbm [resolvable:$true] %s2517
      %2520 = dma.vmem_to_hbm [thread:$0]  %s2516, 32, %s2518, [#allocation4]
    $region149: #{tpu_custom_call.1} parent=1 // pred_fallthru
      _
    // Predicated region
    $region150: #{tpu_custom_call.1} parent=1 // pred_check
      _
    $region151: #{tpu_custom_call.1} parent=1 // pred_check_branch
      %2522 = sbr.rel (0) target = $region153
    $region152: #{tpu_custom_call.1} parent=1 // pred_region
      %2524 = dma.done [#allocation4], 32
    $region153: #{tpu_custom_call.1} parent=1 // pred_fallthru
      _
    %2525 = vsyncpa [#allocation4], 1

</llo_original>
